<compile_context>
chip_gen: v7x
topology: tpu7x:2x2x1
jax: 0.10.0
libtpu: 0.0.40
codegen_flags: <defaults>
</compile_context>

<pallas_src>
import math
import numpy as np
import jax
import jax.numpy as jnp
from jax.experimental import pallas as pl
from jax.experimental.pallas import tpu as pltpu

# ----------------------------- configuration -------------------------------
D_IN = 3
D_OUT = 65
D_HIDDEN = 64
N_LAYERS = 8
SKIP_IN = (4,)
BIAS = 0.5
SCALE = 1.0
INSIDE_OUTSIDE = False

DIMS = [D_IN] + [D_HIDDEN] * N_LAYERS + [D_OUT]      # len = 10
NUM_LAYERS = len(DIMS)                               # 10 -> 9 linear layers
SKIP_W = D_HIDDEN - D_IN                             # 61 (layer-3 out / layer-4 "x" part)

TM = 512            # points per grid step (multiple of 256)
INV_SQRT2 = 1.0 / math.sqrt(2.0)


# ----------------------------- parameter init ------------------------------
def init_params(key):
    """Deterministic geometric init, matching SDFNetwork.__init__ (multires=0).

    Returns a list of (w, b) with w: (in_dim, out_dim), b: (1, out_dim) --
    i.e. the module's effective forward weights (weight_norm is identity at
    init since g = ||v||)."""
    params = []
    for l in range(NUM_LAYERS - 1):
        in_dim = DIMS[l]
        out_dim = DIMS[l + 1] - DIMS[0] if (l + 1) in SKIP_IN else DIMS[l + 1]
        key, kw = jax.random.split(key)
        if l == NUM_LAYERS - 2:  # last linear layer
            mean = math.sqrt(math.pi) / math.sqrt(DIMS[l])
            if INSIDE_OUTSIDE:
                mean = -mean
            w = mean + 1e-4 * jax.random.normal(kw, (in_dim, out_dim), jnp.float32)
            b = jnp.full((1, out_dim), BIAS if INSIDE_OUTSIDE else -BIAS, jnp.float32)
        else:
            std = math.sqrt(2.0) / math.sqrt(out_dim)
            w = std * jax.random.normal(kw, (in_dim, out_dim), jnp.float32)
            b = jnp.zeros((1, out_dim), jnp.float32)
        params.append((w, b))
    return params


# --------------------- pack params for the transposed kernel ----------------
def pack_params(params):
    """Convert (in,out) weights into the consolidated transposed operands."""
    ws = [w for w, _ in params]
    bs = [b for _, b in params]

    # Fused first-layer + skip-"inputs" weight: (128, 3), SCALE folded in.
    w0t = ws[0].T * SCALE                          # (64, 3)
    w4 = ws[4]                                     # (64, 64)
    w4a_t = w4[:SKIP_W, :].T                       # (64, 61)  "x" part, transposed
    w4b_t = (w4[SKIP_W:, :].T) * SCALE             # (64, 3)   "inputs" part, transposed
    w03 = jnp.concatenate([w0t, w4b_t], axis=0)    # (128, 3)

    # Hidden transposed weights for layers 1,2,3,4a,5,6,7 -> (7, 64, 64).
    w3t = jnp.zeros((D_HIDDEN, D_HIDDEN), jnp.float32).at[:SKIP_W, :].set(ws[3].T)
    w4at = jnp.zeros((D_HIDDEN, D_HIDDEN), jnp.float32).at[:, :SKIP_W].set(w4a_t)
    wh = jnp.stack([ws[1].T, ws[2].T, w3t, w4at, ws[5].T, ws[6].T, ws[7].T], axis=0)

    # Hidden biases as columns of a (64, 8) table (layer 3 padded 61 -> 64).
    cols = []
    for l in range(8):
        b = bs[l][0]
        if b.shape[0] < D_HIDDEN:
            b = jnp.concatenate([b, jnp.zeros((D_HIDDEN - b.shape[0],), jnp.float32)])
        cols.append(b)
    bh = jnp.stack(cols, axis=1)                   # (64, 8)

    # Last layer, transposed, with 1/SCALE folded into the sdf row.
    w8t = ws[8].T                                  # (65, 64)
    b8t = bs[8].T                                  # (65, 1)
    w8t = w8t.at[0, :].multiply(1.0 / SCALE)
    b8t = b8t.at[0, 0].multiply(1.0 / SCALE)
    return w03, wh, bh, w8t, b8t


# ------------------------------- the kernel --------------------------------
def _softplus_beta100(x):
    # PyTorch Softplus(beta=100, threshold=20): x if 100*x > 20 else log1p(exp(100x))/100.
    # (The overflow branch is masked by the where -> no clamp needed.)
    z = 100.0 * x
    return jnp.where(z > 20.0, x, jnp.log1p(jnp.exp(z)) * 0.01)


def sdf_kernel(x_ref, w03_ref, wh_ref, bh_ref, w8_ref, b8_ref, out_ref):
    x = x_ref[...]                                                    # (3, TM)

    # Fused (128, 3) @ (3, TM): rows 0..63 = layer-0 pre-activation (no bias),
    # rows 64..127 = skip-layer "inputs" contribution (W4b^T @ scale*x).
    pre = jnp.dot(w03_ref[...], x, preferred_element_type=jnp.float32)  # (128, TM)
    skip = pre[D_HIDDEN:, :]                                          # (64, TM)

    def lin(l, h):
        return (jnp.dot(wh_ref[l], h, preferred_element_type=jnp.float32)
                + bh_ref[:, l + 1:l + 2])

    h = _softplus_beta100(pre[:D_HIDDEN, :] + bh_ref[:, 0:1])         # l=0
    h = _softplus_beta100(lin(0, h))                                  # l=1
    h = _softplus_beta100(lin(1, h))                                  # l=2
    h = _softplus_beta100(lin(2, h))                                  # l=3 (padded 61->64)

    # l=4 skip layer: (W4a^T @ h + W4b^T @ inputs) / sqrt(2) + b4
    s = (jnp.dot(wh_ref[3], h, preferred_element_type=jnp.float32) + skip) * INV_SQRT2
    h = _softplus_beta100(s + bh_ref[:, 4:5])

    h = _softplus_beta100(lin(4, h))                                  # l=5
    h = _softplus_beta100(lin(5, h))                                  # l=6
    h = _softplus_beta100(lin(6, h))                                  # l=7

    # l=8 (no activation); 1/SCALE already folded into row 0 of w8/b8.
    out_ref[...] = (jnp.dot(w8_ref[...], h, preferred_element_type=jnp.float32)
                    + b8_ref[...])                                    # (65, TM)


# ------------------------------- wrapper ------------------------------------
def sdf_network_forward(x, packed, tm=TM):
    """x: (N, D_IN) float32. Returns (N, D_OUT) float32."""
    N = x.shape[0]
    w03, wh, bh, w8t, b8t = packed

    n_pad = pl.cdiv(N, tm) * tm
    xt = x.T                                       # (3, N)  points-on-lanes
    if n_pad != N:
        xt = jnp.pad(xt, ((0, 0), (0, n_pad - N)))

    out_t = pl.pallas_call(
        sdf_kernel,
        out_shape=jax.ShapeDtypeStruct((D_OUT, n_pad), jnp.float32),
        grid_spec=pltpu.PrefetchScalarGridSpec(
            num_scalar_prefetch=0,
            grid=(n_pad // tm,),
            in_specs=[
                pl.BlockSpec((D_IN, tm), lambda i: (0, i)),                 # x
                pl.BlockSpec((2 * D_HIDDEN, D_IN), lambda i: (0, 0)),       # w03
                pl.BlockSpec((7, D_HIDDEN, D_HIDDEN), lambda i: (0, 0, 0)), # wh
                pl.BlockSpec((D_HIDDEN, 8), lambda i: (0, 0)),              # bh
                pl.BlockSpec((D_OUT, D_HIDDEN), lambda i: (0, 0)),          # w8
                pl.BlockSpec((D_OUT, 1), lambda i: (0, 0)),                 # b8
            ],
            out_specs=pl.BlockSpec((D_OUT, tm), lambda i: (0, i)),
        ),
        compiler_params=pltpu.CompilerParams(
            dimension_semantics=("parallel",)),
    )(xt, w03, wh, bh, w8t, b8t)

    return out_t[:, :N].T


# --------------------------- pure-JAX reference -----------------------------
def sdf_network_reference(x, params):
    inputs = x * SCALE
    h = inputs
    for l, (w, b) in enumerate(params):
        if l in SKIP_IN:
            h = jnp.concatenate([h, inputs], axis=-1) / math.sqrt(2.0)
        h = jnp.dot(h, w, preferred_element_type=jnp.float32) + b[0]
        if l < NUM_LAYERS - 2:
            z = 100.0 * h
            h = jnp.where(z > 20.0, h, jnp.log1p(jnp.exp(z)) * 0.01)
    return jnp.concatenate([h[..., :1] / SCALE, h[..., 1:]], axis=-1)


# --------------------------------- main -------------------------------------
if __name__ == "__main__":
    key = jax.random.PRNGKey(0)
    key, kp, kx = jax.random.split(key, 3)

    params = init_params(kp)
    packed = pack_params(params)

    N = 1000                                   # non-multiple of TM: exercises padding
    x = jax.random.normal(kx, (N, D_IN), jnp.float32)

    out = jax.block_until_ready(sdf_network_forward(x, packed))
    ref = sdf_network_reference(x, params)

    np.testing.assert_allclose(np.asarray(out), np.asarray(ref),
                               rtol=1e-4, atol=1e-5)

    print("KERNEL_OK")
</pallas_src>

<mosaic_0001>
module attributes {stable_mosaic.version = 11 : i64} {
  func.func @sdf_kernel(%arg0: i32, %arg1: memref<3x512xf32, #tpu.memory_space<vmem>>, %arg2: memref<128x3xf32, #tpu.memory_space<vmem>>, %arg3: memref<7x64x64xf32, #tpu.memory_space<vmem>>, %arg4: memref<64x8xf32, #tpu.memory_space<vmem>>, %arg5: memref<65x64xf32, #tpu.memory_space<vmem>>, %arg6: memref<65x1xf32, #tpu.memory_space<vmem>>, %arg7: memref<65x512xf32, #tpu.memory_space<vmem>>) attributes {dimension_semantics = [#tpu.dimension_semantics<parallel>], iteration_bounds = array<i64: 2>, scalar_prefetch = 0 : i64, scratch_operands = 0 : i64, tpu.core_type = #tpu.core_type<tc>, window_params = [{transform_indices = @transform_0, window_bounds = array<i64: 3, 512>}, {pipeline_mode = #tpu.pipeline_mode<synchronous>, transform_indices = @transform_1, window_bounds = array<i64: 128, 3>}, {pipeline_mode = #tpu.pipeline_mode<synchronous>, transform_indices = @transform_2, window_bounds = array<i64: 7, 64, 64>}, {pipeline_mode = #tpu.pipeline_mode<synchronous>, transform_indices = @transform_3, window_bounds = array<i64: 64, 8>}, {pipeline_mode = #tpu.pipeline_mode<synchronous>, transform_indices = @transform_4, window_bounds = array<i64: 65, 64>}, {pipeline_mode = #tpu.pipeline_mode<synchronous>, transform_indices = @transform_5, window_bounds = array<i64: 65, 1>}, {transform_indices = @transform_6, window_bounds = array<i64: 65, 512>}]} {
    %c0 = arith.constant 0 : index
    %c0_0 = arith.constant 0 : index
    %0 = vector.load %arg1[%c0, %c0_0] : memref<3x512xf32, #tpu.memory_space<vmem>>, vector<3x512xf32>
    %c0_1 = arith.constant 0 : index
    %c0_2 = arith.constant 0 : index
    %1 = vector.load %arg2[%c0_1, %c0_2] : memref<128x3xf32, #tpu.memory_space<vmem>>, vector<128x3xf32>
    %cst = arith.constant dense<0.000000e+00> : vector<128x512xf32>
    %2 = tpu.matmul %1, %0, %cst {dimension_numbers = #tpu.dot_dimension_numbers<[1], [0], [0], [1], [0, 0, 1, 1], [], []>} : vector<128x3xf32>, vector<3x512xf32>, vector<128x512xf32> -> vector<128x512xf32>
    %3 = vector.extract_strided_slice %2 {offsets = [64, 0], sizes = [64, 512], strides = [1, 1]} : vector<128x512xf32> to vector<64x512xf32>
    %4 = vector.extract_strided_slice %2 {offsets = [0, 0], sizes = [64, 512], strides = [1, 1]} : vector<128x512xf32> to vector<64x512xf32>
    %c0_3 = arith.constant 0 : index
    %c0_4 = arith.constant 0 : index
    %5 = vector.load %arg4[%c0_3, %c0_4] : memref<64x8xf32, #tpu.memory_space<vmem>>, vector<64x1xf32>
    %6 = vector.broadcast %5 : vector<64x1xf32> to vector<64x512xf32>
    %7 = arith.addf %4, %6 : vector<64x512xf32>
    %cst_5 = arith.constant 1.000000e+02 : f32
    %8 = vector.broadcast %cst_5 : f32 to vector<64x512xf32>
    %9 = arith.mulf %8, %7 : vector<64x512xf32>
    %cst_6 = arith.constant 2.000000e+01 : f32
    %10 = vector.broadcast %cst_6 : f32 to vector<64x512xf32>
    %11 = arith.cmpf ogt, %9, %10 : vector<64x512xf32>
    %12 = math.exp %9 : vector<64x512xf32>
    %13 = math.log1p %12 : vector<64x512xf32>
    %cst_7 = arith.constant 0.00999999977 : f32
    %14 = vector.broadcast %cst_7 : f32 to vector<64x512xf32>
    %15 = arith.mulf %13, %14 : vector<64x512xf32>
    %16 = arith.select %11, %7, %15 : vector<64x512xi1>, vector<64x512xf32>
    %c0_8 = arith.constant 0 : index
    %c0_9 = arith.constant 0 : index
    %c0_10 = arith.constant 0 : index
    %17 = vector.load %arg3[%c0_8, %c0_9, %c0_10] : memref<7x64x64xf32, #tpu.memory_space<vmem>>, vector<1x64x64xf32>
    %18 = vector.shape_cast %17 : vector<1x64x64xf32> to vector<64x64xf32>
    %cst_11 = arith.constant dense<0.000000e+00> : vector<64x512xf32>
    %19 = tpu.matmul %18, %16, %cst_11 {dimension_numbers = #tpu.dot_dimension_numbers<[1], [0], [0], [1], [0, 0, 1, 1], [], []>} : vector<64x64xf32>, vector<64x512xf32>, vector<64x512xf32> -> vector<64x512xf32>
    %c0_12 = arith.constant 0 : index
    %c1 = arith.constant 1 : index
    %20 = vector.load %arg4[%c0_12, %c1] : memref<64x8xf32, #tpu.memory_space<vmem>>, vector<64x1xf32>
    %21 = vector.broadcast %20 : vector<64x1xf32> to vector<64x512xf32>
    %22 = arith.addf %19, %21 : vector<64x512xf32>
    %cst_13 = arith.constant 1.000000e+02 : f32
    %23 = vector.broadcast %cst_13 : f32 to vector<64x512xf32>
    %24 = arith.mulf %23, %22 : vector<64x512xf32>
    %cst_14 = arith.constant 2.000000e+01 : f32
    %25 = vector.broadcast %cst_14 : f32 to vector<64x512xf32>
    %26 = arith.cmpf ogt, %24, %25 : vector<64x512xf32>
    %27 = math.exp %24 : vector<64x512xf32>
    %28 = math.log1p %27 : vector<64x512xf32>
    %cst_15 = arith.constant 0.00999999977 : f32
    %29 = vector.broadcast %cst_15 : f32 to vector<64x512xf32>
    %30 = arith.mulf %28, %29 : vector<64x512xf32>
    %31 = arith.select %26, %22, %30 : vector<64x512xi1>, vector<64x512xf32>
    %c1_16 = arith.constant 1 : index
    %c0_17 = arith.constant 0 : index
    %c0_18 = arith.constant 0 : index
    %32 = vector.load %arg3[%c1_16, %c0_17, %c0_18] : memref<7x64x64xf32, #tpu.memory_space<vmem>>, vector<1x64x64xf32>
    %33 = vector.shape_cast %32 : vector<1x64x64xf32> to vector<64x64xf32>
    %cst_19 = arith.constant dense<0.000000e+00> : vector<64x512xf32>
    %34 = tpu.matmul %33, %31, %cst_19 {dimension_numbers = #tpu.dot_dimension_numbers<[1], [0], [0], [1], [0, 0, 1, 1], [], []>} : vector<64x64xf32>, vector<64x512xf32>, vector<64x512xf32> -> vector<64x512xf32>
    %c0_20 = arith.constant 0 : index
    %c2 = arith.constant 2 : index
    %35 = vector.load %arg4[%c0_20, %c2] : memref<64x8xf32, #tpu.memory_space<vmem>>, vector<64x1xf32>
    %36 = vector.broadcast %35 : vector<64x1xf32> to vector<64x512xf32>
    %37 = arith.addf %34, %36 : vector<64x512xf32>
    %cst_21 = arith.constant 1.000000e+02 : f32
    %38 = vector.broadcast %cst_21 : f32 to vector<64x512xf32>
    %39 = arith.mulf %38, %37 : vector<64x512xf32>
    %cst_22 = arith.constant 2.000000e+01 : f32
    %40 = vector.broadcast %cst_22 : f32 to vector<64x512xf32>
    %41 = arith.cmpf ogt, %39, %40 : vector<64x512xf32>
    %42 = math.exp %39 : vector<64x512xf32>
    %43 = math.log1p %42 : vector<64x512xf32>
    %cst_23 = arith.constant 0.00999999977 : f32
    %44 = vector.broadcast %cst_23 : f32 to vector<64x512xf32>
    %45 = arith.mulf %43, %44 : vector<64x512xf32>
    %46 = arith.select %41, %37, %45 : vector<64x512xi1>, vector<64x512xf32>
    %c2_24 = arith.constant 2 : index
    %c0_25 = arith.constant 0 : index
    %c0_26 = arith.constant 0 : index
    %47 = vector.load %arg3[%c2_24, %c0_25, %c0_26] : memref<7x64x64xf32, #tpu.memory_space<vmem>>, vector<1x64x64xf32>
    %48 = vector.shape_cast %47 : vector<1x64x64xf32> to vector<64x64xf32>
    %cst_27 = arith.constant dense<0.000000e+00> : vector<64x512xf32>
    %49 = tpu.matmul %48, %46, %cst_27 {dimension_numbers = #tpu.dot_dimension_numbers<[1], [0], [0], [1], [0, 0, 1, 1], [], []>} : vector<64x64xf32>, vector<64x512xf32>, vector<64x512xf32> -> vector<64x512xf32>
    %c0_28 = arith.constant 0 : index
    %c3 = arith.constant 3 : index
    %50 = vector.load %arg4[%c0_28, %c3] : memref<64x8xf32, #tpu.memory_space<vmem>>, vector<64x1xf32>
    %51 = vector.broadcast %50 : vector<64x1xf32> to vector<64x512xf32>
    %52 = arith.addf %49, %51 : vector<64x512xf32>
    %cst_29 = arith.constant 1.000000e+02 : f32
    %53 = vector.broadcast %cst_29 : f32 to vector<64x512xf32>
    %54 = arith.mulf %53, %52 : vector<64x512xf32>
    %cst_30 = arith.constant 2.000000e+01 : f32
    %55 = vector.broadcast %cst_30 : f32 to vector<64x512xf32>
    %56 = arith.cmpf ogt, %54, %55 : vector<64x512xf32>
    %57 = math.exp %54 : vector<64x512xf32>
    %58 = math.log1p %57 : vector<64x512xf32>
    %cst_31 = arith.constant 0.00999999977 : f32
    %59 = vector.broadcast %cst_31 : f32 to vector<64x512xf32>
    %60 = arith.mulf %58, %59 : vector<64x512xf32>
    %61 = arith.select %56, %52, %60 : vector<64x512xi1>, vector<64x512xf32>
    %c3_32 = arith.constant 3 : index
    %c0_33 = arith.constant 0 : index
    %c0_34 = arith.constant 0 : index
    %62 = vector.load %arg3[%c3_32, %c0_33, %c0_34] : memref<7x64x64xf32, #tpu.memory_space<vmem>>, vector<1x64x64xf32>
    %63 = vector.shape_cast %62 : vector<1x64x64xf32> to vector<64x64xf32>
    %cst_35 = arith.constant dense<0.000000e+00> : vector<64x512xf32>
    %64 = tpu.matmul %63, %61, %cst_35 {dimension_numbers = #tpu.dot_dimension_numbers<[1], [0], [0], [1], [0, 0, 1, 1], [], []>} : vector<64x64xf32>, vector<64x512xf32>, vector<64x512xf32> -> vector<64x512xf32>
    %65 = arith.addf %64, %3 : vector<64x512xf32>
    %cst_36 = arith.constant 0.707106769 : f32
    %66 = vector.broadcast %cst_36 : f32 to vector<64x512xf32>
    %67 = arith.mulf %65, %66 : vector<64x512xf32>
    %c0_37 = arith.constant 0 : index
    %c4 = arith.constant 4 : index
    %68 = vector.load %arg4[%c0_37, %c4] : memref<64x8xf32, #tpu.memory_space<vmem>>, vector<64x1xf32>
    %69 = vector.broadcast %68 : vector<64x1xf32> to vector<64x512xf32>
    %70 = arith.addf %67, %69 : vector<64x512xf32>
    %cst_38 = arith.constant 1.000000e+02 : f32
    %71 = vector.broadcast %cst_38 : f32 to vector<64x512xf32>
    %72 = arith.mulf %71, %70 : vector<64x512xf32>
    %cst_39 = arith.constant 2.000000e+01 : f32
    %73 = vector.broadcast %cst_39 : f32 to vector<64x512xf32>
    %74 = arith.cmpf ogt, %72, %73 : vector<64x512xf32>
    %75 = math.exp %72 : vector<64x512xf32>
    %76 = math.log1p %75 : vector<64x512xf32>
    %cst_40 = arith.constant 0.00999999977 : f32
    %77 = vector.broadcast %cst_40 : f32 to vector<64x512xf32>
    %78 = arith.mulf %76, %77 : vector<64x512xf32>
    %79 = arith.select %74, %70, %78 : vector<64x512xi1>, vector<64x512xf32>
    %c4_41 = arith.constant 4 : index
    %c0_42 = arith.constant 0 : index
    %c0_43 = arith.constant 0 : index
    %80 = vector.load %arg3[%c4_41, %c0_42, %c0_43] : memref<7x64x64xf32, #tpu.memory_space<vmem>>, vector<1x64x64xf32>
    %81 = vector.shape_cast %80 : vector<1x64x64xf32> to vector<64x64xf32>
    %cst_44 = arith.constant dense<0.000000e+00> : vector<64x512xf32>
    %82 = tpu.matmul %81, %79, %cst_44 {dimension_numbers = #tpu.dot_dimension_numbers<[1], [0], [0], [1], [0, 0, 1, 1], [], []>} : vector<64x64xf32>, vector<64x512xf32>, vector<64x512xf32> -> vector<64x512xf32>
    %c0_45 = arith.constant 0 : index
    %c5 = arith.constant 5 : index
    %83 = vector.load %arg4[%c0_45, %c5] : memref<64x8xf32, #tpu.memory_space<vmem>>, vector<64x1xf32>
    %84 = vector.broadcast %83 : vector<64x1xf32> to vector<64x512xf32>
    %85 = arith.addf %82, %84 : vector<64x512xf32>
    %cst_46 = arith.constant 1.000000e+02 : f32
    %86 = vector.broadcast %cst_46 : f32 to vector<64x512xf32>
    %87 = arith.mulf %86, %85 : vector<64x512xf32>
    %cst_47 = arith.constant 2.000000e+01 : f32
    %88 = vector.broadcast %cst_47 : f32 to vector<64x512xf32>
    %89 = arith.cmpf ogt, %87, %88 : vector<64x512xf32>
    %90 = math.exp %87 : vector<64x512xf32>
    %91 = math.log1p %90 : vector<64x512xf32>
    %cst_48 = arith.constant 0.00999999977 : f32
    %92 = vector.broadcast %cst_48 : f32 to vector<64x512xf32>
    %93 = arith.mulf %91, %92 : vector<64x512xf32>
    %94 = arith.select %89, %85, %93 : vector<64x512xi1>, vector<64x512xf32>
    %c5_49 = arith.constant 5 : index
    %c0_50 = arith.constant 0 : index
    %c0_51 = arith.constant 0 : index
    %95 = vector.load %arg3[%c5_49, %c0_50, %c0_51] : memref<7x64x64xf32, #tpu.memory_space<vmem>>, vector<1x64x64xf32>
    %96 = vector.shape_cast %95 : vector<1x64x64xf32> to vector<64x64xf32>
    %cst_52 = arith.constant dense<0.000000e+00> : vector<64x512xf32>
    %97 = tpu.matmul %96, %94, %cst_52 {dimension_numbers = #tpu.dot_dimension_numbers<[1], [0], [0], [1], [0, 0, 1, 1], [], []>} : vector<64x64xf32>, vector<64x512xf32>, vector<64x512xf32> -> vector<64x512xf32>
    %c0_53 = arith.constant 0 : index
    %c6 = arith.constant 6 : index
    %98 = vector.load %arg4[%c0_53, %c6] : memref<64x8xf32, #tpu.memory_space<vmem>>, vector<64x1xf32>
    %99 = vector.broadcast %98 : vector<64x1xf32> to vector<64x512xf32>
    %100 = arith.addf %97, %99 : vector<64x512xf32>
    %cst_54 = arith.constant 1.000000e+02 : f32
    %101 = vector.broadcast %cst_54 : f32 to vector<64x512xf32>
    %102 = arith.mulf %101, %100 : vector<64x512xf32>
    %cst_55 = arith.constant 2.000000e+01 : f32
    %103 = vector.broadcast %cst_55 : f32 to vector<64x512xf32>
    %104 = arith.cmpf ogt, %102, %103 : vector<64x512xf32>
    %105 = math.exp %102 : vector<64x512xf32>
    %106 = math.log1p %105 : vector<64x512xf32>
    %cst_56 = arith.constant 0.00999999977 : f32
    %107 = vector.broadcast %cst_56 : f32 to vector<64x512xf32>
    %108 = arith.mulf %106, %107 : vector<64x512xf32>
    %109 = arith.select %104, %100, %108 : vector<64x512xi1>, vector<64x512xf32>
    %c6_57 = arith.constant 6 : index
    %c0_58 = arith.constant 0 : index
    %c0_59 = arith.constant 0 : index
    %110 = vector.load %arg3[%c6_57, %c0_58, %c0_59] : memref<7x64x64xf32, #tpu.memory_space<vmem>>, vector<1x64x64xf32>
    %111 = vector.shape_cast %110 : vector<1x64x64xf32> to vector<64x64xf32>
    %cst_60 = arith.constant dense<0.000000e+00> : vector<64x512xf32>
    %112 = tpu.matmul %111, %109, %cst_60 {dimension_numbers = #tpu.dot_dimension_numbers<[1], [0], [0], [1], [0, 0, 1, 1], [], []>} : vector<64x64xf32>, vector<64x512xf32>, vector<64x512xf32> -> vector<64x512xf32>
    %c0_61 = arith.constant 0 : index
    %c7 = arith.constant 7 : index
    %113 = vector.load %arg4[%c0_61, %c7] : memref<64x8xf32, #tpu.memory_space<vmem>>, vector<64x1xf32>
    %114 = vector.broadcast %113 : vector<64x1xf32> to vector<64x512xf32>
    %115 = arith.addf %112, %114 : vector<64x512xf32>
    %cst_62 = arith.constant 1.000000e+02 : f32
    %116 = vector.broadcast %cst_62 : f32 to vector<64x512xf32>
    %117 = arith.mulf %116, %115 : vector<64x512xf32>
    %cst_63 = arith.constant 2.000000e+01 : f32
    %118 = vector.broadcast %cst_63 : f32 to vector<64x512xf32>
    %119 = arith.cmpf ogt, %117, %118 : vector<64x512xf32>
    %120 = math.exp %117 : vector<64x512xf32>
    %121 = math.log1p %120 : vector<64x512xf32>
    %cst_64 = arith.constant 0.00999999977 : f32
    %122 = vector.broadcast %cst_64 : f32 to vector<64x512xf32>
    %123 = arith.mulf %121, %122 : vector<64x512xf32>
    %124 = arith.select %119, %115, %123 : vector<64x512xi1>, vector<64x512xf32>
    %c0_65 = arith.constant 0 : index
    %c0_66 = arith.constant 0 : index
    %125 = vector.load %arg5[%c0_65, %c0_66] : memref<65x64xf32, #tpu.memory_space<vmem>>, vector<65x64xf32>
    %cst_67 = arith.constant dense<0.000000e+00> : vector<65x512xf32>
    %126 = tpu.matmul %125, %124, %cst_67 {dimension_numbers = #tpu.dot_dimension_numbers<[1], [0], [0], [1], [0, 0, 1, 1], [], []>} : vector<65x64xf32>, vector<64x512xf32>, vector<65x512xf32> -> vector<65x512xf32>
    %c0_68 = arith.constant 0 : index
    %c0_69 = arith.constant 0 : index
    %127 = vector.load %arg6[%c0_68, %c0_69] : memref<65x1xf32, #tpu.memory_space<vmem>>, vector<65x1xf32>
    %128 = vector.broadcast %127 : vector<65x1xf32> to vector<65x512xf32>
    %129 = arith.addf %126, %128 : vector<65x512xf32>
    %c0_70 = arith.constant 0 : index
    %c0_71 = arith.constant 0 : index
    %130 = vector.load %arg7[%c0_70, %c0_71] : memref<65x512xf32, #tpu.memory_space<vmem>>, vector<65x512xf32>
    tpu.vector_store %arg7[%c0_70, %c0_71], %129 {strides = array<i32>} : memref<65x512xf32, #tpu.memory_space<vmem>>, vector<65x512xf32>,
    return
  }
  func.func @transform_0(%arg0: i32) -> (i32, i32) {
    %c0_i32 = arith.constant 0 : i32
    %c0_i32_0 = arith.constant 0 : i32
    return %c0_i32, %arg0 : i32, i32
  }
  func.func @transform_1(%arg0: i32) -> (i32, i32) {
    %c0_i32 = arith.constant 0 : i32
    %c0_i32_0 = arith.constant 0 : i32
    %c0_i32_1 = arith.constant 0 : i32
    return %c0_i32, %c0_i32_0 : i32, i32
  }
  func.func @transform_2(%arg0: i32) -> (i32, i32, i32) {
    %c0_i32 = arith.constant 0 : i32
    %c0_i32_0 = arith.constant 0 : i32
    %c0_i32_1 = arith.constant 0 : i32
    %c0_i32_2 = arith.constant 0 : i32
    return %c0_i32, %c0_i32_0, %c0_i32_1 : i32, i32, i32
  }
  func.func @transform_3(%arg0: i32) -> (i32, i32) {
    %c0_i32 = arith.constant 0 : i32
    %c0_i32_0 = arith.constant 0 : i32
    %c0_i32_1 = arith.constant 0 : i32
    return %c0_i32, %c0_i32_0 : i32, i32
  }
  func.func @transform_4(%arg0: i32) -> (i32, i32) {
    %c0_i32 = arith.constant 0 : i32
    %c0_i32_0 = arith.constant 0 : i32
    %c0_i32_1 = arith.constant 0 : i32
    return %c0_i32, %c0_i32_0 : i32, i32
  }
  func.func @transform_5(%arg0: i32) -> (i32, i32) {
    %c0_i32 = arith.constant 0 : i32
    %c0_i32_0 = arith.constant 0 : i32
    %c0_i32_1 = arith.constant 0 : i32
    return %c0_i32, %c0_i32_0 : i32, i32
  }
  func.func @transform_6(%arg0: i32) -> (i32, i32) {
    %c0_i32 = arith.constant 0 : i32
    %c0_i32_0 = arith.constant 0 : i32
    return %c0_i32, %arg0 : i32, i32
  }
}

</mosaic_0001>

<llo_original>
// kernel: tpu_custom_call.1
$region0: #{tpu_custom_call.1}
  #allocation0 [shape = 'u32[]', space=smem, size = 0x4, offset = 0x4, fixed_abs, tag = 'smem constant byte address 0x4 - core index']
  #allocation1 [shape = 'u32[144,128]{1,0:T(1,128)}', space=vmem, size = 0x12000, scoped, tag = 'internal scratch']
  %s0 = inlined_call_operand.vmem [shape: f32[3,1024], index: 0, kind: input, shape index: {}]
  %s1 = inlined_call_operand.vmem [shape: f32[128,3], index: 1, kind: input, shape index: {}]
  %s2 = inlined_call_operand.hbm [shape: f32[7,64,64], index: 2, kind: input, shape index: {}]
  %s3 = inlined_call_operand.vmem [shape: f32[64,8], index: 3, kind: input, shape index: {}]
  %s4 = inlined_call_operand.vmem [shape: f32[65,64], index: 4, kind: input, shape index: {}]
  %s5 = inlined_call_operand.vmem [shape: f32[65,1], index: 5, kind: input, shape index: {}]
  %s6 = inlined_call_operand.hbm [shape: f32[65,1024], index: 6, kind: output, shape index: {}]
  %s7 = sld [smem:[#allocation0]]
  $region61: #{tpu_custom_call.1} parent=0
    _
  %s9 = ssub.s32 1, %s7
  %s10 = scalar_select 0, %s9, %s7
  $region1: #{tpu_custom_call.1} parent=0
    #allocation2 [shape = 'u8[229376]{0}', space=vmem, size = 0x38000, scoped, tag = 'input window, operand 2, single buffered']
    #allocation3 [shape = 's32[2]{0}', space=sflag, size = 0x8, scoped, tag = 'scoped memory for tpu_custom_call.1']
    #allocation4 [shape = 's32[2]{0}', space=sflag, size = 0x8, scoped, tag = 'scoped memory for tpu_custom_call.1']
    #allocation5 [shape = 'u8[294912]{0}', space=vmem, size = 0x48000, scoped, tag = 'output window, operand 0']
    %11 = vsyncpa [#allocation3], 0
    %12 = vsyncpa [#allocation4], 0
    %s13 = scalar_lea.sflag [#allocation4], 1
    %14 = vsyncpa %s13, 0
    loop: start=0, step=1, limit=4
    $region2: #{tpu_custom_call.1} parent=1 // loop_pre_header
      _
    $region3: #{tpu_custom_call.1} parent=1 // loop_header
      %s16 = sphi 0, %s20
      %p17 = scmp.ge.s32.totalorder %s16, 4
      %s26 = sphi 0, %s28
      %s29 = sphi 0, %s26
      %s30 = sphi 0, %s29
      %s46 = sphi 0, %s30
      %s50 = sphi 0, %s50
      %s52 = sphi 0, %s50
      %s53 = sphi 0, %s52
      %s67 = sphi 0, %s53
      %s71 = sphi 0, %s71
      %s73 = sphi 0, %s71
      %s74 = sphi 0, %s73
      %s88 = sphi 0, %s74
      %s92 = sphi 0, %s92
      %s94 = sphi 0, %s92
      %s95 = sphi 0, %s94
      %s109 = sphi 0, %s95
      %s113 = sphi 0, %s113
      %s115 = sphi 0, %s113
      %s116 = sphi 0, %s115
      %s130 = sphi 0, %s116
      %s134 = sphi 0, %s134
      %s136 = sphi 0, %s134
      %s137 = sphi 0, %s136
      %s151 = sphi 0, %s137
      %s157 = sphi 0, %s159
      %s160 = sphi 0, %s157
      %s161 = sphi 0, %s160
      %s177 = sphi 0, %s161
    $region4: #{tpu_custom_call.1} parent=1 // loop_header_branch
      %19 = sbr.rel (%p17) target = $region8
    $region5: #{tpu_custom_call.1} parent=1 // loop_body
      %s21 = ssub.s32 %s16, 1
      %s22 = ssub.s32 %s16, 2
      %s23 = sadd.s32 %s16, 1
      %s24 = ssub.s32 %s16, %s23
      %p25 = scmp.eq.s32.totalorder %s24, 0
      %s27 = sadd.s32 %s26, 1
      %s28 = scalar_select %p25, %s26, %s27
      %p31 = pneg %p25
      %p32 = scmp.eq.s32.totalorder %s16, 1
      %p33 = por %p31, %p32
      %p34 = scmp.ne.s32.totalorder %s26, %s29
      %p35 = scmp.eq.s32.totalorder %s16, 0
      %p36 = por %p34, %p35
      %p37 = scmp.ne.s32.totalorder %s26, %s29
      %p38 = scmp.eq.s32.totalorder %s21, 1
      %p39 = por %p37, %p38
      %p40 = scmp.ne.s32.totalorder %s29, %s30
      %p41 = scmp.eq.s32.totalorder %s21, 0
      %p42 = por %p40, %p41
      %p43 = scmp.ne.s32.totalorder %s29, %s30
      %p44 = scmp.eq.s32.totalorder %s22, 1
      %p45 = por %p43, %p44
      %p47 = scmp.ne.s32.totalorder %s30, %s46
      %p48 = scmp.eq.s32.totalorder %s22, 0
      %p49 = por %p47, %p48
      %s51 = sadd.s32 %s50, 1
      %p54 = scmp.eq.s32.totalorder %s16, 1
      %p55 = scmp.ne.s32.totalorder %s50, %s52
      %p56 = scmp.eq.s32.totalorder %s16, 0
      %p57 = por %p55, %p56
      %p58 = scmp.ne.s32.totalorder %s50, %s52
      %p59 = scmp.eq.s32.totalorder %s21, 1
      %p60 = por %p58, %p59
      %p61 = scmp.ne.s32.totalorder %s52, %s53
      %p62 = scmp.eq.s32.totalorder %s21, 0
      %p63 = por %p61, %p62
      %p64 = scmp.ne.s32.totalorder %s52, %s53
      %p65 = scmp.eq.s32.totalorder %s22, 1
      %p66 = por %p64, %p65
      %p68 = scmp.ne.s32.totalorder %s53, %s67
      %p69 = scmp.eq.s32.totalorder %s22, 0
      %p70 = por %p68, %p69
      %s72 = sadd.s32 %s71, 1
      %p75 = scmp.eq.s32.totalorder %s16, 1
      %p76 = scmp.ne.s32.totalorder %s71, %s73
      %p77 = scmp.eq.s32.totalorder %s16, 0
      %p78 = por %p76, %p77
      %p79 = scmp.ne.s32.totalorder %s71, %s73
      %p80 = scmp.eq.s32.totalorder %s21, 1
      %p81 = por %p79, %p80
      %p82 = scmp.ne.s32.totalorder %s73, %s74
      %p83 = scmp.eq.s32.totalorder %s21, 0
      %p84 = por %p82, %p83
      %p85 = scmp.ne.s32.totalorder %s73, %s74
      %p86 = scmp.eq.s32.totalorder %s22, 1
      %p87 = por %p85, %p86
      %p89 = scmp.ne.s32.totalorder %s74, %s88
      %p90 = scmp.eq.s32.totalorder %s22, 0
      %p91 = por %p89, %p90
      %s93 = sadd.s32 %s92, 1
      %p96 = scmp.eq.s32.totalorder %s16, 1
      %p97 = scmp.ne.s32.totalorder %s92, %s94
      %p98 = scmp.eq.s32.totalorder %s16, 0
      %p99 = por %p97, %p98
      %p100 = scmp.ne.s32.totalorder %s92, %s94
      %p101 = scmp.eq.s32.totalorder %s21, 1
      %p102 = por %p100, %p101
      %p103 = scmp.ne.s32.totalorder %s94, %s95
      %p104 = scmp.eq.s32.totalorder %s21, 0
      %p105 = por %p103, %p104
      %p106 = scmp.ne.s32.totalorder %s94, %s95
      %p107 = scmp.eq.s32.totalorder %s22, 1
      %p108 = por %p106, %p107
      %p110 = scmp.ne.s32.totalorder %s95, %s109
      %p111 = scmp.eq.s32.totalorder %s22, 0
      %p112 = por %p110, %p111
      %s114 = sadd.s32 %s113, 1
      %p117 = scmp.eq.s32.totalorder %s16, 1
      %p118 = scmp.ne.s32.totalorder %s113, %s115
      %p119 = scmp.eq.s32.totalorder %s16, 0
      %p120 = por %p118, %p119
      %p121 = scmp.ne.s32.totalorder %s113, %s115
      %p122 = scmp.eq.s32.totalorder %s21, 1
      %p123 = por %p121, %p122
      %p124 = scmp.ne.s32.totalorder %s115, %s116
      %p125 = scmp.eq.s32.totalorder %s21, 0
      %p126 = por %p124, %p125
      %p127 = scmp.ne.s32.totalorder %s115, %s116
      %p128 = scmp.eq.s32.totalorder %s22, 1
      %p129 = por %p127, %p128
      %p131 = scmp.ne.s32.totalorder %s116, %s130
      %p132 = scmp.eq.s32.totalorder %s22, 0
      %p133 = por %p131, %p132
      %s135 = sadd.s32 %s134, 1
      %p138 = scmp.eq.s32.totalorder %s16, 1
      %p139 = scmp.ne.s32.totalorder %s134, %s136
      %p140 = scmp.eq.s32.totalorder %s16, 0
      %p141 = por %p139, %p140
      %p142 = scmp.ne.s32.totalorder %s134, %s136
      %p143 = scmp.eq.s32.totalorder %s21, 1
      %p144 = por %p142, %p143
      %p145 = scmp.ne.s32.totalorder %s136, %s137
      %p146 = scmp.eq.s32.totalorder %s21, 0
      %p147 = por %p145, %p146
      %p148 = scmp.ne.s32.totalorder %s136, %s137
      %p149 = scmp.eq.s32.totalorder %s22, 1
      %p150 = por %p148, %p149
      %p152 = scmp.ne.s32.totalorder %s137, %s151
      %p153 = scmp.eq.s32.totalorder %s22, 0
      %p154 = por %p152, %p153
      %s155 = ssub.s32 %s16, %s23
      %p156 = scmp.eq.s32.totalorder %s155, 0
      %s158 = sadd.s32 %s157, 1
      %s159 = scalar_select %p156, %s157, %s158
      %p162 = pneg %p156
      %p163 = scmp.eq.s32.totalorder %s16, 1
      %p164 = por %p162, %p163
      %p165 = scmp.ne.s32.totalorder %s157, %s160
      %p166 = scmp.eq.s32.totalorder %s16, 0
      %p167 = por %p165, %p166
      %p168 = scmp.ne.s32.totalorder %s157, %s160
      %p169 = scmp.eq.s32.totalorder %s21, 1
      %p170 = por %p168, %p169
      %p171 = scmp.ne.s32.totalorder %s160, %s161
      %p172 = scmp.eq.s32.totalorder %s21, 0
      %p173 = por %p171, %p172
      %p174 = scmp.ne.s32.totalorder %s160, %s161
      %p175 = scmp.eq.s32.totalorder %s22, 1
      %p176 = por %p174, %p175
      %p178 = scmp.ne.s32.totalorder %s161, %s177
      %p179 = scmp.eq.s32.totalorder %s22, 0
      %p180 = por %p178, %p179
      %p181 = scmp.le.s32.totalorder 1, %s16
      %p182 = scmp.lt.s32.totalorder %s16, 3
      %p183 = pnand %p181, %p182
      %p184 = pneg %p183
      // Predicated region
      $region9: #{tpu_custom_call.1} parent=5 // pred_check
        _
      $region10: #{tpu_custom_call.1} parent=5 // pred_check_branch
        %186 = sbr.rel (%p183) target = $region12
      $region11: #{tpu_custom_call.1} parent=5 // pred_region
        %s187 = ssub.s32 %s16, 1
        // Predicated region
        $region13: #{tpu_custom_call.1} parent=11 // pred_check
          %p188 = pneg %p63
        $region14: #{tpu_custom_call.1} parent=11 // pred_check_branch
          %190 = sbr.rel (%p188) target = $region16
        $region15: #{tpu_custom_call.1} parent=11 // pred_region
          _
        $region16: #{tpu_custom_call.1} parent=11 // pred_fallthru
          _
        // Predicated region
        $region17: #{tpu_custom_call.1} parent=11 // pred_check
          %p191 = pneg %p84
        $region18: #{tpu_custom_call.1} parent=11 // pred_check_branch
          %193 = sbr.rel (%p191) target = $region20
        $region19: #{tpu_custom_call.1} parent=11 // pred_region
          %s195 = ssub.s32 7168, 7168
          %196 = vsyncadd [#allocation3], %s195
          %s197 = sshll.u32 [#allocation2], 4
          %s198 = int_to_ptr.vmem [resolvable:$true] %s197
          %203 = dma.hbm_to_vmem [thread:$0]  %s2, 7168, %s198, [#allocation3], 128, 128, 8
        $region20: #{tpu_custom_call.1} parent=11 // pred_fallthru
          _
        // Predicated region
        $region21: #{tpu_custom_call.1} parent=11 // pred_check
          %p204 = pneg %p105
        $region22: #{tpu_custom_call.1} parent=11 // pred_check_branch
          %206 = sbr.rel (%p204) target = $region24
        $region23: #{tpu_custom_call.1} parent=11 // pred_region
          _
        $region24: #{tpu_custom_call.1} parent=11 // pred_fallthru
          _
        // Predicated region
        $region25: #{tpu_custom_call.1} parent=11 // pred_check
          %p207 = pneg %p126
        $region26: #{tpu_custom_call.1} parent=11 // pred_check_branch
          %209 = sbr.rel (%p207) target = $region28
        $region27: #{tpu_custom_call.1} parent=11 // pred_region
          _
        $region28: #{tpu_custom_call.1} parent=11 // pred_fallthru
          _
        // Predicated region
        $region29: #{tpu_custom_call.1} parent=11 // pred_check
          %p210 = pneg %p147
        $region30: #{tpu_custom_call.1} parent=11 // pred_check_branch
          %212 = sbr.rel (%p210) target = $region32
        $region31: #{tpu_custom_call.1} parent=11 // pred_region
          _
        $region32: #{tpu_custom_call.1} parent=11 // pred_fallthru
          _
      $region12: #{tpu_custom_call.1} parent=5 // pred_fallthru
        _
      %p213 = scmp.lt.s32.totalorder %s16, 2
      // Predicated region
      $region33: #{tpu_custom_call.1} parent=5 // pred_check
        %p214 = pneg %p213
      $region34: #{tpu_custom_call.1} parent=5 // pred_check_branch
        %216 = sbr.rel (%p214) target = $region36
      $region35: #{tpu_custom_call.1} parent=5 // pred_region
        // Predicated region
        $region37: #{tpu_custom_call.1} parent=35 // pred_check
          %p217 = pneg %p36
        $region38: #{tpu_custom_call.1} parent=35 // pred_check_branch
          %219 = sbr.rel (%p217) target = $region40
        $region39: #{tpu_custom_call.1} parent=35 // pred_region
          %s220 = smul.u32 4, %s16
          %p221 = scmp.lt.s32.totalorder %s220, 7
          %s222 = scalar_select %p221, %s220, 7
          %s223 = smul.addr %s222, 4
          %s224 = scalar_lea.vmem %s0, %s223
          %s225 = smul.u32 4, %s16
        $region40: #{tpu_custom_call.1} parent=35 // pred_fallthru
          _
      $region36: #{tpu_custom_call.1} parent=5 // pred_fallthru
        _
      %p226 = scmp.le.s32.totalorder 1, %s16
      %p227 = scmp.lt.s32.totalorder %s16, 3
      %p228 = pnand %p226, %p227
      %p229 = pneg %p228
      // Predicated region
      $region41: #{tpu_custom_call.1} parent=5 // pred_check
        _
      $region42: #{tpu_custom_call.1} parent=5 // pred_check_branch
        %231 = sbr.rel (%p228) target = $region44
      $region43: #{tpu_custom_call.1} parent=5 // pred_region
        %s232 = ssub.s32 %s16, 1
        // Predicated region
        $region45: #{tpu_custom_call.1} parent=43 // pred_check
          %p233 = pneg %p84
        $region46: #{tpu_custom_call.1} parent=43 // pred_check_branch
          %235 = sbr.rel (%p233) target = $region48
        $region47: #{tpu_custom_call.1} parent=43 // pred_region
          %236 = dma.done [#allocation3], 7168
        $region48: #{tpu_custom_call.1} parent=43 // pred_fallthru
          _
        %s237 = smul.u32 4, %s21
        %p238 = scmp.lt.s32.totalorder %s237, 7
        %s239 = scalar_select %p238, %s237, 7
        %s240 = smul.addr %s239, 4
        %s241 = scalar_lea.vmem %s0, %s240
        %p242 = pneg %p42
        %p243 = pneg %p39
        %p244 = pneg %p63
        %p245 = pneg %p60
        %p246 = pneg %p84
        %p247 = pneg %p81
        %p248 = pneg %p105
        %p249 = pneg %p102
        %p250 = pneg %p126
        %p251 = pneg %p123
        %p252 = pneg %p147
        %p253 = pneg %p144
        %p254 = pneg %p173
        %p255 = pneg %p170
        %s256 = sand.u32 %s160, 1
        %s257 = scalar_lea.sflag [#allocation4], %s256
        %s258 = sand.u32 %s160, 1
        %s259 = smul.addr %s258, 288
        %s260 = scalar_lea.vmem [#allocation5], %s259
        %s261 = smul.u32 4, %s21
        %p262 = scmp.lt.s32.totalorder %s261, 7
        %s263 = scalar_select %p262, %s261, 7
        %s264 = smul.addr %s263, 4
        %s265 = scalar_lea.vmem %s0, %s264
        %s266 = smul.u32 4, %s21
        %s267 = smul.u32 4, %s21
        %v268 = vld [vmem:[%s265] sm:$0x77]
        %v269 = vld [vmem:[%s265 + $0x8] sm:$0x77]
        %v270 = vld [vmem:[%s1] sm:$0xff]
        %v271 = vld [vmem:[%s1 + $0x8] sm:$0xff]
        %v272 = vld [vmem:[%s1 + $0x10] sm:$0xff]
        %v273 = vld [vmem:[%s1 + $0x18] sm:$0xff]
        %v274 = vld [vmem:[%s1 + $0x20] sm:$0xff]
        %v275 = vld [vmem:[%s1 + $0x28] sm:$0xff]
        %v276 = vld [vmem:[%s1 + $0x30] sm:$0xff]
        %v277 = vld [vmem:[%s1 + $0x38] sm:$0xff]
        %v278 = vld [vmem:[%s1 + $0x40] sm:$0xff]
        %v279 = vld [vmem:[%s1 + $0x48] sm:$0xff]
        %v280 = vld [vmem:[%s1 + $0x50] sm:$0xff]
        %v281 = vld [vmem:[%s1 + $0x58] sm:$0xff]
        %v282 = vld [vmem:[%s1 + $0x60] sm:$0xff]
        %v283 = vld [vmem:[%s1 + $0x68] sm:$0xff]
        %v284 = vld [vmem:[%s1 + $0x70] sm:$0xff]
        %v285 = vld [vmem:[%s1 + $0x78] sm:$0xff]
        %v288 = vcombine.high %v268, %v268
        %v289 = vcombine.high %v269, %v269
        %vm290 = vcmask 23552
        %v292 = vsel %vm290, %v270, 0
        %v295 = vsel %vm290, %v271, 0
        %v298 = vsel %vm290, %v272, 0
        %v301 = vsel %vm290, %v273, 0
        %v304 = vsel %vm290, %v274, 0
        %v307 = vsel %vm290, %v275, 0
        %v310 = vsel %vm290, %v276, 0
        %v313 = vsel %vm290, %v277, 0
        %v316 = vsel %vm290, %v278, 0
        %v319 = vsel %vm290, %v279, 0
        %v322 = vsel %vm290, %v280, 0
        %v325 = vsel %vm290, %v281, 0
        %v328 = vsel %vm290, %v282, 0
        %v331 = vsel %vm290, %v283, 0
        %v334 = vsel %vm290, %v284, 0
        %v337 = vsel %vm290, %v285, 0
        %vm339 = vcmask 1042432
        %v340 = vsel %vm339, %v268, 0
        %v342 = vsel %vm339, %v288, 0
        %v344 = vsel %vm339, %v269, 0
        %v346 = vsel %vm339, %v289, 0
        %348 = vmatprep.subr.mxu0 %v342
        %349 = vmatpush1.msra.mxu0 %v340
        %350 = vmatprep.subr.mxu0 0.0
        %351 = vmatpush1.msra.mxu0 0.0
        %352 = vmatprep.subr.mxu0 0.0
        %353 = vmatpush1.msra.mxu0 0.0
        %354 = vmatprep.subr.mxu0 0.0
        %355 = vmatpush1.msra.mxu0 0.0
        %356 = vmatprep.subr.mxu0 0.0
        %357 = vmatpush1.msra.mxu0 0.0
        %358 = vmatprep.subr.mxu0 0.0
        %359 = vmatpush1.msra.mxu0 0.0
        %360 = vmatprep.subr.mxu0 0.0
        %361 = vmatpush1.msra.mxu0 0.0
        %362 = vmatprep.subr.mxu0 0.0
        %363 = vmatpush1.msra.mxu0 0.0
        %364 = vmatprep.subr.mxu0 0.0
        %365 = vmatpush1.msra.mxu0 0.0
        %366 = vmatprep.subr.mxu0 0.0
        %367 = vmatpush1.msra.mxu0 0.0
        %368 = vmatprep.subr.mxu0 0.0
        %369 = vmatpush1.msra.mxu0 0.0
        %370 = vmatprep.subr.mxu0 0.0
        %371 = vmatpush1.msra.mxu0 0.0
        %372 = vmatprep.subr.mxu0 0.0
        %373 = vmatpush1.msra.mxu0 0.0
        %374 = vmatprep.subr.mxu0 0.0
        %375 = vmatpush1.msra.mxu0 0.0
        %376 = vmatprep.subr.mxu0 0.0
        %377 = vmatpush1.msra.mxu0 0.0
        %378 = vmatprep.subr.mxu0 0.0
        %379 = vmatpush1.msra.mxu0 0.0
        %380 = vmatprep.subr.mxu0 0.0
        %381 = vmatpush1.msra.mxu0 0.0
        %382 = vmatprep.subr.mxu0 0.0
        %383 = vmatpush1.msra.mxu0 0.0
        %384 = vmatprep.subr.mxu0 0.0
        %385 = vmatpush1.msra.mxu0 0.0
        %386 = vmatprep.subr.mxu0 0.0
        %387 = vmatpush1.msra.mxu0 0.0
        %388 = vmatprep.subr.mxu0 0.0
        %389 = vmatpush1.msra.mxu0 0.0
        %390 = vmatprep.subr.mxu0 0.0
        %391 = vmatpush1.msra.mxu0 0.0
        %392 = vmatprep.subr.mxu0 0.0
        %393 = vmatpush1.msra.mxu0 0.0
        %394 = vmatprep.subr.mxu0 0.0
        %395 = vmatpush1.msra.mxu0 0.0
        %396 = vmatprep.subr.mxu0 0.0
        %397 = vmatpush1.msra.mxu0 0.0
        %398 = vmatprep.subr.mxu0 0.0
        %399 = vmatpush1.msra.mxu0 0.0
        %400 = vmatprep.subr.mxu0 0.0
        %401 = vmatpush1.msra.mxu0 0.0
        %402 = vmatprep.subr.mxu0 0.0
        %403 = vmatpush1.msra.mxu0 0.0
        %404 = vmatprep.subr.mxu0 0.0
        %405 = vmatpush1.msra.mxu0 0.0
        %406 = vmatprep.subr.mxu0 0.0
        %407 = vmatpush1.msra.mxu0 0.0
        %408 = vmatprep.subr.mxu0 0.0
        %409 = vmatpush1.msra.mxu0 0.0
        %410 = vmatprep.subr.mxu0 0.0
        %411 = vmatpush1.msra.mxu0 0.0
        %412 = vmatprep.mubr.f32.mxu0 0.0
        %413 = vmatmul.mubr.f32.gmra.mrb[0].mxu0 %v292
        %v414 = vpop.f32.mrb[0].mxu0
        %v415 = vadd.f32 0.0, %v414
        %v416 = vpop.f32.mrb[0].mxu0
        %v417 = vadd.f32 0.0, %v416
        %418 = vmatprep.mubr.f32.mxu0 0.0
        %419 = vmatmul.mubr.f32.gmra.mrb[0].mxu0 %v295
        %v420 = vpop.f32.mrb[0].mxu0
        %v421 = vadd.f32 0.0, %v420
        %v422 = vpop.f32.mrb[0].mxu0
        %v423 = vadd.f32 0.0, %v422
        %424 = vmatprep.mubr.f32.mxu0 0.0
        %425 = vmatmul.mubr.f32.gmra.mrb[0].mxu0 %v298
        %v426 = vpop.f32.mrb[0].mxu0
        %v427 = vadd.f32 0.0, %v426
        %v428 = vpop.f32.mrb[0].mxu0
        %v429 = vadd.f32 0.0, %v428
        %430 = vmatprep.mubr.f32.mxu0 0.0
        %431 = vmatmul.mubr.f32.gmra.mrb[0].mxu0 %v301
        %v432 = vpop.f32.mrb[0].mxu0
        %v433 = vadd.f32 0.0, %v432
        %v434 = vpop.f32.mrb[0].mxu0
        %v435 = vadd.f32 0.0, %v434
        %436 = vmatprep.mubr.f32.mxu0 0.0
        %437 = vmatmul.mubr.f32.gmra.mrb[0].mxu0 %v304
        %v438 = vpop.f32.mrb[0].mxu0
        %v439 = vadd.f32 0.0, %v438
        %v440 = vpop.f32.mrb[0].mxu0
        %v441 = vadd.f32 0.0, %v440
        %442 = vmatprep.mubr.f32.mxu0 0.0
        %443 = vmatmul.mubr.f32.gmra.mrb[0].mxu0 %v307
        %v444 = vpop.f32.mrb[0].mxu0
        %v445 = vadd.f32 0.0, %v444
        %v446 = vpop.f32.mrb[0].mxu0
        %v447 = vadd.f32 0.0, %v446
        %448 = vmatprep.mubr.f32.mxu0 0.0
        %449 = vmatmul.mubr.f32.gmra.mrb[0].mxu0 %v310
        %v450 = vpop.f32.mrb[0].mxu0
        %v451 = vadd.f32 0.0, %v450
        %v452 = vpop.f32.mrb[0].mxu0
        %v453 = vadd.f32 0.0, %v452
        %454 = vmatprep.mubr.f32.mxu0 0.0
        %455 = vmatmul.mubr.f32.gmra.mrb[0].mxu0 %v313
        %v456 = vpop.f32.mrb[0].mxu0
        %v457 = vadd.f32 0.0, %v456
        %v458 = vpop.f32.mrb[0].mxu0
        %v459 = vadd.f32 0.0, %v458
        %460 = vmatprep.mubr.f32.mxu0 0.0
        %461 = vmatmul.mubr.f32.gmra.mrb[0].mxu0 %v316
        %v462 = vpop.f32.mrb[0].mxu0
        %v463 = vadd.f32 0.0, %v462
        %v464 = vpop.f32.mrb[0].mxu0
        %v465 = vadd.f32 0.0, %v464
        %466 = vmatprep.mubr.f32.mxu0 0.0
        %467 = vmatmul.mubr.f32.gmra.mrb[0].mxu0 %v319
        %v468 = vpop.f32.mrb[0].mxu0
        %v469 = vadd.f32 0.0, %v468
        %v470 = vpop.f32.mrb[0].mxu0
        %v471 = vadd.f32 0.0, %v470
        %472 = vmatprep.mubr.f32.mxu0 0.0
        %473 = vmatmul.mubr.f32.gmra.mrb[0].mxu0 %v322
        %v474 = vpop.f32.mrb[0].mxu0
        %v475 = vadd.f32 0.0, %v474
        %v476 = vpop.f32.mrb[0].mxu0
        %v477 = vadd.f32 0.0, %v476
        %478 = vmatprep.mubr.f32.mxu0 0.0
        %479 = vmatmul.mubr.f32.gmra.mrb[0].mxu0 %v325
        %v480 = vpop.f32.mrb[0].mxu0
        %v481 = vadd.f32 0.0, %v480
        %v482 = vpop.f32.mrb[0].mxu0
        %v483 = vadd.f32 0.0, %v482
        %484 = vmatprep.mubr.f32.mxu0 0.0
        %485 = vmatmul.mubr.f32.gmra.mrb[0].mxu0 %v328
        %v486 = vpop.f32.mrb[0].mxu0
        %v487 = vadd.f32 0.0, %v486
        %v488 = vpop.f32.mrb[0].mxu0
        %v489 = vadd.f32 0.0, %v488
        %490 = vmatprep.mubr.f32.mxu0 0.0
        %491 = vmatmul.mubr.f32.gmra.mrb[0].mxu0 %v331
        %v492 = vpop.f32.mrb[0].mxu0
        %v493 = vadd.f32 0.0, %v492
        %v494 = vpop.f32.mrb[0].mxu0
        %v495 = vadd.f32 0.0, %v494
        %496 = vmatprep.mubr.f32.mxu0 0.0
        %497 = vmatmul.mubr.f32.gmra.mrb[0].mxu0 %v334
        %v498 = vpop.f32.mrb[0].mxu0
        %v499 = vadd.f32 0.0, %v498
        %v500 = vpop.f32.mrb[0].mxu0
        %v501 = vadd.f32 0.0, %v500
        %502 = vmatprep.mubr.f32.mxu0 0.0
        %503 = vmatmul.mubr.f32.gmra.mrb[0].mxu0 %v337
        %v504 = vpop.f32.mrb[0].mxu0
        %v505 = vadd.f32 0.0, %v504
        %v506 = vpop.f32.mrb[0].mxu0
        %v507 = vadd.f32 0.0, %v506
        %508 = vdwg.mxu0
        %509 = vmatprep.subr.mxu0 %v346
        %510 = vmatpush1.msra.mxu0 %v344
        %511 = vmatprep.subr.mxu0 0.0
        %512 = vmatpush1.msra.mxu0 0.0
        %513 = vmatprep.subr.mxu0 0.0
        %514 = vmatpush1.msra.mxu0 0.0
        %515 = vmatprep.subr.mxu0 0.0
        %516 = vmatpush1.msra.mxu0 0.0
        %517 = vmatprep.subr.mxu0 0.0
        %518 = vmatpush1.msra.mxu0 0.0
        %519 = vmatprep.subr.mxu0 0.0
        %520 = vmatpush1.msra.mxu0 0.0
        %521 = vmatprep.subr.mxu0 0.0
        %522 = vmatpush1.msra.mxu0 0.0
        %523 = vmatprep.subr.mxu0 0.0
        %524 = vmatpush1.msra.mxu0 0.0
        %525 = vmatprep.subr.mxu0 0.0
        %526 = vmatpush1.msra.mxu0 0.0
        %527 = vmatprep.subr.mxu0 0.0
        %528 = vmatpush1.msra.mxu0 0.0
        %529 = vmatprep.subr.mxu0 0.0
        %530 = vmatpush1.msra.mxu0 0.0
        %531 = vmatprep.subr.mxu0 0.0
        %532 = vmatpush1.msra.mxu0 0.0
        %533 = vmatprep.subr.mxu0 0.0
        %534 = vmatpush1.msra.mxu0 0.0
        %535 = vmatprep.subr.mxu0 0.0
        %536 = vmatpush1.msra.mxu0 0.0
        %537 = vmatprep.subr.mxu0 0.0
        %538 = vmatpush1.msra.mxu0 0.0
        %539 = vmatprep.subr.mxu0 0.0
        %540 = vmatpush1.msra.mxu0 0.0
        %541 = vmatprep.subr.mxu0 0.0
        %542 = vmatpush1.msra.mxu0 0.0
        %543 = vmatprep.subr.mxu0 0.0
        %544 = vmatpush1.msra.mxu0 0.0
        %545 = vmatprep.subr.mxu0 0.0
        %546 = vmatpush1.msra.mxu0 0.0
        %547 = vmatprep.subr.mxu0 0.0
        %548 = vmatpush1.msra.mxu0 0.0
        %549 = vmatprep.subr.mxu0 0.0
        %550 = vmatpush1.msra.mxu0 0.0
        %551 = vmatprep.subr.mxu0 0.0
        %552 = vmatpush1.msra.mxu0 0.0
        %553 = vmatprep.subr.mxu0 0.0
        %554 = vmatpush1.msra.mxu0 0.0
        %555 = vmatprep.subr.mxu0 0.0
        %556 = vmatpush1.msra.mxu0 0.0
        %557 = vmatprep.subr.mxu0 0.0
        %558 = vmatpush1.msra.mxu0 0.0
        %559 = vmatprep.subr.mxu0 0.0
        %560 = vmatpush1.msra.mxu0 0.0
        %561 = vmatprep.subr.mxu0 0.0
        %562 = vmatpush1.msra.mxu0 0.0
        %563 = vmatprep.subr.mxu0 0.0
        %564 = vmatpush1.msra.mxu0 0.0
        %565 = vmatprep.subr.mxu0 0.0
        %566 = vmatpush1.msra.mxu0 0.0
        %567 = vmatprep.subr.mxu0 0.0
        %568 = vmatpush1.msra.mxu0 0.0
        %569 = vmatprep.subr.mxu0 0.0
        %570 = vmatpush1.msra.mxu0 0.0
        %571 = vmatprep.subr.mxu0 0.0
        %572 = vmatpush1.msra.mxu0 0.0
        %573 = vmatprep.mubr.f32.mxu0 0.0
        %574 = vmatmul.mubr.f32.gmra.mrb[0].mxu0 %v292
        %v575 = vpop.f32.mrb[0].mxu0
        %v576 = vadd.f32 0.0, %v575
        %v577 = vpop.f32.mrb[0].mxu0
        %v578 = vadd.f32 0.0, %v577
        %579 = vmatprep.mubr.f32.mxu0 0.0
        %580 = vmatmul.mubr.f32.gmra.mrb[0].mxu0 %v295
        %v581 = vpop.f32.mrb[0].mxu0
        %v582 = vadd.f32 0.0, %v581
        %v583 = vpop.f32.mrb[0].mxu0
        %v584 = vadd.f32 0.0, %v583
        %585 = vmatprep.mubr.f32.mxu0 0.0
        %586 = vmatmul.mubr.f32.gmra.mrb[0].mxu0 %v298
        %v587 = vpop.f32.mrb[0].mxu0
        %v588 = vadd.f32 0.0, %v587
        %v589 = vpop.f32.mrb[0].mxu0
        %v590 = vadd.f32 0.0, %v589
        %591 = vmatprep.mubr.f32.mxu0 0.0
        %592 = vmatmul.mubr.f32.gmra.mrb[0].mxu0 %v301
        %v593 = vpop.f32.mrb[0].mxu0
        %v594 = vadd.f32 0.0, %v593
        %v595 = vpop.f32.mrb[0].mxu0
        %v596 = vadd.f32 0.0, %v595
        %597 = vmatprep.mubr.f32.mxu0 0.0
        %598 = vmatmul.mubr.f32.gmra.mrb[0].mxu0 %v304
        %v599 = vpop.f32.mrb[0].mxu0
        %v600 = vadd.f32 0.0, %v599
        %v601 = vpop.f32.mrb[0].mxu0
        %v602 = vadd.f32 0.0, %v601
        %603 = vmatprep.mubr.f32.mxu0 0.0
        %604 = vmatmul.mubr.f32.gmra.mrb[0].mxu0 %v307
        %v605 = vpop.f32.mrb[0].mxu0
        %v606 = vadd.f32 0.0, %v605
        %v607 = vpop.f32.mrb[0].mxu0
        %v608 = vadd.f32 0.0, %v607
        %609 = vmatprep.mubr.f32.mxu0 0.0
        %610 = vmatmul.mubr.f32.gmra.mrb[0].mxu0 %v310
        %v611 = vpop.f32.mrb[0].mxu0
        %v612 = vadd.f32 0.0, %v611
        %v613 = vpop.f32.mrb[0].mxu0
        %v614 = vadd.f32 0.0, %v613
        %615 = vmatprep.mubr.f32.mxu0 0.0
        %616 = vmatmul.mubr.f32.gmra.mrb[0].mxu0 %v313
        %v617 = vpop.f32.mrb[0].mxu0
        %v618 = vadd.f32 0.0, %v617
        %v619 = vpop.f32.mrb[0].mxu0
        %v620 = vadd.f32 0.0, %v619
        %621 = vmatprep.mubr.f32.mxu0 0.0
        %622 = vmatmul.mubr.f32.gmra.mrb[0].mxu0 %v316
        %v623 = vpop.f32.mrb[0].mxu0
        %v624 = vadd.f32 0.0, %v623
        %v625 = vpop.f32.mrb[0].mxu0
        %v626 = vadd.f32 0.0, %v625
        %627 = vmatprep.mubr.f32.mxu0 0.0
        %628 = vmatmul.mubr.f32.gmra.mrb[0].mxu0 %v319
        %v629 = vpop.f32.mrb[0].mxu0
        %v630 = vadd.f32 0.0, %v629
        %v631 = vpop.f32.mrb[0].mxu0
        %v632 = vadd.f32 0.0, %v631
        %633 = vmatprep.mubr.f32.mxu0 0.0
        %634 = vmatmul.mubr.f32.gmra.mrb[0].mxu0 %v322
        %v635 = vpop.f32.mrb[0].mxu0
        %v636 = vadd.f32 0.0, %v635
        %v637 = vpop.f32.mrb[0].mxu0
        %v638 = vadd.f32 0.0, %v637
        %639 = vmatprep.mubr.f32.mxu0 0.0
        %640 = vmatmul.mubr.f32.gmra.mrb[0].mxu0 %v325
        %v641 = vpop.f32.mrb[0].mxu0
        %v642 = vadd.f32 0.0, %v641
        %v643 = vpop.f32.mrb[0].mxu0
        %v644 = vadd.f32 0.0, %v643
        %645 = vmatprep.mubr.f32.mxu0 0.0
        %646 = vmatmul.mubr.f32.gmra.mrb[0].mxu0 %v328
        %v647 = vpop.f32.mrb[0].mxu0
        %v648 = vadd.f32 0.0, %v647
        %v649 = vpop.f32.mrb[0].mxu0
        %v650 = vadd.f32 0.0, %v649
        %651 = vmatprep.mubr.f32.mxu0 0.0
        %652 = vmatmul.mubr.f32.gmra.mrb[0].mxu0 %v331
        %v653 = vpop.f32.mrb[0].mxu0
        %v654 = vadd.f32 0.0, %v653
        %v655 = vpop.f32.mrb[0].mxu0
        %v656 = vadd.f32 0.0, %v655
        %657 = vmatprep.mubr.f32.mxu0 0.0
        %658 = vmatmul.mubr.f32.gmra.mrb[0].mxu0 %v334
        %v659 = vpop.f32.mrb[0].mxu0
        %v660 = vadd.f32 0.0, %v659
        %v661 = vpop.f32.mrb[0].mxu0
        %v662 = vadd.f32 0.0, %v661
        %663 = vmatprep.mubr.f32.mxu0 0.0
        %664 = vmatmul.mubr.f32.gmra.mrb[0].mxu0 %v337
        %v665 = vpop.f32.mrb[0].mxu0
        %v666 = vadd.f32 0.0, %v665
        %v667 = vpop.f32.mrb[0].mxu0
        %v668 = vadd.f32 0.0, %v667
        %669 = vdwg.mxu0
        %v670 = vld [vmem:[%s3] sm:$0xff]
        %v671 = vld [vmem:[%s3 + $0x8] sm:$0xff]
        %v672 = vld [vmem:[%s3 + $0x10] sm:$0xff]
        %v673 = vld [vmem:[%s3 + $0x18] sm:$0xff]
        %v674 = vld [vmem:[%s3 + $0x20] sm:$0xff]
        %v675 = vld [vmem:[%s3 + $0x28] sm:$0xff]
        %v676 = vld [vmem:[%s3 + $0x30] sm:$0xff]
        %v677 = vld [vmem:[%s3 + $0x38] sm:$0xff]
        %679 = vset.pattern.permute.xlu0 0
        %680 = vperm.xlu0 %679, %v670
        %v681 = vpop.permute.xlu0 %680
        %684 = vset.pattern.permute.xlu0 0
        %685 = vperm.xlu0 %684, %v671
        %v686 = vpop.permute.xlu0 %685
        %689 = vset.pattern.permute.xlu0 0
        %690 = vperm.xlu0 %689, %v672
        %v691 = vpop.permute.xlu0 %690
        %694 = vset.pattern.permute.xlu0 0
        %695 = vperm.xlu0 %694, %v673
        %v696 = vpop.permute.xlu0 %695
        %699 = vset.pattern.permute.xlu0 0
        %700 = vperm.xlu0 %699, %v674
        %v701 = vpop.permute.xlu0 %700
        %704 = vset.pattern.permute.xlu0 0
        %705 = vperm.xlu0 %704, %v675
        %v706 = vpop.permute.xlu0 %705
        %709 = vset.pattern.permute.xlu0 0
        %710 = vperm.xlu0 %709, %v676
        %v711 = vpop.permute.xlu0 %710
        %714 = vset.pattern.permute.xlu0 0
        %715 = vperm.xlu0 %714, %v677
        %v716 = vpop.permute.xlu0 %715
        %v718 = vadd.f32 %v415, %v681
        %v719 = vadd.f32 %v417, %v681
        %v720 = vadd.f32 %v576, %v681
        %v721 = vadd.f32 %v578, %v681
        %v722 = vadd.f32 %v421, %v686
        %v723 = vadd.f32 %v423, %v686
        %v724 = vadd.f32 %v582, %v686
        %v725 = vadd.f32 %v584, %v686
        %v726 = vadd.f32 %v427, %v691
        %v727 = vadd.f32 %v429, %v691
        %v728 = vadd.f32 %v588, %v691
        %v729 = vadd.f32 %v590, %v691
        %v730 = vadd.f32 %v433, %v696
        %v731 = vadd.f32 %v435, %v696
        %v732 = vadd.f32 %v594, %v696
        %v733 = vadd.f32 %v596, %v696
        %v734 = vadd.f32 %v439, %v701
        %v735 = vadd.f32 %v441, %v701
        %v736 = vadd.f32 %v600, %v701
        %v737 = vadd.f32 %v602, %v701
        %v738 = vadd.f32 %v445, %v706
        %v739 = vadd.f32 %v447, %v706
        %v740 = vadd.f32 %v606, %v706
        %v741 = vadd.f32 %v608, %v706
        %v742 = vadd.f32 %v451, %v711
        %v743 = vadd.f32 %v453, %v711
        %v744 = vadd.f32 %v612, %v711
        %v745 = vadd.f32 %v614, %v711
        %v746 = vadd.f32 %v457, %v716
        %v747 = vadd.f32 %v459, %v716
        %v748 = vadd.f32 %v618, %v716
        %v749 = vadd.f32 %v620, %v716
        %v750 = vmul.f32 %v718, 100.0
        %v751 = vmul.f32 %v719, 100.0
        %v752 = vmul.f32 %v720, 100.0
        %v753 = vmul.f32 %v721, 100.0
        %v754 = vmul.f32 %v722, 100.0
        %v755 = vmul.f32 %v723, 100.0
        %v756 = vmul.f32 %v724, 100.0
        %v757 = vmul.f32 %v725, 100.0
        %v758 = vmul.f32 %v726, 100.0
        %v759 = vmul.f32 %v727, 100.0
        %v760 = vmul.f32 %v728, 100.0
        %v761 = vmul.f32 %v729, 100.0
        %v762 = vmul.f32 %v730, 100.0
        %v763 = vmul.f32 %v731, 100.0
        %v764 = vmul.f32 %v732, 100.0
        %v765 = vmul.f32 %v733, 100.0
        %v766 = vmul.f32 %v734, 100.0
        %v767 = vmul.f32 %v735, 100.0
        %v768 = vmul.f32 %v736, 100.0
        %v769 = vmul.f32 %v737, 100.0
        %v770 = vmul.f32 %v738, 100.0
        %v771 = vmul.f32 %v739, 100.0
        %v772 = vmul.f32 %v740, 100.0
        %v773 = vmul.f32 %v741, 100.0
        %v774 = vmul.f32 %v742, 100.0
        %v775 = vmul.f32 %v743, 100.0
        %v776 = vmul.f32 %v744, 100.0
        %v777 = vmul.f32 %v745, 100.0
        %v778 = vmul.f32 %v746, 100.0
        %v779 = vmul.f32 %v747, 100.0
        %v780 = vmul.f32 %v748, 100.0
        %v781 = vmul.f32 %v749, 100.0
        %vm782 = vcmp.gt.f32.partialorder %v750, 20.0
        %vm783 = vcmp.gt.f32.partialorder %v751, 20.0
        %vm784 = vcmp.gt.f32.partialorder %v752, 20.0
        %vm785 = vcmp.gt.f32.partialorder %v753, 20.0
        %vm786 = vcmp.gt.f32.partialorder %v754, 20.0
        %vm787 = vcmp.gt.f32.partialorder %v755, 20.0
        %vm788 = vcmp.gt.f32.partialorder %v756, 20.0
        %vm789 = vcmp.gt.f32.partialorder %v757, 20.0
        %vm790 = vcmp.gt.f32.partialorder %v758, 20.0
        %vm791 = vcmp.gt.f32.partialorder %v759, 20.0
        %vm792 = vcmp.gt.f32.partialorder %v760, 20.0
        %vm793 = vcmp.gt.f32.partialorder %v761, 20.0
        %vm794 = vcmp.gt.f32.partialorder %v762, 20.0
        %vm795 = vcmp.gt.f32.partialorder %v763, 20.0
        %vm796 = vcmp.gt.f32.partialorder %v764, 20.0
        %vm797 = vcmp.gt.f32.partialorder %v765, 20.0
        %vm798 = vcmp.gt.f32.partialorder %v766, 20.0
        %vm799 = vcmp.gt.f32.partialorder %v767, 20.0
        %vm800 = vcmp.gt.f32.partialorder %v768, 20.0
        %vm801 = vcmp.gt.f32.partialorder %v769, 20.0
        %vm802 = vcmp.gt.f32.partialorder %v770, 20.0
        %vm803 = vcmp.gt.f32.partialorder %v771, 20.0
        %vm804 = vcmp.gt.f32.partialorder %v772, 20.0
        %vm805 = vcmp.gt.f32.partialorder %v773, 20.0
        %vm806 = vcmp.gt.f32.partialorder %v774, 20.0
        %vm807 = vcmp.gt.f32.partialorder %v775, 20.0
        %vm808 = vcmp.gt.f32.partialorder %v776, 20.0
        %vm809 = vcmp.gt.f32.partialorder %v777, 20.0
        %vm810 = vcmp.gt.f32.partialorder %v778, 20.0
        %vm811 = vcmp.gt.f32.partialorder %v779, 20.0
        %vm812 = vcmp.gt.f32.partialorder %v780, 20.0
        %vm813 = vcmp.gt.f32.partialorder %v781, 20.0
        %v814 = vmul.f32 %v750, 1.442695
        %v815 = vpow.pop %v814
        %v816 = vmul.f32 %v751, 1.442695
        %v817 = vpow.pop %v816
        %v818 = vmul.f32 %v752, 1.442695
        %v819 = vpow.pop %v818
        %v820 = vmul.f32 %v753, 1.442695
        %v821 = vpow.pop %v820
        %v822 = vmul.f32 %v754, 1.442695
        %v823 = vpow.pop %v822
        %v824 = vmul.f32 %v755, 1.442695
        %v825 = vpow.pop %v824
        %v826 = vmul.f32 %v756, 1.442695
        %v827 = vpow.pop %v826
        %v828 = vmul.f32 %v757, 1.442695
        %v829 = vpow.pop %v828
        %v830 = vmul.f32 %v758, 1.442695
        %v831 = vpow.pop %v830
        %v832 = vmul.f32 %v759, 1.442695
        %v833 = vpow.pop %v832
        %v834 = vmul.f32 %v760, 1.442695
        %v835 = vpow.pop %v834
        %v836 = vmul.f32 %v761, 1.442695
        %v837 = vpow.pop %v836
        %v838 = vmul.f32 %v762, 1.442695
        %v839 = vpow.pop %v838
        %v840 = vmul.f32 %v763, 1.442695
        %v841 = vpow.pop %v840
        %v842 = vmul.f32 %v764, 1.442695
        %v843 = vpow.pop %v842
        %v844 = vmul.f32 %v765, 1.442695
        %v845 = vpow.pop %v844
        %v846 = vmul.f32 %v766, 1.442695
        %v847 = vpow.pop %v846
        %v848 = vmul.f32 %v767, 1.442695
        %v849 = vpow.pop %v848
        %v850 = vmul.f32 %v768, 1.442695
        %v851 = vpow.pop %v850
        %v852 = vmul.f32 %v769, 1.442695
        %v853 = vpow.pop %v852
        %v854 = vmul.f32 %v770, 1.442695
        %v855 = vpow.pop %v854
        %v856 = vmul.f32 %v771, 1.442695
        %v857 = vpow.pop %v856
        %v858 = vmul.f32 %v772, 1.442695
        %v859 = vpow.pop %v858
        %v860 = vmul.f32 %v773, 1.442695
        %v861 = vpow.pop %v860
        %v862 = vmul.f32 %v774, 1.442695
        %v863 = vpow.pop %v862
        %v864 = vmul.f32 %v775, 1.442695
        %v865 = vpow.pop %v864
        %v866 = vmul.f32 %v776, 1.442695
        %v867 = vpow.pop %v866
        %v868 = vmul.f32 %v777, 1.442695
        %v869 = vpow.pop %v868
        %v870 = vmul.f32 %v778, 1.442695
        %v871 = vpow.pop %v870
        %v872 = vmul.f32 %v779, 1.442695
        %v873 = vpow.pop %v872
        %v874 = vmul.f32 %v780, 1.442695
        %v875 = vpow.pop %v874
        %v876 = vmul.f32 %v781, 1.442695
        %v877 = vpow.pop %v876
        %v878 = vadd.f32 %v815, 1.0
        %v879 = vlog2.pop %v878
        %v880 = vmul.f32 %v879, 0.6931472
        %v881 = vmul.f32 -0.5, %v815
        %v882 = vadd.f32 %v881, 1.0
        %v883 = vmul.f32 %v882, %v815
        %v884 = vand.u32 2147483647, %v815
        %vm885 = vcmp.lt.f32.partialorder %v884, 0.0004427343
        %v886 = vsel %vm885, %v883, %v880
        %v887 = vadd.f32 %v817, 1.0
        %v888 = vlog2.pop %v887
        %v889 = vmul.f32 %v888, 0.6931472
        %v890 = vmul.f32 -0.5, %v817
        %v891 = vadd.f32 %v890, 1.0
        %v892 = vmul.f32 %v891, %v817
        %v893 = vand.u32 2147483647, %v817
        %vm894 = vcmp.lt.f32.partialorder %v893, 0.0004427343
        %v895 = vsel %vm894, %v892, %v889
        %v896 = vadd.f32 %v819, 1.0
        %v897 = vlog2.pop %v896
        %v898 = vmul.f32 %v897, 0.6931472
        %v899 = vmul.f32 -0.5, %v819
        %v900 = vadd.f32 %v899, 1.0
        %v901 = vmul.f32 %v900, %v819
        %v902 = vand.u32 2147483647, %v819
        %vm903 = vcmp.lt.f32.partialorder %v902, 0.0004427343
        %v904 = vsel %vm903, %v901, %v898
        %v905 = vadd.f32 %v821, 1.0
        %v906 = vlog2.pop %v905
        %v907 = vmul.f32 %v906, 0.6931472
        %v908 = vmul.f32 -0.5, %v821
        %v909 = vadd.f32 %v908, 1.0
        %v910 = vmul.f32 %v909, %v821
        %v911 = vand.u32 2147483647, %v821
        %vm912 = vcmp.lt.f32.partialorder %v911, 0.0004427343
        %v913 = vsel %vm912, %v910, %v907
        %v914 = vadd.f32 %v823, 1.0
        %v915 = vlog2.pop %v914
        %v916 = vmul.f32 %v915, 0.6931472
        %v917 = vmul.f32 -0.5, %v823
        %v918 = vadd.f32 %v917, 1.0
        %v919 = vmul.f32 %v918, %v823
        %v920 = vand.u32 2147483647, %v823
        %vm921 = vcmp.lt.f32.partialorder %v920, 0.0004427343
        %v922 = vsel %vm921, %v919, %v916
        %v923 = vadd.f32 %v825, 1.0
        %v924 = vlog2.pop %v923
        %v925 = vmul.f32 %v924, 0.6931472
        %v926 = vmul.f32 -0.5, %v825
        %v927 = vadd.f32 %v926, 1.0
        %v928 = vmul.f32 %v927, %v825
        %v929 = vand.u32 2147483647, %v825
        %vm930 = vcmp.lt.f32.partialorder %v929, 0.0004427343
        %v931 = vsel %vm930, %v928, %v925
        %v932 = vadd.f32 %v827, 1.0
        %v933 = vlog2.pop %v932
        %v934 = vmul.f32 %v933, 0.6931472
        %v935 = vmul.f32 -0.5, %v827
        %v936 = vadd.f32 %v935, 1.0
        %v937 = vmul.f32 %v936, %v827
        %v938 = vand.u32 2147483647, %v827
        %vm939 = vcmp.lt.f32.partialorder %v938, 0.0004427343
        %v940 = vsel %vm939, %v937, %v934
        %v941 = vadd.f32 %v829, 1.0
        %v942 = vlog2.pop %v941
        %v943 = vmul.f32 %v942, 0.6931472
        %v944 = vmul.f32 -0.5, %v829
        %v945 = vadd.f32 %v944, 1.0
        %v946 = vmul.f32 %v945, %v829
        %v947 = vand.u32 2147483647, %v829
        %vm948 = vcmp.lt.f32.partialorder %v947, 0.0004427343
        %v949 = vsel %vm948, %v946, %v943
        %v950 = vadd.f32 %v831, 1.0
        %v951 = vlog2.pop %v950
        %v952 = vmul.f32 %v951, 0.6931472
        %v953 = vmul.f32 -0.5, %v831
        %v954 = vadd.f32 %v953, 1.0
        %v955 = vmul.f32 %v954, %v831
        %v956 = vand.u32 2147483647, %v831
        %vm957 = vcmp.lt.f32.partialorder %v956, 0.0004427343
        %v958 = vsel %vm957, %v955, %v952
        %v959 = vadd.f32 %v833, 1.0
        %v960 = vlog2.pop %v959
        %v961 = vmul.f32 %v960, 0.6931472
        %v962 = vmul.f32 -0.5, %v833
        %v963 = vadd.f32 %v962, 1.0
        %v964 = vmul.f32 %v963, %v833
        %v965 = vand.u32 2147483647, %v833
        %vm966 = vcmp.lt.f32.partialorder %v965, 0.0004427343
        %v967 = vsel %vm966, %v964, %v961
        %v968 = vadd.f32 %v835, 1.0
        %v969 = vlog2.pop %v968
        %v970 = vmul.f32 %v969, 0.6931472
        %v971 = vmul.f32 -0.5, %v835
        %v972 = vadd.f32 %v971, 1.0
        %v973 = vmul.f32 %v972, %v835
        %v974 = vand.u32 2147483647, %v835
        %vm975 = vcmp.lt.f32.partialorder %v974, 0.0004427343
        %v976 = vsel %vm975, %v973, %v970
        %v977 = vadd.f32 %v837, 1.0
        %v978 = vlog2.pop %v977
        %v979 = vmul.f32 %v978, 0.6931472
        %v980 = vmul.f32 -0.5, %v837
        %v981 = vadd.f32 %v980, 1.0
        %v982 = vmul.f32 %v981, %v837
        %v983 = vand.u32 2147483647, %v837
        %vm984 = vcmp.lt.f32.partialorder %v983, 0.0004427343
        %v985 = vsel %vm984, %v982, %v979
        %v986 = vadd.f32 %v839, 1.0
        %v987 = vlog2.pop %v986
        %v988 = vmul.f32 %v987, 0.6931472
        %v989 = vmul.f32 -0.5, %v839
        %v990 = vadd.f32 %v989, 1.0
        %v991 = vmul.f32 %v990, %v839
        %v992 = vand.u32 2147483647, %v839
        %vm993 = vcmp.lt.f32.partialorder %v992, 0.0004427343
        %v994 = vsel %vm993, %v991, %v988
        %v995 = vadd.f32 %v841, 1.0
        %v996 = vlog2.pop %v995
        %v997 = vmul.f32 %v996, 0.6931472
        %v998 = vmul.f32 -0.5, %v841
        %v999 = vadd.f32 %v998, 1.0
        %v1000 = vmul.f32 %v999, %v841
        %v1001 = vand.u32 2147483647, %v841
        %vm1002 = vcmp.lt.f32.partialorder %v1001, 0.0004427343
        %v1003 = vsel %vm1002, %v1000, %v997
        %v1004 = vadd.f32 %v843, 1.0
        %v1005 = vlog2.pop %v1004
        %v1006 = vmul.f32 %v1005, 0.6931472
        %v1007 = vmul.f32 -0.5, %v843
        %v1008 = vadd.f32 %v1007, 1.0
        %v1009 = vmul.f32 %v1008, %v843
        %v1010 = vand.u32 2147483647, %v843
        %vm1011 = vcmp.lt.f32.partialorder %v1010, 0.0004427343
        %v1012 = vsel %vm1011, %v1009, %v1006
        %v1013 = vadd.f32 %v845, 1.0
        %v1014 = vlog2.pop %v1013
        %v1015 = vmul.f32 %v1014, 0.6931472
        %v1016 = vmul.f32 -0.5, %v845
        %v1017 = vadd.f32 %v1016, 1.0
        %v1018 = vmul.f32 %v1017, %v845
        %v1019 = vand.u32 2147483647, %v845
        %vm1020 = vcmp.lt.f32.partialorder %v1019, 0.0004427343
        %v1021 = vsel %vm1020, %v1018, %v1015
        %v1022 = vadd.f32 %v847, 1.0
        %v1023 = vlog2.pop %v1022
        %v1024 = vmul.f32 %v1023, 0.6931472
        %v1025 = vmul.f32 -0.5, %v847
        %v1026 = vadd.f32 %v1025, 1.0
        %v1027 = vmul.f32 %v1026, %v847
        %v1028 = vand.u32 2147483647, %v847
        %vm1029 = vcmp.lt.f32.partialorder %v1028, 0.0004427343
        %v1030 = vsel %vm1029, %v1027, %v1024
        %v1031 = vadd.f32 %v849, 1.0
        %v1032 = vlog2.pop %v1031
        %v1033 = vmul.f32 %v1032, 0.6931472
        %v1034 = vmul.f32 -0.5, %v849
        %v1035 = vadd.f32 %v1034, 1.0
        %v1036 = vmul.f32 %v1035, %v849
        %v1037 = vand.u32 2147483647, %v849
        %vm1038 = vcmp.lt.f32.partialorder %v1037, 0.0004427343
        %v1039 = vsel %vm1038, %v1036, %v1033
        %v1040 = vadd.f32 %v851, 1.0
        %v1041 = vlog2.pop %v1040
        %v1042 = vmul.f32 %v1041, 0.6931472
        %v1043 = vmul.f32 -0.5, %v851
        %v1044 = vadd.f32 %v1043, 1.0
        %v1045 = vmul.f32 %v1044, %v851
        %v1046 = vand.u32 2147483647, %v851
        %vm1047 = vcmp.lt.f32.partialorder %v1046, 0.0004427343
        %v1048 = vsel %vm1047, %v1045, %v1042
        %v1049 = vadd.f32 %v853, 1.0
        %v1050 = vlog2.pop %v1049
        %v1051 = vmul.f32 %v1050, 0.6931472
        %v1052 = vmul.f32 -0.5, %v853
        %v1053 = vadd.f32 %v1052, 1.0
        %v1054 = vmul.f32 %v1053, %v853
        %v1055 = vand.u32 2147483647, %v853
        %vm1056 = vcmp.lt.f32.partialorder %v1055, 0.0004427343
        %v1057 = vsel %vm1056, %v1054, %v1051
        %v1058 = vadd.f32 %v855, 1.0
        %v1059 = vlog2.pop %v1058
        %v1060 = vmul.f32 %v1059, 0.6931472
        %v1061 = vmul.f32 -0.5, %v855
        %v1062 = vadd.f32 %v1061, 1.0
        %v1063 = vmul.f32 %v1062, %v855
        %v1064 = vand.u32 2147483647, %v855
        %vm1065 = vcmp.lt.f32.partialorder %v1064, 0.0004427343
        %v1066 = vsel %vm1065, %v1063, %v1060
        %v1067 = vadd.f32 %v857, 1.0
        %v1068 = vlog2.pop %v1067
        %v1069 = vmul.f32 %v1068, 0.6931472
        %v1070 = vmul.f32 -0.5, %v857
        %v1071 = vadd.f32 %v1070, 1.0
        %v1072 = vmul.f32 %v1071, %v857
        %v1073 = vand.u32 2147483647, %v857
        %vm1074 = vcmp.lt.f32.partialorder %v1073, 0.0004427343
        %v1075 = vsel %vm1074, %v1072, %v1069
        %v1076 = vadd.f32 %v859, 1.0
        %v1077 = vlog2.pop %v1076
        %v1078 = vmul.f32 %v1077, 0.6931472
        %v1079 = vmul.f32 -0.5, %v859
        %v1080 = vadd.f32 %v1079, 1.0
        %v1081 = vmul.f32 %v1080, %v859
        %v1082 = vand.u32 2147483647, %v859
        %vm1083 = vcmp.lt.f32.partialorder %v1082, 0.0004427343
        %v1084 = vsel %vm1083, %v1081, %v1078
        %v1085 = vadd.f32 %v861, 1.0
        %v1086 = vlog2.pop %v1085
        %v1087 = vmul.f32 %v1086, 0.6931472
        %v1088 = vmul.f32 -0.5, %v861
        %v1089 = vadd.f32 %v1088, 1.0
        %v1090 = vmul.f32 %v1089, %v861
        %v1091 = vand.u32 2147483647, %v861
        %vm1092 = vcmp.lt.f32.partialorder %v1091, 0.0004427343
        %v1093 = vsel %vm1092, %v1090, %v1087
        %v1094 = vadd.f32 %v863, 1.0
        %v1095 = vlog2.pop %v1094
        %v1096 = vmul.f32 %v1095, 0.6931472
        %v1097 = vmul.f32 -0.5, %v863
        %v1098 = vadd.f32 %v1097, 1.0
        %v1099 = vmul.f32 %v1098, %v863
        %v1100 = vand.u32 2147483647, %v863
        %vm1101 = vcmp.lt.f32.partialorder %v1100, 0.0004427343
        %v1102 = vsel %vm1101, %v1099, %v1096
        %v1103 = vadd.f32 %v865, 1.0
        %v1104 = vlog2.pop %v1103
        %v1105 = vmul.f32 %v1104, 0.6931472
        %v1106 = vmul.f32 -0.5, %v865
        %v1107 = vadd.f32 %v1106, 1.0
        %v1108 = vmul.f32 %v1107, %v865
        %v1109 = vand.u32 2147483647, %v865
        %vm1110 = vcmp.lt.f32.partialorder %v1109, 0.0004427343
        %v1111 = vsel %vm1110, %v1108, %v1105
        %v1112 = vadd.f32 %v867, 1.0
        %v1113 = vlog2.pop %v1112
        %v1114 = vmul.f32 %v1113, 0.6931472
        %v1115 = vmul.f32 -0.5, %v867
        %v1116 = vadd.f32 %v1115, 1.0
        %v1117 = vmul.f32 %v1116, %v867
        %v1118 = vand.u32 2147483647, %v867
        %vm1119 = vcmp.lt.f32.partialorder %v1118, 0.0004427343
        %v1120 = vsel %vm1119, %v1117, %v1114
        %v1121 = vadd.f32 %v869, 1.0
        %v1122 = vlog2.pop %v1121
        %v1123 = vmul.f32 %v1122, 0.6931472
        %v1124 = vmul.f32 -0.5, %v869
        %v1125 = vadd.f32 %v1124, 1.0
        %v1126 = vmul.f32 %v1125, %v869
        %v1127 = vand.u32 2147483647, %v869
        %vm1128 = vcmp.lt.f32.partialorder %v1127, 0.0004427343
        %v1129 = vsel %vm1128, %v1126, %v1123
        %v1130 = vadd.f32 %v871, 1.0
        %v1131 = vlog2.pop %v1130
        %v1132 = vmul.f32 %v1131, 0.6931472
        %v1133 = vmul.f32 -0.5, %v871
        %v1134 = vadd.f32 %v1133, 1.0
        %v1135 = vmul.f32 %v1134, %v871
        %v1136 = vand.u32 2147483647, %v871
        %vm1137 = vcmp.lt.f32.partialorder %v1136, 0.0004427343
        %v1138 = vsel %vm1137, %v1135, %v1132
        %v1139 = vadd.f32 %v873, 1.0
        %v1140 = vlog2.pop %v1139
        %v1141 = vmul.f32 %v1140, 0.6931472
        %v1142 = vmul.f32 -0.5, %v873
        %v1143 = vadd.f32 %v1142, 1.0
        %v1144 = vmul.f32 %v1143, %v873
        %v1145 = vand.u32 2147483647, %v873
        %vm1146 = vcmp.lt.f32.partialorder %v1145, 0.0004427343
        %v1147 = vsel %vm1146, %v1144, %v1141
        %v1148 = vadd.f32 %v875, 1.0
        %v1149 = vlog2.pop %v1148
        %v1150 = vmul.f32 %v1149, 0.6931472
        %v1151 = vmul.f32 -0.5, %v875
        %v1152 = vadd.f32 %v1151, 1.0
        %v1153 = vmul.f32 %v1152, %v875
        %v1154 = vand.u32 2147483647, %v875
        %vm1155 = vcmp.lt.f32.partialorder %v1154, 0.0004427343
        %v1156 = vsel %vm1155, %v1153, %v1150
        %v1157 = vadd.f32 %v877, 1.0
        %v1158 = vlog2.pop %v1157
        %v1159 = vmul.f32 %v1158, 0.6931472
        %v1160 = vmul.f32 -0.5, %v877
        %v1161 = vadd.f32 %v1160, 1.0
        %v1162 = vmul.f32 %v1161, %v877
        %v1163 = vand.u32 2147483647, %v877
        %vm1164 = vcmp.lt.f32.partialorder %v1163, 0.0004427343
        %v1165 = vsel %vm1164, %v1162, %v1159
        %v1166 = vmul.f32 %v886, 0.01
        %v1167 = vmul.f32 %v895, 0.01
        %v1168 = vmul.f32 %v904, 0.01
        %v1169 = vmul.f32 %v913, 0.01
        %v1170 = vmul.f32 %v922, 0.01
        %v1171 = vmul.f32 %v931, 0.01
        %v1172 = vmul.f32 %v940, 0.01
        %v1173 = vmul.f32 %v949, 0.01
        %v1174 = vmul.f32 %v958, 0.01
        %v1175 = vmul.f32 %v967, 0.01
        %v1176 = vmul.f32 %v976, 0.01
        %v1177 = vmul.f32 %v985, 0.01
        %v1178 = vmul.f32 %v994, 0.01
        %v1179 = vmul.f32 %v1003, 0.01
        %v1180 = vmul.f32 %v1012, 0.01
        %v1181 = vmul.f32 %v1021, 0.01
        %v1182 = vmul.f32 %v1030, 0.01
        %v1183 = vmul.f32 %v1039, 0.01
        %v1184 = vmul.f32 %v1048, 0.01
        %v1185 = vmul.f32 %v1057, 0.01
        %v1186 = vmul.f32 %v1066, 0.01
        %v1187 = vmul.f32 %v1075, 0.01
        %v1188 = vmul.f32 %v1084, 0.01
        %v1189 = vmul.f32 %v1093, 0.01
        %v1190 = vmul.f32 %v1102, 0.01
        %v1191 = vmul.f32 %v1111, 0.01
        %v1192 = vmul.f32 %v1120, 0.01
        %v1193 = vmul.f32 %v1129, 0.01
        %v1194 = vmul.f32 %v1138, 0.01
        %v1195 = vmul.f32 %v1147, 0.01
        %v1196 = vmul.f32 %v1156, 0.01
        %v1197 = vmul.f32 %v1165, 0.01
        %v1198 = vsel %vm782, %v718, %v1166
        %v1199 = vsel %vm783, %v719, %v1167
        %v1200 = vsel %vm784, %v720, %v1168
        %v1201 = vsel %vm785, %v721, %v1169
        %v1202 = vsel %vm786, %v722, %v1170
        %v1203 = vsel %vm787, %v723, %v1171
        %v1204 = vsel %vm788, %v724, %v1172
        %v1205 = vsel %vm789, %v725, %v1173
        %v1206 = vsel %vm790, %v726, %v1174
        %v1207 = vsel %vm791, %v727, %v1175
        %v1208 = vsel %vm792, %v728, %v1176
        %v1209 = vsel %vm793, %v729, %v1177
        %v1210 = vsel %vm794, %v730, %v1178
        %v1211 = vsel %vm795, %v731, %v1179
        %v1212 = vsel %vm796, %v732, %v1180
        %v1213 = vsel %vm797, %v733, %v1181
        %v1214 = vsel %vm798, %v734, %v1182
        %v1215 = vsel %vm799, %v735, %v1183
        %v1216 = vsel %vm800, %v736, %v1184
        %v1217 = vsel %vm801, %v737, %v1185
        %v1218 = vsel %vm802, %v738, %v1186
        %v1219 = vsel %vm803, %v739, %v1187
        %v1220 = vsel %vm804, %v740, %v1188
        %v1221 = vsel %vm805, %v741, %v1189
        %v1222 = vsel %vm806, %v742, %v1190
        %v1223 = vsel %vm807, %v743, %v1191
        %v1224 = vsel %vm808, %v744, %v1192
        %v1225 = vsel %vm809, %v745, %v1193
        %v1226 = vsel %vm810, %v746, %v1194
        %v1227 = vsel %vm811, %v747, %v1195
        %v1228 = vsel %vm812, %v748, %v1196
        %v1229 = vsel %vm813, %v749, %v1197
        %v1230 = vld [vmem:[#allocation2] sm:$0xff]
        %v1231 = vld [vmem:[#allocation2 + $0x8] sm:$0xff]
        %v1232 = vld [vmem:[#allocation2 + $0x10] sm:$0xff]
        %v1233 = vld [vmem:[#allocation2 + $0x18] sm:$0xff]
        %v1234 = vld [vmem:[#allocation2 + $0x20] sm:$0xff]
        %v1235 = vld [vmem:[#allocation2 + $0x28] sm:$0xff]
        %v1236 = vld [vmem:[#allocation2 + $0x30] sm:$0xff]
        %v1237 = vld [vmem:[#allocation2 + $0x38] sm:$0xff]
        %1238 = vset.pattern.permute.xlu0 1
        %1239 = vperm.xlu0 %1238, %v670
        %v1240 = vpop.permute.xlu0 %1239
        %1242 = vset.pattern.permute.xlu0 1
        %1243 = vperm.xlu0 %1242, %v671
        %v1244 = vpop.permute.xlu0 %1243
        %1246 = vset.pattern.permute.xlu0 1
        %1247 = vperm.xlu0 %1246, %v672
        %v1248 = vpop.permute.xlu0 %1247
        %1250 = vset.pattern.permute.xlu0 1
        %1251 = vperm.xlu0 %1250, %v673
        %v1252 = vpop.permute.xlu0 %1251
        %1254 = vset.pattern.permute.xlu0 1
        %1255 = vperm.xlu0 %1254, %v674
        %v1256 = vpop.permute.xlu0 %1255
        %1258 = vset.pattern.permute.xlu0 1
        %1259 = vperm.xlu0 %1258, %v675
        %v1260 = vpop.permute.xlu0 %1259
        %1262 = vset.pattern.permute.xlu0 1
        %1263 = vperm.xlu0 %1262, %v676
        %v1264 = vpop.permute.xlu0 %1263
        %1266 = vset.pattern.permute.xlu0 1
        %1267 = vperm.xlu0 %1266, %v677
        %v1268 = vpop.permute.xlu0 %1267
        %vm1270 = vcmask 523264
        %v1272 = vsel %vm1270, %v1230, 0
        %v1275 = vsel %vm1270, %v1231, 0
        %v1278 = vsel %vm1270, %v1232, 0
        %v1281 = vsel %vm1270, %v1233, 0
        %v1284 = vsel %vm1270, %v1234, 0
        %v1287 = vsel %vm1270, %v1235, 0
        %v1290 = vsel %vm1270, %v1236, 0
        %v1293 = vsel %vm1270, %v1237, 0
        %1295 = vmatprep.subr.mxu0 %v1199
        %1296 = vmatpush1.msra.mxu0 %v1198
        %1297 = vmatprep.subr.mxu0 %v1203
        %1298 = vmatpush1.msra.mxu0 %v1202
        %1299 = vmatprep.subr.mxu0 %v1207
        %1300 = vmatpush1.msra.mxu0 %v1206
        %1301 = vmatprep.subr.mxu0 %v1211
        %1302 = vmatpush1.msra.mxu0 %v1210
        %1303 = vmatprep.subr.mxu0 %v1215
        %1304 = vmatpush1.msra.mxu0 %v1214
        %1305 = vmatprep.subr.mxu0 %v1219
        %1306 = vmatpush1.msra.mxu0 %v1218
        %1307 = vmatprep.subr.mxu0 %v1223
        %1308 = vmatpush1.msra.mxu0 %v1222
        %1309 = vmatprep.subr.mxu0 %v1227
        %1310 = vmatpush1.msra.mxu0 %v1226
        %1311 = vmatprep.subr.mxu0 0.0
        %1312 = vmatpush1.msra.mxu0 0.0
        %1313 = vmatprep.subr.mxu0 0.0
        %1314 = vmatpush1.msra.mxu0 0.0
        %1315 = vmatprep.subr.mxu0 0.0
        %1316 = vmatpush1.msra.mxu0 0.0
        %1317 = vmatprep.subr.mxu0 0.0
        %1318 = vmatpush1.msra.mxu0 0.0
        %1319 = vmatprep.subr.mxu0 0.0
        %1320 = vmatpush1.msra.mxu0 0.0
        %1321 = vmatprep.subr.mxu0 0.0
        %1322 = vmatpush1.msra.mxu0 0.0
        %1323 = vmatprep.subr.mxu0 0.0
        %1324 = vmatpush1.msra.mxu0 0.0
        %1325 = vmatprep.subr.mxu0 0.0
        %1326 = vmatpush1.msra.mxu0 0.0
        %1327 = vmatprep.subr.mxu0 0.0
        %1328 = vmatpush1.msra.mxu0 0.0
        %1329 = vmatprep.subr.mxu0 0.0
        %1330 = vmatpush1.msra.mxu0 0.0
        %1331 = vmatprep.subr.mxu0 0.0
        %1332 = vmatpush1.msra.mxu0 0.0
        %1333 = vmatprep.subr.mxu0 0.0
        %1334 = vmatpush1.msra.mxu0 0.0
        %1335 = vmatprep.subr.mxu0 0.0
        %1336 = vmatpush1.msra.mxu0 0.0
        %1337 = vmatprep.subr.mxu0 0.0
        %1338 = vmatpush1.msra.mxu0 0.0
        %1339 = vmatprep.subr.mxu0 0.0
        %1340 = vmatpush1.msra.mxu0 0.0
        %1341 = vmatprep.subr.mxu0 0.0
        %1342 = vmatpush1.msra.mxu0 0.0
        %1343 = vmatprep.subr.mxu0 0.0
        %1344 = vmatpush1.msra.mxu0 0.0
        %1345 = vmatprep.subr.mxu0 0.0
        %1346 = vmatpush1.msra.mxu0 0.0
        %1347 = vmatprep.subr.mxu0 0.0
        %1348 = vmatpush1.msra.mxu0 0.0
        %1349 = vmatprep.subr.mxu0 0.0
        %1350 = vmatpush1.msra.mxu0 0.0
        %1351 = vmatprep.subr.mxu0 0.0
        %1352 = vmatpush1.msra.mxu0 0.0
        %1353 = vmatprep.subr.mxu0 0.0
        %1354 = vmatpush1.msra.mxu0 0.0
        %1355 = vmatprep.subr.mxu0 0.0
        %1356 = vmatpush1.msra.mxu0 0.0
        %1357 = vmatprep.subr.mxu0 0.0
        %1358 = vmatpush1.msra.mxu0 0.0
        %1359 = vmatprep.mubr.f32.mxu0 0.0
        %1360 = vmatmul.mubr.f32.gmra.mrb[0].mxu0 %v1272
        %v1361 = vpop.f32.mrb[0].mxu0
        %v1362 = vadd.f32 %v1240, %v1361
        %v1363 = vpop.f32.mrb[0].mxu0
        %v1364 = vadd.f32 %v1240, %v1363
        %1365 = vmatprep.mubr.f32.mxu0 0.0
        %1366 = vmatmul.mubr.f32.gmra.mrb[0].mxu0 %v1275
        %v1367 = vpop.f32.mrb[0].mxu0
        %v1368 = vadd.f32 %v1244, %v1367
        %v1369 = vpop.f32.mrb[0].mxu0
        %v1370 = vadd.f32 %v1244, %v1369
        %1371 = vmatprep.mubr.f32.mxu0 0.0
        %1372 = vmatmul.mubr.f32.gmra.mrb[0].mxu0 %v1278
        %v1373 = vpop.f32.mrb[0].mxu0
        %v1374 = vadd.f32 %v1248, %v1373
        %v1375 = vpop.f32.mrb[0].mxu0
        %v1376 = vadd.f32 %v1248, %v1375
        %1377 = vmatprep.mubr.f32.mxu0 0.0
        %1378 = vmatmul.mubr.f32.gmra.mrb[0].mxu0 %v1281
        %v1379 = vpop.f32.mrb[0].mxu0
        %v1380 = vadd.f32 %v1252, %v1379
        %v1381 = vpop.f32.mrb[0].mxu0
        %v1382 = vadd.f32 %v1252, %v1381
        %1383 = vmatprep.mubr.f32.mxu0 0.0
        %1384 = vmatmul.mubr.f32.gmra.mrb[0].mxu0 %v1284
        %v1385 = vpop.f32.mrb[0].mxu0
        %v1386 = vadd.f32 %v1256, %v1385
        %v1387 = vpop.f32.mrb[0].mxu0
        %v1388 = vadd.f32 %v1256, %v1387
        %1389 = vmatprep.mubr.f32.mxu0 0.0
        %1390 = vmatmul.mubr.f32.gmra.mrb[0].mxu0 %v1287
        %v1391 = vpop.f32.mrb[0].mxu0
        %v1392 = vadd.f32 %v1260, %v1391
        %v1393 = vpop.f32.mrb[0].mxu0
        %v1394 = vadd.f32 %v1260, %v1393
        %1395 = vmatprep.mubr.f32.mxu0 0.0
        %1396 = vmatmul.mubr.f32.gmra.mrb[0].mxu0 %v1290
        %v1397 = vpop.f32.mrb[0].mxu0
        %v1398 = vadd.f32 %v1264, %v1397
        %v1399 = vpop.f32.mrb[0].mxu0
        %v1400 = vadd.f32 %v1264, %v1399
        %1401 = vmatprep.mubr.f32.mxu0 0.0
        %1402 = vmatmul.mubr.f32.gmra.mrb[0].mxu0 %v1293
        %v1403 = vpop.f32.mrb[0].mxu0
        %v1404 = vadd.f32 %v1268, %v1403
        %v1405 = vpop.f32.mrb[0].mxu0
        %v1406 = vadd.f32 %v1268, %v1405
        %1407 = vdwg.mxu0
        %1408 = vmatprep.subr.mxu0 %v1201
        %1409 = vmatpush1.msra.mxu0 %v1200
        %1410 = vmatprep.subr.mxu0 %v1205
        %1411 = vmatpush1.msra.mxu0 %v1204
        %1412 = vmatprep.subr.mxu0 %v1209
        %1413 = vmatpush1.msra.mxu0 %v1208
        %1414 = vmatprep.subr.mxu0 %v1213
        %1415 = vmatpush1.msra.mxu0 %v1212
        %1416 = vmatprep.subr.mxu0 %v1217
        %1417 = vmatpush1.msra.mxu0 %v1216
        %1418 = vmatprep.subr.mxu0 %v1221
        %1419 = vmatpush1.msra.mxu0 %v1220
        %1420 = vmatprep.subr.mxu0 %v1225
        %1421 = vmatpush1.msra.mxu0 %v1224
        %1422 = vmatprep.subr.mxu0 %v1229
        %1423 = vmatpush1.msra.mxu0 %v1228
        %1424 = vmatprep.subr.mxu0 0.0
        %1425 = vmatpush1.msra.mxu0 0.0
        %1426 = vmatprep.subr.mxu0 0.0
        %1427 = vmatpush1.msra.mxu0 0.0
        %1428 = vmatprep.subr.mxu0 0.0
        %1429 = vmatpush1.msra.mxu0 0.0
        %1430 = vmatprep.subr.mxu0 0.0
        %1431 = vmatpush1.msra.mxu0 0.0
        %1432 = vmatprep.subr.mxu0 0.0
        %1433 = vmatpush1.msra.mxu0 0.0
        %1434 = vmatprep.subr.mxu0 0.0
        %1435 = vmatpush1.msra.mxu0 0.0
        %1436 = vmatprep.subr.mxu0 0.0
        %1437 = vmatpush1.msra.mxu0 0.0
        %1438 = vmatprep.subr.mxu0 0.0
        %1439 = vmatpush1.msra.mxu0 0.0
        %1440 = vmatprep.subr.mxu0 0.0
        %1441 = vmatpush1.msra.mxu0 0.0
        %1442 = vmatprep.subr.mxu0 0.0
        %1443 = vmatpush1.msra.mxu0 0.0
        %1444 = vmatprep.subr.mxu0 0.0
        %1445 = vmatpush1.msra.mxu0 0.0
        %1446 = vmatprep.subr.mxu0 0.0
        %1447 = vmatpush1.msra.mxu0 0.0
        %1448 = vmatprep.subr.mxu0 0.0
        %1449 = vmatpush1.msra.mxu0 0.0
        %1450 = vmatprep.subr.mxu0 0.0
        %1451 = vmatpush1.msra.mxu0 0.0
        %1452 = vmatprep.subr.mxu0 0.0
        %1453 = vmatpush1.msra.mxu0 0.0
        %1454 = vmatprep.subr.mxu0 0.0
        %1455 = vmatpush1.msra.mxu0 0.0
        %1456 = vmatprep.subr.mxu0 0.0
        %1457 = vmatpush1.msra.mxu0 0.0
        %1458 = vmatprep.subr.mxu0 0.0
        %1459 = vmatpush1.msra.mxu0 0.0
        %1460 = vmatprep.subr.mxu0 0.0
        %1461 = vmatpush1.msra.mxu0 0.0
        %1462 = vmatprep.subr.mxu0 0.0
        %1463 = vmatpush1.msra.mxu0 0.0
        %1464 = vmatprep.subr.mxu0 0.0
        %1465 = vmatpush1.msra.mxu0 0.0
        %1466 = vmatprep.subr.mxu0 0.0
        %1467 = vmatpush1.msra.mxu0 0.0
        %1468 = vmatprep.subr.mxu0 0.0
        %1469 = vmatpush1.msra.mxu0 0.0
        %1470 = vmatprep.subr.mxu0 0.0
        %1471 = vmatpush1.msra.mxu0 0.0
        %1472 = vmatprep.mubr.f32.mxu0 0.0
        %1473 = vmatmul.mubr.f32.gmra.mrb[0].mxu0 %v1272
        %v1474 = vpop.f32.mrb[0].mxu0
        %v1475 = vadd.f32 %v1240, %v1474
        %v1476 = vpop.f32.mrb[0].mxu0
        %v1477 = vadd.f32 %v1240, %v1476
        %1478 = vmatprep.mubr.f32.mxu0 0.0
        %1479 = vmatmul.mubr.f32.gmra.mrb[0].mxu0 %v1275
        %v1480 = vpop.f32.mrb[0].mxu0
        %v1481 = vadd.f32 %v1244, %v1480
        %v1482 = vpop.f32.mrb[0].mxu0
        %v1483 = vadd.f32 %v1244, %v1482
        %1484 = vmatprep.mubr.f32.mxu0 0.0
        %1485 = vmatmul.mubr.f32.gmra.mrb[0].mxu0 %v1278
        %v1486 = vpop.f32.mrb[0].mxu0
        %v1487 = vadd.f32 %v1248, %v1486
        %v1488 = vpop.f32.mrb[0].mxu0
        %v1489 = vadd.f32 %v1248, %v1488
        %1490 = vmatprep.mubr.f32.mxu0 0.0
        %1491 = vmatmul.mubr.f32.gmra.mrb[0].mxu0 %v1281
        %v1492 = vpop.f32.mrb[0].mxu0
        %v1493 = vadd.f32 %v1252, %v1492
        %v1494 = vpop.f32.mrb[0].mxu0
        %v1495 = vadd.f32 %v1252, %v1494
        %1496 = vmatprep.mubr.f32.mxu0 0.0
        %1497 = vmatmul.mubr.f32.gmra.mrb[0].mxu0 %v1284
        %v1498 = vpop.f32.mrb[0].mxu0
        %v1499 = vadd.f32 %v1256, %v1498
        %v1500 = vpop.f32.mrb[0].mxu0
        %v1501 = vadd.f32 %v1256, %v1500
        %1502 = vmatprep.mubr.f32.mxu0 0.0
        %1503 = vmatmul.mubr.f32.gmra.mrb[0].mxu0 %v1287
        %v1504 = vpop.f32.mrb[0].mxu0
        %v1505 = vadd.f32 %v1260, %v1504
        %v1506 = vpop.f32.mrb[0].mxu0
        %v1507 = vadd.f32 %v1260, %v1506
        %1508 = vmatprep.mubr.f32.mxu0 0.0
        %1509 = vmatmul.mubr.f32.gmra.mrb[0].mxu0 %v1290
        %v1510 = vpop.f32.mrb[0].mxu0
        %v1511 = vadd.f32 %v1264, %v1510
        %v1512 = vpop.f32.mrb[0].mxu0
        %v1513 = vadd.f32 %v1264, %v1512
        %1514 = vmatprep.mubr.f32.mxu0 0.0
        %1515 = vmatmul.mubr.f32.gmra.mrb[0].mxu0 %v1293
        %v1516 = vpop.f32.mrb[0].mxu0
        %v1517 = vadd.f32 %v1268, %v1516
        %v1518 = vpop.f32.mrb[0].mxu0
        %v1519 = vadd.f32 %v1268, %v1518
        %1520 = vdwg.mxu0
        %v1521 = vmul.f32 %v1362, 100.0
        %v1522 = vmul.f32 %v1364, 100.0
        %v1523 = vmul.f32 %v1475, 100.0
        %v1524 = vmul.f32 %v1477, 100.0
        %v1525 = vmul.f32 %v1368, 100.0
        %v1526 = vmul.f32 %v1370, 100.0
        %v1527 = vmul.f32 %v1481, 100.0
        %v1528 = vmul.f32 %v1483, 100.0
        %v1529 = vmul.f32 %v1374, 100.0
        %v1530 = vmul.f32 %v1376, 100.0
        %v1531 = vmul.f32 %v1487, 100.0
        %v1532 = vmul.f32 %v1489, 100.0
        %v1533 = vmul.f32 %v1380, 100.0
        %v1534 = vmul.f32 %v1382, 100.0
        %v1535 = vmul.f32 %v1493, 100.0
        %v1536 = vmul.f32 %v1495, 100.0
        %v1537 = vmul.f32 %v1386, 100.0
        %v1538 = vmul.f32 %v1388, 100.0
        %v1539 = vmul.f32 %v1499, 100.0
        %v1540 = vmul.f32 %v1501, 100.0
        %v1541 = vmul.f32 %v1392, 100.0
        %v1542 = vmul.f32 %v1394, 100.0
        %v1543 = vmul.f32 %v1505, 100.0
        %v1544 = vmul.f32 %v1507, 100.0
        %v1545 = vmul.f32 %v1398, 100.0
        %v1546 = vmul.f32 %v1400, 100.0
        %v1547 = vmul.f32 %v1511, 100.0
        %v1548 = vmul.f32 %v1513, 100.0
        %v1549 = vmul.f32 %v1404, 100.0
        %v1550 = vmul.f32 %v1406, 100.0
        %v1551 = vmul.f32 %v1517, 100.0
        %v1552 = vmul.f32 %v1519, 100.0
        %vm1553 = vcmp.gt.f32.partialorder %v1521, 20.0
        %vm1554 = vcmp.gt.f32.partialorder %v1522, 20.0
        %vm1555 = vcmp.gt.f32.partialorder %v1523, 20.0
        %vm1556 = vcmp.gt.f32.partialorder %v1524, 20.0
        %vm1557 = vcmp.gt.f32.partialorder %v1525, 20.0
        %vm1558 = vcmp.gt.f32.partialorder %v1526, 20.0
        %vm1559 = vcmp.gt.f32.partialorder %v1527, 20.0
        %vm1560 = vcmp.gt.f32.partialorder %v1528, 20.0
        %vm1561 = vcmp.gt.f32.partialorder %v1529, 20.0
        %vm1562 = vcmp.gt.f32.partialorder %v1530, 20.0
        %vm1563 = vcmp.gt.f32.partialorder %v1531, 20.0
        %vm1564 = vcmp.gt.f32.partialorder %v1532, 20.0
        %vm1565 = vcmp.gt.f32.partialorder %v1533, 20.0
        %vm1566 = vcmp.gt.f32.partialorder %v1534, 20.0
        %vm1567 = vcmp.gt.f32.partialorder %v1535, 20.0
        %vm1568 = vcmp.gt.f32.partialorder %v1536, 20.0
        %vm1569 = vcmp.gt.f32.partialorder %v1537, 20.0
        %vm1570 = vcmp.gt.f32.partialorder %v1538, 20.0
        %vm1571 = vcmp.gt.f32.partialorder %v1539, 20.0
        %vm1572 = vcmp.gt.f32.partialorder %v1540, 20.0
        %vm1573 = vcmp.gt.f32.partialorder %v1541, 20.0
        %vm1574 = vcmp.gt.f32.partialorder %v1542, 20.0
        %vm1575 = vcmp.gt.f32.partialorder %v1543, 20.0
        %vm1576 = vcmp.gt.f32.partialorder %v1544, 20.0
        %vm1577 = vcmp.gt.f32.partialorder %v1545, 20.0
        %vm1578 = vcmp.gt.f32.partialorder %v1546, 20.0
        %vm1579 = vcmp.gt.f32.partialorder %v1547, 20.0
        %vm1580 = vcmp.gt.f32.partialorder %v1548, 20.0
        %vm1581 = vcmp.gt.f32.partialorder %v1549, 20.0
        %vm1582 = vcmp.gt.f32.partialorder %v1550, 20.0
        %vm1583 = vcmp.gt.f32.partialorder %v1551, 20.0
        %vm1584 = vcmp.gt.f32.partialorder %v1552, 20.0
        %v1585 = vmul.f32 %v1521, 1.442695
        %v1586 = vpow.pop %v1585
        %v1587 = vmul.f32 %v1522, 1.442695
        %v1588 = vpow.pop %v1587
        %v1589 = vmul.f32 %v1523, 1.442695
        %v1590 = vpow.pop %v1589
        %v1591 = vmul.f32 %v1524, 1.442695
        %v1592 = vpow.pop %v1591
        %v1593 = vmul.f32 %v1525, 1.442695
        %v1594 = vpow.pop %v1593
        %v1595 = vmul.f32 %v1526, 1.442695
        %v1596 = vpow.pop %v1595
        %v1597 = vmul.f32 %v1527, 1.442695
        %v1598 = vpow.pop %v1597
        %v1599 = vmul.f32 %v1528, 1.442695
        %v1600 = vpow.pop %v1599
        %v1601 = vmul.f32 %v1529, 1.442695
        %v1602 = vpow.pop %v1601
        %v1603 = vmul.f32 %v1530, 1.442695
        %v1604 = vpow.pop %v1603
        %v1605 = vmul.f32 %v1531, 1.442695
        %v1606 = vpow.pop %v1605
        %v1607 = vmul.f32 %v1532, 1.442695
        %v1608 = vpow.pop %v1607
        %v1609 = vmul.f32 %v1533, 1.442695
        %v1610 = vpow.pop %v1609
        %v1611 = vmul.f32 %v1534, 1.442695
        %v1612 = vpow.pop %v1611
        %v1613 = vmul.f32 %v1535, 1.442695
        %v1614 = vpow.pop %v1613
        %v1615 = vmul.f32 %v1536, 1.442695
        %v1616 = vpow.pop %v1615
        %v1617 = vmul.f32 %v1537, 1.442695
        %v1618 = vpow.pop %v1617
        %v1619 = vmul.f32 %v1538, 1.442695
        %v1620 = vpow.pop %v1619
        %v1621 = vmul.f32 %v1539, 1.442695
        %v1622 = vpow.pop %v1621
        %v1623 = vmul.f32 %v1540, 1.442695
        %v1624 = vpow.pop %v1623
        %v1625 = vmul.f32 %v1541, 1.442695
        %v1626 = vpow.pop %v1625
        %v1627 = vmul.f32 %v1542, 1.442695
        %v1628 = vpow.pop %v1627
        %v1629 = vmul.f32 %v1543, 1.442695
        %v1630 = vpow.pop %v1629
        %v1631 = vmul.f32 %v1544, 1.442695
        %v1632 = vpow.pop %v1631
        %v1633 = vmul.f32 %v1545, 1.442695
        %v1634 = vpow.pop %v1633
        %v1635 = vmul.f32 %v1546, 1.442695
        %v1636 = vpow.pop %v1635
        %v1637 = vmul.f32 %v1547, 1.442695
        %v1638 = vpow.pop %v1637
        %v1639 = vmul.f32 %v1548, 1.442695
        %v1640 = vpow.pop %v1639
        %v1641 = vmul.f32 %v1549, 1.442695
        %v1642 = vpow.pop %v1641
        %v1643 = vmul.f32 %v1550, 1.442695
        %v1644 = vpow.pop %v1643
        %v1645 = vmul.f32 %v1551, 1.442695
        %v1646 = vpow.pop %v1645
        %v1647 = vmul.f32 %v1552, 1.442695
        %v1648 = vpow.pop %v1647
        %v1649 = vadd.f32 %v1586, 1.0
        %v1650 = vlog2.pop %v1649
        %v1651 = vmul.f32 %v1650, 0.6931472
        %v1652 = vmul.f32 -0.5, %v1586
        %v1653 = vadd.f32 %v1652, 1.0
        %v1654 = vmul.f32 %v1653, %v1586
        %v1655 = vand.u32 2147483647, %v1586
        %vm1656 = vcmp.lt.f32.partialorder %v1655, 0.0004427343
        %v1657 = vsel %vm1656, %v1654, %v1651
        %v1658 = vadd.f32 %v1588, 1.0
        %v1659 = vlog2.pop %v1658
        %v1660 = vmul.f32 %v1659, 0.6931472
        %v1661 = vmul.f32 -0.5, %v1588
        %v1662 = vadd.f32 %v1661, 1.0
        %v1663 = vmul.f32 %v1662, %v1588
        %v1664 = vand.u32 2147483647, %v1588
        %vm1665 = vcmp.lt.f32.partialorder %v1664, 0.0004427343
        %v1666 = vsel %vm1665, %v1663, %v1660
        %v1667 = vadd.f32 %v1590, 1.0
        %v1668 = vlog2.pop %v1667
        %v1669 = vmul.f32 %v1668, 0.6931472
        %v1670 = vmul.f32 -0.5, %v1590
        %v1671 = vadd.f32 %v1670, 1.0
        %v1672 = vmul.f32 %v1671, %v1590
        %v1673 = vand.u32 2147483647, %v1590
        %vm1674 = vcmp.lt.f32.partialorder %v1673, 0.0004427343
        %v1675 = vsel %vm1674, %v1672, %v1669
        %v1676 = vadd.f32 %v1592, 1.0
        %v1677 = vlog2.pop %v1676
        %v1678 = vmul.f32 %v1677, 0.6931472
        %v1679 = vmul.f32 -0.5, %v1592
        %v1680 = vadd.f32 %v1679, 1.0
        %v1681 = vmul.f32 %v1680, %v1592
        %v1682 = vand.u32 2147483647, %v1592
        %vm1683 = vcmp.lt.f32.partialorder %v1682, 0.0004427343
        %v1684 = vsel %vm1683, %v1681, %v1678
        %v1685 = vadd.f32 %v1594, 1.0
        %v1686 = vlog2.pop %v1685
        %v1687 = vmul.f32 %v1686, 0.6931472
        %v1688 = vmul.f32 -0.5, %v1594
        %v1689 = vadd.f32 %v1688, 1.0
        %v1690 = vmul.f32 %v1689, %v1594
        %v1691 = vand.u32 2147483647, %v1594
        %vm1692 = vcmp.lt.f32.partialorder %v1691, 0.0004427343
        %v1693 = vsel %vm1692, %v1690, %v1687
        %v1694 = vadd.f32 %v1596, 1.0
        %v1695 = vlog2.pop %v1694
        %v1696 = vmul.f32 %v1695, 0.6931472
        %v1697 = vmul.f32 -0.5, %v1596
        %v1698 = vadd.f32 %v1697, 1.0
        %v1699 = vmul.f32 %v1698, %v1596
        %v1700 = vand.u32 2147483647, %v1596
        %vm1701 = vcmp.lt.f32.partialorder %v1700, 0.0004427343
        %v1702 = vsel %vm1701, %v1699, %v1696
        %v1703 = vadd.f32 %v1598, 1.0
        %v1704 = vlog2.pop %v1703
        %v1705 = vmul.f32 %v1704, 0.6931472
        %v1706 = vmul.f32 -0.5, %v1598
        %v1707 = vadd.f32 %v1706, 1.0
        %v1708 = vmul.f32 %v1707, %v1598
        %v1709 = vand.u32 2147483647, %v1598
        %vm1710 = vcmp.lt.f32.partialorder %v1709, 0.0004427343
        %v1711 = vsel %vm1710, %v1708, %v1705
        %v1712 = vadd.f32 %v1600, 1.0
        %v1713 = vlog2.pop %v1712
        %v1714 = vmul.f32 %v1713, 0.6931472
        %v1715 = vmul.f32 -0.5, %v1600
        %v1716 = vadd.f32 %v1715, 1.0
        %v1717 = vmul.f32 %v1716, %v1600
        %v1718 = vand.u32 2147483647, %v1600
        %vm1719 = vcmp.lt.f32.partialorder %v1718, 0.0004427343
        %v1720 = vsel %vm1719, %v1717, %v1714
        %v1721 = vadd.f32 %v1602, 1.0
        %v1722 = vlog2.pop %v1721
        %v1723 = vmul.f32 %v1722, 0.6931472
        %v1724 = vmul.f32 -0.5, %v1602
        %v1725 = vadd.f32 %v1724, 1.0
        %v1726 = vmul.f32 %v1725, %v1602
        %v1727 = vand.u32 2147483647, %v1602
        %vm1728 = vcmp.lt.f32.partialorder %v1727, 0.0004427343
        %v1729 = vsel %vm1728, %v1726, %v1723
        %v1730 = vadd.f32 %v1604, 1.0
        %v1731 = vlog2.pop %v1730
        %v1732 = vmul.f32 %v1731, 0.6931472
        %v1733 = vmul.f32 -0.5, %v1604
        %v1734 = vadd.f32 %v1733, 1.0
        %v1735 = vmul.f32 %v1734, %v1604
        %v1736 = vand.u32 2147483647, %v1604
        %vm1737 = vcmp.lt.f32.partialorder %v1736, 0.0004427343
        %v1738 = vsel %vm1737, %v1735, %v1732
        %v1739 = vadd.f32 %v1606, 1.0
        %v1740 = vlog2.pop %v1739
        %v1741 = vmul.f32 %v1740, 0.6931472
        %v1742 = vmul.f32 -0.5, %v1606
        %v1743 = vadd.f32 %v1742, 1.0
        %v1744 = vmul.f32 %v1743, %v1606
        %v1745 = vand.u32 2147483647, %v1606
        %vm1746 = vcmp.lt.f32.partialorder %v1745, 0.0004427343
        %v1747 = vsel %vm1746, %v1744, %v1741
        %v1748 = vadd.f32 %v1608, 1.0
        %v1749 = vlog2.pop %v1748
        %v1750 = vmul.f32 %v1749, 0.6931472
        %v1751 = vmul.f32 -0.5, %v1608
        %v1752 = vadd.f32 %v1751, 1.0
        %v1753 = vmul.f32 %v1752, %v1608
        %v1754 = vand.u32 2147483647, %v1608
        %vm1755 = vcmp.lt.f32.partialorder %v1754, 0.0004427343
        %v1756 = vsel %vm1755, %v1753, %v1750
        %v1757 = vadd.f32 %v1610, 1.0
        %v1758 = vlog2.pop %v1757
        %v1759 = vmul.f32 %v1758, 0.6931472
        %v1760 = vmul.f32 -0.5, %v1610
        %v1761 = vadd.f32 %v1760, 1.0
        %v1762 = vmul.f32 %v1761, %v1610
        %v1763 = vand.u32 2147483647, %v1610
        %vm1764 = vcmp.lt.f32.partialorder %v1763, 0.0004427343
        %v1765 = vsel %vm1764, %v1762, %v1759
        %v1766 = vadd.f32 %v1612, 1.0
        %v1767 = vlog2.pop %v1766
        %v1768 = vmul.f32 %v1767, 0.6931472
        %v1769 = vmul.f32 -0.5, %v1612
        %v1770 = vadd.f32 %v1769, 1.0
        %v1771 = vmul.f32 %v1770, %v1612
        %v1772 = vand.u32 2147483647, %v1612
        %vm1773 = vcmp.lt.f32.partialorder %v1772, 0.0004427343
        %v1774 = vsel %vm1773, %v1771, %v1768
        %v1775 = vadd.f32 %v1614, 1.0
        %v1776 = vlog2.pop %v1775
        %v1777 = vmul.f32 %v1776, 0.6931472
        %v1778 = vmul.f32 -0.5, %v1614
        %v1779 = vadd.f32 %v1778, 1.0
        %v1780 = vmul.f32 %v1779, %v1614
        %v1781 = vand.u32 2147483647, %v1614
        %vm1782 = vcmp.lt.f32.partialorder %v1781, 0.0004427343
        %v1783 = vsel %vm1782, %v1780, %v1777
        %v1784 = vadd.f32 %v1616, 1.0
        %v1785 = vlog2.pop %v1784
        %v1786 = vmul.f32 %v1785, 0.6931472
        %v1787 = vmul.f32 -0.5, %v1616
        %v1788 = vadd.f32 %v1787, 1.0
        %v1789 = vmul.f32 %v1788, %v1616
        %v1790 = vand.u32 2147483647, %v1616
        %vm1791 = vcmp.lt.f32.partialorder %v1790, 0.0004427343
        %v1792 = vsel %vm1791, %v1789, %v1786
        %v1793 = vadd.f32 %v1618, 1.0
        %v1794 = vlog2.pop %v1793
        %v1795 = vmul.f32 %v1794, 0.6931472
        %v1796 = vmul.f32 -0.5, %v1618
        %v1797 = vadd.f32 %v1796, 1.0
        %v1798 = vmul.f32 %v1797, %v1618
        %v1799 = vand.u32 2147483647, %v1618
        %vm1800 = vcmp.lt.f32.partialorder %v1799, 0.0004427343
        %v1801 = vsel %vm1800, %v1798, %v1795
        %v1802 = vadd.f32 %v1620, 1.0
        %v1803 = vlog2.pop %v1802
        %v1804 = vmul.f32 %v1803, 0.6931472
        %v1805 = vmul.f32 -0.5, %v1620
        %v1806 = vadd.f32 %v1805, 1.0
        %v1807 = vmul.f32 %v1806, %v1620
        %v1808 = vand.u32 2147483647, %v1620
        %vm1809 = vcmp.lt.f32.partialorder %v1808, 0.0004427343
        %v1810 = vsel %vm1809, %v1807, %v1804
        %v1811 = vadd.f32 %v1622, 1.0
        %v1812 = vlog2.pop %v1811
        %v1813 = vmul.f32 %v1812, 0.6931472
        %v1814 = vmul.f32 -0.5, %v1622
        %v1815 = vadd.f32 %v1814, 1.0
        %v1816 = vmul.f32 %v1815, %v1622
        %v1817 = vand.u32 2147483647, %v1622
        %vm1818 = vcmp.lt.f32.partialorder %v1817, 0.0004427343
        %v1819 = vsel %vm1818, %v1816, %v1813
        %v1820 = vadd.f32 %v1624, 1.0
        %v1821 = vlog2.pop %v1820
        %v1822 = vmul.f32 %v1821, 0.6931472
        %v1823 = vmul.f32 -0.5, %v1624
        %v1824 = vadd.f32 %v1823, 1.0
        %v1825 = vmul.f32 %v1824, %v1624
        %v1826 = vand.u32 2147483647, %v1624
        %vm1827 = vcmp.lt.f32.partialorder %v1826, 0.0004427343
        %v1828 = vsel %vm1827, %v1825, %v1822
        %v1829 = vadd.f32 %v1626, 1.0
        %v1830 = vlog2.pop %v1829
        %v1831 = vmul.f32 %v1830, 0.6931472
        %v1832 = vmul.f32 -0.5, %v1626
        %v1833 = vadd.f32 %v1832, 1.0
        %v1834 = vmul.f32 %v1833, %v1626
        %v1835 = vand.u32 2147483647, %v1626
        %vm1836 = vcmp.lt.f32.partialorder %v1835, 0.0004427343
        %v1837 = vsel %vm1836, %v1834, %v1831
        %v1838 = vadd.f32 %v1628, 1.0
        %v1839 = vlog2.pop %v1838
        %v1840 = vmul.f32 %v1839, 0.6931472
        %v1841 = vmul.f32 -0.5, %v1628
        %v1842 = vadd.f32 %v1841, 1.0
        %v1843 = vmul.f32 %v1842, %v1628
        %v1844 = vand.u32 2147483647, %v1628
        %vm1845 = vcmp.lt.f32.partialorder %v1844, 0.0004427343
        %v1846 = vsel %vm1845, %v1843, %v1840
        %v1847 = vadd.f32 %v1630, 1.0
        %v1848 = vlog2.pop %v1847
        %v1849 = vmul.f32 %v1848, 0.6931472
        %v1850 = vmul.f32 -0.5, %v1630
        %v1851 = vadd.f32 %v1850, 1.0
        %v1852 = vmul.f32 %v1851, %v1630
        %v1853 = vand.u32 2147483647, %v1630
        %vm1854 = vcmp.lt.f32.partialorder %v1853, 0.0004427343
        %v1855 = vsel %vm1854, %v1852, %v1849
        %v1856 = vadd.f32 %v1632, 1.0
        %v1857 = vlog2.pop %v1856
        %v1858 = vmul.f32 %v1857, 0.6931472
        %v1859 = vmul.f32 -0.5, %v1632
        %v1860 = vadd.f32 %v1859, 1.0
        %v1861 = vmul.f32 %v1860, %v1632
        %v1862 = vand.u32 2147483647, %v1632
        %vm1863 = vcmp.lt.f32.partialorder %v1862, 0.0004427343
        %v1864 = vsel %vm1863, %v1861, %v1858
        %v1865 = vadd.f32 %v1634, 1.0
        %v1866 = vlog2.pop %v1865
        %v1867 = vmul.f32 %v1866, 0.6931472
        %v1868 = vmul.f32 -0.5, %v1634
        %v1869 = vadd.f32 %v1868, 1.0
        %v1870 = vmul.f32 %v1869, %v1634
        %v1871 = vand.u32 2147483647, %v1634
        %vm1872 = vcmp.lt.f32.partialorder %v1871, 0.0004427343
        %v1873 = vsel %vm1872, %v1870, %v1867
        %v1874 = vadd.f32 %v1636, 1.0
        %v1875 = vlog2.pop %v1874
        %v1876 = vmul.f32 %v1875, 0.6931472
        %v1877 = vmul.f32 -0.5, %v1636
        %v1878 = vadd.f32 %v1877, 1.0
        %v1879 = vmul.f32 %v1878, %v1636
        %v1880 = vand.u32 2147483647, %v1636
        %vm1881 = vcmp.lt.f32.partialorder %v1880, 0.0004427343
        %v1882 = vsel %vm1881, %v1879, %v1876
        %v1883 = vadd.f32 %v1638, 1.0
        %v1884 = vlog2.pop %v1883
        %v1885 = vmul.f32 %v1884, 0.6931472
        %v1886 = vmul.f32 -0.5, %v1638
        %v1887 = vadd.f32 %v1886, 1.0
        %v1888 = vmul.f32 %v1887, %v1638
        %v1889 = vand.u32 2147483647, %v1638
        %vm1890 = vcmp.lt.f32.partialorder %v1889, 0.0004427343
        %v1891 = vsel %vm1890, %v1888, %v1885
        %v1892 = vadd.f32 %v1640, 1.0
        %v1893 = vlog2.pop %v1892
        %v1894 = vmul.f32 %v1893, 0.6931472
        %v1895 = vmul.f32 -0.5, %v1640
        %v1896 = vadd.f32 %v1895, 1.0
        %v1897 = vmul.f32 %v1896, %v1640
        %v1898 = vand.u32 2147483647, %v1640
        %vm1899 = vcmp.lt.f32.partialorder %v1898, 0.0004427343
        %v1900 = vsel %vm1899, %v1897, %v1894
        %v1901 = vadd.f32 %v1642, 1.0
        %v1902 = vlog2.pop %v1901
        %v1903 = vmul.f32 %v1902, 0.6931472
        %v1904 = vmul.f32 -0.5, %v1642
        %v1905 = vadd.f32 %v1904, 1.0
        %v1906 = vmul.f32 %v1905, %v1642
        %v1907 = vand.u32 2147483647, %v1642
        %vm1908 = vcmp.lt.f32.partialorder %v1907, 0.0004427343
        %v1909 = vsel %vm1908, %v1906, %v1903
        %v1910 = vadd.f32 %v1644, 1.0
        %v1911 = vlog2.pop %v1910
        %v1912 = vmul.f32 %v1911, 0.6931472
        %v1913 = vmul.f32 -0.5, %v1644
        %v1914 = vadd.f32 %v1913, 1.0
        %v1915 = vmul.f32 %v1914, %v1644
        %v1916 = vand.u32 2147483647, %v1644
        %vm1917 = vcmp.lt.f32.partialorder %v1916, 0.0004427343
        %v1918 = vsel %vm1917, %v1915, %v1912
        %v1919 = vadd.f32 %v1646, 1.0
        %v1920 = vlog2.pop %v1919
        %v1921 = vmul.f32 %v1920, 0.6931472
        %v1922 = vmul.f32 -0.5, %v1646
        %v1923 = vadd.f32 %v1922, 1.0
        %v1924 = vmul.f32 %v1923, %v1646
        %v1925 = vand.u32 2147483647, %v1646
        %vm1926 = vcmp.lt.f32.partialorder %v1925, 0.0004427343
        %v1927 = vsel %vm1926, %v1924, %v1921
        %v1928 = vadd.f32 %v1648, 1.0
        %v1929 = vlog2.pop %v1928
        %v1930 = vmul.f32 %v1929, 0.6931472
        %v1931 = vmul.f32 -0.5, %v1648
        %v1932 = vadd.f32 %v1931, 1.0
        %v1933 = vmul.f32 %v1932, %v1648
        %v1934 = vand.u32 2147483647, %v1648
        %vm1935 = vcmp.lt.f32.partialorder %v1934, 0.0004427343
        %v1936 = vsel %vm1935, %v1933, %v1930
        %v1937 = vmul.f32 %v1657, 0.01
        %v1938 = vmul.f32 %v1666, 0.01
        %v1939 = vmul.f32 %v1675, 0.01
        %v1940 = vmul.f32 %v1684, 0.01
        %v1941 = vmul.f32 %v1693, 0.01
        %v1942 = vmul.f32 %v1702, 0.01
        %v1943 = vmul.f32 %v1711, 0.01
        %v1944 = vmul.f32 %v1720, 0.01
        %v1945 = vmul.f32 %v1729, 0.01
        %v1946 = vmul.f32 %v1738, 0.01
        %v1947 = vmul.f32 %v1747, 0.01
        %v1948 = vmul.f32 %v1756, 0.01
        %v1949 = vmul.f32 %v1765, 0.01
        %v1950 = vmul.f32 %v1774, 0.01
        %v1951 = vmul.f32 %v1783, 0.01
        %v1952 = vmul.f32 %v1792, 0.01
        %v1953 = vmul.f32 %v1801, 0.01
        %v1954 = vmul.f32 %v1810, 0.01
        %v1955 = vmul.f32 %v1819, 0.01
        %v1956 = vmul.f32 %v1828, 0.01
        %v1957 = vmul.f32 %v1837, 0.01
        %v1958 = vmul.f32 %v1846, 0.01
        %v1959 = vmul.f32 %v1855, 0.01
        %v1960 = vmul.f32 %v1864, 0.01
        %v1961 = vmul.f32 %v1873, 0.01
        %v1962 = vmul.f32 %v1882, 0.01
        %v1963 = vmul.f32 %v1891, 0.01
        %v1964 = vmul.f32 %v1900, 0.01
        %v1965 = vmul.f32 %v1909, 0.01
        %v1966 = vmul.f32 %v1918, 0.01
        %v1967 = vmul.f32 %v1927, 0.01
        %v1968 = vmul.f32 %v1936, 0.01
        %v1969 = vsel %vm1553, %v1362, %v1937
        %v1970 = vsel %vm1554, %v1364, %v1938
        %v1971 = vsel %vm1555, %v1475, %v1939
        %v1972 = vsel %vm1556, %v1477, %v1940
        %v1973 = vsel %vm1557, %v1368, %v1941
        %v1974 = vsel %vm1558, %v1370, %v1942
        %v1975 = vsel %vm1559, %v1481, %v1943
        %v1976 = vsel %vm1560, %v1483, %v1944
        %v1977 = vsel %vm1561, %v1374, %v1945
        %v1978 = vsel %vm1562, %v1376, %v1946
        %v1979 = vsel %vm1563, %v1487, %v1947
        %v1980 = vsel %vm1564, %v1489, %v1948
        %v1981 = vsel %vm1565, %v1380, %v1949
        %v1982 = vsel %vm1566, %v1382, %v1950
        %v1983 = vsel %vm1567, %v1493, %v1951
        %v1984 = vsel %vm1568, %v1495, %v1952
        %v1985 = vsel %vm1569, %v1386, %v1953
        %v1986 = vsel %vm1570, %v1388, %v1954
        %v1987 = vsel %vm1571, %v1499, %v1955
        %v1988 = vsel %vm1572, %v1501, %v1956
        %v1989 = vsel %vm1573, %v1392, %v1957
        %v1990 = vsel %vm1574, %v1394, %v1958
        %v1991 = vsel %vm1575, %v1505, %v1959
        %v1992 = vsel %vm1576, %v1507, %v1960
        %v1993 = vsel %vm1577, %v1398, %v1961
        %v1994 = vsel %vm1578, %v1400, %v1962
        %v1995 = vsel %vm1579, %v1511, %v1963
        %v1996 = vsel %vm1580, %v1513, %v1964
        %v1997 = vsel %vm1581, %v1404, %v1965
        %v1998 = vsel %vm1582, %v1406, %v1966
        %v1999 = vsel %vm1583, %v1517, %v1967
        %v2000 = vsel %vm1584, %v1519, %v1968
        %s2001 = scalar_lea.vmem [#allocation2], 64
        %v2002 = vld [vmem:[%s2001] sm:$0xff]
        %v2003 = vld [vmem:[%s2001 + $0x8] sm:$0xff]
        %v2004 = vld [vmem:[%s2001 + $0x10] sm:$0xff]
        %v2005 = vld [vmem:[%s2001 + $0x18] sm:$0xff]
        %v2006 = vld [vmem:[%s2001 + $0x20] sm:$0xff]
        %v2007 = vld [vmem:[%s2001 + $0x28] sm:$0xff]
        %v2008 = vld [vmem:[%s2001 + $0x30] sm:$0xff]
        %v2009 = vld [vmem:[%s2001 + $0x38] sm:$0xff]
        %2010 = vset.pattern.permute.xlu0 2
        %2011 = vperm.xlu0 %2010, %v670
        %v2012 = vpop.permute.xlu0 %2011
        %2014 = vset.pattern.permute.xlu0 2
        %2015 = vperm.xlu0 %2014, %v671
        %v2016 = vpop.permute.xlu0 %2015
        %2018 = vset.pattern.permute.xlu0 2
        %2019 = vperm.xlu0 %2018, %v672
        %v2020 = vpop.permute.xlu0 %2019
        %2022 = vset.pattern.permute.xlu0 2
        %2023 = vperm.xlu0 %2022, %v673
        %v2024 = vpop.permute.xlu0 %2023
        %2026 = vset.pattern.permute.xlu0 2
        %2027 = vperm.xlu0 %2026, %v674
        %v2028 = vpop.permute.xlu0 %2027
        %2030 = vset.pattern.permute.xlu0 2
        %2031 = vperm.xlu0 %2030, %v675
        %v2032 = vpop.permute.xlu0 %2031
        %2034 = vset.pattern.permute.xlu0 2
        %2035 = vperm.xlu0 %2034, %v676
        %v2036 = vpop.permute.xlu0 %2035
        %2038 = vset.pattern.permute.xlu0 2
        %2039 = vperm.xlu0 %2038, %v677
        %v2040 = vpop.permute.xlu0 %2039
        %v2043 = vsel %vm1270, %v2002, 0
        %v2046 = vsel %vm1270, %v2003, 0
        %v2049 = vsel %vm1270, %v2004, 0
        %v2052 = vsel %vm1270, %v2005, 0
        %v2055 = vsel %vm1270, %v2006, 0
        %v2058 = vsel %vm1270, %v2007, 0
        %v2061 = vsel %vm1270, %v2008, 0
        %v2064 = vsel %vm1270, %v2009, 0
        %2066 = vmatprep.subr.mxu0 %v1970
        %2067 = vmatpush1.msra.mxu0 %v1969
        %2068 = vmatprep.subr.mxu0 %v1974
        %2069 = vmatpush1.msra.mxu0 %v1973
        %2070 = vmatprep.subr.mxu0 %v1978
        %2071 = vmatpush1.msra.mxu0 %v1977
        %2072 = vmatprep.subr.mxu0 %v1982
        %2073 = vmatpush1.msra.mxu0 %v1981
        %2074 = vmatprep.subr.mxu0 %v1986
        %2075 = vmatpush1.msra.mxu0 %v1985
        %2076 = vmatprep.subr.mxu0 %v1990
        %2077 = vmatpush1.msra.mxu0 %v1989
        %2078 = vmatprep.subr.mxu0 %v1994
        %2079 = vmatpush1.msra.mxu0 %v1993
        %2080 = vmatprep.subr.mxu0 %v1998
        %2081 = vmatpush1.msra.mxu0 %v1997
        %2082 = vmatprep.subr.mxu0 0.0
        %2083 = vmatpush1.msra.mxu0 0.0
        %2084 = vmatprep.subr.mxu0 0.0
        %2085 = vmatpush1.msra.mxu0 0.0
        %2086 = vmatprep.subr.mxu0 0.0
        %2087 = vmatpush1.msra.mxu0 0.0
        %2088 = vmatprep.subr.mxu0 0.0
        %2089 = vmatpush1.msra.mxu0 0.0
        %2090 = vmatprep.subr.mxu0 0.0
        %2091 = vmatpush1.msra.mxu0 0.0
        %2092 = vmatprep.subr.mxu0 0.0
        %2093 = vmatpush1.msra.mxu0 0.0
        %2094 = vmatprep.subr.mxu0 0.0
        %2095 = vmatpush1.msra.mxu0 0.0
        %2096 = vmatprep.subr.mxu0 0.0
        %2097 = vmatpush1.msra.mxu0 0.0
        %2098 = vmatprep.subr.mxu0 0.0
        %2099 = vmatpush1.msra.mxu0 0.0
        %2100 = vmatprep.subr.mxu0 0.0
        %2101 = vmatpush1.msra.mxu0 0.0
        %2102 = vmatprep.subr.mxu0 0.0
        %2103 = vmatpush1.msra.mxu0 0.0
        %2104 = vmatprep.subr.mxu0 0.0
        %2105 = vmatpush1.msra.mxu0 0.0
        %2106 = vmatprep.subr.mxu0 0.0
        %2107 = vmatpush1.msra.mxu0 0.0
        %2108 = vmatprep.subr.mxu0 0.0
        %2109 = vmatpush1.msra.mxu0 0.0
        %2110 = vmatprep.subr.mxu0 0.0
        %2111 = vmatpush1.msra.mxu0 0.0
        %2112 = vmatprep.subr.mxu0 0.0
        %2113 = vmatpush1.msra.mxu0 0.0
        %2114 = vmatprep.subr.mxu0 0.0
        %2115 = vmatpush1.msra.mxu0 0.0
        %2116 = vmatprep.subr.mxu0 0.0
        %2117 = vmatpush1.msra.mxu0 0.0
        %2118 = vmatprep.subr.mxu0 0.0
        %2119 = vmatpush1.msra.mxu0 0.0
        %2120 = vmatprep.subr.mxu0 0.0
        %2121 = vmatpush1.msra.mxu0 0.0
        %2122 = vmatprep.subr.mxu0 0.0
        %2123 = vmatpush1.msra.mxu0 0.0
        %2124 = vmatprep.subr.mxu0 0.0
        %2125 = vmatpush1.msra.mxu0 0.0
        %2126 = vmatprep.subr.mxu0 0.0
        %2127 = vmatpush1.msra.mxu0 0.0
        %2128 = vmatprep.subr.mxu0 0.0
        %2129 = vmatpush1.msra.mxu0 0.0
        %2130 = vmatprep.mubr.f32.mxu0 0.0
        %2131 = vmatmul.mubr.f32.gmra.mrb[0].mxu0 %v2043
        %v2132 = vpop.f32.mrb[0].mxu0
        %v2133 = vadd.f32 %v2012, %v2132
        %v2134 = vpop.f32.mrb[0].mxu0
        %v2135 = vadd.f32 %v2012, %v2134
        %2136 = vmatprep.mubr.f32.mxu0 0.0
        %2137 = vmatmul.mubr.f32.gmra.mrb[0].mxu0 %v2046
        %v2138 = vpop.f32.mrb[0].mxu0
        %v2139 = vadd.f32 %v2016, %v2138
        %v2140 = vpop.f32.mrb[0].mxu0
        %v2141 = vadd.f32 %v2016, %v2140
        %2142 = vmatprep.mubr.f32.mxu0 0.0
        %2143 = vmatmul.mubr.f32.gmra.mrb[0].mxu0 %v2049
        %v2144 = vpop.f32.mrb[0].mxu0
        %v2145 = vadd.f32 %v2020, %v2144
        %v2146 = vpop.f32.mrb[0].mxu0
        %v2147 = vadd.f32 %v2020, %v2146
        %2148 = vmatprep.mubr.f32.mxu0 0.0
        %2149 = vmatmul.mubr.f32.gmra.mrb[0].mxu0 %v2052
        %v2150 = vpop.f32.mrb[0].mxu0
        %v2151 = vadd.f32 %v2024, %v2150
        %v2152 = vpop.f32.mrb[0].mxu0
        %v2153 = vadd.f32 %v2024, %v2152
        %2154 = vmatprep.mubr.f32.mxu0 0.0
        %2155 = vmatmul.mubr.f32.gmra.mrb[0].mxu0 %v2055
        %v2156 = vpop.f32.mrb[0].mxu0
        %v2157 = vadd.f32 %v2028, %v2156
        %v2158 = vpop.f32.mrb[0].mxu0
        %v2159 = vadd.f32 %v2028, %v2158
        %2160 = vmatprep.mubr.f32.mxu0 0.0
        %2161 = vmatmul.mubr.f32.gmra.mrb[0].mxu0 %v2058
        %v2162 = vpop.f32.mrb[0].mxu0
        %v2163 = vadd.f32 %v2032, %v2162
        %v2164 = vpop.f32.mrb[0].mxu0
        %v2165 = vadd.f32 %v2032, %v2164
        %2166 = vmatprep.mubr.f32.mxu0 0.0
        %2167 = vmatmul.mubr.f32.gmra.mrb[0].mxu0 %v2061
        %v2168 = vpop.f32.mrb[0].mxu0
        %v2169 = vadd.f32 %v2036, %v2168
        %v2170 = vpop.f32.mrb[0].mxu0
        %v2171 = vadd.f32 %v2036, %v2170
        %2172 = vmatprep.mubr.f32.mxu0 0.0
        %2173 = vmatmul.mubr.f32.gmra.mrb[0].mxu0 %v2064
        %v2174 = vpop.f32.mrb[0].mxu0
        %v2175 = vadd.f32 %v2040, %v2174
        %v2176 = vpop.f32.mrb[0].mxu0
        %v2177 = vadd.f32 %v2040, %v2176
        %2178 = vdwg.mxu0
        %2179 = vmatprep.subr.mxu0 %v1972
        %2180 = vmatpush1.msra.mxu0 %v1971
        %2181 = vmatprep.subr.mxu0 %v1976
        %2182 = vmatpush1.msra.mxu0 %v1975
        %2183 = vmatprep.subr.mxu0 %v1980
        %2184 = vmatpush1.msra.mxu0 %v1979
        %2185 = vmatprep.subr.mxu0 %v1984
        %2186 = vmatpush1.msra.mxu0 %v1983
        %2187 = vmatprep.subr.mxu0 %v1988
        %2188 = vmatpush1.msra.mxu0 %v1987
        %2189 = vmatprep.subr.mxu0 %v1992
        %2190 = vmatpush1.msra.mxu0 %v1991
        %2191 = vmatprep.subr.mxu0 %v1996
        %2192 = vmatpush1.msra.mxu0 %v1995
        %2193 = vmatprep.subr.mxu0 %v2000
        %2194 = vmatpush1.msra.mxu0 %v1999
        %2195 = vmatprep.subr.mxu0 0.0
        %2196 = vmatpush1.msra.mxu0 0.0
        %2197 = vmatprep.subr.mxu0 0.0
        %2198 = vmatpush1.msra.mxu0 0.0
        %2199 = vmatprep.subr.mxu0 0.0
        %2200 = vmatpush1.msra.mxu0 0.0
        %2201 = vmatprep.subr.mxu0 0.0
        %2202 = vmatpush1.msra.mxu0 0.0
        %2203 = vmatprep.subr.mxu0 0.0
        %2204 = vmatpush1.msra.mxu0 0.0
        %2205 = vmatprep.subr.mxu0 0.0
        %2206 = vmatpush1.msra.mxu0 0.0
        %2207 = vmatprep.subr.mxu0 0.0
        %2208 = vmatpush1.msra.mxu0 0.0
        %2209 = vmatprep.subr.mxu0 0.0
        %2210 = vmatpush1.msra.mxu0 0.0
        %2211 = vmatprep.subr.mxu0 0.0
        %2212 = vmatpush1.msra.mxu0 0.0
        %2213 = vmatprep.subr.mxu0 0.0
        %2214 = vmatpush1.msra.mxu0 0.0
        %2215 = vmatprep.subr.mxu0 0.0
        %2216 = vmatpush1.msra.mxu0 0.0
        %2217 = vmatprep.subr.mxu0 0.0
        %2218 = vmatpush1.msra.mxu0 0.0
        %2219 = vmatprep.subr.mxu0 0.0
        %2220 = vmatpush1.msra.mxu0 0.0
        %2221 = vmatprep.subr.mxu0 0.0
        %2222 = vmatpush1.msra.mxu0 0.0
        %2223 = vmatprep.subr.mxu0 0.0
        %2224 = vmatpush1.msra.mxu0 0.0
        %2225 = vmatprep.subr.mxu0 0.0
        %2226 = vmatpush1.msra.mxu0 0.0
        %2227 = vmatprep.subr.mxu0 0.0
        %2228 = vmatpush1.msra.mxu0 0.0
        %2229 = vmatprep.subr.mxu0 0.0
        %2230 = vmatpush1.msra.mxu0 0.0
        %2231 = vmatprep.subr.mxu0 0.0
        %2232 = vmatpush1.msra.mxu0 0.0
        %2233 = vmatprep.subr.mxu0 0.0
        %2234 = vmatpush1.msra.mxu0 0.0
        %2235 = vmatprep.subr.mxu0 0.0
        %2236 = vmatpush1.msra.mxu0 0.0
        %2237 = vmatprep.subr.mxu0 0.0
        %2238 = vmatpush1.msra.mxu0 0.0
        %2239 = vmatprep.subr.mxu0 0.0
        %2240 = vmatpush1.msra.mxu0 0.0
        %2241 = vmatprep.subr.mxu0 0.0
        %2242 = vmatpush1.msra.mxu0 0.0
        %2243 = vmatprep.mubr.f32.mxu0 0.0
        %2244 = vmatmul.mubr.f32.gmra.mrb[0].mxu0 %v2043
        %v2245 = vpop.f32.mrb[0].mxu0
        %v2246 = vadd.f32 %v2012, %v2245
        %v2247 = vpop.f32.mrb[0].mxu0
        %v2248 = vadd.f32 %v2012, %v2247
        %2249 = vmatprep.mubr.f32.mxu0 0.0
        %2250 = vmatmul.mubr.f32.gmra.mrb[0].mxu0 %v2046
        %v2251 = vpop.f32.mrb[0].mxu0
        %v2252 = vadd.f32 %v2016, %v2251
        %v2253 = vpop.f32.mrb[0].mxu0
        %v2254 = vadd.f32 %v2016, %v2253
        %2255 = vmatprep.mubr.f32.mxu0 0.0
        %2256 = vmatmul.mubr.f32.gmra.mrb[0].mxu0 %v2049
        %v2257 = vpop.f32.mrb[0].mxu0
        %v2258 = vadd.f32 %v2020, %v2257
        %v2259 = vpop.f32.mrb[0].mxu0
        %v2260 = vadd.f32 %v2020, %v2259
        %2261 = vmatprep.mubr.f32.mxu0 0.0
        %2262 = vmatmul.mubr.f32.gmra.mrb[0].mxu0 %v2052
        %v2263 = vpop.f32.mrb[0].mxu0
        %v2264 = vadd.f32 %v2024, %v2263
        %v2265 = vpop.f32.mrb[0].mxu0
        %v2266 = vadd.f32 %v2024, %v2265
        %2267 = vmatprep.mubr.f32.mxu0 0.0
        %2268 = vmatmul.mubr.f32.gmra.mrb[0].mxu0 %v2055
        %v2269 = vpop.f32.mrb[0].mxu0
        %v2270 = vadd.f32 %v2028, %v2269
        %v2271 = vpop.f32.mrb[0].mxu0
        %v2272 = vadd.f32 %v2028, %v2271
        %2273 = vmatprep.mubr.f32.mxu0 0.0
        %2274 = vmatmul.mubr.f32.gmra.mrb[0].mxu0 %v2058
        %v2275 = vpop.f32.mrb[0].mxu0
        %v2276 = vadd.f32 %v2032, %v2275
        %v2277 = vpop.f32.mrb[0].mxu0
        %v2278 = vadd.f32 %v2032, %v2277
        %2279 = vmatprep.mubr.f32.mxu0 0.0
        %2280 = vmatmul.mubr.f32.gmra.mrb[0].mxu0 %v2061
        %v2281 = vpop.f32.mrb[0].mxu0
        %v2282 = vadd.f32 %v2036, %v2281
        %v2283 = vpop.f32.mrb[0].mxu0
        %v2284 = vadd.f32 %v2036, %v2283
        %2285 = vmatprep.mubr.f32.mxu0 0.0
        %2286 = vmatmul.mubr.f32.gmra.mrb[0].mxu0 %v2064
        %v2287 = vpop.f32.mrb[0].mxu0
        %v2288 = vadd.f32 %v2040, %v2287
        %v2289 = vpop.f32.mrb[0].mxu0
        %v2290 = vadd.f32 %v2040, %v2289
        %2291 = vdwg.mxu0
        %v2292 = vmul.f32 %v2133, 100.0
        %v2293 = vmul.f32 %v2135, 100.0
        %v2294 = vmul.f32 %v2246, 100.0
        %v2295 = vmul.f32 %v2248, 100.0
        %v2296 = vmul.f32 %v2139, 100.0
        %v2297 = vmul.f32 %v2141, 100.0
        %v2298 = vmul.f32 %v2252, 100.0
        %v2299 = vmul.f32 %v2254, 100.0
        %v2300 = vmul.f32 %v2145, 100.0
        %v2301 = vmul.f32 %v2147, 100.0
        %v2302 = vmul.f32 %v2258, 100.0
        %v2303 = vmul.f32 %v2260, 100.0
        %v2304 = vmul.f32 %v2151, 100.0
        %v2305 = vmul.f32 %v2153, 100.0
        %v2306 = vmul.f32 %v2264, 100.0
        %v2307 = vmul.f32 %v2266, 100.0
        %v2308 = vmul.f32 %v2157, 100.0
        %v2309 = vmul.f32 %v2159, 100.0
        %v2310 = vmul.f32 %v2270, 100.0
        %v2311 = vmul.f32 %v2272, 100.0
        %v2312 = vmul.f32 %v2163, 100.0
        %v2313 = vmul.f32 %v2165, 100.0
        %v2314 = vmul.f32 %v2276, 100.0
        %v2315 = vmul.f32 %v2278, 100.0
        %v2316 = vmul.f32 %v2169, 100.0
        %v2317 = vmul.f32 %v2171, 100.0
        %v2318 = vmul.f32 %v2282, 100.0
        %v2319 = vmul.f32 %v2284, 100.0
        %v2320 = vmul.f32 %v2175, 100.0
        %v2321 = vmul.f32 %v2177, 100.0
        %v2322 = vmul.f32 %v2288, 100.0
        %v2323 = vmul.f32 %v2290, 100.0
        %vm2324 = vcmp.gt.f32.partialorder %v2292, 20.0
        %vm2325 = vcmp.gt.f32.partialorder %v2293, 20.0
        %vm2326 = vcmp.gt.f32.partialorder %v2294, 20.0
        %vm2327 = vcmp.gt.f32.partialorder %v2295, 20.0
        %vm2328 = vcmp.gt.f32.partialorder %v2296, 20.0
        %vm2329 = vcmp.gt.f32.partialorder %v2297, 20.0
        %vm2330 = vcmp.gt.f32.partialorder %v2298, 20.0
        %vm2331 = vcmp.gt.f32.partialorder %v2299, 20.0
        %vm2332 = vcmp.gt.f32.partialorder %v2300, 20.0
        %vm2333 = vcmp.gt.f32.partialorder %v2301, 20.0
        %vm2334 = vcmp.gt.f32.partialorder %v2302, 20.0
        %vm2335 = vcmp.gt.f32.partialorder %v2303, 20.0
        %vm2336 = vcmp.gt.f32.partialorder %v2304, 20.0
        %vm2337 = vcmp.gt.f32.partialorder %v2305, 20.0
        %vm2338 = vcmp.gt.f32.partialorder %v2306, 20.0
        %vm2339 = vcmp.gt.f32.partialorder %v2307, 20.0
        %vm2340 = vcmp.gt.f32.partialorder %v2308, 20.0
        %vm2341 = vcmp.gt.f32.partialorder %v2309, 20.0
        %vm2342 = vcmp.gt.f32.partialorder %v2310, 20.0
        %vm2343 = vcmp.gt.f32.partialorder %v2311, 20.0
        %vm2344 = vcmp.gt.f32.partialorder %v2312, 20.0
        %vm2345 = vcmp.gt.f32.partialorder %v2313, 20.0
        %vm2346 = vcmp.gt.f32.partialorder %v2314, 20.0
        %vm2347 = vcmp.gt.f32.partialorder %v2315, 20.0
        %vm2348 = vcmp.gt.f32.partialorder %v2316, 20.0
        %vm2349 = vcmp.gt.f32.partialorder %v2317, 20.0
        %vm2350 = vcmp.gt.f32.partialorder %v2318, 20.0
        %vm2351 = vcmp.gt.f32.partialorder %v2319, 20.0
        %vm2352 = vcmp.gt.f32.partialorder %v2320, 20.0
        %vm2353 = vcmp.gt.f32.partialorder %v2321, 20.0
        %vm2354 = vcmp.gt.f32.partialorder %v2322, 20.0
        %vm2355 = vcmp.gt.f32.partialorder %v2323, 20.0
        %v2356 = vmul.f32 %v2292, 1.442695
        %v2357 = vpow.pop %v2356
        %v2358 = vmul.f32 %v2293, 1.442695
        %v2359 = vpow.pop %v2358
        %v2360 = vmul.f32 %v2294, 1.442695
        %v2361 = vpow.pop %v2360
        %v2362 = vmul.f32 %v2295, 1.442695
        %v2363 = vpow.pop %v2362
        %v2364 = vmul.f32 %v2296, 1.442695
        %v2365 = vpow.pop %v2364
        %v2366 = vmul.f32 %v2297, 1.442695
        %v2367 = vpow.pop %v2366
        %v2368 = vmul.f32 %v2298, 1.442695
        %v2369 = vpow.pop %v2368
        %v2370 = vmul.f32 %v2299, 1.442695
        %v2371 = vpow.pop %v2370
        %v2372 = vmul.f32 %v2300, 1.442695
        %v2373 = vpow.pop %v2372
        %v2374 = vmul.f32 %v2301, 1.442695
        %v2375 = vpow.pop %v2374
        %v2376 = vmul.f32 %v2302, 1.442695
        %v2377 = vpow.pop %v2376
        %v2378 = vmul.f32 %v2303, 1.442695
        %v2379 = vpow.pop %v2378
        %v2380 = vmul.f32 %v2304, 1.442695
        %v2381 = vpow.pop %v2380
        %v2382 = vmul.f32 %v2305, 1.442695
        %v2383 = vpow.pop %v2382
        %v2384 = vmul.f32 %v2306, 1.442695
        %v2385 = vpow.pop %v2384
        %v2386 = vmul.f32 %v2307, 1.442695
        %v2387 = vpow.pop %v2386
        %v2388 = vmul.f32 %v2308, 1.442695
        %v2389 = vpow.pop %v2388
        %v2390 = vmul.f32 %v2309, 1.442695
        %v2391 = vpow.pop %v2390
        %v2392 = vmul.f32 %v2310, 1.442695
        %v2393 = vpow.pop %v2392
        %v2394 = vmul.f32 %v2311, 1.442695
        %v2395 = vpow.pop %v2394
        %v2396 = vmul.f32 %v2312, 1.442695
        %v2397 = vpow.pop %v2396
        %v2398 = vmul.f32 %v2313, 1.442695
        %v2399 = vpow.pop %v2398
        %v2400 = vmul.f32 %v2314, 1.442695
        %v2401 = vpow.pop %v2400
        %v2402 = vmul.f32 %v2315, 1.442695
        %v2403 = vpow.pop %v2402
        %v2404 = vmul.f32 %v2316, 1.442695
        %v2405 = vpow.pop %v2404
        %v2406 = vmul.f32 %v2317, 1.442695
        %v2407 = vpow.pop %v2406
        %v2408 = vmul.f32 %v2318, 1.442695
        %v2409 = vpow.pop %v2408
        %v2410 = vmul.f32 %v2319, 1.442695
        %v2411 = vpow.pop %v2410
        %v2412 = vmul.f32 %v2320, 1.442695
        %v2413 = vpow.pop %v2412
        %v2414 = vmul.f32 %v2321, 1.442695
        %v2415 = vpow.pop %v2414
        %v2416 = vmul.f32 %v2322, 1.442695
        %v2417 = vpow.pop %v2416
        %v2418 = vmul.f32 %v2323, 1.442695
        %v2419 = vpow.pop %v2418
        %v2420 = vadd.f32 %v2357, 1.0
        %v2421 = vlog2.pop %v2420
        %v2422 = vmul.f32 %v2421, 0.6931472
        %v2423 = vmul.f32 -0.5, %v2357
        %v2424 = vadd.f32 %v2423, 1.0
        %v2425 = vmul.f32 %v2424, %v2357
        %v2426 = vand.u32 2147483647, %v2357
        %vm2427 = vcmp.lt.f32.partialorder %v2426, 0.0004427343
        %v2428 = vsel %vm2427, %v2425, %v2422
        %v2429 = vadd.f32 %v2359, 1.0
        %v2430 = vlog2.pop %v2429
        %v2431 = vmul.f32 %v2430, 0.6931472
        %v2432 = vmul.f32 -0.5, %v2359
        %v2433 = vadd.f32 %v2432, 1.0
        %v2434 = vmul.f32 %v2433, %v2359
        %v2435 = vand.u32 2147483647, %v2359
        %vm2436 = vcmp.lt.f32.partialorder %v2435, 0.0004427343
        %v2437 = vsel %vm2436, %v2434, %v2431
        %v2438 = vadd.f32 %v2361, 1.0
        %v2439 = vlog2.pop %v2438
        %v2440 = vmul.f32 %v2439, 0.6931472
        %v2441 = vmul.f32 -0.5, %v2361
        %v2442 = vadd.f32 %v2441, 1.0
        %v2443 = vmul.f32 %v2442, %v2361
        %v2444 = vand.u32 2147483647, %v2361
        %vm2445 = vcmp.lt.f32.partialorder %v2444, 0.0004427343
        %v2446 = vsel %vm2445, %v2443, %v2440
        %v2447 = vadd.f32 %v2363, 1.0
        %v2448 = vlog2.pop %v2447
        %v2449 = vmul.f32 %v2448, 0.6931472
        %v2450 = vmul.f32 -0.5, %v2363
        %v2451 = vadd.f32 %v2450, 1.0
        %v2452 = vmul.f32 %v2451, %v2363
        %v2453 = vand.u32 2147483647, %v2363
        %vm2454 = vcmp.lt.f32.partialorder %v2453, 0.0004427343
        %v2455 = vsel %vm2454, %v2452, %v2449
        %v2456 = vadd.f32 %v2365, 1.0
        %v2457 = vlog2.pop %v2456
        %v2458 = vmul.f32 %v2457, 0.6931472
        %v2459 = vmul.f32 -0.5, %v2365
        %v2460 = vadd.f32 %v2459, 1.0
        %v2461 = vmul.f32 %v2460, %v2365
        %v2462 = vand.u32 2147483647, %v2365
        %vm2463 = vcmp.lt.f32.partialorder %v2462, 0.0004427343
        %v2464 = vsel %vm2463, %v2461, %v2458
        %v2465 = vadd.f32 %v2367, 1.0
        %v2466 = vlog2.pop %v2465
        %v2467 = vmul.f32 %v2466, 0.6931472
        %v2468 = vmul.f32 -0.5, %v2367
        %v2469 = vadd.f32 %v2468, 1.0
        %v2470 = vmul.f32 %v2469, %v2367
        %v2471 = vand.u32 2147483647, %v2367
        %vm2472 = vcmp.lt.f32.partialorder %v2471, 0.0004427343
        %v2473 = vsel %vm2472, %v2470, %v2467
        %v2474 = vadd.f32 %v2369, 1.0
        %v2475 = vlog2.pop %v2474
        %v2476 = vmul.f32 %v2475, 0.6931472
        %v2477 = vmul.f32 -0.5, %v2369
        %v2478 = vadd.f32 %v2477, 1.0
        %v2479 = vmul.f32 %v2478, %v2369
        %v2480 = vand.u32 2147483647, %v2369
        %vm2481 = vcmp.lt.f32.partialorder %v2480, 0.0004427343
        %v2482 = vsel %vm2481, %v2479, %v2476
        %v2483 = vadd.f32 %v2371, 1.0
        %v2484 = vlog2.pop %v2483
        %v2485 = vmul.f32 %v2484, 0.6931472
        %v2486 = vmul.f32 -0.5, %v2371
        %v2487 = vadd.f32 %v2486, 1.0
        %v2488 = vmul.f32 %v2487, %v2371
        %v2489 = vand.u32 2147483647, %v2371
        %vm2490 = vcmp.lt.f32.partialorder %v2489, 0.0004427343
        %v2491 = vsel %vm2490, %v2488, %v2485
        %v2492 = vadd.f32 %v2373, 1.0
        %v2493 = vlog2.pop %v2492
        %v2494 = vmul.f32 %v2493, 0.6931472
        %v2495 = vmul.f32 -0.5, %v2373
        %v2496 = vadd.f32 %v2495, 1.0
        %v2497 = vmul.f32 %v2496, %v2373
        %v2498 = vand.u32 2147483647, %v2373
        %vm2499 = vcmp.lt.f32.partialorder %v2498, 0.0004427343
        %v2500 = vsel %vm2499, %v2497, %v2494
        %v2501 = vadd.f32 %v2375, 1.0
        %v2502 = vlog2.pop %v2501
        %v2503 = vmul.f32 %v2502, 0.6931472
        %v2504 = vmul.f32 -0.5, %v2375
        %v2505 = vadd.f32 %v2504, 1.0
        %v2506 = vmul.f32 %v2505, %v2375
        %v2507 = vand.u32 2147483647, %v2375
        %vm2508 = vcmp.lt.f32.partialorder %v2507, 0.0004427343
        %v2509 = vsel %vm2508, %v2506, %v2503
        %v2510 = vadd.f32 %v2377, 1.0
        %v2511 = vlog2.pop %v2510
        %v2512 = vmul.f32 %v2511, 0.6931472
        %v2513 = vmul.f32 -0.5, %v2377
        %v2514 = vadd.f32 %v2513, 1.0
        %v2515 = vmul.f32 %v2514, %v2377
        %v2516 = vand.u32 2147483647, %v2377
        %vm2517 = vcmp.lt.f32.partialorder %v2516, 0.0004427343
        %v2518 = vsel %vm2517, %v2515, %v2512
        %v2519 = vadd.f32 %v2379, 1.0
        %v2520 = vlog2.pop %v2519
        %v2521 = vmul.f32 %v2520, 0.6931472
        %v2522 = vmul.f32 -0.5, %v2379
        %v2523 = vadd.f32 %v2522, 1.0
        %v2524 = vmul.f32 %v2523, %v2379
        %v2525 = vand.u32 2147483647, %v2379
        %vm2526 = vcmp.lt.f32.partialorder %v2525, 0.0004427343
        %v2527 = vsel %vm2526, %v2524, %v2521
        %v2528 = vadd.f32 %v2381, 1.0
        %v2529 = vlog2.pop %v2528
        %v2530 = vmul.f32 %v2529, 0.6931472
        %v2531 = vmul.f32 -0.5, %v2381
        %v2532 = vadd.f32 %v2531, 1.0
        %v2533 = vmul.f32 %v2532, %v2381
        %v2534 = vand.u32 2147483647, %v2381
        %vm2535 = vcmp.lt.f32.partialorder %v2534, 0.0004427343
        %v2536 = vsel %vm2535, %v2533, %v2530
        %v2537 = vadd.f32 %v2383, 1.0
        %v2538 = vlog2.pop %v2537
        %v2539 = vmul.f32 %v2538, 0.6931472
        %v2540 = vmul.f32 -0.5, %v2383
        %v2541 = vadd.f32 %v2540, 1.0
        %v2542 = vmul.f32 %v2541, %v2383
        %v2543 = vand.u32 2147483647, %v2383
        %vm2544 = vcmp.lt.f32.partialorder %v2543, 0.0004427343
        %v2545 = vsel %vm2544, %v2542, %v2539
        %v2546 = vadd.f32 %v2385, 1.0
        %v2547 = vlog2.pop %v2546
        %v2548 = vmul.f32 %v2547, 0.6931472
        %v2549 = vmul.f32 -0.5, %v2385
        %v2550 = vadd.f32 %v2549, 1.0
        %v2551 = vmul.f32 %v2550, %v2385
        %v2552 = vand.u32 2147483647, %v2385
        %vm2553 = vcmp.lt.f32.partialorder %v2552, 0.0004427343
        %v2554 = vsel %vm2553, %v2551, %v2548
        %v2555 = vadd.f32 %v2387, 1.0
        %v2556 = vlog2.pop %v2555
        %v2557 = vmul.f32 %v2556, 0.6931472
        %v2558 = vmul.f32 -0.5, %v2387
        %v2559 = vadd.f32 %v2558, 1.0
        %v2560 = vmul.f32 %v2559, %v2387
        %v2561 = vand.u32 2147483647, %v2387
        %vm2562 = vcmp.lt.f32.partialorder %v2561, 0.0004427343
        %v2563 = vsel %vm2562, %v2560, %v2557
        %v2564 = vadd.f32 %v2389, 1.0
        %v2565 = vlog2.pop %v2564
        %v2566 = vmul.f32 %v2565, 0.6931472
        %v2567 = vmul.f32 -0.5, %v2389
        %v2568 = vadd.f32 %v2567, 1.0
        %v2569 = vmul.f32 %v2568, %v2389
        %v2570 = vand.u32 2147483647, %v2389
        %vm2571 = vcmp.lt.f32.partialorder %v2570, 0.0004427343
        %v2572 = vsel %vm2571, %v2569, %v2566
        %v2573 = vadd.f32 %v2391, 1.0
        %v2574 = vlog2.pop %v2573
        %v2575 = vmul.f32 %v2574, 0.6931472
        %v2576 = vmul.f32 -0.5, %v2391
        %v2577 = vadd.f32 %v2576, 1.0
        %v2578 = vmul.f32 %v2577, %v2391
        %v2579 = vand.u32 2147483647, %v2391
        %vm2580 = vcmp.lt.f32.partialorder %v2579, 0.0004427343
        %v2581 = vsel %vm2580, %v2578, %v2575
        %v2582 = vadd.f32 %v2393, 1.0
        %v2583 = vlog2.pop %v2582
        %v2584 = vmul.f32 %v2583, 0.6931472
        %v2585 = vmul.f32 -0.5, %v2393
        %v2586 = vadd.f32 %v2585, 1.0
        %v2587 = vmul.f32 %v2586, %v2393
        %v2588 = vand.u32 2147483647, %v2393
        %vm2589 = vcmp.lt.f32.partialorder %v2588, 0.0004427343
        %v2590 = vsel %vm2589, %v2587, %v2584
        %v2591 = vadd.f32 %v2395, 1.0
        %v2592 = vlog2.pop %v2591
        %v2593 = vmul.f32 %v2592, 0.6931472
        %v2594 = vmul.f32 -0.5, %v2395
        %v2595 = vadd.f32 %v2594, 1.0
        %v2596 = vmul.f32 %v2595, %v2395
        %v2597 = vand.u32 2147483647, %v2395
        %vm2598 = vcmp.lt.f32.partialorder %v2597, 0.0004427343
        %v2599 = vsel %vm2598, %v2596, %v2593
        %v2600 = vadd.f32 %v2397, 1.0
        %v2601 = vlog2.pop %v2600
        %v2602 = vmul.f32 %v2601, 0.6931472
        %v2603 = vmul.f32 -0.5, %v2397
        %v2604 = vadd.f32 %v2603, 1.0
        %v2605 = vmul.f32 %v2604, %v2397
        %v2606 = vand.u32 2147483647, %v2397
        %vm2607 = vcmp.lt.f32.partialorder %v2606, 0.0004427343
        %v2608 = vsel %vm2607, %v2605, %v2602
        %v2609 = vadd.f32 %v2399, 1.0
        %v2610 = vlog2.pop %v2609
        %v2611 = vmul.f32 %v2610, 0.6931472
        %v2612 = vmul.f32 -0.5, %v2399
        %v2613 = vadd.f32 %v2612, 1.0
        %v2614 = vmul.f32 %v2613, %v2399
        %v2615 = vand.u32 2147483647, %v2399
        %vm2616 = vcmp.lt.f32.partialorder %v2615, 0.0004427343
        %v2617 = vsel %vm2616, %v2614, %v2611
        %v2618 = vadd.f32 %v2401, 1.0
        %v2619 = vlog2.pop %v2618
        %v2620 = vmul.f32 %v2619, 0.6931472
        %v2621 = vmul.f32 -0.5, %v2401
        %v2622 = vadd.f32 %v2621, 1.0
        %v2623 = vmul.f32 %v2622, %v2401
        %v2624 = vand.u32 2147483647, %v2401
        %vm2625 = vcmp.lt.f32.partialorder %v2624, 0.0004427343
        %v2626 = vsel %vm2625, %v2623, %v2620
        %v2627 = vadd.f32 %v2403, 1.0
        %v2628 = vlog2.pop %v2627
        %v2629 = vmul.f32 %v2628, 0.6931472
        %v2630 = vmul.f32 -0.5, %v2403
        %v2631 = vadd.f32 %v2630, 1.0
        %v2632 = vmul.f32 %v2631, %v2403
        %v2633 = vand.u32 2147483647, %v2403
        %vm2634 = vcmp.lt.f32.partialorder %v2633, 0.0004427343
        %v2635 = vsel %vm2634, %v2632, %v2629
        %v2636 = vadd.f32 %v2405, 1.0
        %v2637 = vlog2.pop %v2636
        %v2638 = vmul.f32 %v2637, 0.6931472
        %v2639 = vmul.f32 -0.5, %v2405
        %v2640 = vadd.f32 %v2639, 1.0
        %v2641 = vmul.f32 %v2640, %v2405
        %v2642 = vand.u32 2147483647, %v2405
        %vm2643 = vcmp.lt.f32.partialorder %v2642, 0.0004427343
        %v2644 = vsel %vm2643, %v2641, %v2638
        %v2645 = vadd.f32 %v2407, 1.0
        %v2646 = vlog2.pop %v2645
        %v2647 = vmul.f32 %v2646, 0.6931472
        %v2648 = vmul.f32 -0.5, %v2407
        %v2649 = vadd.f32 %v2648, 1.0
        %v2650 = vmul.f32 %v2649, %v2407
        %v2651 = vand.u32 2147483647, %v2407
        %vm2652 = vcmp.lt.f32.partialorder %v2651, 0.0004427343
        %v2653 = vsel %vm2652, %v2650, %v2647
        %v2654 = vadd.f32 %v2409, 1.0
        %v2655 = vlog2.pop %v2654
        %v2656 = vmul.f32 %v2655, 0.6931472
        %v2657 = vmul.f32 -0.5, %v2409
        %v2658 = vadd.f32 %v2657, 1.0
        %v2659 = vmul.f32 %v2658, %v2409
        %v2660 = vand.u32 2147483647, %v2409
        %vm2661 = vcmp.lt.f32.partialorder %v2660, 0.0004427343
        %v2662 = vsel %vm2661, %v2659, %v2656
        %v2663 = vadd.f32 %v2411, 1.0
        %v2664 = vlog2.pop %v2663
        %v2665 = vmul.f32 %v2664, 0.6931472
        %v2666 = vmul.f32 -0.5, %v2411
        %v2667 = vadd.f32 %v2666, 1.0
        %v2668 = vmul.f32 %v2667, %v2411
        %v2669 = vand.u32 2147483647, %v2411
        %vm2670 = vcmp.lt.f32.partialorder %v2669, 0.0004427343
        %v2671 = vsel %vm2670, %v2668, %v2665
        %v2672 = vadd.f32 %v2413, 1.0
        %v2673 = vlog2.pop %v2672
        %v2674 = vmul.f32 %v2673, 0.6931472
        %v2675 = vmul.f32 -0.5, %v2413
        %v2676 = vadd.f32 %v2675, 1.0
        %v2677 = vmul.f32 %v2676, %v2413
        %v2678 = vand.u32 2147483647, %v2413
        %vm2679 = vcmp.lt.f32.partialorder %v2678, 0.0004427343
        %v2680 = vsel %vm2679, %v2677, %v2674
        %v2681 = vadd.f32 %v2415, 1.0
        %v2682 = vlog2.pop %v2681
        %v2683 = vmul.f32 %v2682, 0.6931472
        %v2684 = vmul.f32 -0.5, %v2415
        %v2685 = vadd.f32 %v2684, 1.0
        %v2686 = vmul.f32 %v2685, %v2415
        %v2687 = vand.u32 2147483647, %v2415
        %vm2688 = vcmp.lt.f32.partialorder %v2687, 0.0004427343
        %v2689 = vsel %vm2688, %v2686, %v2683
        %v2690 = vadd.f32 %v2417, 1.0
        %v2691 = vlog2.pop %v2690
        %v2692 = vmul.f32 %v2691, 0.6931472
        %v2693 = vmul.f32 -0.5, %v2417
        %v2694 = vadd.f32 %v2693, 1.0
        %v2695 = vmul.f32 %v2694, %v2417
        %v2696 = vand.u32 2147483647, %v2417
        %vm2697 = vcmp.lt.f32.partialorder %v2696, 0.0004427343
        %v2698 = vsel %vm2697, %v2695, %v2692
        %v2699 = vadd.f32 %v2419, 1.0
        %v2700 = vlog2.pop %v2699
        %v2701 = vmul.f32 %v2700, 0.6931472
        %v2702 = vmul.f32 -0.5, %v2419
        %v2703 = vadd.f32 %v2702, 1.0
        %v2704 = vmul.f32 %v2703, %v2419
        %v2705 = vand.u32 2147483647, %v2419
        %vm2706 = vcmp.lt.f32.partialorder %v2705, 0.0004427343
        %v2707 = vsel %vm2706, %v2704, %v2701
        %v2708 = vmul.f32 %v2428, 0.01
        %v2709 = vmul.f32 %v2437, 0.01
        %v2710 = vmul.f32 %v2446, 0.01
        %v2711 = vmul.f32 %v2455, 0.01
        %v2712 = vmul.f32 %v2464, 0.01
        %v2713 = vmul.f32 %v2473, 0.01
        %v2714 = vmul.f32 %v2482, 0.01
        %v2715 = vmul.f32 %v2491, 0.01
        %v2716 = vmul.f32 %v2500, 0.01
        %v2717 = vmul.f32 %v2509, 0.01
        %v2718 = vmul.f32 %v2518, 0.01
        %v2719 = vmul.f32 %v2527, 0.01
        %v2720 = vmul.f32 %v2536, 0.01
        %v2721 = vmul.f32 %v2545, 0.01
        %v2722 = vmul.f32 %v2554, 0.01
        %v2723 = vmul.f32 %v2563, 0.01
        %v2724 = vmul.f32 %v2572, 0.01
        %v2725 = vmul.f32 %v2581, 0.01
        %v2726 = vmul.f32 %v2590, 0.01
        %v2727 = vmul.f32 %v2599, 0.01
        %v2728 = vmul.f32 %v2608, 0.01
        %v2729 = vmul.f32 %v2617, 0.01
        %v2730 = vmul.f32 %v2626, 0.01
        %v2731 = vmul.f32 %v2635, 0.01
        %v2732 = vmul.f32 %v2644, 0.01
        %v2733 = vmul.f32 %v2653, 0.01
        %v2734 = vmul.f32 %v2662, 0.01
        %v2735 = vmul.f32 %v2671, 0.01
        %v2736 = vmul.f32 %v2680, 0.01
        %v2737 = vmul.f32 %v2689, 0.01
        %v2738 = vmul.f32 %v2698, 0.01
        %v2739 = vmul.f32 %v2707, 0.01
        %v2740 = vsel %vm2324, %v2133, %v2708
        %v2741 = vsel %vm2325, %v2135, %v2709
        %v2742 = vsel %vm2326, %v2246, %v2710
        %v2743 = vsel %vm2327, %v2248, %v2711
        %v2744 = vsel %vm2328, %v2139, %v2712
        %v2745 = vsel %vm2329, %v2141, %v2713
        %v2746 = vsel %vm2330, %v2252, %v2714
        %v2747 = vsel %vm2331, %v2254, %v2715
        %v2748 = vsel %vm2332, %v2145, %v2716
        %v2749 = vsel %vm2333, %v2147, %v2717
        %v2750 = vsel %vm2334, %v2258, %v2718
        %v2751 = vsel %vm2335, %v2260, %v2719
        %v2752 = vsel %vm2336, %v2151, %v2720
        %v2753 = vsel %vm2337, %v2153, %v2721
        %v2754 = vsel %vm2338, %v2264, %v2722
        %v2755 = vsel %vm2339, %v2266, %v2723
        %v2756 = vsel %vm2340, %v2157, %v2724
        %v2757 = vsel %vm2341, %v2159, %v2725
        %v2758 = vsel %vm2342, %v2270, %v2726
        %v2759 = vsel %vm2343, %v2272, %v2727
        %v2760 = vsel %vm2344, %v2163, %v2728
        %v2761 = vsel %vm2345, %v2165, %v2729
        %v2762 = vsel %vm2346, %v2276, %v2730
        %v2763 = vsel %vm2347, %v2278, %v2731
        %v2764 = vsel %vm2348, %v2169, %v2732
        %v2765 = vsel %vm2349, %v2171, %v2733
        %v2766 = vsel %vm2350, %v2282, %v2734
        %v2767 = vsel %vm2351, %v2284, %v2735
        %v2768 = vsel %vm2352, %v2175, %v2736
        %v2769 = vsel %vm2353, %v2177, %v2737
        %v2770 = vsel %vm2354, %v2288, %v2738
        %v2771 = vsel %vm2355, %v2290, %v2739
        %s2772 = scalar_lea.vmem [#allocation2], 128
        %v2773 = vld [vmem:[%s2772] sm:$0xff]
        %v2774 = vld [vmem:[%s2772 + $0x8] sm:$0xff]
        %v2775 = vld [vmem:[%s2772 + $0x10] sm:$0xff]
        %v2776 = vld [vmem:[%s2772 + $0x18] sm:$0xff]
        %v2777 = vld [vmem:[%s2772 + $0x20] sm:$0xff]
        %v2778 = vld [vmem:[%s2772 + $0x28] sm:$0xff]
        %v2779 = vld [vmem:[%s2772 + $0x30] sm:$0xff]
        %v2780 = vld [vmem:[%s2772 + $0x38] sm:$0xff]
        %2781 = vset.pattern.permute.xlu0 3
        %2782 = vperm.xlu0 %2781, %v670
        %v2783 = vpop.permute.xlu0 %2782
        %2785 = vset.pattern.permute.xlu0 3
        %2786 = vperm.xlu0 %2785, %v671
        %v2787 = vpop.permute.xlu0 %2786
        %2789 = vset.pattern.permute.xlu0 3
        %2790 = vperm.xlu0 %2789, %v672
        %v2791 = vpop.permute.xlu0 %2790
        %2793 = vset.pattern.permute.xlu0 3
        %2794 = vperm.xlu0 %2793, %v673
        %v2795 = vpop.permute.xlu0 %2794
        %2797 = vset.pattern.permute.xlu0 3
        %2798 = vperm.xlu0 %2797, %v674
        %v2799 = vpop.permute.xlu0 %2798
        %2801 = vset.pattern.permute.xlu0 3
        %2802 = vperm.xlu0 %2801, %v675
        %v2803 = vpop.permute.xlu0 %2802
        %2805 = vset.pattern.permute.xlu0 3
        %2806 = vperm.xlu0 %2805, %v676
        %v2807 = vpop.permute.xlu0 %2806
        %2809 = vset.pattern.permute.xlu0 3
        %2810 = vperm.xlu0 %2809, %v677
        %v2811 = vpop.permute.xlu0 %2810
        %v2814 = vsel %vm1270, %v2773, 0
        %v2817 = vsel %vm1270, %v2774, 0
        %v2820 = vsel %vm1270, %v2775, 0
        %v2823 = vsel %vm1270, %v2776, 0
        %v2826 = vsel %vm1270, %v2777, 0
        %v2829 = vsel %vm1270, %v2778, 0
        %v2832 = vsel %vm1270, %v2779, 0
        %v2835 = vsel %vm1270, %v2780, 0
        %2837 = vmatprep.subr.mxu0 %v2741
        %2838 = vmatpush1.msra.mxu0 %v2740
        %2839 = vmatprep.subr.mxu0 %v2745
        %2840 = vmatpush1.msra.mxu0 %v2744
        %2841 = vmatprep.subr.mxu0 %v2749
        %2842 = vmatpush1.msra.mxu0 %v2748
        %2843 = vmatprep.subr.mxu0 %v2753
        %2844 = vmatpush1.msra.mxu0 %v2752
        %2845 = vmatprep.subr.mxu0 %v2757
        %2846 = vmatpush1.msra.mxu0 %v2756
        %2847 = vmatprep.subr.mxu0 %v2761
        %2848 = vmatpush1.msra.mxu0 %v2760
        %2849 = vmatprep.subr.mxu0 %v2765
        %2850 = vmatpush1.msra.mxu0 %v2764
        %2851 = vmatprep.subr.mxu0 %v2769
        %2852 = vmatpush1.msra.mxu0 %v2768
        %2853 = vmatprep.subr.mxu0 0.0
        %2854 = vmatpush1.msra.mxu0 0.0
        %2855 = vmatprep.subr.mxu0 0.0
        %2856 = vmatpush1.msra.mxu0 0.0
        %2857 = vmatprep.subr.mxu0 0.0
        %2858 = vmatpush1.msra.mxu0 0.0
        %2859 = vmatprep.subr.mxu0 0.0
        %2860 = vmatpush1.msra.mxu0 0.0
        %2861 = vmatprep.subr.mxu0 0.0
        %2862 = vmatpush1.msra.mxu0 0.0
        %2863 = vmatprep.subr.mxu0 0.0
        %2864 = vmatpush1.msra.mxu0 0.0
        %2865 = vmatprep.subr.mxu0 0.0
        %2866 = vmatpush1.msra.mxu0 0.0
        %2867 = vmatprep.subr.mxu0 0.0
        %2868 = vmatpush1.msra.mxu0 0.0
        %2869 = vmatprep.subr.mxu0 0.0
        %2870 = vmatpush1.msra.mxu0 0.0
        %2871 = vmatprep.subr.mxu0 0.0
        %2872 = vmatpush1.msra.mxu0 0.0
        %2873 = vmatprep.subr.mxu0 0.0
        %2874 = vmatpush1.msra.mxu0 0.0
        %2875 = vmatprep.subr.mxu0 0.0
        %2876 = vmatpush1.msra.mxu0 0.0
        %2877 = vmatprep.subr.mxu0 0.0
        %2878 = vmatpush1.msra.mxu0 0.0
        %2879 = vmatprep.subr.mxu0 0.0
        %2880 = vmatpush1.msra.mxu0 0.0
        %2881 = vmatprep.subr.mxu0 0.0
        %2882 = vmatpush1.msra.mxu0 0.0
        %2883 = vmatprep.subr.mxu0 0.0
        %2884 = vmatpush1.msra.mxu0 0.0
        %2885 = vmatprep.subr.mxu0 0.0
        %2886 = vmatpush1.msra.mxu0 0.0
        %2887 = vmatprep.subr.mxu0 0.0
        %2888 = vmatpush1.msra.mxu0 0.0
        %2889 = vmatprep.subr.mxu0 0.0
        %2890 = vmatpush1.msra.mxu0 0.0
        %2891 = vmatprep.subr.mxu0 0.0
        %2892 = vmatpush1.msra.mxu0 0.0
        %2893 = vmatprep.subr.mxu0 0.0
        %2894 = vmatpush1.msra.mxu0 0.0
        %2895 = vmatprep.subr.mxu0 0.0
        %2896 = vmatpush1.msra.mxu0 0.0
        %2897 = vmatprep.subr.mxu0 0.0
        %2898 = vmatpush1.msra.mxu0 0.0
        %2899 = vmatprep.subr.mxu0 0.0
        %2900 = vmatpush1.msra.mxu0 0.0
        %2901 = vmatprep.mubr.f32.mxu0 0.0
        %2902 = vmatmul.mubr.f32.gmra.mrb[0].mxu0 %v2814
        %v2903 = vpop.f32.mrb[0].mxu0
        %v2904 = vadd.f32 %v2783, %v2903
        %v2905 = vpop.f32.mrb[0].mxu0
        %v2906 = vadd.f32 %v2783, %v2905
        %2907 = vmatprep.mubr.f32.mxu0 0.0
        %2908 = vmatmul.mubr.f32.gmra.mrb[0].mxu0 %v2817
        %v2909 = vpop.f32.mrb[0].mxu0
        %v2910 = vadd.f32 %v2787, %v2909
        %v2911 = vpop.f32.mrb[0].mxu0
        %v2912 = vadd.f32 %v2787, %v2911
        %2913 = vmatprep.mubr.f32.mxu0 0.0
        %2914 = vmatmul.mubr.f32.gmra.mrb[0].mxu0 %v2820
        %v2915 = vpop.f32.mrb[0].mxu0
        %v2916 = vadd.f32 %v2791, %v2915
        %v2917 = vpop.f32.mrb[0].mxu0
        %v2918 = vadd.f32 %v2791, %v2917
        %2919 = vmatprep.mubr.f32.mxu0 0.0
        %2920 = vmatmul.mubr.f32.gmra.mrb[0].mxu0 %v2823
        %v2921 = vpop.f32.mrb[0].mxu0
        %v2922 = vadd.f32 %v2795, %v2921
        %v2923 = vpop.f32.mrb[0].mxu0
        %v2924 = vadd.f32 %v2795, %v2923
        %2925 = vmatprep.mubr.f32.mxu0 0.0
        %2926 = vmatmul.mubr.f32.gmra.mrb[0].mxu0 %v2826
        %v2927 = vpop.f32.mrb[0].mxu0
        %v2928 = vadd.f32 %v2799, %v2927
        %v2929 = vpop.f32.mrb[0].mxu0
        %v2930 = vadd.f32 %v2799, %v2929
        %2931 = vmatprep.mubr.f32.mxu0 0.0
        %2932 = vmatmul.mubr.f32.gmra.mrb[0].mxu0 %v2829
        %v2933 = vpop.f32.mrb[0].mxu0
        %v2934 = vadd.f32 %v2803, %v2933
        %v2935 = vpop.f32.mrb[0].mxu0
        %v2936 = vadd.f32 %v2803, %v2935
        %2937 = vmatprep.mubr.f32.mxu0 0.0
        %2938 = vmatmul.mubr.f32.gmra.mrb[0].mxu0 %v2832
        %v2939 = vpop.f32.mrb[0].mxu0
        %v2940 = vadd.f32 %v2807, %v2939
        %v2941 = vpop.f32.mrb[0].mxu0
        %v2942 = vadd.f32 %v2807, %v2941
        %2943 = vmatprep.mubr.f32.mxu0 0.0
        %2944 = vmatmul.mubr.f32.gmra.mrb[0].mxu0 %v2835
        %v2945 = vpop.f32.mrb[0].mxu0
        %v2946 = vadd.f32 %v2811, %v2945
        %v2947 = vpop.f32.mrb[0].mxu0
        %v2948 = vadd.f32 %v2811, %v2947
        %2949 = vdwg.mxu0
        %2950 = vmatprep.subr.mxu0 %v2743
        %2951 = vmatpush1.msra.mxu0 %v2742
        %2952 = vmatprep.subr.mxu0 %v2747
        %2953 = vmatpush1.msra.mxu0 %v2746
        %2954 = vmatprep.subr.mxu0 %v2751
        %2955 = vmatpush1.msra.mxu0 %v2750
        %2956 = vmatprep.subr.mxu0 %v2755
        %2957 = vmatpush1.msra.mxu0 %v2754
        %2958 = vmatprep.subr.mxu0 %v2759
        %2959 = vmatpush1.msra.mxu0 %v2758
        %2960 = vmatprep.subr.mxu0 %v2763
        %2961 = vmatpush1.msra.mxu0 %v2762
        %2962 = vmatprep.subr.mxu0 %v2767
        %2963 = vmatpush1.msra.mxu0 %v2766
        %2964 = vmatprep.subr.mxu0 %v2771
        %2965 = vmatpush1.msra.mxu0 %v2770
        %2966 = vmatprep.subr.mxu0 0.0
        %2967 = vmatpush1.msra.mxu0 0.0
        %2968 = vmatprep.subr.mxu0 0.0
        %2969 = vmatpush1.msra.mxu0 0.0
        %2970 = vmatprep.subr.mxu0 0.0
        %2971 = vmatpush1.msra.mxu0 0.0
        %2972 = vmatprep.subr.mxu0 0.0
        %2973 = vmatpush1.msra.mxu0 0.0
        %2974 = vmatprep.subr.mxu0 0.0
        %2975 = vmatpush1.msra.mxu0 0.0
        %2976 = vmatprep.subr.mxu0 0.0
        %2977 = vmatpush1.msra.mxu0 0.0
        %2978 = vmatprep.subr.mxu0 0.0
        %2979 = vmatpush1.msra.mxu0 0.0
        %2980 = vmatprep.subr.mxu0 0.0
        %2981 = vmatpush1.msra.mxu0 0.0
        %2982 = vmatprep.subr.mxu0 0.0
        %2983 = vmatpush1.msra.mxu0 0.0
        %2984 = vmatprep.subr.mxu0 0.0
        %2985 = vmatpush1.msra.mxu0 0.0
        %2986 = vmatprep.subr.mxu0 0.0
        %2987 = vmatpush1.msra.mxu0 0.0
        %2988 = vmatprep.subr.mxu0 0.0
        %2989 = vmatpush1.msra.mxu0 0.0
        %2990 = vmatprep.subr.mxu0 0.0
        %2991 = vmatpush1.msra.mxu0 0.0
        %2992 = vmatprep.subr.mxu0 0.0
        %2993 = vmatpush1.msra.mxu0 0.0
        %2994 = vmatprep.subr.mxu0 0.0
        %2995 = vmatpush1.msra.mxu0 0.0
        %2996 = vmatprep.subr.mxu0 0.0
        %2997 = vmatpush1.msra.mxu0 0.0
        %2998 = vmatprep.subr.mxu0 0.0
        %2999 = vmatpush1.msra.mxu0 0.0
        %3000 = vmatprep.subr.mxu0 0.0
        %3001 = vmatpush1.msra.mxu0 0.0
        %3002 = vmatprep.subr.mxu0 0.0
        %3003 = vmatpush1.msra.mxu0 0.0
        %3004 = vmatprep.subr.mxu0 0.0
        %3005 = vmatpush1.msra.mxu0 0.0
        %3006 = vmatprep.subr.mxu0 0.0
        %3007 = vmatpush1.msra.mxu0 0.0
        %3008 = vmatprep.subr.mxu0 0.0
        %3009 = vmatpush1.msra.mxu0 0.0
        %3010 = vmatprep.subr.mxu0 0.0
        %3011 = vmatpush1.msra.mxu0 0.0
        %3012 = vmatprep.subr.mxu0 0.0
        %3013 = vmatpush1.msra.mxu0 0.0
        %3014 = vmatprep.mubr.f32.mxu0 0.0
        %3015 = vmatmul.mubr.f32.gmra.mrb[0].mxu0 %v2814
        %v3016 = vpop.f32.mrb[0].mxu0
        %v3017 = vadd.f32 %v2783, %v3016
        %v3018 = vpop.f32.mrb[0].mxu0
        %v3019 = vadd.f32 %v2783, %v3018
        %3020 = vmatprep.mubr.f32.mxu0 0.0
        %3021 = vmatmul.mubr.f32.gmra.mrb[0].mxu0 %v2817
        %v3022 = vpop.f32.mrb[0].mxu0
        %v3023 = vadd.f32 %v2787, %v3022
        %v3024 = vpop.f32.mrb[0].mxu0
        %v3025 = vadd.f32 %v2787, %v3024
        %3026 = vmatprep.mubr.f32.mxu0 0.0
        %3027 = vmatmul.mubr.f32.gmra.mrb[0].mxu0 %v2820
        %v3028 = vpop.f32.mrb[0].mxu0
        %v3029 = vadd.f32 %v2791, %v3028
        %v3030 = vpop.f32.mrb[0].mxu0
        %v3031 = vadd.f32 %v2791, %v3030
        %3032 = vmatprep.mubr.f32.mxu0 0.0
        %3033 = vmatmul.mubr.f32.gmra.mrb[0].mxu0 %v2823
        %v3034 = vpop.f32.mrb[0].mxu0
        %v3035 = vadd.f32 %v2795, %v3034
        %v3036 = vpop.f32.mrb[0].mxu0
        %v3037 = vadd.f32 %v2795, %v3036
        %3038 = vmatprep.mubr.f32.mxu0 0.0
        %3039 = vmatmul.mubr.f32.gmra.mrb[0].mxu0 %v2826
        %v3040 = vpop.f32.mrb[0].mxu0
        %v3041 = vadd.f32 %v2799, %v3040
        %v3042 = vpop.f32.mrb[0].mxu0
        %v3043 = vadd.f32 %v2799, %v3042
        %3044 = vmatprep.mubr.f32.mxu0 0.0
        %3045 = vmatmul.mubr.f32.gmra.mrb[0].mxu0 %v2829
        %v3046 = vpop.f32.mrb[0].mxu0
        %v3047 = vadd.f32 %v2803, %v3046
        %v3048 = vpop.f32.mrb[0].mxu0
        %v3049 = vadd.f32 %v2803, %v3048
        %3050 = vmatprep.mubr.f32.mxu0 0.0
        %3051 = vmatmul.mubr.f32.gmra.mrb[0].mxu0 %v2832
        %v3052 = vpop.f32.mrb[0].mxu0
        %v3053 = vadd.f32 %v2807, %v3052
        %v3054 = vpop.f32.mrb[0].mxu0
        %v3055 = vadd.f32 %v2807, %v3054
        %3056 = vmatprep.mubr.f32.mxu0 0.0
        %3057 = vmatmul.mubr.f32.gmra.mrb[0].mxu0 %v2835
        %v3058 = vpop.f32.mrb[0].mxu0
        %v3059 = vadd.f32 %v2811, %v3058
        %v3060 = vpop.f32.mrb[0].mxu0
        %v3061 = vadd.f32 %v2811, %v3060
        %3062 = vdwg.mxu0
        %v3063 = vmul.f32 %v2904, 100.0
        %v3064 = vmul.f32 %v2906, 100.0
        %v3065 = vmul.f32 %v3017, 100.0
        %v3066 = vmul.f32 %v3019, 100.0
        %v3067 = vmul.f32 %v2910, 100.0
        %v3068 = vmul.f32 %v2912, 100.0
        %v3069 = vmul.f32 %v3023, 100.0
        %v3070 = vmul.f32 %v3025, 100.0
        %v3071 = vmul.f32 %v2916, 100.0
        %v3072 = vmul.f32 %v2918, 100.0
        %v3073 = vmul.f32 %v3029, 100.0
        %v3074 = vmul.f32 %v3031, 100.0
        %v3075 = vmul.f32 %v2922, 100.0
        %v3076 = vmul.f32 %v2924, 100.0
        %v3077 = vmul.f32 %v3035, 100.0
        %v3078 = vmul.f32 %v3037, 100.0
        %v3079 = vmul.f32 %v2928, 100.0
        %v3080 = vmul.f32 %v2930, 100.0
        %v3081 = vmul.f32 %v3041, 100.0
        %v3082 = vmul.f32 %v3043, 100.0
        %v3083 = vmul.f32 %v2934, 100.0
        %v3084 = vmul.f32 %v2936, 100.0
        %v3085 = vmul.f32 %v3047, 100.0
        %v3086 = vmul.f32 %v3049, 100.0
        %v3087 = vmul.f32 %v2940, 100.0
        %v3088 = vmul.f32 %v2942, 100.0
        %v3089 = vmul.f32 %v3053, 100.0
        %v3090 = vmul.f32 %v3055, 100.0
        %v3091 = vmul.f32 %v2946, 100.0
        %v3092 = vmul.f32 %v2948, 100.0
        %v3093 = vmul.f32 %v3059, 100.0
        %v3094 = vmul.f32 %v3061, 100.0
        %vm3095 = vcmp.gt.f32.partialorder %v3063, 20.0
        %vm3096 = vcmp.gt.f32.partialorder %v3064, 20.0
        %vm3097 = vcmp.gt.f32.partialorder %v3065, 20.0
        %vm3098 = vcmp.gt.f32.partialorder %v3066, 20.0
        %vm3099 = vcmp.gt.f32.partialorder %v3067, 20.0
        %vm3100 = vcmp.gt.f32.partialorder %v3068, 20.0
        %vm3101 = vcmp.gt.f32.partialorder %v3069, 20.0
        %vm3102 = vcmp.gt.f32.partialorder %v3070, 20.0
        %vm3103 = vcmp.gt.f32.partialorder %v3071, 20.0
        %vm3104 = vcmp.gt.f32.partialorder %v3072, 20.0
        %vm3105 = vcmp.gt.f32.partialorder %v3073, 20.0
        %vm3106 = vcmp.gt.f32.partialorder %v3074, 20.0
        %vm3107 = vcmp.gt.f32.partialorder %v3075, 20.0
        %vm3108 = vcmp.gt.f32.partialorder %v3076, 20.0
        %vm3109 = vcmp.gt.f32.partialorder %v3077, 20.0
        %vm3110 = vcmp.gt.f32.partialorder %v3078, 20.0
        %vm3111 = vcmp.gt.f32.partialorder %v3079, 20.0
        %vm3112 = vcmp.gt.f32.partialorder %v3080, 20.0
        %vm3113 = vcmp.gt.f32.partialorder %v3081, 20.0
        %vm3114 = vcmp.gt.f32.partialorder %v3082, 20.0
        %vm3115 = vcmp.gt.f32.partialorder %v3083, 20.0
        %vm3116 = vcmp.gt.f32.partialorder %v3084, 20.0
        %vm3117 = vcmp.gt.f32.partialorder %v3085, 20.0
        %vm3118 = vcmp.gt.f32.partialorder %v3086, 20.0
        %vm3119 = vcmp.gt.f32.partialorder %v3087, 20.0
        %vm3120 = vcmp.gt.f32.partialorder %v3088, 20.0
        %vm3121 = vcmp.gt.f32.partialorder %v3089, 20.0
        %vm3122 = vcmp.gt.f32.partialorder %v3090, 20.0
        %vm3123 = vcmp.gt.f32.partialorder %v3091, 20.0
        %vm3124 = vcmp.gt.f32.partialorder %v3092, 20.0
        %vm3125 = vcmp.gt.f32.partialorder %v3093, 20.0
        %vm3126 = vcmp.gt.f32.partialorder %v3094, 20.0
        %v3127 = vmul.f32 %v3063, 1.442695
        %v3128 = vpow.pop %v3127
        %v3129 = vmul.f32 %v3064, 1.442695
        %v3130 = vpow.pop %v3129
        %v3131 = vmul.f32 %v3065, 1.442695
        %v3132 = vpow.pop %v3131
        %v3133 = vmul.f32 %v3066, 1.442695
        %v3134 = vpow.pop %v3133
        %v3135 = vmul.f32 %v3067, 1.442695
        %v3136 = vpow.pop %v3135
        %v3137 = vmul.f32 %v3068, 1.442695
        %v3138 = vpow.pop %v3137
        %v3139 = vmul.f32 %v3069, 1.442695
        %v3140 = vpow.pop %v3139
        %v3141 = vmul.f32 %v3070, 1.442695
        %v3142 = vpow.pop %v3141
        %v3143 = vmul.f32 %v3071, 1.442695
        %v3144 = vpow.pop %v3143
        %v3145 = vmul.f32 %v3072, 1.442695
        %v3146 = vpow.pop %v3145
        %v3147 = vmul.f32 %v3073, 1.442695
        %v3148 = vpow.pop %v3147
        %v3149 = vmul.f32 %v3074, 1.442695
        %v3150 = vpow.pop %v3149
        %v3151 = vmul.f32 %v3075, 1.442695
        %v3152 = vpow.pop %v3151
        %v3153 = vmul.f32 %v3076, 1.442695
        %v3154 = vpow.pop %v3153
        %v3155 = vmul.f32 %v3077, 1.442695
        %v3156 = vpow.pop %v3155
        %v3157 = vmul.f32 %v3078, 1.442695
        %v3158 = vpow.pop %v3157
        %v3159 = vmul.f32 %v3079, 1.442695
        %v3160 = vpow.pop %v3159
        %v3161 = vmul.f32 %v3080, 1.442695
        %v3162 = vpow.pop %v3161
        %v3163 = vmul.f32 %v3081, 1.442695
        %v3164 = vpow.pop %v3163
        %v3165 = vmul.f32 %v3082, 1.442695
        %v3166 = vpow.pop %v3165
        %v3167 = vmul.f32 %v3083, 1.442695
        %v3168 = vpow.pop %v3167
        %v3169 = vmul.f32 %v3084, 1.442695
        %v3170 = vpow.pop %v3169
        %v3171 = vmul.f32 %v3085, 1.442695
        %v3172 = vpow.pop %v3171
        %v3173 = vmul.f32 %v3086, 1.442695
        %v3174 = vpow.pop %v3173
        %v3175 = vmul.f32 %v3087, 1.442695
        %v3176 = vpow.pop %v3175
        %v3177 = vmul.f32 %v3088, 1.442695
        %v3178 = vpow.pop %v3177
        %v3179 = vmul.f32 %v3089, 1.442695
        %v3180 = vpow.pop %v3179
        %v3181 = vmul.f32 %v3090, 1.442695
        %v3182 = vpow.pop %v3181
        %v3183 = vmul.f32 %v3091, 1.442695
        %v3184 = vpow.pop %v3183
        %v3185 = vmul.f32 %v3092, 1.442695
        %v3186 = vpow.pop %v3185
        %v3187 = vmul.f32 %v3093, 1.442695
        %v3188 = vpow.pop %v3187
        %v3189 = vmul.f32 %v3094, 1.442695
        %v3190 = vpow.pop %v3189
        %v3191 = vadd.f32 %v3128, 1.0
        %v3192 = vlog2.pop %v3191
        %v3193 = vmul.f32 %v3192, 0.6931472
        %v3194 = vmul.f32 -0.5, %v3128
        %v3195 = vadd.f32 %v3194, 1.0
        %v3196 = vmul.f32 %v3195, %v3128
        %v3197 = vand.u32 2147483647, %v3128
        %vm3198 = vcmp.lt.f32.partialorder %v3197, 0.0004427343
        %v3199 = vsel %vm3198, %v3196, %v3193
        %v3200 = vadd.f32 %v3130, 1.0
        %v3201 = vlog2.pop %v3200
        %v3202 = vmul.f32 %v3201, 0.6931472
        %v3203 = vmul.f32 -0.5, %v3130
        %v3204 = vadd.f32 %v3203, 1.0
        %v3205 = vmul.f32 %v3204, %v3130
        %v3206 = vand.u32 2147483647, %v3130
        %vm3207 = vcmp.lt.f32.partialorder %v3206, 0.0004427343
        %v3208 = vsel %vm3207, %v3205, %v3202
        %v3209 = vadd.f32 %v3132, 1.0
        %v3210 = vlog2.pop %v3209
        %v3211 = vmul.f32 %v3210, 0.6931472
        %v3212 = vmul.f32 -0.5, %v3132
        %v3213 = vadd.f32 %v3212, 1.0
        %v3214 = vmul.f32 %v3213, %v3132
        %v3215 = vand.u32 2147483647, %v3132
        %vm3216 = vcmp.lt.f32.partialorder %v3215, 0.0004427343
        %v3217 = vsel %vm3216, %v3214, %v3211
        %v3218 = vadd.f32 %v3134, 1.0
        %v3219 = vlog2.pop %v3218
        %v3220 = vmul.f32 %v3219, 0.6931472
        %v3221 = vmul.f32 -0.5, %v3134
        %v3222 = vadd.f32 %v3221, 1.0
        %v3223 = vmul.f32 %v3222, %v3134
        %v3224 = vand.u32 2147483647, %v3134
        %vm3225 = vcmp.lt.f32.partialorder %v3224, 0.0004427343
        %v3226 = vsel %vm3225, %v3223, %v3220
        %v3227 = vadd.f32 %v3136, 1.0
        %v3228 = vlog2.pop %v3227
        %v3229 = vmul.f32 %v3228, 0.6931472
        %v3230 = vmul.f32 -0.5, %v3136
        %v3231 = vadd.f32 %v3230, 1.0
        %v3232 = vmul.f32 %v3231, %v3136
        %v3233 = vand.u32 2147483647, %v3136
        %vm3234 = vcmp.lt.f32.partialorder %v3233, 0.0004427343
        %v3235 = vsel %vm3234, %v3232, %v3229
        %v3236 = vadd.f32 %v3138, 1.0
        %v3237 = vlog2.pop %v3236
        %v3238 = vmul.f32 %v3237, 0.6931472
        %v3239 = vmul.f32 -0.5, %v3138
        %v3240 = vadd.f32 %v3239, 1.0
        %v3241 = vmul.f32 %v3240, %v3138
        %v3242 = vand.u32 2147483647, %v3138
        %vm3243 = vcmp.lt.f32.partialorder %v3242, 0.0004427343
        %v3244 = vsel %vm3243, %v3241, %v3238
        %v3245 = vadd.f32 %v3140, 1.0
        %v3246 = vlog2.pop %v3245
        %v3247 = vmul.f32 %v3246, 0.6931472
        %v3248 = vmul.f32 -0.5, %v3140
        %v3249 = vadd.f32 %v3248, 1.0
        %v3250 = vmul.f32 %v3249, %v3140
        %v3251 = vand.u32 2147483647, %v3140
        %vm3252 = vcmp.lt.f32.partialorder %v3251, 0.0004427343
        %v3253 = vsel %vm3252, %v3250, %v3247
        %v3254 = vadd.f32 %v3142, 1.0
        %v3255 = vlog2.pop %v3254
        %v3256 = vmul.f32 %v3255, 0.6931472
        %v3257 = vmul.f32 -0.5, %v3142
        %v3258 = vadd.f32 %v3257, 1.0
        %v3259 = vmul.f32 %v3258, %v3142
        %v3260 = vand.u32 2147483647, %v3142
        %vm3261 = vcmp.lt.f32.partialorder %v3260, 0.0004427343
        %v3262 = vsel %vm3261, %v3259, %v3256
        %v3263 = vadd.f32 %v3144, 1.0
        %v3264 = vlog2.pop %v3263
        %v3265 = vmul.f32 %v3264, 0.6931472
        %v3266 = vmul.f32 -0.5, %v3144
        %v3267 = vadd.f32 %v3266, 1.0
        %v3268 = vmul.f32 %v3267, %v3144
        %v3269 = vand.u32 2147483647, %v3144
        %vm3270 = vcmp.lt.f32.partialorder %v3269, 0.0004427343
        %v3271 = vsel %vm3270, %v3268, %v3265
        %v3272 = vadd.f32 %v3146, 1.0
        %v3273 = vlog2.pop %v3272
        %v3274 = vmul.f32 %v3273, 0.6931472
        %v3275 = vmul.f32 -0.5, %v3146
        %v3276 = vadd.f32 %v3275, 1.0
        %v3277 = vmul.f32 %v3276, %v3146
        %v3278 = vand.u32 2147483647, %v3146
        %vm3279 = vcmp.lt.f32.partialorder %v3278, 0.0004427343
        %v3280 = vsel %vm3279, %v3277, %v3274
        %v3281 = vadd.f32 %v3148, 1.0
        %v3282 = vlog2.pop %v3281
        %v3283 = vmul.f32 %v3282, 0.6931472
        %v3284 = vmul.f32 -0.5, %v3148
        %v3285 = vadd.f32 %v3284, 1.0
        %v3286 = vmul.f32 %v3285, %v3148
        %v3287 = vand.u32 2147483647, %v3148
        %vm3288 = vcmp.lt.f32.partialorder %v3287, 0.0004427343
        %v3289 = vsel %vm3288, %v3286, %v3283
        %v3290 = vadd.f32 %v3150, 1.0
        %v3291 = vlog2.pop %v3290
        %v3292 = vmul.f32 %v3291, 0.6931472
        %v3293 = vmul.f32 -0.5, %v3150
        %v3294 = vadd.f32 %v3293, 1.0
        %v3295 = vmul.f32 %v3294, %v3150
        %v3296 = vand.u32 2147483647, %v3150
        %vm3297 = vcmp.lt.f32.partialorder %v3296, 0.0004427343
        %v3298 = vsel %vm3297, %v3295, %v3292
        %v3299 = vadd.f32 %v3152, 1.0
        %v3300 = vlog2.pop %v3299
        %v3301 = vmul.f32 %v3300, 0.6931472
        %v3302 = vmul.f32 -0.5, %v3152
        %v3303 = vadd.f32 %v3302, 1.0
        %v3304 = vmul.f32 %v3303, %v3152
        %v3305 = vand.u32 2147483647, %v3152
        %vm3306 = vcmp.lt.f32.partialorder %v3305, 0.0004427343
        %v3307 = vsel %vm3306, %v3304, %v3301
        %v3308 = vadd.f32 %v3154, 1.0
        %v3309 = vlog2.pop %v3308
        %v3310 = vmul.f32 %v3309, 0.6931472
        %v3311 = vmul.f32 -0.5, %v3154
        %v3312 = vadd.f32 %v3311, 1.0
        %v3313 = vmul.f32 %v3312, %v3154
        %v3314 = vand.u32 2147483647, %v3154
        %vm3315 = vcmp.lt.f32.partialorder %v3314, 0.0004427343
        %v3316 = vsel %vm3315, %v3313, %v3310
        %v3317 = vadd.f32 %v3156, 1.0
        %v3318 = vlog2.pop %v3317
        %v3319 = vmul.f32 %v3318, 0.6931472
        %v3320 = vmul.f32 -0.5, %v3156
        %v3321 = vadd.f32 %v3320, 1.0
        %v3322 = vmul.f32 %v3321, %v3156
        %v3323 = vand.u32 2147483647, %v3156
        %vm3324 = vcmp.lt.f32.partialorder %v3323, 0.0004427343
        %v3325 = vsel %vm3324, %v3322, %v3319
        %v3326 = vadd.f32 %v3158, 1.0
        %v3327 = vlog2.pop %v3326
        %v3328 = vmul.f32 %v3327, 0.6931472
        %v3329 = vmul.f32 -0.5, %v3158
        %v3330 = vadd.f32 %v3329, 1.0
        %v3331 = vmul.f32 %v3330, %v3158
        %v3332 = vand.u32 2147483647, %v3158
        %vm3333 = vcmp.lt.f32.partialorder %v3332, 0.0004427343
        %v3334 = vsel %vm3333, %v3331, %v3328
        %v3335 = vadd.f32 %v3160, 1.0
        %v3336 = vlog2.pop %v3335
        %v3337 = vmul.f32 %v3336, 0.6931472
        %v3338 = vmul.f32 -0.5, %v3160
        %v3339 = vadd.f32 %v3338, 1.0
        %v3340 = vmul.f32 %v3339, %v3160
        %v3341 = vand.u32 2147483647, %v3160
        %vm3342 = vcmp.lt.f32.partialorder %v3341, 0.0004427343
        %v3343 = vsel %vm3342, %v3340, %v3337
        %v3344 = vadd.f32 %v3162, 1.0
        %v3345 = vlog2.pop %v3344
        %v3346 = vmul.f32 %v3345, 0.6931472
        %v3347 = vmul.f32 -0.5, %v3162
        %v3348 = vadd.f32 %v3347, 1.0
        %v3349 = vmul.f32 %v3348, %v3162
        %v3350 = vand.u32 2147483647, %v3162
        %vm3351 = vcmp.lt.f32.partialorder %v3350, 0.0004427343
        %v3352 = vsel %vm3351, %v3349, %v3346
        %v3353 = vadd.f32 %v3164, 1.0
        %v3354 = vlog2.pop %v3353
        %v3355 = vmul.f32 %v3354, 0.6931472
        %v3356 = vmul.f32 -0.5, %v3164
        %v3357 = vadd.f32 %v3356, 1.0
        %v3358 = vmul.f32 %v3357, %v3164
        %v3359 = vand.u32 2147483647, %v3164
        %vm3360 = vcmp.lt.f32.partialorder %v3359, 0.0004427343
        %v3361 = vsel %vm3360, %v3358, %v3355
        %v3362 = vadd.f32 %v3166, 1.0
        %v3363 = vlog2.pop %v3362
        %v3364 = vmul.f32 %v3363, 0.6931472
        %v3365 = vmul.f32 -0.5, %v3166
        %v3366 = vadd.f32 %v3365, 1.0
        %v3367 = vmul.f32 %v3366, %v3166
        %v3368 = vand.u32 2147483647, %v3166
        %vm3369 = vcmp.lt.f32.partialorder %v3368, 0.0004427343
        %v3370 = vsel %vm3369, %v3367, %v3364
        %v3371 = vadd.f32 %v3168, 1.0
        %v3372 = vlog2.pop %v3371
        %v3373 = vmul.f32 %v3372, 0.6931472
        %v3374 = vmul.f32 -0.5, %v3168
        %v3375 = vadd.f32 %v3374, 1.0
        %v3376 = vmul.f32 %v3375, %v3168
        %v3377 = vand.u32 2147483647, %v3168
        %vm3378 = vcmp.lt.f32.partialorder %v3377, 0.0004427343
        %v3379 = vsel %vm3378, %v3376, %v3373
        %v3380 = vadd.f32 %v3170, 1.0
        %v3381 = vlog2.pop %v3380
        %v3382 = vmul.f32 %v3381, 0.6931472
        %v3383 = vmul.f32 -0.5, %v3170
        %v3384 = vadd.f32 %v3383, 1.0
        %v3385 = vmul.f32 %v3384, %v3170
        %v3386 = vand.u32 2147483647, %v3170
        %vm3387 = vcmp.lt.f32.partialorder %v3386, 0.0004427343
        %v3388 = vsel %vm3387, %v3385, %v3382
        %v3389 = vadd.f32 %v3172, 1.0
        %v3390 = vlog2.pop %v3389
        %v3391 = vmul.f32 %v3390, 0.6931472
        %v3392 = vmul.f32 -0.5, %v3172
        %v3393 = vadd.f32 %v3392, 1.0
        %v3394 = vmul.f32 %v3393, %v3172
        %v3395 = vand.u32 2147483647, %v3172
        %vm3396 = vcmp.lt.f32.partialorder %v3395, 0.0004427343
        %v3397 = vsel %vm3396, %v3394, %v3391
        %v3398 = vadd.f32 %v3174, 1.0
        %v3399 = vlog2.pop %v3398
        %v3400 = vmul.f32 %v3399, 0.6931472
        %v3401 = vmul.f32 -0.5, %v3174
        %v3402 = vadd.f32 %v3401, 1.0
        %v3403 = vmul.f32 %v3402, %v3174
        %v3404 = vand.u32 2147483647, %v3174
        %vm3405 = vcmp.lt.f32.partialorder %v3404, 0.0004427343
        %v3406 = vsel %vm3405, %v3403, %v3400
        %v3407 = vadd.f32 %v3176, 1.0
        %v3408 = vlog2.pop %v3407
        %v3409 = vmul.f32 %v3408, 0.6931472
        %v3410 = vmul.f32 -0.5, %v3176
        %v3411 = vadd.f32 %v3410, 1.0
        %v3412 = vmul.f32 %v3411, %v3176
        %v3413 = vand.u32 2147483647, %v3176
        %vm3414 = vcmp.lt.f32.partialorder %v3413, 0.0004427343
        %v3415 = vsel %vm3414, %v3412, %v3409
        %v3416 = vadd.f32 %v3178, 1.0
        %v3417 = vlog2.pop %v3416
        %v3418 = vmul.f32 %v3417, 0.6931472
        %v3419 = vmul.f32 -0.5, %v3178
        %v3420 = vadd.f32 %v3419, 1.0
        %v3421 = vmul.f32 %v3420, %v3178
        %v3422 = vand.u32 2147483647, %v3178
        %vm3423 = vcmp.lt.f32.partialorder %v3422, 0.0004427343
        %v3424 = vsel %vm3423, %v3421, %v3418
        %v3425 = vadd.f32 %v3180, 1.0
        %v3426 = vlog2.pop %v3425
        %v3427 = vmul.f32 %v3426, 0.6931472
        %v3428 = vmul.f32 -0.5, %v3180
        %v3429 = vadd.f32 %v3428, 1.0
        %v3430 = vmul.f32 %v3429, %v3180
        %v3431 = vand.u32 2147483647, %v3180
        %vm3432 = vcmp.lt.f32.partialorder %v3431, 0.0004427343
        %v3433 = vsel %vm3432, %v3430, %v3427
        %v3434 = vadd.f32 %v3182, 1.0
        %v3435 = vlog2.pop %v3434
        %v3436 = vmul.f32 %v3435, 0.6931472
        %v3437 = vmul.f32 -0.5, %v3182
        %v3438 = vadd.f32 %v3437, 1.0
        %v3439 = vmul.f32 %v3438, %v3182
        %v3440 = vand.u32 2147483647, %v3182
        %vm3441 = vcmp.lt.f32.partialorder %v3440, 0.0004427343
        %v3442 = vsel %vm3441, %v3439, %v3436
        %v3443 = vadd.f32 %v3184, 1.0
        %v3444 = vlog2.pop %v3443
        %v3445 = vmul.f32 %v3444, 0.6931472
        %v3446 = vmul.f32 -0.5, %v3184
        %v3447 = vadd.f32 %v3446, 1.0
        %v3448 = vmul.f32 %v3447, %v3184
        %v3449 = vand.u32 2147483647, %v3184
        %vm3450 = vcmp.lt.f32.partialorder %v3449, 0.0004427343
        %v3451 = vsel %vm3450, %v3448, %v3445
        %v3452 = vadd.f32 %v3186, 1.0
        %v3453 = vlog2.pop %v3452
        %v3454 = vmul.f32 %v3453, 0.6931472
        %v3455 = vmul.f32 -0.5, %v3186
        %v3456 = vadd.f32 %v3455, 1.0
        %v3457 = vmul.f32 %v3456, %v3186
        %v3458 = vand.u32 2147483647, %v3186
        %vm3459 = vcmp.lt.f32.partialorder %v3458, 0.0004427343
        %v3460 = vsel %vm3459, %v3457, %v3454
        %v3461 = vadd.f32 %v3188, 1.0
        %v3462 = vlog2.pop %v3461
        %v3463 = vmul.f32 %v3462, 0.6931472
        %v3464 = vmul.f32 -0.5, %v3188
        %v3465 = vadd.f32 %v3464, 1.0
        %v3466 = vmul.f32 %v3465, %v3188
        %v3467 = vand.u32 2147483647, %v3188
        %vm3468 = vcmp.lt.f32.partialorder %v3467, 0.0004427343
        %v3469 = vsel %vm3468, %v3466, %v3463
        %v3470 = vadd.f32 %v3190, 1.0
        %v3471 = vlog2.pop %v3470
        %v3472 = vmul.f32 %v3471, 0.6931472
        %v3473 = vmul.f32 -0.5, %v3190
        %v3474 = vadd.f32 %v3473, 1.0
        %v3475 = vmul.f32 %v3474, %v3190
        %v3476 = vand.u32 2147483647, %v3190
        %vm3477 = vcmp.lt.f32.partialorder %v3476, 0.0004427343
        %v3478 = vsel %vm3477, %v3475, %v3472
        %v3479 = vmul.f32 %v3199, 0.01
        %v3480 = vmul.f32 %v3208, 0.01
        %v3481 = vmul.f32 %v3217, 0.01
        %v3482 = vmul.f32 %v3226, 0.01
        %v3483 = vmul.f32 %v3235, 0.01
        %v3484 = vmul.f32 %v3244, 0.01
        %v3485 = vmul.f32 %v3253, 0.01
        %v3486 = vmul.f32 %v3262, 0.01
        %v3487 = vmul.f32 %v3271, 0.01
        %v3488 = vmul.f32 %v3280, 0.01
        %v3489 = vmul.f32 %v3289, 0.01
        %v3490 = vmul.f32 %v3298, 0.01
        %v3491 = vmul.f32 %v3307, 0.01
        %v3492 = vmul.f32 %v3316, 0.01
        %v3493 = vmul.f32 %v3325, 0.01
        %v3494 = vmul.f32 %v3334, 0.01
        %v3495 = vmul.f32 %v3343, 0.01
        %v3496 = vmul.f32 %v3352, 0.01
        %v3497 = vmul.f32 %v3361, 0.01
        %v3498 = vmul.f32 %v3370, 0.01
        %v3499 = vmul.f32 %v3379, 0.01
        %v3500 = vmul.f32 %v3388, 0.01
        %v3501 = vmul.f32 %v3397, 0.01
        %v3502 = vmul.f32 %v3406, 0.01
        %v3503 = vmul.f32 %v3415, 0.01
        %v3504 = vmul.f32 %v3424, 0.01
        %v3505 = vmul.f32 %v3433, 0.01
        %v3506 = vmul.f32 %v3442, 0.01
        %v3507 = vmul.f32 %v3451, 0.01
        %v3508 = vmul.f32 %v3460, 0.01
        %v3509 = vmul.f32 %v3469, 0.01
        %v3510 = vmul.f32 %v3478, 0.01
        %v3511 = vsel %vm3095, %v2904, %v3479
        %v3512 = vsel %vm3096, %v2906, %v3480
        %v3513 = vsel %vm3097, %v3017, %v3481
        %v3514 = vsel %vm3098, %v3019, %v3482
        %v3515 = vsel %vm3099, %v2910, %v3483
        %v3516 = vsel %vm3100, %v2912, %v3484
        %v3517 = vsel %vm3101, %v3023, %v3485
        %v3518 = vsel %vm3102, %v3025, %v3486
        %v3519 = vsel %vm3103, %v2916, %v3487
        %v3520 = vsel %vm3104, %v2918, %v3488
        %v3521 = vsel %vm3105, %v3029, %v3489
        %v3522 = vsel %vm3106, %v3031, %v3490
        %v3523 = vsel %vm3107, %v2922, %v3491
        %v3524 = vsel %vm3108, %v2924, %v3492
        %v3525 = vsel %vm3109, %v3035, %v3493
        %v3526 = vsel %vm3110, %v3037, %v3494
        %v3527 = vsel %vm3111, %v2928, %v3495
        %v3528 = vsel %vm3112, %v2930, %v3496
        %v3529 = vsel %vm3113, %v3041, %v3497
        %v3530 = vsel %vm3114, %v3043, %v3498
        %v3531 = vsel %vm3115, %v2934, %v3499
        %v3532 = vsel %vm3116, %v2936, %v3500
        %v3533 = vsel %vm3117, %v3047, %v3501
        %v3534 = vsel %vm3118, %v3049, %v3502
        %v3535 = vsel %vm3119, %v2940, %v3503
        %v3536 = vsel %vm3120, %v2942, %v3504
        %v3537 = vsel %vm3121, %v3053, %v3505
        %v3538 = vsel %vm3122, %v3055, %v3506
        %v3539 = vsel %vm3123, %v2946, %v3507
        %v3540 = vsel %vm3124, %v2948, %v3508
        %v3541 = vsel %vm3125, %v3059, %v3509
        %v3542 = vsel %vm3126, %v3061, %v3510
        %s3543 = scalar_lea.vmem [#allocation2], 192
        %v3544 = vld [vmem:[%s3543] sm:$0xff]
        %v3545 = vld [vmem:[%s3543 + $0x8] sm:$0xff]
        %v3546 = vld [vmem:[%s3543 + $0x10] sm:$0xff]
        %v3547 = vld [vmem:[%s3543 + $0x18] sm:$0xff]
        %v3548 = vld [vmem:[%s3543 + $0x20] sm:$0xff]
        %v3549 = vld [vmem:[%s3543 + $0x28] sm:$0xff]
        %v3550 = vld [vmem:[%s3543 + $0x30] sm:$0xff]
        %v3551 = vld [vmem:[%s3543 + $0x38] sm:$0xff]
        %v3553 = vsel %vm1270, %v3544, 0
        %v3556 = vsel %vm1270, %v3545, 0
        %v3559 = vsel %vm1270, %v3546, 0
        %v3562 = vsel %vm1270, %v3547, 0
        %v3565 = vsel %vm1270, %v3548, 0
        %v3568 = vsel %vm1270, %v3549, 0
        %v3571 = vsel %vm1270, %v3550, 0
        %v3574 = vsel %vm1270, %v3551, 0
        %3576 = vmatprep.subr.mxu0 %v3512
        %3577 = vmatpush1.msra.mxu0 %v3511
        %3578 = vmatprep.subr.mxu0 %v3516
        %3579 = vmatpush1.msra.mxu0 %v3515
        %3580 = vmatprep.subr.mxu0 %v3520
        %3581 = vmatpush1.msra.mxu0 %v3519
        %3582 = vmatprep.subr.mxu0 %v3524
        %3583 = vmatpush1.msra.mxu0 %v3523
        %3584 = vmatprep.subr.mxu0 %v3528
        %3585 = vmatpush1.msra.mxu0 %v3527
        %3586 = vmatprep.subr.mxu0 %v3532
        %3587 = vmatpush1.msra.mxu0 %v3531
        %3588 = vmatprep.subr.mxu0 %v3536
        %3589 = vmatpush1.msra.mxu0 %v3535
        %3590 = vmatprep.subr.mxu0 %v3540
        %3591 = vmatpush1.msra.mxu0 %v3539
        %3592 = vmatprep.subr.mxu0 0.0
        %3593 = vmatpush1.msra.mxu0 0.0
        %3594 = vmatprep.subr.mxu0 0.0
        %3595 = vmatpush1.msra.mxu0 0.0
        %3596 = vmatprep.subr.mxu0 0.0
        %3597 = vmatpush1.msra.mxu0 0.0
        %3598 = vmatprep.subr.mxu0 0.0
        %3599 = vmatpush1.msra.mxu0 0.0
        %3600 = vmatprep.subr.mxu0 0.0
        %3601 = vmatpush1.msra.mxu0 0.0
        %3602 = vmatprep.subr.mxu0 0.0
        %3603 = vmatpush1.msra.mxu0 0.0
        %3604 = vmatprep.subr.mxu0 0.0
        %3605 = vmatpush1.msra.mxu0 0.0
        %3606 = vmatprep.subr.mxu0 0.0
        %3607 = vmatpush1.msra.mxu0 0.0
        %3608 = vmatprep.subr.mxu0 0.0
        %3609 = vmatpush1.msra.mxu0 0.0
        %3610 = vmatprep.subr.mxu0 0.0
        %3611 = vmatpush1.msra.mxu0 0.0
        %3612 = vmatprep.subr.mxu0 0.0
        %3613 = vmatpush1.msra.mxu0 0.0
        %3614 = vmatprep.subr.mxu0 0.0
        %3615 = vmatpush1.msra.mxu0 0.0
        %3616 = vmatprep.subr.mxu0 0.0
        %3617 = vmatpush1.msra.mxu0 0.0
        %3618 = vmatprep.subr.mxu0 0.0
        %3619 = vmatpush1.msra.mxu0 0.0
        %3620 = vmatprep.subr.mxu0 0.0
        %3621 = vmatpush1.msra.mxu0 0.0
        %3622 = vmatprep.subr.mxu0 0.0
        %3623 = vmatpush1.msra.mxu0 0.0
        %3624 = vmatprep.subr.mxu0 0.0
        %3625 = vmatpush1.msra.mxu0 0.0
        %3626 = vmatprep.subr.mxu0 0.0
        %3627 = vmatpush1.msra.mxu0 0.0
        %3628 = vmatprep.subr.mxu0 0.0
        %3629 = vmatpush1.msra.mxu0 0.0
        %3630 = vmatprep.subr.mxu0 0.0
        %3631 = vmatpush1.msra.mxu0 0.0
        %3632 = vmatprep.subr.mxu0 0.0
        %3633 = vmatpush1.msra.mxu0 0.0
        %3634 = vmatprep.subr.mxu0 0.0
        %3635 = vmatpush1.msra.mxu0 0.0
        %3636 = vmatprep.subr.mxu0 0.0
        %3637 = vmatpush1.msra.mxu0 0.0
        %3638 = vmatprep.subr.mxu0 0.0
        %3639 = vmatpush1.msra.mxu0 0.0
        %3640 = vmatprep.mubr.f32.mxu0 0.0
        %3641 = vmatmul.mubr.f32.gmra.mrb[0].mxu0 %v3553
        %v3642 = vpop.f32.mrb[0].mxu0
        %v3643 = vadd.f32 %v463, %v3642
        %v3644 = vpop.f32.mrb[0].mxu0
        %v3645 = vadd.f32 %v465, %v3644
        %3646 = vmatprep.mubr.f32.mxu0 0.0
        %3647 = vmatmul.mubr.f32.gmra.mrb[0].mxu0 %v3556
        %v3648 = vpop.f32.mrb[0].mxu0
        %v3649 = vadd.f32 %v469, %v3648
        %v3650 = vpop.f32.mrb[0].mxu0
        %v3651 = vadd.f32 %v471, %v3650
        %3652 = vmatprep.mubr.f32.mxu0 0.0
        %3653 = vmatmul.mubr.f32.gmra.mrb[0].mxu0 %v3559
        %v3654 = vpop.f32.mrb[0].mxu0
        %v3655 = vadd.f32 %v475, %v3654
        %v3656 = vpop.f32.mrb[0].mxu0
        %v3657 = vadd.f32 %v477, %v3656
        %3658 = vmatprep.mubr.f32.mxu0 0.0
        %3659 = vmatmul.mubr.f32.gmra.mrb[0].mxu0 %v3562
        %v3660 = vpop.f32.mrb[0].mxu0
        %v3661 = vadd.f32 %v481, %v3660
        %v3662 = vpop.f32.mrb[0].mxu0
        %v3663 = vadd.f32 %v483, %v3662
        %3664 = vmatprep.mubr.f32.mxu0 0.0
        %3665 = vmatmul.mubr.f32.gmra.mrb[0].mxu0 %v3565
        %v3666 = vpop.f32.mrb[0].mxu0
        %v3667 = vadd.f32 %v487, %v3666
        %v3668 = vpop.f32.mrb[0].mxu0
        %v3669 = vadd.f32 %v489, %v3668
        %3670 = vmatprep.mubr.f32.mxu0 0.0
        %3671 = vmatmul.mubr.f32.gmra.mrb[0].mxu0 %v3568
        %v3672 = vpop.f32.mrb[0].mxu0
        %v3673 = vadd.f32 %v493, %v3672
        %v3674 = vpop.f32.mrb[0].mxu0
        %v3675 = vadd.f32 %v495, %v3674
        %3676 = vmatprep.mubr.f32.mxu0 0.0
        %3677 = vmatmul.mubr.f32.gmra.mrb[0].mxu0 %v3571
        %v3678 = vpop.f32.mrb[0].mxu0
        %v3679 = vadd.f32 %v499, %v3678
        %v3680 = vpop.f32.mrb[0].mxu0
        %v3681 = vadd.f32 %v501, %v3680
        %3682 = vmatprep.mubr.f32.mxu0 0.0
        %3683 = vmatmul.mubr.f32.gmra.mrb[0].mxu0 %v3574
        %v3684 = vpop.f32.mrb[0].mxu0
        %v3685 = vadd.f32 %v505, %v3684
        %v3686 = vpop.f32.mrb[0].mxu0
        %v3687 = vadd.f32 %v507, %v3686
        %3688 = vdwg.mxu0
        %3689 = vmatprep.subr.mxu0 %v3514
        %3690 = vmatpush1.msra.mxu0 %v3513
        %3691 = vmatprep.subr.mxu0 %v3518
        %3692 = vmatpush1.msra.mxu0 %v3517
        %3693 = vmatprep.subr.mxu0 %v3522
        %3694 = vmatpush1.msra.mxu0 %v3521
        %3695 = vmatprep.subr.mxu0 %v3526
        %3696 = vmatpush1.msra.mxu0 %v3525
        %3697 = vmatprep.subr.mxu0 %v3530
        %3698 = vmatpush1.msra.mxu0 %v3529
        %3699 = vmatprep.subr.mxu0 %v3534
        %3700 = vmatpush1.msra.mxu0 %v3533
        %3701 = vmatprep.subr.mxu0 %v3538
        %3702 = vmatpush1.msra.mxu0 %v3537
        %3703 = vmatprep.subr.mxu0 %v3542
        %3704 = vmatpush1.msra.mxu0 %v3541
        %3705 = vmatprep.subr.mxu0 0.0
        %3706 = vmatpush1.msra.mxu0 0.0
        %3707 = vmatprep.subr.mxu0 0.0
        %3708 = vmatpush1.msra.mxu0 0.0
        %3709 = vmatprep.subr.mxu0 0.0
        %3710 = vmatpush1.msra.mxu0 0.0
        %3711 = vmatprep.subr.mxu0 0.0
        %3712 = vmatpush1.msra.mxu0 0.0
        %3713 = vmatprep.subr.mxu0 0.0
        %3714 = vmatpush1.msra.mxu0 0.0
        %3715 = vmatprep.subr.mxu0 0.0
        %3716 = vmatpush1.msra.mxu0 0.0
        %3717 = vmatprep.subr.mxu0 0.0
        %3718 = vmatpush1.msra.mxu0 0.0
        %3719 = vmatprep.subr.mxu0 0.0
        %3720 = vmatpush1.msra.mxu0 0.0
        %3721 = vmatprep.subr.mxu0 0.0
        %3722 = vmatpush1.msra.mxu0 0.0
        %3723 = vmatprep.subr.mxu0 0.0
        %3724 = vmatpush1.msra.mxu0 0.0
        %3725 = vmatprep.subr.mxu0 0.0
        %3726 = vmatpush1.msra.mxu0 0.0
        %3727 = vmatprep.subr.mxu0 0.0
        %3728 = vmatpush1.msra.mxu0 0.0
        %3729 = vmatprep.subr.mxu0 0.0
        %3730 = vmatpush1.msra.mxu0 0.0
        %3731 = vmatprep.subr.mxu0 0.0
        %3732 = vmatpush1.msra.mxu0 0.0
        %3733 = vmatprep.subr.mxu0 0.0
        %3734 = vmatpush1.msra.mxu0 0.0
        %3735 = vmatprep.subr.mxu0 0.0
        %3736 = vmatpush1.msra.mxu0 0.0
        %3737 = vmatprep.subr.mxu0 0.0
        %3738 = vmatpush1.msra.mxu0 0.0
        %3739 = vmatprep.subr.mxu0 0.0
        %3740 = vmatpush1.msra.mxu0 0.0
        %3741 = vmatprep.subr.mxu0 0.0
        %3742 = vmatpush1.msra.mxu0 0.0
        %3743 = vmatprep.subr.mxu0 0.0
        %3744 = vmatpush1.msra.mxu0 0.0
        %3745 = vmatprep.subr.mxu0 0.0
        %3746 = vmatpush1.msra.mxu0 0.0
        %3747 = vmatprep.subr.mxu0 0.0
        %3748 = vmatpush1.msra.mxu0 0.0
        %3749 = vmatprep.subr.mxu0 0.0
        %3750 = vmatpush1.msra.mxu0 0.0
        %3751 = vmatprep.subr.mxu0 0.0
        %3752 = vmatpush1.msra.mxu0 0.0
        %3753 = vmatprep.mubr.f32.mxu0 0.0
        %3754 = vmatmul.mubr.f32.gmra.mrb[0].mxu0 %v3553
        %v3755 = vpop.f32.mrb[0].mxu0
        %v3756 = vadd.f32 %v624, %v3755
        %v3757 = vpop.f32.mrb[0].mxu0
        %v3758 = vadd.f32 %v626, %v3757
        %3759 = vmatprep.mubr.f32.mxu0 0.0
        %3760 = vmatmul.mubr.f32.gmra.mrb[0].mxu0 %v3556
        %v3761 = vpop.f32.mrb[0].mxu0
        %v3762 = vadd.f32 %v630, %v3761
        %v3763 = vpop.f32.mrb[0].mxu0
        %v3764 = vadd.f32 %v632, %v3763
        %3765 = vmatprep.mubr.f32.mxu0 0.0
        %3766 = vmatmul.mubr.f32.gmra.mrb[0].mxu0 %v3559
        %v3767 = vpop.f32.mrb[0].mxu0
        %v3768 = vadd.f32 %v636, %v3767
        %v3769 = vpop.f32.mrb[0].mxu0
        %v3770 = vadd.f32 %v638, %v3769
        %3771 = vmatprep.mubr.f32.mxu0 0.0
        %3772 = vmatmul.mubr.f32.gmra.mrb[0].mxu0 %v3562
        %v3773 = vpop.f32.mrb[0].mxu0
        %v3774 = vadd.f32 %v642, %v3773
        %v3775 = vpop.f32.mrb[0].mxu0
        %v3776 = vadd.f32 %v644, %v3775
        %3777 = vmatprep.mubr.f32.mxu0 0.0
        %3778 = vmatmul.mubr.f32.gmra.mrb[0].mxu0 %v3565
        %v3779 = vpop.f32.mrb[0].mxu0
        %v3780 = vadd.f32 %v648, %v3779
        %v3781 = vpop.f32.mrb[0].mxu0
        %v3782 = vadd.f32 %v650, %v3781
        %3783 = vmatprep.mubr.f32.mxu0 0.0
        %3784 = vmatmul.mubr.f32.gmra.mrb[0].mxu0 %v3568
        %v3785 = vpop.f32.mrb[0].mxu0
        %v3786 = vadd.f32 %v654, %v3785
        %v3787 = vpop.f32.mrb[0].mxu0
        %v3788 = vadd.f32 %v656, %v3787
        %3789 = vmatprep.mubr.f32.mxu0 0.0
        %3790 = vmatmul.mubr.f32.gmra.mrb[0].mxu0 %v3571
        %v3791 = vpop.f32.mrb[0].mxu0
        %v3792 = vadd.f32 %v660, %v3791
        %v3793 = vpop.f32.mrb[0].mxu0
        %v3794 = vadd.f32 %v662, %v3793
        %3795 = vmatprep.mubr.f32.mxu0 0.0
        %3796 = vmatmul.mubr.f32.gmra.mrb[0].mxu0 %v3574
        %v3797 = vpop.f32.mrb[0].mxu0
        %v3798 = vadd.f32 %v666, %v3797
        %v3799 = vpop.f32.mrb[0].mxu0
        %v3800 = vadd.f32 %v668, %v3799
        %3801 = vdwg.mxu0
        %v3802 = vmul.f32 %v3643, 0.70710677
        %v3803 = vmul.f32 %v3645, 0.70710677
        %v3804 = vmul.f32 %v3756, 0.70710677
        %v3805 = vmul.f32 %v3758, 0.70710677
        %v3806 = vmul.f32 %v3649, 0.70710677
        %v3807 = vmul.f32 %v3651, 0.70710677
        %v3808 = vmul.f32 %v3762, 0.70710677
        %v3809 = vmul.f32 %v3764, 0.70710677
        %v3810 = vmul.f32 %v3655, 0.70710677
        %v3811 = vmul.f32 %v3657, 0.70710677
        %v3812 = vmul.f32 %v3768, 0.70710677
        %v3813 = vmul.f32 %v3770, 0.70710677
        %v3814 = vmul.f32 %v3661, 0.70710677
        %v3815 = vmul.f32 %v3663, 0.70710677
        %v3816 = vmul.f32 %v3774, 0.70710677
        %v3817 = vmul.f32 %v3776, 0.70710677
        %v3818 = vmul.f32 %v3667, 0.70710677
        %v3819 = vmul.f32 %v3669, 0.70710677
        %v3820 = vmul.f32 %v3780, 0.70710677
        %v3821 = vmul.f32 %v3782, 0.70710677
        %v3822 = vmul.f32 %v3673, 0.70710677
        %v3823 = vmul.f32 %v3675, 0.70710677
        %v3824 = vmul.f32 %v3786, 0.70710677
        %v3825 = vmul.f32 %v3788, 0.70710677
        %v3826 = vmul.f32 %v3679, 0.70710677
        %v3827 = vmul.f32 %v3681, 0.70710677
        %v3828 = vmul.f32 %v3792, 0.70710677
        %v3829 = vmul.f32 %v3794, 0.70710677
        %v3830 = vmul.f32 %v3685, 0.70710677
        %v3831 = vmul.f32 %v3687, 0.70710677
        %v3832 = vmul.f32 %v3798, 0.70710677
        %v3833 = vmul.f32 %v3800, 0.70710677
        %3834 = vset.pattern.permute.xlu0 4
        %3835 = vperm.xlu0 %3834, %v670
        %v3836 = vpop.permute.xlu0 %3835
        %3838 = vset.pattern.permute.xlu0 4
        %3839 = vperm.xlu0 %3838, %v671
        %v3840 = vpop.permute.xlu0 %3839
        %3842 = vset.pattern.permute.xlu0 4
        %3843 = vperm.xlu0 %3842, %v672
        %v3844 = vpop.permute.xlu0 %3843
        %3846 = vset.pattern.permute.xlu0 4
        %3847 = vperm.xlu0 %3846, %v673
        %v3848 = vpop.permute.xlu0 %3847
        %3850 = vset.pattern.permute.xlu0 4
        %3851 = vperm.xlu0 %3850, %v674
        %v3852 = vpop.permute.xlu0 %3851
        %3854 = vset.pattern.permute.xlu0 4
        %3855 = vperm.xlu0 %3854, %v675
        %v3856 = vpop.permute.xlu0 %3855
        %3858 = vset.pattern.permute.xlu0 4
        %3859 = vperm.xlu0 %3858, %v676
        %v3860 = vpop.permute.xlu0 %3859
        %3862 = vset.pattern.permute.xlu0 4
        %3863 = vperm.xlu0 %3862, %v677
        %v3864 = vpop.permute.xlu0 %3863
        %v3866 = vadd.f32 %v3802, %v3836
        %v3867 = vadd.f32 %v3803, %v3836
        %v3868 = vadd.f32 %v3804, %v3836
        %v3869 = vadd.f32 %v3805, %v3836
        %v3870 = vadd.f32 %v3806, %v3840
        %v3871 = vadd.f32 %v3807, %v3840
        %v3872 = vadd.f32 %v3808, %v3840
        %v3873 = vadd.f32 %v3809, %v3840
        %v3874 = vadd.f32 %v3810, %v3844
        %v3875 = vadd.f32 %v3811, %v3844
        %v3876 = vadd.f32 %v3812, %v3844
        %v3877 = vadd.f32 %v3813, %v3844
        %v3878 = vadd.f32 %v3814, %v3848
        %v3879 = vadd.f32 %v3815, %v3848
        %v3880 = vadd.f32 %v3816, %v3848
        %v3881 = vadd.f32 %v3817, %v3848
        %v3882 = vadd.f32 %v3818, %v3852
        %v3883 = vadd.f32 %v3819, %v3852
        %v3884 = vadd.f32 %v3820, %v3852
        %v3885 = vadd.f32 %v3821, %v3852
        %v3886 = vadd.f32 %v3822, %v3856
        %v3887 = vadd.f32 %v3823, %v3856
        %v3888 = vadd.f32 %v3824, %v3856
        %v3889 = vadd.f32 %v3825, %v3856
        %v3890 = vadd.f32 %v3826, %v3860
        %v3891 = vadd.f32 %v3827, %v3860
        %v3892 = vadd.f32 %v3828, %v3860
        %v3893 = vadd.f32 %v3829, %v3860
        %v3894 = vadd.f32 %v3830, %v3864
        %v3895 = vadd.f32 %v3831, %v3864
        %v3896 = vadd.f32 %v3832, %v3864
        %v3897 = vadd.f32 %v3833, %v3864
        %v3898 = vmul.f32 %v3866, 100.0
        %v3899 = vmul.f32 %v3867, 100.0
        %v3900 = vmul.f32 %v3868, 100.0
        %v3901 = vmul.f32 %v3869, 100.0
        %v3902 = vmul.f32 %v3870, 100.0
        %v3903 = vmul.f32 %v3871, 100.0
        %v3904 = vmul.f32 %v3872, 100.0
        %v3905 = vmul.f32 %v3873, 100.0
        %v3906 = vmul.f32 %v3874, 100.0
        %v3907 = vmul.f32 %v3875, 100.0
        %v3908 = vmul.f32 %v3876, 100.0
        %v3909 = vmul.f32 %v3877, 100.0
        %v3910 = vmul.f32 %v3878, 100.0
        %v3911 = vmul.f32 %v3879, 100.0
        %v3912 = vmul.f32 %v3880, 100.0
        %v3913 = vmul.f32 %v3881, 100.0
        %v3914 = vmul.f32 %v3882, 100.0
        %v3915 = vmul.f32 %v3883, 100.0
        %v3916 = vmul.f32 %v3884, 100.0
        %v3917 = vmul.f32 %v3885, 100.0
        %v3918 = vmul.f32 %v3886, 100.0
        %v3919 = vmul.f32 %v3887, 100.0
        %v3920 = vmul.f32 %v3888, 100.0
        %v3921 = vmul.f32 %v3889, 100.0
        %v3922 = vmul.f32 %v3890, 100.0
        %v3923 = vmul.f32 %v3891, 100.0
        %v3924 = vmul.f32 %v3892, 100.0
        %v3925 = vmul.f32 %v3893, 100.0
        %v3926 = vmul.f32 %v3894, 100.0
        %v3927 = vmul.f32 %v3895, 100.0
        %v3928 = vmul.f32 %v3896, 100.0
        %v3929 = vmul.f32 %v3897, 100.0
        %vm3930 = vcmp.gt.f32.partialorder %v3898, 20.0
        %vm3931 = vcmp.gt.f32.partialorder %v3899, 20.0
        %vm3932 = vcmp.gt.f32.partialorder %v3900, 20.0
        %vm3933 = vcmp.gt.f32.partialorder %v3901, 20.0
        %vm3934 = vcmp.gt.f32.partialorder %v3902, 20.0
        %vm3935 = vcmp.gt.f32.partialorder %v3903, 20.0
        %vm3936 = vcmp.gt.f32.partialorder %v3904, 20.0
        %vm3937 = vcmp.gt.f32.partialorder %v3905, 20.0
        %vm3938 = vcmp.gt.f32.partialorder %v3906, 20.0
        %vm3939 = vcmp.gt.f32.partialorder %v3907, 20.0
        %vm3940 = vcmp.gt.f32.partialorder %v3908, 20.0
        %vm3941 = vcmp.gt.f32.partialorder %v3909, 20.0
        %vm3942 = vcmp.gt.f32.partialorder %v3910, 20.0
        %vm3943 = vcmp.gt.f32.partialorder %v3911, 20.0
        %vm3944 = vcmp.gt.f32.partialorder %v3912, 20.0
        %vm3945 = vcmp.gt.f32.partialorder %v3913, 20.0
        %vm3946 = vcmp.gt.f32.partialorder %v3914, 20.0
        %vm3947 = vcmp.gt.f32.partialorder %v3915, 20.0
        %vm3948 = vcmp.gt.f32.partialorder %v3916, 20.0
        %vm3949 = vcmp.gt.f32.partialorder %v3917, 20.0
        %vm3950 = vcmp.gt.f32.partialorder %v3918, 20.0
        %vm3951 = vcmp.gt.f32.partialorder %v3919, 20.0
        %vm3952 = vcmp.gt.f32.partialorder %v3920, 20.0
        %vm3953 = vcmp.gt.f32.partialorder %v3921, 20.0
        %vm3954 = vcmp.gt.f32.partialorder %v3922, 20.0
        %vm3955 = vcmp.gt.f32.partialorder %v3923, 20.0
        %vm3956 = vcmp.gt.f32.partialorder %v3924, 20.0
        %vm3957 = vcmp.gt.f32.partialorder %v3925, 20.0
        %vm3958 = vcmp.gt.f32.partialorder %v3926, 20.0
        %vm3959 = vcmp.gt.f32.partialorder %v3927, 20.0
        %vm3960 = vcmp.gt.f32.partialorder %v3928, 20.0
        %vm3961 = vcmp.gt.f32.partialorder %v3929, 20.0
        %v3962 = vmul.f32 %v3898, 1.442695
        %v3963 = vpow.pop %v3962
        %v3964 = vmul.f32 %v3899, 1.442695
        %v3965 = vpow.pop %v3964
        %v3966 = vmul.f32 %v3900, 1.442695
        %v3967 = vpow.pop %v3966
        %v3968 = vmul.f32 %v3901, 1.442695
        %v3969 = vpow.pop %v3968
        %v3970 = vmul.f32 %v3902, 1.442695
        %v3971 = vpow.pop %v3970
        %v3972 = vmul.f32 %v3903, 1.442695
        %v3973 = vpow.pop %v3972
        %v3974 = vmul.f32 %v3904, 1.442695
        %v3975 = vpow.pop %v3974
        %v3976 = vmul.f32 %v3905, 1.442695
        %v3977 = vpow.pop %v3976
        %v3978 = vmul.f32 %v3906, 1.442695
        %v3979 = vpow.pop %v3978
        %v3980 = vmul.f32 %v3907, 1.442695
        %v3981 = vpow.pop %v3980
        %v3982 = vmul.f32 %v3908, 1.442695
        %v3983 = vpow.pop %v3982
        %v3984 = vmul.f32 %v3909, 1.442695
        %v3985 = vpow.pop %v3984
        %v3986 = vmul.f32 %v3910, 1.442695
        %v3987 = vpow.pop %v3986
        %v3988 = vmul.f32 %v3911, 1.442695
        %v3989 = vpow.pop %v3988
        %v3990 = vmul.f32 %v3912, 1.442695
        %v3991 = vpow.pop %v3990
        %v3992 = vmul.f32 %v3913, 1.442695
        %v3993 = vpow.pop %v3992
        %v3994 = vmul.f32 %v3914, 1.442695
        %v3995 = vpow.pop %v3994
        %v3996 = vmul.f32 %v3915, 1.442695
        %v3997 = vpow.pop %v3996
        %v3998 = vmul.f32 %v3916, 1.442695
        %v3999 = vpow.pop %v3998
        %v4000 = vmul.f32 %v3917, 1.442695
        %v4001 = vpow.pop %v4000
        %v4002 = vmul.f32 %v3918, 1.442695
        %v4003 = vpow.pop %v4002
        %v4004 = vmul.f32 %v3919, 1.442695
        %v4005 = vpow.pop %v4004
        %v4006 = vmul.f32 %v3920, 1.442695
        %v4007 = vpow.pop %v4006
        %v4008 = vmul.f32 %v3921, 1.442695
        %v4009 = vpow.pop %v4008
        %v4010 = vmul.f32 %v3922, 1.442695
        %v4011 = vpow.pop %v4010
        %v4012 = vmul.f32 %v3923, 1.442695
        %v4013 = vpow.pop %v4012
        %v4014 = vmul.f32 %v3924, 1.442695
        %v4015 = vpow.pop %v4014
        %v4016 = vmul.f32 %v3925, 1.442695
        %v4017 = vpow.pop %v4016
        %v4018 = vmul.f32 %v3926, 1.442695
        %v4019 = vpow.pop %v4018
        %v4020 = vmul.f32 %v3927, 1.442695
        %v4021 = vpow.pop %v4020
        %v4022 = vmul.f32 %v3928, 1.442695
        %v4023 = vpow.pop %v4022
        %v4024 = vmul.f32 %v3929, 1.442695
        %v4025 = vpow.pop %v4024
        %v4026 = vadd.f32 %v3963, 1.0
        %v4027 = vlog2.pop %v4026
        %v4028 = vmul.f32 %v4027, 0.6931472
        %v4029 = vmul.f32 -0.5, %v3963
        %v4030 = vadd.f32 %v4029, 1.0
        %v4031 = vmul.f32 %v4030, %v3963
        %v4032 = vand.u32 2147483647, %v3963
        %vm4033 = vcmp.lt.f32.partialorder %v4032, 0.0004427343
        %v4034 = vsel %vm4033, %v4031, %v4028
        %v4035 = vadd.f32 %v3965, 1.0
        %v4036 = vlog2.pop %v4035
        %v4037 = vmul.f32 %v4036, 0.6931472
        %v4038 = vmul.f32 -0.5, %v3965
        %v4039 = vadd.f32 %v4038, 1.0
        %v4040 = vmul.f32 %v4039, %v3965
        %v4041 = vand.u32 2147483647, %v3965
        %vm4042 = vcmp.lt.f32.partialorder %v4041, 0.0004427343
        %v4043 = vsel %vm4042, %v4040, %v4037
        %v4044 = vadd.f32 %v3967, 1.0
        %v4045 = vlog2.pop %v4044
        %v4046 = vmul.f32 %v4045, 0.6931472
        %v4047 = vmul.f32 -0.5, %v3967
        %v4048 = vadd.f32 %v4047, 1.0
        %v4049 = vmul.f32 %v4048, %v3967
        %v4050 = vand.u32 2147483647, %v3967
        %vm4051 = vcmp.lt.f32.partialorder %v4050, 0.0004427343
        %v4052 = vsel %vm4051, %v4049, %v4046
        %v4053 = vadd.f32 %v3969, 1.0
        %v4054 = vlog2.pop %v4053
        %v4055 = vmul.f32 %v4054, 0.6931472
        %v4056 = vmul.f32 -0.5, %v3969
        %v4057 = vadd.f32 %v4056, 1.0
        %v4058 = vmul.f32 %v4057, %v3969
        %v4059 = vand.u32 2147483647, %v3969
        %vm4060 = vcmp.lt.f32.partialorder %v4059, 0.0004427343
        %v4061 = vsel %vm4060, %v4058, %v4055
        %v4062 = vadd.f32 %v3971, 1.0
        %v4063 = vlog2.pop %v4062
        %v4064 = vmul.f32 %v4063, 0.6931472
        %v4065 = vmul.f32 -0.5, %v3971
        %v4066 = vadd.f32 %v4065, 1.0
        %v4067 = vmul.f32 %v4066, %v3971
        %v4068 = vand.u32 2147483647, %v3971
        %vm4069 = vcmp.lt.f32.partialorder %v4068, 0.0004427343
        %v4070 = vsel %vm4069, %v4067, %v4064
        %v4071 = vadd.f32 %v3973, 1.0
        %v4072 = vlog2.pop %v4071
        %v4073 = vmul.f32 %v4072, 0.6931472
        %v4074 = vmul.f32 -0.5, %v3973
        %v4075 = vadd.f32 %v4074, 1.0
        %v4076 = vmul.f32 %v4075, %v3973
        %v4077 = vand.u32 2147483647, %v3973
        %vm4078 = vcmp.lt.f32.partialorder %v4077, 0.0004427343
        %v4079 = vsel %vm4078, %v4076, %v4073
        %v4080 = vadd.f32 %v3975, 1.0
        %v4081 = vlog2.pop %v4080
        %v4082 = vmul.f32 %v4081, 0.6931472
        %v4083 = vmul.f32 -0.5, %v3975
        %v4084 = vadd.f32 %v4083, 1.0
        %v4085 = vmul.f32 %v4084, %v3975
        %v4086 = vand.u32 2147483647, %v3975
        %vm4087 = vcmp.lt.f32.partialorder %v4086, 0.0004427343
        %v4088 = vsel %vm4087, %v4085, %v4082
        %v4089 = vadd.f32 %v3977, 1.0
        %v4090 = vlog2.pop %v4089
        %v4091 = vmul.f32 %v4090, 0.6931472
        %v4092 = vmul.f32 -0.5, %v3977
        %v4093 = vadd.f32 %v4092, 1.0
        %v4094 = vmul.f32 %v4093, %v3977
        %v4095 = vand.u32 2147483647, %v3977
        %vm4096 = vcmp.lt.f32.partialorder %v4095, 0.0004427343
        %v4097 = vsel %vm4096, %v4094, %v4091
        %v4098 = vadd.f32 %v3979, 1.0
        %v4099 = vlog2.pop %v4098
        %v4100 = vmul.f32 %v4099, 0.6931472
        %v4101 = vmul.f32 -0.5, %v3979
        %v4102 = vadd.f32 %v4101, 1.0
        %v4103 = vmul.f32 %v4102, %v3979
        %v4104 = vand.u32 2147483647, %v3979
        %vm4105 = vcmp.lt.f32.partialorder %v4104, 0.0004427343
        %v4106 = vsel %vm4105, %v4103, %v4100
        %v4107 = vadd.f32 %v3981, 1.0
        %v4108 = vlog2.pop %v4107
        %v4109 = vmul.f32 %v4108, 0.6931472
        %v4110 = vmul.f32 -0.5, %v3981
        %v4111 = vadd.f32 %v4110, 1.0
        %v4112 = vmul.f32 %v4111, %v3981
        %v4113 = vand.u32 2147483647, %v3981
        %vm4114 = vcmp.lt.f32.partialorder %v4113, 0.0004427343
        %v4115 = vsel %vm4114, %v4112, %v4109
        %v4116 = vadd.f32 %v3983, 1.0
        %v4117 = vlog2.pop %v4116
        %v4118 = vmul.f32 %v4117, 0.6931472
        %v4119 = vmul.f32 -0.5, %v3983
        %v4120 = vadd.f32 %v4119, 1.0
        %v4121 = vmul.f32 %v4120, %v3983
        %v4122 = vand.u32 2147483647, %v3983
        %vm4123 = vcmp.lt.f32.partialorder %v4122, 0.0004427343
        %v4124 = vsel %vm4123, %v4121, %v4118
        %v4125 = vadd.f32 %v3985, 1.0
        %v4126 = vlog2.pop %v4125
        %v4127 = vmul.f32 %v4126, 0.6931472
        %v4128 = vmul.f32 -0.5, %v3985
        %v4129 = vadd.f32 %v4128, 1.0
        %v4130 = vmul.f32 %v4129, %v3985
        %v4131 = vand.u32 2147483647, %v3985
        %vm4132 = vcmp.lt.f32.partialorder %v4131, 0.0004427343
        %v4133 = vsel %vm4132, %v4130, %v4127
        %v4134 = vadd.f32 %v3987, 1.0
        %v4135 = vlog2.pop %v4134
        %v4136 = vmul.f32 %v4135, 0.6931472
        %v4137 = vmul.f32 -0.5, %v3987
        %v4138 = vadd.f32 %v4137, 1.0
        %v4139 = vmul.f32 %v4138, %v3987
        %v4140 = vand.u32 2147483647, %v3987
        %vm4141 = vcmp.lt.f32.partialorder %v4140, 0.0004427343
        %v4142 = vsel %vm4141, %v4139, %v4136
        %v4143 = vadd.f32 %v3989, 1.0
        %v4144 = vlog2.pop %v4143
        %v4145 = vmul.f32 %v4144, 0.6931472
        %v4146 = vmul.f32 -0.5, %v3989
        %v4147 = vadd.f32 %v4146, 1.0
        %v4148 = vmul.f32 %v4147, %v3989
        %v4149 = vand.u32 2147483647, %v3989
        %vm4150 = vcmp.lt.f32.partialorder %v4149, 0.0004427343
        %v4151 = vsel %vm4150, %v4148, %v4145
        %v4152 = vadd.f32 %v3991, 1.0
        %v4153 = vlog2.pop %v4152
        %v4154 = vmul.f32 %v4153, 0.6931472
        %v4155 = vmul.f32 -0.5, %v3991
        %v4156 = vadd.f32 %v4155, 1.0
        %v4157 = vmul.f32 %v4156, %v3991
        %v4158 = vand.u32 2147483647, %v3991
        %vm4159 = vcmp.lt.f32.partialorder %v4158, 0.0004427343
        %v4160 = vsel %vm4159, %v4157, %v4154
        %v4161 = vadd.f32 %v3993, 1.0
        %v4162 = vlog2.pop %v4161
        %v4163 = vmul.f32 %v4162, 0.6931472
        %v4164 = vmul.f32 -0.5, %v3993
        %v4165 = vadd.f32 %v4164, 1.0
        %v4166 = vmul.f32 %v4165, %v3993
        %v4167 = vand.u32 2147483647, %v3993
        %vm4168 = vcmp.lt.f32.partialorder %v4167, 0.0004427343
        %v4169 = vsel %vm4168, %v4166, %v4163
        %v4170 = vadd.f32 %v3995, 1.0
        %v4171 = vlog2.pop %v4170
        %v4172 = vmul.f32 %v4171, 0.6931472
        %v4173 = vmul.f32 -0.5, %v3995
        %v4174 = vadd.f32 %v4173, 1.0
        %v4175 = vmul.f32 %v4174, %v3995
        %v4176 = vand.u32 2147483647, %v3995
        %vm4177 = vcmp.lt.f32.partialorder %v4176, 0.0004427343
        %v4178 = vsel %vm4177, %v4175, %v4172
        %v4179 = vadd.f32 %v3997, 1.0
        %v4180 = vlog2.pop %v4179
        %v4181 = vmul.f32 %v4180, 0.6931472
        %v4182 = vmul.f32 -0.5, %v3997
        %v4183 = vadd.f32 %v4182, 1.0
        %v4184 = vmul.f32 %v4183, %v3997
        %v4185 = vand.u32 2147483647, %v3997
        %vm4186 = vcmp.lt.f32.partialorder %v4185, 0.0004427343
        %v4187 = vsel %vm4186, %v4184, %v4181
        %v4188 = vadd.f32 %v3999, 1.0
        %v4189 = vlog2.pop %v4188
        %v4190 = vmul.f32 %v4189, 0.6931472
        %v4191 = vmul.f32 -0.5, %v3999
        %v4192 = vadd.f32 %v4191, 1.0
        %v4193 = vmul.f32 %v4192, %v3999
        %v4194 = vand.u32 2147483647, %v3999
        %vm4195 = vcmp.lt.f32.partialorder %v4194, 0.0004427343
        %v4196 = vsel %vm4195, %v4193, %v4190
        %v4197 = vadd.f32 %v4001, 1.0
        %v4198 = vlog2.pop %v4197
        %v4199 = vmul.f32 %v4198, 0.6931472
        %v4200 = vmul.f32 -0.5, %v4001
        %v4201 = vadd.f32 %v4200, 1.0
        %v4202 = vmul.f32 %v4201, %v4001
        %v4203 = vand.u32 2147483647, %v4001
        %vm4204 = vcmp.lt.f32.partialorder %v4203, 0.0004427343
        %v4205 = vsel %vm4204, %v4202, %v4199
        %v4206 = vadd.f32 %v4003, 1.0
        %v4207 = vlog2.pop %v4206
        %v4208 = vmul.f32 %v4207, 0.6931472
        %v4209 = vmul.f32 -0.5, %v4003
        %v4210 = vadd.f32 %v4209, 1.0
        %v4211 = vmul.f32 %v4210, %v4003
        %v4212 = vand.u32 2147483647, %v4003
        %vm4213 = vcmp.lt.f32.partialorder %v4212, 0.0004427343
        %v4214 = vsel %vm4213, %v4211, %v4208
        %v4215 = vadd.f32 %v4005, 1.0
        %v4216 = vlog2.pop %v4215
        %v4217 = vmul.f32 %v4216, 0.6931472
        %v4218 = vmul.f32 -0.5, %v4005
        %v4219 = vadd.f32 %v4218, 1.0
        %v4220 = vmul.f32 %v4219, %v4005
        %v4221 = vand.u32 2147483647, %v4005
        %vm4222 = vcmp.lt.f32.partialorder %v4221, 0.0004427343
        %v4223 = vsel %vm4222, %v4220, %v4217
        %v4224 = vadd.f32 %v4007, 1.0
        %v4225 = vlog2.pop %v4224
        %v4226 = vmul.f32 %v4225, 0.6931472
        %v4227 = vmul.f32 -0.5, %v4007
        %v4228 = vadd.f32 %v4227, 1.0
        %v4229 = vmul.f32 %v4228, %v4007
        %v4230 = vand.u32 2147483647, %v4007
        %vm4231 = vcmp.lt.f32.partialorder %v4230, 0.0004427343
        %v4232 = vsel %vm4231, %v4229, %v4226
        %v4233 = vadd.f32 %v4009, 1.0
        %v4234 = vlog2.pop %v4233
        %v4235 = vmul.f32 %v4234, 0.6931472
        %v4236 = vmul.f32 -0.5, %v4009
        %v4237 = vadd.f32 %v4236, 1.0
        %v4238 = vmul.f32 %v4237, %v4009
        %v4239 = vand.u32 2147483647, %v4009
        %vm4240 = vcmp.lt.f32.partialorder %v4239, 0.0004427343
        %v4241 = vsel %vm4240, %v4238, %v4235
        %v4242 = vadd.f32 %v4011, 1.0
        %v4243 = vlog2.pop %v4242
        %v4244 = vmul.f32 %v4243, 0.6931472
        %v4245 = vmul.f32 -0.5, %v4011
        %v4246 = vadd.f32 %v4245, 1.0
        %v4247 = vmul.f32 %v4246, %v4011
        %v4248 = vand.u32 2147483647, %v4011
        %vm4249 = vcmp.lt.f32.partialorder %v4248, 0.0004427343
        %v4250 = vsel %vm4249, %v4247, %v4244
        %v4251 = vadd.f32 %v4013, 1.0
        %v4252 = vlog2.pop %v4251
        %v4253 = vmul.f32 %v4252, 0.6931472
        %v4254 = vmul.f32 -0.5, %v4013
        %v4255 = vadd.f32 %v4254, 1.0
        %v4256 = vmul.f32 %v4255, %v4013
        %v4257 = vand.u32 2147483647, %v4013
        %vm4258 = vcmp.lt.f32.partialorder %v4257, 0.0004427343
        %v4259 = vsel %vm4258, %v4256, %v4253
        %v4260 = vadd.f32 %v4015, 1.0
        %v4261 = vlog2.pop %v4260
        %v4262 = vmul.f32 %v4261, 0.6931472
        %v4263 = vmul.f32 -0.5, %v4015
        %v4264 = vadd.f32 %v4263, 1.0
        %v4265 = vmul.f32 %v4264, %v4015
        %v4266 = vand.u32 2147483647, %v4015
        %vm4267 = vcmp.lt.f32.partialorder %v4266, 0.0004427343
        %v4268 = vsel %vm4267, %v4265, %v4262
        %v4269 = vadd.f32 %v4017, 1.0
        %v4270 = vlog2.pop %v4269
        %v4271 = vmul.f32 %v4270, 0.6931472
        %v4272 = vmul.f32 -0.5, %v4017
        %v4273 = vadd.f32 %v4272, 1.0
        %v4274 = vmul.f32 %v4273, %v4017
        %v4275 = vand.u32 2147483647, %v4017
        %vm4276 = vcmp.lt.f32.partialorder %v4275, 0.0004427343
        %v4277 = vsel %vm4276, %v4274, %v4271
        %v4278 = vadd.f32 %v4019, 1.0
        %v4279 = vlog2.pop %v4278
        %v4280 = vmul.f32 %v4279, 0.6931472
        %v4281 = vmul.f32 -0.5, %v4019
        %v4282 = vadd.f32 %v4281, 1.0
        %v4283 = vmul.f32 %v4282, %v4019
        %v4284 = vand.u32 2147483647, %v4019
        %vm4285 = vcmp.lt.f32.partialorder %v4284, 0.0004427343
        %v4286 = vsel %vm4285, %v4283, %v4280
        %v4287 = vadd.f32 %v4021, 1.0
        %v4288 = vlog2.pop %v4287
        %v4289 = vmul.f32 %v4288, 0.6931472
        %v4290 = vmul.f32 -0.5, %v4021
        %v4291 = vadd.f32 %v4290, 1.0
        %v4292 = vmul.f32 %v4291, %v4021
        %v4293 = vand.u32 2147483647, %v4021
        %vm4294 = vcmp.lt.f32.partialorder %v4293, 0.0004427343
        %v4295 = vsel %vm4294, %v4292, %v4289
        %v4296 = vadd.f32 %v4023, 1.0
        %v4297 = vlog2.pop %v4296
        %v4298 = vmul.f32 %v4297, 0.6931472
        %v4299 = vmul.f32 -0.5, %v4023
        %v4300 = vadd.f32 %v4299, 1.0
        %v4301 = vmul.f32 %v4300, %v4023
        %v4302 = vand.u32 2147483647, %v4023
        %vm4303 = vcmp.lt.f32.partialorder %v4302, 0.0004427343
        %v4304 = vsel %vm4303, %v4301, %v4298
        %v4305 = vadd.f32 %v4025, 1.0
        %v4306 = vlog2.pop %v4305
        %v4307 = vmul.f32 %v4306, 0.6931472
        %v4308 = vmul.f32 -0.5, %v4025
        %v4309 = vadd.f32 %v4308, 1.0
        %v4310 = vmul.f32 %v4309, %v4025
        %v4311 = vand.u32 2147483647, %v4025
        %vm4312 = vcmp.lt.f32.partialorder %v4311, 0.0004427343
        %v4313 = vsel %vm4312, %v4310, %v4307
        %v4314 = vmul.f32 %v4034, 0.01
        %v4315 = vmul.f32 %v4043, 0.01
        %v4316 = vmul.f32 %v4052, 0.01
        %v4317 = vmul.f32 %v4061, 0.01
        %v4318 = vmul.f32 %v4070, 0.01
        %v4319 = vmul.f32 %v4079, 0.01
        %v4320 = vmul.f32 %v4088, 0.01
        %v4321 = vmul.f32 %v4097, 0.01
        %v4322 = vmul.f32 %v4106, 0.01
        %v4323 = vmul.f32 %v4115, 0.01
        %v4324 = vmul.f32 %v4124, 0.01
        %v4325 = vmul.f32 %v4133, 0.01
        %v4326 = vmul.f32 %v4142, 0.01
        %v4327 = vmul.f32 %v4151, 0.01
        %v4328 = vmul.f32 %v4160, 0.01
        %v4329 = vmul.f32 %v4169, 0.01
        %v4330 = vmul.f32 %v4178, 0.01
        %v4331 = vmul.f32 %v4187, 0.01
        %v4332 = vmul.f32 %v4196, 0.01
        %v4333 = vmul.f32 %v4205, 0.01
        %v4334 = vmul.f32 %v4214, 0.01
        %v4335 = vmul.f32 %v4223, 0.01
        %v4336 = vmul.f32 %v4232, 0.01
        %v4337 = vmul.f32 %v4241, 0.01
        %v4338 = vmul.f32 %v4250, 0.01
        %v4339 = vmul.f32 %v4259, 0.01
        %v4340 = vmul.f32 %v4268, 0.01
        %v4341 = vmul.f32 %v4277, 0.01
        %v4342 = vmul.f32 %v4286, 0.01
        %v4343 = vmul.f32 %v4295, 0.01
        %v4344 = vmul.f32 %v4304, 0.01
        %v4345 = vmul.f32 %v4313, 0.01
        %v4346 = vsel %vm3930, %v3866, %v4314
        %v4347 = vsel %vm3931, %v3867, %v4315
        %v4348 = vsel %vm3932, %v3868, %v4316
        %v4349 = vsel %vm3933, %v3869, %v4317
        %v4350 = vsel %vm3934, %v3870, %v4318
        %v4351 = vsel %vm3935, %v3871, %v4319
        %v4352 = vsel %vm3936, %v3872, %v4320
        %v4353 = vsel %vm3937, %v3873, %v4321
        %v4354 = vsel %vm3938, %v3874, %v4322
        %v4355 = vsel %vm3939, %v3875, %v4323
        %v4356 = vsel %vm3940, %v3876, %v4324
        %v4357 = vsel %vm3941, %v3877, %v4325
        %v4358 = vsel %vm3942, %v3878, %v4326
        %v4359 = vsel %vm3943, %v3879, %v4327
        %v4360 = vsel %vm3944, %v3880, %v4328
        %v4361 = vsel %vm3945, %v3881, %v4329
        %v4362 = vsel %vm3946, %v3882, %v4330
        %v4363 = vsel %vm3947, %v3883, %v4331
        %v4364 = vsel %vm3948, %v3884, %v4332
        %v4365 = vsel %vm3949, %v3885, %v4333
        %v4366 = vsel %vm3950, %v3886, %v4334
        %v4367 = vsel %vm3951, %v3887, %v4335
        %v4368 = vsel %vm3952, %v3888, %v4336
        %v4369 = vsel %vm3953, %v3889, %v4337
        %v4370 = vsel %vm3954, %v3890, %v4338
        %v4371 = vsel %vm3955, %v3891, %v4339
        %v4372 = vsel %vm3956, %v3892, %v4340
        %v4373 = vsel %vm3957, %v3893, %v4341
        %v4374 = vsel %vm3958, %v3894, %v4342
        %v4375 = vsel %vm3959, %v3895, %v4343
        %v4376 = vsel %vm3960, %v3896, %v4344
        %v4377 = vsel %vm3961, %v3897, %v4345
        %s4378 = scalar_lea.vmem [#allocation2], 256
        %v4379 = vld [vmem:[%s4378] sm:$0xff]
        %v4380 = vld [vmem:[%s4378 + $0x8] sm:$0xff]
        %v4381 = vld [vmem:[%s4378 + $0x10] sm:$0xff]
        %v4382 = vld [vmem:[%s4378 + $0x18] sm:$0xff]
        %v4383 = vld [vmem:[%s4378 + $0x20] sm:$0xff]
        %v4384 = vld [vmem:[%s4378 + $0x28] sm:$0xff]
        %v4385 = vld [vmem:[%s4378 + $0x30] sm:$0xff]
        %v4386 = vld [vmem:[%s4378 + $0x38] sm:$0xff]
        %4387 = vset.pattern.permute.xlu0 5
        %4388 = vperm.xlu0 %4387, %v670
        %v4389 = vpop.permute.xlu0 %4388
        %4391 = vset.pattern.permute.xlu0 5
        %4392 = vperm.xlu0 %4391, %v671
        %v4393 = vpop.permute.xlu0 %4392
        %4395 = vset.pattern.permute.xlu0 5
        %4396 = vperm.xlu0 %4395, %v672
        %v4397 = vpop.permute.xlu0 %4396
        %4399 = vset.pattern.permute.xlu0 5
        %4400 = vperm.xlu0 %4399, %v673
        %v4401 = vpop.permute.xlu0 %4400
        %4403 = vset.pattern.permute.xlu0 5
        %4404 = vperm.xlu0 %4403, %v674
        %v4405 = vpop.permute.xlu0 %4404
        %4407 = vset.pattern.permute.xlu0 5
        %4408 = vperm.xlu0 %4407, %v675
        %v4409 = vpop.permute.xlu0 %4408
        %4411 = vset.pattern.permute.xlu0 5
        %4412 = vperm.xlu0 %4411, %v676
        %v4413 = vpop.permute.xlu0 %4412
        %4415 = vset.pattern.permute.xlu0 5
        %4416 = vperm.xlu0 %4415, %v677
        %v4417 = vpop.permute.xlu0 %4416
        %v4420 = vsel %vm1270, %v4379, 0
        %v4423 = vsel %vm1270, %v4380, 0
        %v4426 = vsel %vm1270, %v4381, 0
        %v4429 = vsel %vm1270, %v4382, 0
        %v4432 = vsel %vm1270, %v4383, 0
        %v4435 = vsel %vm1270, %v4384, 0
        %v4438 = vsel %vm1270, %v4385, 0
        %v4441 = vsel %vm1270, %v4386, 0
        %4443 = vmatprep.subr.mxu0 %v4347
        %4444 = vmatpush1.msra.mxu0 %v4346
        %4445 = vmatprep.subr.mxu0 %v4351
        %4446 = vmatpush1.msra.mxu0 %v4350
        %4447 = vmatprep.subr.mxu0 %v4355
        %4448 = vmatpush1.msra.mxu0 %v4354
        %4449 = vmatprep.subr.mxu0 %v4359
        %4450 = vmatpush1.msra.mxu0 %v4358
        %4451 = vmatprep.subr.mxu0 %v4363
        %4452 = vmatpush1.msra.mxu0 %v4362
        %4453 = vmatprep.subr.mxu0 %v4367
        %4454 = vmatpush1.msra.mxu0 %v4366
        %4455 = vmatprep.subr.mxu0 %v4371
        %4456 = vmatpush1.msra.mxu0 %v4370
        %4457 = vmatprep.subr.mxu0 %v4375
        %4458 = vmatpush1.msra.mxu0 %v4374
        %4459 = vmatprep.subr.mxu0 0.0
        %4460 = vmatpush1.msra.mxu0 0.0
        %4461 = vmatprep.subr.mxu0 0.0
        %4462 = vmatpush1.msra.mxu0 0.0
        %4463 = vmatprep.subr.mxu0 0.0
        %4464 = vmatpush1.msra.mxu0 0.0
        %4465 = vmatprep.subr.mxu0 0.0
        %4466 = vmatpush1.msra.mxu0 0.0
        %4467 = vmatprep.subr.mxu0 0.0
        %4468 = vmatpush1.msra.mxu0 0.0
        %4469 = vmatprep.subr.mxu0 0.0
        %4470 = vmatpush1.msra.mxu0 0.0
        %4471 = vmatprep.subr.mxu0 0.0
        %4472 = vmatpush1.msra.mxu0 0.0
        %4473 = vmatprep.subr.mxu0 0.0
        %4474 = vmatpush1.msra.mxu0 0.0
        %4475 = vmatprep.subr.mxu0 0.0
        %4476 = vmatpush1.msra.mxu0 0.0
        %4477 = vmatprep.subr.mxu0 0.0
        %4478 = vmatpush1.msra.mxu0 0.0
        %4479 = vmatprep.subr.mxu0 0.0
        %4480 = vmatpush1.msra.mxu0 0.0
        %4481 = vmatprep.subr.mxu0 0.0
        %4482 = vmatpush1.msra.mxu0 0.0
        %4483 = vmatprep.subr.mxu0 0.0
        %4484 = vmatpush1.msra.mxu0 0.0
        %4485 = vmatprep.subr.mxu0 0.0
        %4486 = vmatpush1.msra.mxu0 0.0
        %4487 = vmatprep.subr.mxu0 0.0
        %4488 = vmatpush1.msra.mxu0 0.0
        %4489 = vmatprep.subr.mxu0 0.0
        %4490 = vmatpush1.msra.mxu0 0.0
        %4491 = vmatprep.subr.mxu0 0.0
        %4492 = vmatpush1.msra.mxu0 0.0
        %4493 = vmatprep.subr.mxu0 0.0
        %4494 = vmatpush1.msra.mxu0 0.0
        %4495 = vmatprep.subr.mxu0 0.0
        %4496 = vmatpush1.msra.mxu0 0.0
        %4497 = vmatprep.subr.mxu0 0.0
        %4498 = vmatpush1.msra.mxu0 0.0
        %4499 = vmatprep.subr.mxu0 0.0
        %4500 = vmatpush1.msra.mxu0 0.0
        %4501 = vmatprep.subr.mxu0 0.0
        %4502 = vmatpush1.msra.mxu0 0.0
        %4503 = vmatprep.subr.mxu0 0.0
        %4504 = vmatpush1.msra.mxu0 0.0
        %4505 = vmatprep.subr.mxu0 0.0
        %4506 = vmatpush1.msra.mxu0 0.0
        %4507 = vmatprep.mubr.f32.mxu0 0.0
        %4508 = vmatmul.mubr.f32.gmra.mrb[0].mxu0 %v4420
        %v4509 = vpop.f32.mrb[0].mxu0
        %v4510 = vadd.f32 %v4389, %v4509
        %v4511 = vpop.f32.mrb[0].mxu0
        %v4512 = vadd.f32 %v4389, %v4511
        %4513 = vmatprep.mubr.f32.mxu0 0.0
        %4514 = vmatmul.mubr.f32.gmra.mrb[0].mxu0 %v4423
        %v4515 = vpop.f32.mrb[0].mxu0
        %v4516 = vadd.f32 %v4393, %v4515
        %v4517 = vpop.f32.mrb[0].mxu0
        %v4518 = vadd.f32 %v4393, %v4517
        %4519 = vmatprep.mubr.f32.mxu0 0.0
        %4520 = vmatmul.mubr.f32.gmra.mrb[0].mxu0 %v4426
        %v4521 = vpop.f32.mrb[0].mxu0
        %v4522 = vadd.f32 %v4397, %v4521
        %v4523 = vpop.f32.mrb[0].mxu0
        %v4524 = vadd.f32 %v4397, %v4523
        %4525 = vmatprep.mubr.f32.mxu0 0.0
        %4526 = vmatmul.mubr.f32.gmra.mrb[0].mxu0 %v4429
        %v4527 = vpop.f32.mrb[0].mxu0
        %v4528 = vadd.f32 %v4401, %v4527
        %v4529 = vpop.f32.mrb[0].mxu0
        %v4530 = vadd.f32 %v4401, %v4529
        %4531 = vmatprep.mubr.f32.mxu0 0.0
        %4532 = vmatmul.mubr.f32.gmra.mrb[0].mxu0 %v4432
        %v4533 = vpop.f32.mrb[0].mxu0
        %v4534 = vadd.f32 %v4405, %v4533
        %v4535 = vpop.f32.mrb[0].mxu0
        %v4536 = vadd.f32 %v4405, %v4535
        %4537 = vmatprep.mubr.f32.mxu0 0.0
        %4538 = vmatmul.mubr.f32.gmra.mrb[0].mxu0 %v4435
        %v4539 = vpop.f32.mrb[0].mxu0
        %v4540 = vadd.f32 %v4409, %v4539
        %v4541 = vpop.f32.mrb[0].mxu0
        %v4542 = vadd.f32 %v4409, %v4541
        %4543 = vmatprep.mubr.f32.mxu0 0.0
        %4544 = vmatmul.mubr.f32.gmra.mrb[0].mxu0 %v4438
        %v4545 = vpop.f32.mrb[0].mxu0
        %v4546 = vadd.f32 %v4413, %v4545
        %v4547 = vpop.f32.mrb[0].mxu0
        %v4548 = vadd.f32 %v4413, %v4547
        %4549 = vmatprep.mubr.f32.mxu0 0.0
        %4550 = vmatmul.mubr.f32.gmra.mrb[0].mxu0 %v4441
        %v4551 = vpop.f32.mrb[0].mxu0
        %v4552 = vadd.f32 %v4417, %v4551
        %v4553 = vpop.f32.mrb[0].mxu0
        %v4554 = vadd.f32 %v4417, %v4553
        %4555 = vdwg.mxu0
        %4556 = vmatprep.subr.mxu0 %v4349
        %4557 = vmatpush1.msra.mxu0 %v4348
        %4558 = vmatprep.subr.mxu0 %v4353
        %4559 = vmatpush1.msra.mxu0 %v4352
        %4560 = vmatprep.subr.mxu0 %v4357
        %4561 = vmatpush1.msra.mxu0 %v4356
        %4562 = vmatprep.subr.mxu0 %v4361
        %4563 = vmatpush1.msra.mxu0 %v4360
        %4564 = vmatprep.subr.mxu0 %v4365
        %4565 = vmatpush1.msra.mxu0 %v4364
        %4566 = vmatprep.subr.mxu0 %v4369
        %4567 = vmatpush1.msra.mxu0 %v4368
        %4568 = vmatprep.subr.mxu0 %v4373
        %4569 = vmatpush1.msra.mxu0 %v4372
        %4570 = vmatprep.subr.mxu0 %v4377
        %4571 = vmatpush1.msra.mxu0 %v4376
        %4572 = vmatprep.subr.mxu0 0.0
        %4573 = vmatpush1.msra.mxu0 0.0
        %4574 = vmatprep.subr.mxu0 0.0
        %4575 = vmatpush1.msra.mxu0 0.0
        %4576 = vmatprep.subr.mxu0 0.0
        %4577 = vmatpush1.msra.mxu0 0.0
        %4578 = vmatprep.subr.mxu0 0.0
        %4579 = vmatpush1.msra.mxu0 0.0
        %4580 = vmatprep.subr.mxu0 0.0
        %4581 = vmatpush1.msra.mxu0 0.0
        %4582 = vmatprep.subr.mxu0 0.0
        %4583 = vmatpush1.msra.mxu0 0.0
        %4584 = vmatprep.subr.mxu0 0.0
        %4585 = vmatpush1.msra.mxu0 0.0
        %4586 = vmatprep.subr.mxu0 0.0
        %4587 = vmatpush1.msra.mxu0 0.0
        %4588 = vmatprep.subr.mxu0 0.0
        %4589 = vmatpush1.msra.mxu0 0.0
        %4590 = vmatprep.subr.mxu0 0.0
        %4591 = vmatpush1.msra.mxu0 0.0
        %4592 = vmatprep.subr.mxu0 0.0
        %4593 = vmatpush1.msra.mxu0 0.0
        %4594 = vmatprep.subr.mxu0 0.0
        %4595 = vmatpush1.msra.mxu0 0.0
        %4596 = vmatprep.subr.mxu0 0.0
        %4597 = vmatpush1.msra.mxu0 0.0
        %4598 = vmatprep.subr.mxu0 0.0
        %4599 = vmatpush1.msra.mxu0 0.0
        %4600 = vmatprep.subr.mxu0 0.0
        %4601 = vmatpush1.msra.mxu0 0.0
        %4602 = vmatprep.subr.mxu0 0.0
        %4603 = vmatpush1.msra.mxu0 0.0
        %4604 = vmatprep.subr.mxu0 0.0
        %4605 = vmatpush1.msra.mxu0 0.0
        %4606 = vmatprep.subr.mxu0 0.0
        %4607 = vmatpush1.msra.mxu0 0.0
        %4608 = vmatprep.subr.mxu0 0.0
        %4609 = vmatpush1.msra.mxu0 0.0
        %4610 = vmatprep.subr.mxu0 0.0
        %4611 = vmatpush1.msra.mxu0 0.0
        %4612 = vmatprep.subr.mxu0 0.0
        %4613 = vmatpush1.msra.mxu0 0.0
        %4614 = vmatprep.subr.mxu0 0.0
        %4615 = vmatpush1.msra.mxu0 0.0
        %4616 = vmatprep.subr.mxu0 0.0
        %4617 = vmatpush1.msra.mxu0 0.0
        %4618 = vmatprep.subr.mxu0 0.0
        %4619 = vmatpush1.msra.mxu0 0.0
        %4620 = vmatprep.mubr.f32.mxu0 0.0
        %4621 = vmatmul.mubr.f32.gmra.mrb[0].mxu0 %v4420
        %v4622 = vpop.f32.mrb[0].mxu0
        %v4623 = vadd.f32 %v4389, %v4622
        %v4624 = vpop.f32.mrb[0].mxu0
        %v4625 = vadd.f32 %v4389, %v4624
        %4626 = vmatprep.mubr.f32.mxu0 0.0
        %4627 = vmatmul.mubr.f32.gmra.mrb[0].mxu0 %v4423
        %v4628 = vpop.f32.mrb[0].mxu0
        %v4629 = vadd.f32 %v4393, %v4628
        %v4630 = vpop.f32.mrb[0].mxu0
        %v4631 = vadd.f32 %v4393, %v4630
        %4632 = vmatprep.mubr.f32.mxu0 0.0
        %4633 = vmatmul.mubr.f32.gmra.mrb[0].mxu0 %v4426
        %v4634 = vpop.f32.mrb[0].mxu0
        %v4635 = vadd.f32 %v4397, %v4634
        %v4636 = vpop.f32.mrb[0].mxu0
        %v4637 = vadd.f32 %v4397, %v4636
        %4638 = vmatprep.mubr.f32.mxu0 0.0
        %4639 = vmatmul.mubr.f32.gmra.mrb[0].mxu0 %v4429
        %v4640 = vpop.f32.mrb[0].mxu0
        %v4641 = vadd.f32 %v4401, %v4640
        %v4642 = vpop.f32.mrb[0].mxu0
        %v4643 = vadd.f32 %v4401, %v4642
        %4644 = vmatprep.mubr.f32.mxu0 0.0
        %4645 = vmatmul.mubr.f32.gmra.mrb[0].mxu0 %v4432
        %v4646 = vpop.f32.mrb[0].mxu0
        %v4647 = vadd.f32 %v4405, %v4646
        %v4648 = vpop.f32.mrb[0].mxu0
        %v4649 = vadd.f32 %v4405, %v4648
        %4650 = vmatprep.mubr.f32.mxu0 0.0
        %4651 = vmatmul.mubr.f32.gmra.mrb[0].mxu0 %v4435
        %v4652 = vpop.f32.mrb[0].mxu0
        %v4653 = vadd.f32 %v4409, %v4652
        %v4654 = vpop.f32.mrb[0].mxu0
        %v4655 = vadd.f32 %v4409, %v4654
        %4656 = vmatprep.mubr.f32.mxu0 0.0
        %4657 = vmatmul.mubr.f32.gmra.mrb[0].mxu0 %v4438
        %v4658 = vpop.f32.mrb[0].mxu0
        %v4659 = vadd.f32 %v4413, %v4658
        %v4660 = vpop.f32.mrb[0].mxu0
        %v4661 = vadd.f32 %v4413, %v4660
        %4662 = vmatprep.mubr.f32.mxu0 0.0
        %4663 = vmatmul.mubr.f32.gmra.mrb[0].mxu0 %v4441
        %v4664 = vpop.f32.mrb[0].mxu0
        %v4665 = vadd.f32 %v4417, %v4664
        %v4666 = vpop.f32.mrb[0].mxu0
        %v4667 = vadd.f32 %v4417, %v4666
        %4668 = vdwg.mxu0
        %v4669 = vmul.f32 %v4510, 100.0
        %v4670 = vmul.f32 %v4512, 100.0
        %v4671 = vmul.f32 %v4623, 100.0
        %v4672 = vmul.f32 %v4625, 100.0
        %v4673 = vmul.f32 %v4516, 100.0
        %v4674 = vmul.f32 %v4518, 100.0
        %v4675 = vmul.f32 %v4629, 100.0
        %v4676 = vmul.f32 %v4631, 100.0
        %v4677 = vmul.f32 %v4522, 100.0
        %v4678 = vmul.f32 %v4524, 100.0
        %v4679 = vmul.f32 %v4635, 100.0
        %v4680 = vmul.f32 %v4637, 100.0
        %v4681 = vmul.f32 %v4528, 100.0
        %v4682 = vmul.f32 %v4530, 100.0
        %v4683 = vmul.f32 %v4641, 100.0
        %v4684 = vmul.f32 %v4643, 100.0
        %v4685 = vmul.f32 %v4534, 100.0
        %v4686 = vmul.f32 %v4536, 100.0
        %v4687 = vmul.f32 %v4647, 100.0
        %v4688 = vmul.f32 %v4649, 100.0
        %v4689 = vmul.f32 %v4540, 100.0
        %v4690 = vmul.f32 %v4542, 100.0
        %v4691 = vmul.f32 %v4653, 100.0
        %v4692 = vmul.f32 %v4655, 100.0
        %v4693 = vmul.f32 %v4546, 100.0
        %v4694 = vmul.f32 %v4548, 100.0
        %v4695 = vmul.f32 %v4659, 100.0
        %v4696 = vmul.f32 %v4661, 100.0
        %v4697 = vmul.f32 %v4552, 100.0
        %v4698 = vmul.f32 %v4554, 100.0
        %v4699 = vmul.f32 %v4665, 100.0
        %v4700 = vmul.f32 %v4667, 100.0
        %vm4701 = vcmp.gt.f32.partialorder %v4669, 20.0
        %vm4702 = vcmp.gt.f32.partialorder %v4670, 20.0
        %vm4703 = vcmp.gt.f32.partialorder %v4671, 20.0
        %vm4704 = vcmp.gt.f32.partialorder %v4672, 20.0
        %vm4705 = vcmp.gt.f32.partialorder %v4673, 20.0
        %vm4706 = vcmp.gt.f32.partialorder %v4674, 20.0
        %vm4707 = vcmp.gt.f32.partialorder %v4675, 20.0
        %vm4708 = vcmp.gt.f32.partialorder %v4676, 20.0
        %vm4709 = vcmp.gt.f32.partialorder %v4677, 20.0
        %vm4710 = vcmp.gt.f32.partialorder %v4678, 20.0
        %vm4711 = vcmp.gt.f32.partialorder %v4679, 20.0
        %vm4712 = vcmp.gt.f32.partialorder %v4680, 20.0
        %vm4713 = vcmp.gt.f32.partialorder %v4681, 20.0
        %vm4714 = vcmp.gt.f32.partialorder %v4682, 20.0
        %vm4715 = vcmp.gt.f32.partialorder %v4683, 20.0
        %vm4716 = vcmp.gt.f32.partialorder %v4684, 20.0
        %vm4717 = vcmp.gt.f32.partialorder %v4685, 20.0
        %vm4718 = vcmp.gt.f32.partialorder %v4686, 20.0
        %vm4719 = vcmp.gt.f32.partialorder %v4687, 20.0
        %vm4720 = vcmp.gt.f32.partialorder %v4688, 20.0
        %vm4721 = vcmp.gt.f32.partialorder %v4689, 20.0
        %vm4722 = vcmp.gt.f32.partialorder %v4690, 20.0
        %vm4723 = vcmp.gt.f32.partialorder %v4691, 20.0
        %vm4724 = vcmp.gt.f32.partialorder %v4692, 20.0
        %vm4725 = vcmp.gt.f32.partialorder %v4693, 20.0
        %vm4726 = vcmp.gt.f32.partialorder %v4694, 20.0
        %vm4727 = vcmp.gt.f32.partialorder %v4695, 20.0
        %vm4728 = vcmp.gt.f32.partialorder %v4696, 20.0
        %vm4729 = vcmp.gt.f32.partialorder %v4697, 20.0
        %vm4730 = vcmp.gt.f32.partialorder %v4698, 20.0
        %vm4731 = vcmp.gt.f32.partialorder %v4699, 20.0
        %vm4732 = vcmp.gt.f32.partialorder %v4700, 20.0
        %v4733 = vmul.f32 %v4669, 1.442695
        %v4734 = vpow.pop %v4733
        %v4735 = vmul.f32 %v4670, 1.442695
        %v4736 = vpow.pop %v4735
        %v4737 = vmul.f32 %v4671, 1.442695
        %v4738 = vpow.pop %v4737
        %v4739 = vmul.f32 %v4672, 1.442695
        %v4740 = vpow.pop %v4739
        %v4741 = vmul.f32 %v4673, 1.442695
        %v4742 = vpow.pop %v4741
        %v4743 = vmul.f32 %v4674, 1.442695
        %v4744 = vpow.pop %v4743
        %v4745 = vmul.f32 %v4675, 1.442695
        %v4746 = vpow.pop %v4745
        %v4747 = vmul.f32 %v4676, 1.442695
        %v4748 = vpow.pop %v4747
        %v4749 = vmul.f32 %v4677, 1.442695
        %v4750 = vpow.pop %v4749
        %v4751 = vmul.f32 %v4678, 1.442695
        %v4752 = vpow.pop %v4751
        %v4753 = vmul.f32 %v4679, 1.442695
        %v4754 = vpow.pop %v4753
        %v4755 = vmul.f32 %v4680, 1.442695
        %v4756 = vpow.pop %v4755
        %v4757 = vmul.f32 %v4681, 1.442695
        %v4758 = vpow.pop %v4757
        %v4759 = vmul.f32 %v4682, 1.442695
        %v4760 = vpow.pop %v4759
        %v4761 = vmul.f32 %v4683, 1.442695
        %v4762 = vpow.pop %v4761
        %v4763 = vmul.f32 %v4684, 1.442695
        %v4764 = vpow.pop %v4763
        %v4765 = vmul.f32 %v4685, 1.442695
        %v4766 = vpow.pop %v4765
        %v4767 = vmul.f32 %v4686, 1.442695
        %v4768 = vpow.pop %v4767
        %v4769 = vmul.f32 %v4687, 1.442695
        %v4770 = vpow.pop %v4769
        %v4771 = vmul.f32 %v4688, 1.442695
        %v4772 = vpow.pop %v4771
        %v4773 = vmul.f32 %v4689, 1.442695
        %v4774 = vpow.pop %v4773
        %v4775 = vmul.f32 %v4690, 1.442695
        %v4776 = vpow.pop %v4775
        %v4777 = vmul.f32 %v4691, 1.442695
        %v4778 = vpow.pop %v4777
        %v4779 = vmul.f32 %v4692, 1.442695
        %v4780 = vpow.pop %v4779
        %v4781 = vmul.f32 %v4693, 1.442695
        %v4782 = vpow.pop %v4781
        %v4783 = vmul.f32 %v4694, 1.442695
        %v4784 = vpow.pop %v4783
        %v4785 = vmul.f32 %v4695, 1.442695
        %v4786 = vpow.pop %v4785
        %v4787 = vmul.f32 %v4696, 1.442695
        %v4788 = vpow.pop %v4787
        %v4789 = vmul.f32 %v4697, 1.442695
        %v4790 = vpow.pop %v4789
        %v4791 = vmul.f32 %v4698, 1.442695
        %v4792 = vpow.pop %v4791
        %v4793 = vmul.f32 %v4699, 1.442695
        %v4794 = vpow.pop %v4793
        %v4795 = vmul.f32 %v4700, 1.442695
        %v4796 = vpow.pop %v4795
        %v4797 = vadd.f32 %v4734, 1.0
        %v4798 = vlog2.pop %v4797
        %v4799 = vmul.f32 %v4798, 0.6931472
        %v4800 = vmul.f32 -0.5, %v4734
        %v4801 = vadd.f32 %v4800, 1.0
        %v4802 = vmul.f32 %v4801, %v4734
        %v4803 = vand.u32 2147483647, %v4734
        %vm4804 = vcmp.lt.f32.partialorder %v4803, 0.0004427343
        %v4805 = vsel %vm4804, %v4802, %v4799
        %v4806 = vadd.f32 %v4736, 1.0
        %v4807 = vlog2.pop %v4806
        %v4808 = vmul.f32 %v4807, 0.6931472
        %v4809 = vmul.f32 -0.5, %v4736
        %v4810 = vadd.f32 %v4809, 1.0
        %v4811 = vmul.f32 %v4810, %v4736
        %v4812 = vand.u32 2147483647, %v4736
        %vm4813 = vcmp.lt.f32.partialorder %v4812, 0.0004427343
        %v4814 = vsel %vm4813, %v4811, %v4808
        %v4815 = vadd.f32 %v4738, 1.0
        %v4816 = vlog2.pop %v4815
        %v4817 = vmul.f32 %v4816, 0.6931472
        %v4818 = vmul.f32 -0.5, %v4738
        %v4819 = vadd.f32 %v4818, 1.0
        %v4820 = vmul.f32 %v4819, %v4738
        %v4821 = vand.u32 2147483647, %v4738
        %vm4822 = vcmp.lt.f32.partialorder %v4821, 0.0004427343
        %v4823 = vsel %vm4822, %v4820, %v4817
        %v4824 = vadd.f32 %v4740, 1.0
        %v4825 = vlog2.pop %v4824
        %v4826 = vmul.f32 %v4825, 0.6931472
        %v4827 = vmul.f32 -0.5, %v4740
        %v4828 = vadd.f32 %v4827, 1.0
        %v4829 = vmul.f32 %v4828, %v4740
        %v4830 = vand.u32 2147483647, %v4740
        %vm4831 = vcmp.lt.f32.partialorder %v4830, 0.0004427343
        %v4832 = vsel %vm4831, %v4829, %v4826
        %v4833 = vadd.f32 %v4742, 1.0
        %v4834 = vlog2.pop %v4833
        %v4835 = vmul.f32 %v4834, 0.6931472
        %v4836 = vmul.f32 -0.5, %v4742
        %v4837 = vadd.f32 %v4836, 1.0
        %v4838 = vmul.f32 %v4837, %v4742
        %v4839 = vand.u32 2147483647, %v4742
        %vm4840 = vcmp.lt.f32.partialorder %v4839, 0.0004427343
        %v4841 = vsel %vm4840, %v4838, %v4835
        %v4842 = vadd.f32 %v4744, 1.0
        %v4843 = vlog2.pop %v4842
        %v4844 = vmul.f32 %v4843, 0.6931472
        %v4845 = vmul.f32 -0.5, %v4744
        %v4846 = vadd.f32 %v4845, 1.0
        %v4847 = vmul.f32 %v4846, %v4744
        %v4848 = vand.u32 2147483647, %v4744
        %vm4849 = vcmp.lt.f32.partialorder %v4848, 0.0004427343
        %v4850 = vsel %vm4849, %v4847, %v4844
        %v4851 = vadd.f32 %v4746, 1.0
        %v4852 = vlog2.pop %v4851
        %v4853 = vmul.f32 %v4852, 0.6931472
        %v4854 = vmul.f32 -0.5, %v4746
        %v4855 = vadd.f32 %v4854, 1.0
        %v4856 = vmul.f32 %v4855, %v4746
        %v4857 = vand.u32 2147483647, %v4746
        %vm4858 = vcmp.lt.f32.partialorder %v4857, 0.0004427343
        %v4859 = vsel %vm4858, %v4856, %v4853
        %v4860 = vadd.f32 %v4748, 1.0
        %v4861 = vlog2.pop %v4860
        %v4862 = vmul.f32 %v4861, 0.6931472
        %v4863 = vmul.f32 -0.5, %v4748
        %v4864 = vadd.f32 %v4863, 1.0
        %v4865 = vmul.f32 %v4864, %v4748
        %v4866 = vand.u32 2147483647, %v4748
        %vm4867 = vcmp.lt.f32.partialorder %v4866, 0.0004427343
        %v4868 = vsel %vm4867, %v4865, %v4862
        %v4869 = vadd.f32 %v4750, 1.0
        %v4870 = vlog2.pop %v4869
        %v4871 = vmul.f32 %v4870, 0.6931472
        %v4872 = vmul.f32 -0.5, %v4750
        %v4873 = vadd.f32 %v4872, 1.0
        %v4874 = vmul.f32 %v4873, %v4750
        %v4875 = vand.u32 2147483647, %v4750
        %vm4876 = vcmp.lt.f32.partialorder %v4875, 0.0004427343
        %v4877 = vsel %vm4876, %v4874, %v4871
        %v4878 = vadd.f32 %v4752, 1.0
        %v4879 = vlog2.pop %v4878
        %v4880 = vmul.f32 %v4879, 0.6931472
        %v4881 = vmul.f32 -0.5, %v4752
        %v4882 = vadd.f32 %v4881, 1.0
        %v4883 = vmul.f32 %v4882, %v4752
        %v4884 = vand.u32 2147483647, %v4752
        %vm4885 = vcmp.lt.f32.partialorder %v4884, 0.0004427343
        %v4886 = vsel %vm4885, %v4883, %v4880
        %v4887 = vadd.f32 %v4754, 1.0
        %v4888 = vlog2.pop %v4887
        %v4889 = vmul.f32 %v4888, 0.6931472
        %v4890 = vmul.f32 -0.5, %v4754
        %v4891 = vadd.f32 %v4890, 1.0
        %v4892 = vmul.f32 %v4891, %v4754
        %v4893 = vand.u32 2147483647, %v4754
        %vm4894 = vcmp.lt.f32.partialorder %v4893, 0.0004427343
        %v4895 = vsel %vm4894, %v4892, %v4889
        %v4896 = vadd.f32 %v4756, 1.0
        %v4897 = vlog2.pop %v4896
        %v4898 = vmul.f32 %v4897, 0.6931472
        %v4899 = vmul.f32 -0.5, %v4756
        %v4900 = vadd.f32 %v4899, 1.0
        %v4901 = vmul.f32 %v4900, %v4756
        %v4902 = vand.u32 2147483647, %v4756
        %vm4903 = vcmp.lt.f32.partialorder %v4902, 0.0004427343
        %v4904 = vsel %vm4903, %v4901, %v4898
        %v4905 = vadd.f32 %v4758, 1.0
        %v4906 = vlog2.pop %v4905
        %v4907 = vmul.f32 %v4906, 0.6931472
        %v4908 = vmul.f32 -0.5, %v4758
        %v4909 = vadd.f32 %v4908, 1.0
        %v4910 = vmul.f32 %v4909, %v4758
        %v4911 = vand.u32 2147483647, %v4758
        %vm4912 = vcmp.lt.f32.partialorder %v4911, 0.0004427343
        %v4913 = vsel %vm4912, %v4910, %v4907
        %v4914 = vadd.f32 %v4760, 1.0
        %v4915 = vlog2.pop %v4914
        %v4916 = vmul.f32 %v4915, 0.6931472
        %v4917 = vmul.f32 -0.5, %v4760
        %v4918 = vadd.f32 %v4917, 1.0
        %v4919 = vmul.f32 %v4918, %v4760
        %v4920 = vand.u32 2147483647, %v4760
        %vm4921 = vcmp.lt.f32.partialorder %v4920, 0.0004427343
        %v4922 = vsel %vm4921, %v4919, %v4916
        %v4923 = vadd.f32 %v4762, 1.0
        %v4924 = vlog2.pop %v4923
        %v4925 = vmul.f32 %v4924, 0.6931472
        %v4926 = vmul.f32 -0.5, %v4762
        %v4927 = vadd.f32 %v4926, 1.0
        %v4928 = vmul.f32 %v4927, %v4762
        %v4929 = vand.u32 2147483647, %v4762
        %vm4930 = vcmp.lt.f32.partialorder %v4929, 0.0004427343
        %v4931 = vsel %vm4930, %v4928, %v4925
        %v4932 = vadd.f32 %v4764, 1.0
        %v4933 = vlog2.pop %v4932
        %v4934 = vmul.f32 %v4933, 0.6931472
        %v4935 = vmul.f32 -0.5, %v4764
        %v4936 = vadd.f32 %v4935, 1.0
        %v4937 = vmul.f32 %v4936, %v4764
        %v4938 = vand.u32 2147483647, %v4764
        %vm4939 = vcmp.lt.f32.partialorder %v4938, 0.0004427343
        %v4940 = vsel %vm4939, %v4937, %v4934
        %v4941 = vadd.f32 %v4766, 1.0
        %v4942 = vlog2.pop %v4941
        %v4943 = vmul.f32 %v4942, 0.6931472
        %v4944 = vmul.f32 -0.5, %v4766
        %v4945 = vadd.f32 %v4944, 1.0
        %v4946 = vmul.f32 %v4945, %v4766
        %v4947 = vand.u32 2147483647, %v4766
        %vm4948 = vcmp.lt.f32.partialorder %v4947, 0.0004427343
        %v4949 = vsel %vm4948, %v4946, %v4943
        %v4950 = vadd.f32 %v4768, 1.0
        %v4951 = vlog2.pop %v4950
        %v4952 = vmul.f32 %v4951, 0.6931472
        %v4953 = vmul.f32 -0.5, %v4768
        %v4954 = vadd.f32 %v4953, 1.0
        %v4955 = vmul.f32 %v4954, %v4768
        %v4956 = vand.u32 2147483647, %v4768
        %vm4957 = vcmp.lt.f32.partialorder %v4956, 0.0004427343
        %v4958 = vsel %vm4957, %v4955, %v4952
        %v4959 = vadd.f32 %v4770, 1.0
        %v4960 = vlog2.pop %v4959
        %v4961 = vmul.f32 %v4960, 0.6931472
        %v4962 = vmul.f32 -0.5, %v4770
        %v4963 = vadd.f32 %v4962, 1.0
        %v4964 = vmul.f32 %v4963, %v4770
        %v4965 = vand.u32 2147483647, %v4770
        %vm4966 = vcmp.lt.f32.partialorder %v4965, 0.0004427343
        %v4967 = vsel %vm4966, %v4964, %v4961
        %v4968 = vadd.f32 %v4772, 1.0
        %v4969 = vlog2.pop %v4968
        %v4970 = vmul.f32 %v4969, 0.6931472
        %v4971 = vmul.f32 -0.5, %v4772
        %v4972 = vadd.f32 %v4971, 1.0
        %v4973 = vmul.f32 %v4972, %v4772
        %v4974 = vand.u32 2147483647, %v4772
        %vm4975 = vcmp.lt.f32.partialorder %v4974, 0.0004427343
        %v4976 = vsel %vm4975, %v4973, %v4970
        %v4977 = vadd.f32 %v4774, 1.0
        %v4978 = vlog2.pop %v4977
        %v4979 = vmul.f32 %v4978, 0.6931472
        %v4980 = vmul.f32 -0.5, %v4774
        %v4981 = vadd.f32 %v4980, 1.0
        %v4982 = vmul.f32 %v4981, %v4774
        %v4983 = vand.u32 2147483647, %v4774
        %vm4984 = vcmp.lt.f32.partialorder %v4983, 0.0004427343
        %v4985 = vsel %vm4984, %v4982, %v4979
        %v4986 = vadd.f32 %v4776, 1.0
        %v4987 = vlog2.pop %v4986
        %v4988 = vmul.f32 %v4987, 0.6931472
        %v4989 = vmul.f32 -0.5, %v4776
        %v4990 = vadd.f32 %v4989, 1.0
        %v4991 = vmul.f32 %v4990, %v4776
        %v4992 = vand.u32 2147483647, %v4776
        %vm4993 = vcmp.lt.f32.partialorder %v4992, 0.0004427343
        %v4994 = vsel %vm4993, %v4991, %v4988
        %v4995 = vadd.f32 %v4778, 1.0
        %v4996 = vlog2.pop %v4995
        %v4997 = vmul.f32 %v4996, 0.6931472
        %v4998 = vmul.f32 -0.5, %v4778
        %v4999 = vadd.f32 %v4998, 1.0
        %v5000 = vmul.f32 %v4999, %v4778
        %v5001 = vand.u32 2147483647, %v4778
        %vm5002 = vcmp.lt.f32.partialorder %v5001, 0.0004427343
        %v5003 = vsel %vm5002, %v5000, %v4997
        %v5004 = vadd.f32 %v4780, 1.0
        %v5005 = vlog2.pop %v5004
        %v5006 = vmul.f32 %v5005, 0.6931472
        %v5007 = vmul.f32 -0.5, %v4780
        %v5008 = vadd.f32 %v5007, 1.0
        %v5009 = vmul.f32 %v5008, %v4780
        %v5010 = vand.u32 2147483647, %v4780
        %vm5011 = vcmp.lt.f32.partialorder %v5010, 0.0004427343
        %v5012 = vsel %vm5011, %v5009, %v5006
        %v5013 = vadd.f32 %v4782, 1.0
        %v5014 = vlog2.pop %v5013
        %v5015 = vmul.f32 %v5014, 0.6931472
        %v5016 = vmul.f32 -0.5, %v4782
        %v5017 = vadd.f32 %v5016, 1.0
        %v5018 = vmul.f32 %v5017, %v4782
        %v5019 = vand.u32 2147483647, %v4782
        %vm5020 = vcmp.lt.f32.partialorder %v5019, 0.0004427343
        %v5021 = vsel %vm5020, %v5018, %v5015
        %v5022 = vadd.f32 %v4784, 1.0
        %v5023 = vlog2.pop %v5022
        %v5024 = vmul.f32 %v5023, 0.6931472
        %v5025 = vmul.f32 -0.5, %v4784
        %v5026 = vadd.f32 %v5025, 1.0
        %v5027 = vmul.f32 %v5026, %v4784
        %v5028 = vand.u32 2147483647, %v4784
        %vm5029 = vcmp.lt.f32.partialorder %v5028, 0.0004427343
        %v5030 = vsel %vm5029, %v5027, %v5024
        %v5031 = vadd.f32 %v4786, 1.0
        %v5032 = vlog2.pop %v5031
        %v5033 = vmul.f32 %v5032, 0.6931472
        %v5034 = vmul.f32 -0.5, %v4786
        %v5035 = vadd.f32 %v5034, 1.0
        %v5036 = vmul.f32 %v5035, %v4786
        %v5037 = vand.u32 2147483647, %v4786
        %vm5038 = vcmp.lt.f32.partialorder %v5037, 0.0004427343
        %v5039 = vsel %vm5038, %v5036, %v5033
        %v5040 = vadd.f32 %v4788, 1.0
        %v5041 = vlog2.pop %v5040
        %v5042 = vmul.f32 %v5041, 0.6931472
        %v5043 = vmul.f32 -0.5, %v4788
        %v5044 = vadd.f32 %v5043, 1.0
        %v5045 = vmul.f32 %v5044, %v4788
        %v5046 = vand.u32 2147483647, %v4788
        %vm5047 = vcmp.lt.f32.partialorder %v5046, 0.0004427343
        %v5048 = vsel %vm5047, %v5045, %v5042
        %v5049 = vadd.f32 %v4790, 1.0
        %v5050 = vlog2.pop %v5049
        %v5051 = vmul.f32 %v5050, 0.6931472
        %v5052 = vmul.f32 -0.5, %v4790
        %v5053 = vadd.f32 %v5052, 1.0
        %v5054 = vmul.f32 %v5053, %v4790
        %v5055 = vand.u32 2147483647, %v4790
        %vm5056 = vcmp.lt.f32.partialorder %v5055, 0.0004427343
        %v5057 = vsel %vm5056, %v5054, %v5051
        %v5058 = vadd.f32 %v4792, 1.0
        %v5059 = vlog2.pop %v5058
        %v5060 = vmul.f32 %v5059, 0.6931472
        %v5061 = vmul.f32 -0.5, %v4792
        %v5062 = vadd.f32 %v5061, 1.0
        %v5063 = vmul.f32 %v5062, %v4792
        %v5064 = vand.u32 2147483647, %v4792
        %vm5065 = vcmp.lt.f32.partialorder %v5064, 0.0004427343
        %v5066 = vsel %vm5065, %v5063, %v5060
        %v5067 = vadd.f32 %v4794, 1.0
        %v5068 = vlog2.pop %v5067
        %v5069 = vmul.f32 %v5068, 0.6931472
        %v5070 = vmul.f32 -0.5, %v4794
        %v5071 = vadd.f32 %v5070, 1.0
        %v5072 = vmul.f32 %v5071, %v4794
        %v5073 = vand.u32 2147483647, %v4794
        %vm5074 = vcmp.lt.f32.partialorder %v5073, 0.0004427343
        %v5075 = vsel %vm5074, %v5072, %v5069
        %v5076 = vadd.f32 %v4796, 1.0
        %v5077 = vlog2.pop %v5076
        %v5078 = vmul.f32 %v5077, 0.6931472
        %v5079 = vmul.f32 -0.5, %v4796
        %v5080 = vadd.f32 %v5079, 1.0
        %v5081 = vmul.f32 %v5080, %v4796
        %v5082 = vand.u32 2147483647, %v4796
        %vm5083 = vcmp.lt.f32.partialorder %v5082, 0.0004427343
        %v5084 = vsel %vm5083, %v5081, %v5078
        %v5085 = vmul.f32 %v4805, 0.01
        %v5086 = vmul.f32 %v4814, 0.01
        %v5087 = vmul.f32 %v4823, 0.01
        %v5088 = vmul.f32 %v4832, 0.01
        %v5089 = vmul.f32 %v4841, 0.01
        %v5090 = vmul.f32 %v4850, 0.01
        %v5091 = vmul.f32 %v4859, 0.01
        %v5092 = vmul.f32 %v4868, 0.01
        %v5093 = vmul.f32 %v4877, 0.01
        %v5094 = vmul.f32 %v4886, 0.01
        %v5095 = vmul.f32 %v4895, 0.01
        %v5096 = vmul.f32 %v4904, 0.01
        %v5097 = vmul.f32 %v4913, 0.01
        %v5098 = vmul.f32 %v4922, 0.01
        %v5099 = vmul.f32 %v4931, 0.01
        %v5100 = vmul.f32 %v4940, 0.01
        %v5101 = vmul.f32 %v4949, 0.01
        %v5102 = vmul.f32 %v4958, 0.01
        %v5103 = vmul.f32 %v4967, 0.01
        %v5104 = vmul.f32 %v4976, 0.01
        %v5105 = vmul.f32 %v4985, 0.01
        %v5106 = vmul.f32 %v4994, 0.01
        %v5107 = vmul.f32 %v5003, 0.01
        %v5108 = vmul.f32 %v5012, 0.01
        %v5109 = vmul.f32 %v5021, 0.01
        %v5110 = vmul.f32 %v5030, 0.01
        %v5111 = vmul.f32 %v5039, 0.01
        %v5112 = vmul.f32 %v5048, 0.01
        %v5113 = vmul.f32 %v5057, 0.01
        %v5114 = vmul.f32 %v5066, 0.01
        %v5115 = vmul.f32 %v5075, 0.01
        %v5116 = vmul.f32 %v5084, 0.01
        %v5117 = vsel %vm4701, %v4510, %v5085
        %v5118 = vsel %vm4702, %v4512, %v5086
        %v5119 = vsel %vm4703, %v4623, %v5087
        %v5120 = vsel %vm4704, %v4625, %v5088
        %v5121 = vsel %vm4705, %v4516, %v5089
        %v5122 = vsel %vm4706, %v4518, %v5090
        %v5123 = vsel %vm4707, %v4629, %v5091
        %v5124 = vsel %vm4708, %v4631, %v5092
        %v5125 = vsel %vm4709, %v4522, %v5093
        %v5126 = vsel %vm4710, %v4524, %v5094
        %v5127 = vsel %vm4711, %v4635, %v5095
        %v5128 = vsel %vm4712, %v4637, %v5096
        %v5129 = vsel %vm4713, %v4528, %v5097
        %v5130 = vsel %vm4714, %v4530, %v5098
        %v5131 = vsel %vm4715, %v4641, %v5099
        %v5132 = vsel %vm4716, %v4643, %v5100
        %v5133 = vsel %vm4717, %v4534, %v5101
        %v5134 = vsel %vm4718, %v4536, %v5102
        %v5135 = vsel %vm4719, %v4647, %v5103
        %v5136 = vsel %vm4720, %v4649, %v5104
        %v5137 = vsel %vm4721, %v4540, %v5105
        %v5138 = vsel %vm4722, %v4542, %v5106
        %v5139 = vsel %vm4723, %v4653, %v5107
        %v5140 = vsel %vm4724, %v4655, %v5108
        %v5141 = vsel %vm4725, %v4546, %v5109
        %v5142 = vsel %vm4726, %v4548, %v5110
        %v5143 = vsel %vm4727, %v4659, %v5111
        %v5144 = vsel %vm4728, %v4661, %v5112
        %v5145 = vsel %vm4729, %v4552, %v5113
        %v5146 = vsel %vm4730, %v4554, %v5114
        %v5147 = vsel %vm4731, %v4665, %v5115
        %v5148 = vsel %vm4732, %v4667, %v5116
        %s5149 = scalar_lea.vmem [#allocation2], 320
        %v5150 = vld [vmem:[%s5149] sm:$0xff]
        %v5151 = vld [vmem:[%s5149 + $0x8] sm:$0xff]
        %v5152 = vld [vmem:[%s5149 + $0x10] sm:$0xff]
        %v5153 = vld [vmem:[%s5149 + $0x18] sm:$0xff]
        %v5154 = vld [vmem:[%s5149 + $0x20] sm:$0xff]
        %v5155 = vld [vmem:[%s5149 + $0x28] sm:$0xff]
        %v5156 = vld [vmem:[%s5149 + $0x30] sm:$0xff]
        %v5157 = vld [vmem:[%s5149 + $0x38] sm:$0xff]
        %5158 = vset.pattern.permute.xlu0 6
        %5159 = vperm.xlu0 %5158, %v670
        %v5160 = vpop.permute.xlu0 %5159
        %5162 = vset.pattern.permute.xlu0 6
        %5163 = vperm.xlu0 %5162, %v671
        %v5164 = vpop.permute.xlu0 %5163
        %5166 = vset.pattern.permute.xlu0 6
        %5167 = vperm.xlu0 %5166, %v672
        %v5168 = vpop.permute.xlu0 %5167
        %5170 = vset.pattern.permute.xlu0 6
        %5171 = vperm.xlu0 %5170, %v673
        %v5172 = vpop.permute.xlu0 %5171
        %5174 = vset.pattern.permute.xlu0 6
        %5175 = vperm.xlu0 %5174, %v674
        %v5176 = vpop.permute.xlu0 %5175
        %5178 = vset.pattern.permute.xlu0 6
        %5179 = vperm.xlu0 %5178, %v675
        %v5180 = vpop.permute.xlu0 %5179
        %5182 = vset.pattern.permute.xlu0 6
        %5183 = vperm.xlu0 %5182, %v676
        %v5184 = vpop.permute.xlu0 %5183
        %5186 = vset.pattern.permute.xlu0 6
        %5187 = vperm.xlu0 %5186, %v677
        %v5188 = vpop.permute.xlu0 %5187
        %v5191 = vsel %vm1270, %v5150, 0
        %v5194 = vsel %vm1270, %v5151, 0
        %v5197 = vsel %vm1270, %v5152, 0
        %v5200 = vsel %vm1270, %v5153, 0
        %v5203 = vsel %vm1270, %v5154, 0
        %v5206 = vsel %vm1270, %v5155, 0
        %v5209 = vsel %vm1270, %v5156, 0
        %v5212 = vsel %vm1270, %v5157, 0
        %5214 = vmatprep.subr.mxu0 %v5118
        %5215 = vmatpush1.msra.mxu0 %v5117
        %5216 = vmatprep.subr.mxu0 %v5122
        %5217 = vmatpush1.msra.mxu0 %v5121
        %5218 = vmatprep.subr.mxu0 %v5126
        %5219 = vmatpush1.msra.mxu0 %v5125
        %5220 = vmatprep.subr.mxu0 %v5130
        %5221 = vmatpush1.msra.mxu0 %v5129
        %5222 = vmatprep.subr.mxu0 %v5134
        %5223 = vmatpush1.msra.mxu0 %v5133
        %5224 = vmatprep.subr.mxu0 %v5138
        %5225 = vmatpush1.msra.mxu0 %v5137
        %5226 = vmatprep.subr.mxu0 %v5142
        %5227 = vmatpush1.msra.mxu0 %v5141
        %5228 = vmatprep.subr.mxu0 %v5146
        %5229 = vmatpush1.msra.mxu0 %v5145
        %5230 = vmatprep.subr.mxu0 0.0
        %5231 = vmatpush1.msra.mxu0 0.0
        %5232 = vmatprep.subr.mxu0 0.0
        %5233 = vmatpush1.msra.mxu0 0.0
        %5234 = vmatprep.subr.mxu0 0.0
        %5235 = vmatpush1.msra.mxu0 0.0
        %5236 = vmatprep.subr.mxu0 0.0
        %5237 = vmatpush1.msra.mxu0 0.0
        %5238 = vmatprep.subr.mxu0 0.0
        %5239 = vmatpush1.msra.mxu0 0.0
        %5240 = vmatprep.subr.mxu0 0.0
        %5241 = vmatpush1.msra.mxu0 0.0
        %5242 = vmatprep.subr.mxu0 0.0
        %5243 = vmatpush1.msra.mxu0 0.0
        %5244 = vmatprep.subr.mxu0 0.0
        %5245 = vmatpush1.msra.mxu0 0.0
        %5246 = vmatprep.subr.mxu0 0.0
        %5247 = vmatpush1.msra.mxu0 0.0
        %5248 = vmatprep.subr.mxu0 0.0
        %5249 = vmatpush1.msra.mxu0 0.0
        %5250 = vmatprep.subr.mxu0 0.0
        %5251 = vmatpush1.msra.mxu0 0.0
        %5252 = vmatprep.subr.mxu0 0.0
        %5253 = vmatpush1.msra.mxu0 0.0
        %5254 = vmatprep.subr.mxu0 0.0
        %5255 = vmatpush1.msra.mxu0 0.0
        %5256 = vmatprep.subr.mxu0 0.0
        %5257 = vmatpush1.msra.mxu0 0.0
        %5258 = vmatprep.subr.mxu0 0.0
        %5259 = vmatpush1.msra.mxu0 0.0
        %5260 = vmatprep.subr.mxu0 0.0
        %5261 = vmatpush1.msra.mxu0 0.0
        %5262 = vmatprep.subr.mxu0 0.0
        %5263 = vmatpush1.msra.mxu0 0.0
        %5264 = vmatprep.subr.mxu0 0.0
        %5265 = vmatpush1.msra.mxu0 0.0
        %5266 = vmatprep.subr.mxu0 0.0
        %5267 = vmatpush1.msra.mxu0 0.0
        %5268 = vmatprep.subr.mxu0 0.0
        %5269 = vmatpush1.msra.mxu0 0.0
        %5270 = vmatprep.subr.mxu0 0.0
        %5271 = vmatpush1.msra.mxu0 0.0
        %5272 = vmatprep.subr.mxu0 0.0
        %5273 = vmatpush1.msra.mxu0 0.0
        %5274 = vmatprep.subr.mxu0 0.0
        %5275 = vmatpush1.msra.mxu0 0.0
        %5276 = vmatprep.subr.mxu0 0.0
        %5277 = vmatpush1.msra.mxu0 0.0
        %5278 = vmatprep.mubr.f32.mxu0 0.0
        %5279 = vmatmul.mubr.f32.gmra.mrb[0].mxu0 %v5191
        %v5280 = vpop.f32.mrb[0].mxu0
        %v5281 = vadd.f32 %v5160, %v5280
        %v5282 = vpop.f32.mrb[0].mxu0
        %v5283 = vadd.f32 %v5160, %v5282
        %5284 = vmatprep.mubr.f32.mxu0 0.0
        %5285 = vmatmul.mubr.f32.gmra.mrb[0].mxu0 %v5194
        %v5286 = vpop.f32.mrb[0].mxu0
        %v5287 = vadd.f32 %v5164, %v5286
        %v5288 = vpop.f32.mrb[0].mxu0
        %v5289 = vadd.f32 %v5164, %v5288
        %5290 = vmatprep.mubr.f32.mxu0 0.0
        %5291 = vmatmul.mubr.f32.gmra.mrb[0].mxu0 %v5197
        %v5292 = vpop.f32.mrb[0].mxu0
        %v5293 = vadd.f32 %v5168, %v5292
        %v5294 = vpop.f32.mrb[0].mxu0
        %v5295 = vadd.f32 %v5168, %v5294
        %5296 = vmatprep.mubr.f32.mxu0 0.0
        %5297 = vmatmul.mubr.f32.gmra.mrb[0].mxu0 %v5200
        %v5298 = vpop.f32.mrb[0].mxu0
        %v5299 = vadd.f32 %v5172, %v5298
        %v5300 = vpop.f32.mrb[0].mxu0
        %v5301 = vadd.f32 %v5172, %v5300
        %5302 = vmatprep.mubr.f32.mxu0 0.0
        %5303 = vmatmul.mubr.f32.gmra.mrb[0].mxu0 %v5203
        %v5304 = vpop.f32.mrb[0].mxu0
        %v5305 = vadd.f32 %v5176, %v5304
        %v5306 = vpop.f32.mrb[0].mxu0
        %v5307 = vadd.f32 %v5176, %v5306
        %5308 = vmatprep.mubr.f32.mxu0 0.0
        %5309 = vmatmul.mubr.f32.gmra.mrb[0].mxu0 %v5206
        %v5310 = vpop.f32.mrb[0].mxu0
        %v5311 = vadd.f32 %v5180, %v5310
        %v5312 = vpop.f32.mrb[0].mxu0
        %v5313 = vadd.f32 %v5180, %v5312
        %5314 = vmatprep.mubr.f32.mxu0 0.0
        %5315 = vmatmul.mubr.f32.gmra.mrb[0].mxu0 %v5209
        %v5316 = vpop.f32.mrb[0].mxu0
        %v5317 = vadd.f32 %v5184, %v5316
        %v5318 = vpop.f32.mrb[0].mxu0
        %v5319 = vadd.f32 %v5184, %v5318
        %5320 = vmatprep.mubr.f32.mxu0 0.0
        %5321 = vmatmul.mubr.f32.gmra.mrb[0].mxu0 %v5212
        %v5322 = vpop.f32.mrb[0].mxu0
        %v5323 = vadd.f32 %v5188, %v5322
        %v5324 = vpop.f32.mrb[0].mxu0
        %v5325 = vadd.f32 %v5188, %v5324
        %5326 = vdwg.mxu0
        %5327 = vmatprep.subr.mxu0 %v5120
        %5328 = vmatpush1.msra.mxu0 %v5119
        %5329 = vmatprep.subr.mxu0 %v5124
        %5330 = vmatpush1.msra.mxu0 %v5123
        %5331 = vmatprep.subr.mxu0 %v5128
        %5332 = vmatpush1.msra.mxu0 %v5127
        %5333 = vmatprep.subr.mxu0 %v5132
        %5334 = vmatpush1.msra.mxu0 %v5131
        %5335 = vmatprep.subr.mxu0 %v5136
        %5336 = vmatpush1.msra.mxu0 %v5135
        %5337 = vmatprep.subr.mxu0 %v5140
        %5338 = vmatpush1.msra.mxu0 %v5139
        %5339 = vmatprep.subr.mxu0 %v5144
        %5340 = vmatpush1.msra.mxu0 %v5143
        %5341 = vmatprep.subr.mxu0 %v5148
        %5342 = vmatpush1.msra.mxu0 %v5147
        %5343 = vmatprep.subr.mxu0 0.0
        %5344 = vmatpush1.msra.mxu0 0.0
        %5345 = vmatprep.subr.mxu0 0.0
        %5346 = vmatpush1.msra.mxu0 0.0
        %5347 = vmatprep.subr.mxu0 0.0
        %5348 = vmatpush1.msra.mxu0 0.0
        %5349 = vmatprep.subr.mxu0 0.0
        %5350 = vmatpush1.msra.mxu0 0.0
        %5351 = vmatprep.subr.mxu0 0.0
        %5352 = vmatpush1.msra.mxu0 0.0
        %5353 = vmatprep.subr.mxu0 0.0
        %5354 = vmatpush1.msra.mxu0 0.0
        %5355 = vmatprep.subr.mxu0 0.0
        %5356 = vmatpush1.msra.mxu0 0.0
        %5357 = vmatprep.subr.mxu0 0.0
        %5358 = vmatpush1.msra.mxu0 0.0
        %5359 = vmatprep.subr.mxu0 0.0
        %5360 = vmatpush1.msra.mxu0 0.0
        %5361 = vmatprep.subr.mxu0 0.0
        %5362 = vmatpush1.msra.mxu0 0.0
        %5363 = vmatprep.subr.mxu0 0.0
        %5364 = vmatpush1.msra.mxu0 0.0
        %5365 = vmatprep.subr.mxu0 0.0
        %5366 = vmatpush1.msra.mxu0 0.0
        %5367 = vmatprep.subr.mxu0 0.0
        %5368 = vmatpush1.msra.mxu0 0.0
        %5369 = vmatprep.subr.mxu0 0.0
        %5370 = vmatpush1.msra.mxu0 0.0
        %5371 = vmatprep.subr.mxu0 0.0
        %5372 = vmatpush1.msra.mxu0 0.0
        %5373 = vmatprep.subr.mxu0 0.0
        %5374 = vmatpush1.msra.mxu0 0.0
        %5375 = vmatprep.subr.mxu0 0.0
        %5376 = vmatpush1.msra.mxu0 0.0
        %5377 = vmatprep.subr.mxu0 0.0
        %5378 = vmatpush1.msra.mxu0 0.0
        %5379 = vmatprep.subr.mxu0 0.0
        %5380 = vmatpush1.msra.mxu0 0.0
        %5381 = vmatprep.subr.mxu0 0.0
        %5382 = vmatpush1.msra.mxu0 0.0
        %5383 = vmatprep.subr.mxu0 0.0
        %5384 = vmatpush1.msra.mxu0 0.0
        %5385 = vmatprep.subr.mxu0 0.0
        %5386 = vmatpush1.msra.mxu0 0.0
        %5387 = vmatprep.subr.mxu0 0.0
        %5388 = vmatpush1.msra.mxu0 0.0
        %5389 = vmatprep.subr.mxu0 0.0
        %5390 = vmatpush1.msra.mxu0 0.0
        %5391 = vmatprep.mubr.f32.mxu0 0.0
        %5392 = vmatmul.mubr.f32.gmra.mrb[0].mxu0 %v5191
        %v5393 = vpop.f32.mrb[0].mxu0
        %v5394 = vadd.f32 %v5160, %v5393
        %v5395 = vpop.f32.mrb[0].mxu0
        %v5396 = vadd.f32 %v5160, %v5395
        %5397 = vmatprep.mubr.f32.mxu0 0.0
        %5398 = vmatmul.mubr.f32.gmra.mrb[0].mxu0 %v5194
        %v5399 = vpop.f32.mrb[0].mxu0
        %v5400 = vadd.f32 %v5164, %v5399
        %v5401 = vpop.f32.mrb[0].mxu0
        %v5402 = vadd.f32 %v5164, %v5401
        %5403 = vmatprep.mubr.f32.mxu0 0.0
        %5404 = vmatmul.mubr.f32.gmra.mrb[0].mxu0 %v5197
        %v5405 = vpop.f32.mrb[0].mxu0
        %v5406 = vadd.f32 %v5168, %v5405
        %v5407 = vpop.f32.mrb[0].mxu0
        %v5408 = vadd.f32 %v5168, %v5407
        %5409 = vmatprep.mubr.f32.mxu0 0.0
        %5410 = vmatmul.mubr.f32.gmra.mrb[0].mxu0 %v5200
        %v5411 = vpop.f32.mrb[0].mxu0
        %v5412 = vadd.f32 %v5172, %v5411
        %v5413 = vpop.f32.mrb[0].mxu0
        %v5414 = vadd.f32 %v5172, %v5413
        %5415 = vmatprep.mubr.f32.mxu0 0.0
        %5416 = vmatmul.mubr.f32.gmra.mrb[0].mxu0 %v5203
        %v5417 = vpop.f32.mrb[0].mxu0
        %v5418 = vadd.f32 %v5176, %v5417
        %v5419 = vpop.f32.mrb[0].mxu0
        %v5420 = vadd.f32 %v5176, %v5419
        %5421 = vmatprep.mubr.f32.mxu0 0.0
        %5422 = vmatmul.mubr.f32.gmra.mrb[0].mxu0 %v5206
        %v5423 = vpop.f32.mrb[0].mxu0
        %v5424 = vadd.f32 %v5180, %v5423
        %v5425 = vpop.f32.mrb[0].mxu0
        %v5426 = vadd.f32 %v5180, %v5425
        %5427 = vmatprep.mubr.f32.mxu0 0.0
        %5428 = vmatmul.mubr.f32.gmra.mrb[0].mxu0 %v5209
        %v5429 = vpop.f32.mrb[0].mxu0
        %v5430 = vadd.f32 %v5184, %v5429
        %v5431 = vpop.f32.mrb[0].mxu0
        %v5432 = vadd.f32 %v5184, %v5431
        %5433 = vmatprep.mubr.f32.mxu0 0.0
        %5434 = vmatmul.mubr.f32.gmra.mrb[0].mxu0 %v5212
        %v5435 = vpop.f32.mrb[0].mxu0
        %v5436 = vadd.f32 %v5188, %v5435
        %v5437 = vpop.f32.mrb[0].mxu0
        %v5438 = vadd.f32 %v5188, %v5437
        %5439 = vdwg.mxu0
        %v5440 = vmul.f32 %v5281, 100.0
        %v5441 = vmul.f32 %v5283, 100.0
        %v5442 = vmul.f32 %v5394, 100.0
        %v5443 = vmul.f32 %v5396, 100.0
        %v5444 = vmul.f32 %v5287, 100.0
        %v5445 = vmul.f32 %v5289, 100.0
        %v5446 = vmul.f32 %v5400, 100.0
        %v5447 = vmul.f32 %v5402, 100.0
        %v5448 = vmul.f32 %v5293, 100.0
        %v5449 = vmul.f32 %v5295, 100.0
        %v5450 = vmul.f32 %v5406, 100.0
        %v5451 = vmul.f32 %v5408, 100.0
        %v5452 = vmul.f32 %v5299, 100.0
        %v5453 = vmul.f32 %v5301, 100.0
        %v5454 = vmul.f32 %v5412, 100.0
        %v5455 = vmul.f32 %v5414, 100.0
        %v5456 = vmul.f32 %v5305, 100.0
        %v5457 = vmul.f32 %v5307, 100.0
        %v5458 = vmul.f32 %v5418, 100.0
        %v5459 = vmul.f32 %v5420, 100.0
        %v5460 = vmul.f32 %v5311, 100.0
        %v5461 = vmul.f32 %v5313, 100.0
        %v5462 = vmul.f32 %v5424, 100.0
        %v5463 = vmul.f32 %v5426, 100.0
        %v5464 = vmul.f32 %v5317, 100.0
        %v5465 = vmul.f32 %v5319, 100.0
        %v5466 = vmul.f32 %v5430, 100.0
        %v5467 = vmul.f32 %v5432, 100.0
        %v5468 = vmul.f32 %v5323, 100.0
        %v5469 = vmul.f32 %v5325, 100.0
        %v5470 = vmul.f32 %v5436, 100.0
        %v5471 = vmul.f32 %v5438, 100.0
        %vm5472 = vcmp.gt.f32.partialorder %v5440, 20.0
        %vm5473 = vcmp.gt.f32.partialorder %v5441, 20.0
        %vm5474 = vcmp.gt.f32.partialorder %v5442, 20.0
        %vm5475 = vcmp.gt.f32.partialorder %v5443, 20.0
        %vm5476 = vcmp.gt.f32.partialorder %v5444, 20.0
        %vm5477 = vcmp.gt.f32.partialorder %v5445, 20.0
        %vm5478 = vcmp.gt.f32.partialorder %v5446, 20.0
        %vm5479 = vcmp.gt.f32.partialorder %v5447, 20.0
        %vm5480 = vcmp.gt.f32.partialorder %v5448, 20.0
        %vm5481 = vcmp.gt.f32.partialorder %v5449, 20.0
        %vm5482 = vcmp.gt.f32.partialorder %v5450, 20.0
        %vm5483 = vcmp.gt.f32.partialorder %v5451, 20.0
        %vm5484 = vcmp.gt.f32.partialorder %v5452, 20.0
        %vm5485 = vcmp.gt.f32.partialorder %v5453, 20.0
        %vm5486 = vcmp.gt.f32.partialorder %v5454, 20.0
        %vm5487 = vcmp.gt.f32.partialorder %v5455, 20.0
        %vm5488 = vcmp.gt.f32.partialorder %v5456, 20.0
        %vm5489 = vcmp.gt.f32.partialorder %v5457, 20.0
        %vm5490 = vcmp.gt.f32.partialorder %v5458, 20.0
        %vm5491 = vcmp.gt.f32.partialorder %v5459, 20.0
        %vm5492 = vcmp.gt.f32.partialorder %v5460, 20.0
        %vm5493 = vcmp.gt.f32.partialorder %v5461, 20.0
        %vm5494 = vcmp.gt.f32.partialorder %v5462, 20.0
        %vm5495 = vcmp.gt.f32.partialorder %v5463, 20.0
        %vm5496 = vcmp.gt.f32.partialorder %v5464, 20.0
        %vm5497 = vcmp.gt.f32.partialorder %v5465, 20.0
        %vm5498 = vcmp.gt.f32.partialorder %v5466, 20.0
        %vm5499 = vcmp.gt.f32.partialorder %v5467, 20.0
        %vm5500 = vcmp.gt.f32.partialorder %v5468, 20.0
        %vm5501 = vcmp.gt.f32.partialorder %v5469, 20.0
        %vm5502 = vcmp.gt.f32.partialorder %v5470, 20.0
        %vm5503 = vcmp.gt.f32.partialorder %v5471, 20.0
        %v5504 = vmul.f32 %v5440, 1.442695
        %v5505 = vpow.pop %v5504
        %v5506 = vmul.f32 %v5441, 1.442695
        %v5507 = vpow.pop %v5506
        %v5508 = vmul.f32 %v5442, 1.442695
        %v5509 = vpow.pop %v5508
        %v5510 = vmul.f32 %v5443, 1.442695
        %v5511 = vpow.pop %v5510
        %v5512 = vmul.f32 %v5444, 1.442695
        %v5513 = vpow.pop %v5512
        %v5514 = vmul.f32 %v5445, 1.442695
        %v5515 = vpow.pop %v5514
        %v5516 = vmul.f32 %v5446, 1.442695
        %v5517 = vpow.pop %v5516
        %v5518 = vmul.f32 %v5447, 1.442695
        %v5519 = vpow.pop %v5518
        %v5520 = vmul.f32 %v5448, 1.442695
        %v5521 = vpow.pop %v5520
        %v5522 = vmul.f32 %v5449, 1.442695
        %v5523 = vpow.pop %v5522
        %v5524 = vmul.f32 %v5450, 1.442695
        %v5525 = vpow.pop %v5524
        %v5526 = vmul.f32 %v5451, 1.442695
        %v5527 = vpow.pop %v5526
        %v5528 = vmul.f32 %v5452, 1.442695
        %v5529 = vpow.pop %v5528
        %v5530 = vmul.f32 %v5453, 1.442695
        %v5531 = vpow.pop %v5530
        %v5532 = vmul.f32 %v5454, 1.442695
        %v5533 = vpow.pop %v5532
        %v5534 = vmul.f32 %v5455, 1.442695
        %v5535 = vpow.pop %v5534
        %v5536 = vmul.f32 %v5456, 1.442695
        %v5537 = vpow.pop %v5536
        %v5538 = vmul.f32 %v5457, 1.442695
        %v5539 = vpow.pop %v5538
        %v5540 = vmul.f32 %v5458, 1.442695
        %v5541 = vpow.pop %v5540
        %v5542 = vmul.f32 %v5459, 1.442695
        %v5543 = vpow.pop %v5542
        %v5544 = vmul.f32 %v5460, 1.442695
        %v5545 = vpow.pop %v5544
        %v5546 = vmul.f32 %v5461, 1.442695
        %v5547 = vpow.pop %v5546
        %v5548 = vmul.f32 %v5462, 1.442695
        %v5549 = vpow.pop %v5548
        %v5550 = vmul.f32 %v5463, 1.442695
        %v5551 = vpow.pop %v5550
        %v5552 = vmul.f32 %v5464, 1.442695
        %v5553 = vpow.pop %v5552
        %v5554 = vmul.f32 %v5465, 1.442695
        %v5555 = vpow.pop %v5554
        %v5556 = vmul.f32 %v5466, 1.442695
        %v5557 = vpow.pop %v5556
        %v5558 = vmul.f32 %v5467, 1.442695
        %v5559 = vpow.pop %v5558
        %v5560 = vmul.f32 %v5468, 1.442695
        %v5561 = vpow.pop %v5560
        %v5562 = vmul.f32 %v5469, 1.442695
        %v5563 = vpow.pop %v5562
        %v5564 = vmul.f32 %v5470, 1.442695
        %v5565 = vpow.pop %v5564
        %v5566 = vmul.f32 %v5471, 1.442695
        %v5567 = vpow.pop %v5566
        %v5568 = vadd.f32 %v5505, 1.0
        %v5569 = vlog2.pop %v5568
        %v5570 = vmul.f32 %v5569, 0.6931472
        %v5571 = vmul.f32 -0.5, %v5505
        %v5572 = vadd.f32 %v5571, 1.0
        %v5573 = vmul.f32 %v5572, %v5505
        %v5574 = vand.u32 2147483647, %v5505
        %vm5575 = vcmp.lt.f32.partialorder %v5574, 0.0004427343
        %v5576 = vsel %vm5575, %v5573, %v5570
        %v5577 = vadd.f32 %v5507, 1.0
        %v5578 = vlog2.pop %v5577
        %v5579 = vmul.f32 %v5578, 0.6931472
        %v5580 = vmul.f32 -0.5, %v5507
        %v5581 = vadd.f32 %v5580, 1.0
        %v5582 = vmul.f32 %v5581, %v5507
        %v5583 = vand.u32 2147483647, %v5507
        %vm5584 = vcmp.lt.f32.partialorder %v5583, 0.0004427343
        %v5585 = vsel %vm5584, %v5582, %v5579
        %v5586 = vadd.f32 %v5509, 1.0
        %v5587 = vlog2.pop %v5586
        %v5588 = vmul.f32 %v5587, 0.6931472
        %v5589 = vmul.f32 -0.5, %v5509
        %v5590 = vadd.f32 %v5589, 1.0
        %v5591 = vmul.f32 %v5590, %v5509
        %v5592 = vand.u32 2147483647, %v5509
        %vm5593 = vcmp.lt.f32.partialorder %v5592, 0.0004427343
        %v5594 = vsel %vm5593, %v5591, %v5588
        %v5595 = vadd.f32 %v5511, 1.0
        %v5596 = vlog2.pop %v5595
        %v5597 = vmul.f32 %v5596, 0.6931472
        %v5598 = vmul.f32 -0.5, %v5511
        %v5599 = vadd.f32 %v5598, 1.0
        %v5600 = vmul.f32 %v5599, %v5511
        %v5601 = vand.u32 2147483647, %v5511
        %vm5602 = vcmp.lt.f32.partialorder %v5601, 0.0004427343
        %v5603 = vsel %vm5602, %v5600, %v5597
        %v5604 = vadd.f32 %v5513, 1.0
        %v5605 = vlog2.pop %v5604
        %v5606 = vmul.f32 %v5605, 0.6931472
        %v5607 = vmul.f32 -0.5, %v5513
        %v5608 = vadd.f32 %v5607, 1.0
        %v5609 = vmul.f32 %v5608, %v5513
        %v5610 = vand.u32 2147483647, %v5513
        %vm5611 = vcmp.lt.f32.partialorder %v5610, 0.0004427343
        %v5612 = vsel %vm5611, %v5609, %v5606
        %v5613 = vadd.f32 %v5515, 1.0
        %v5614 = vlog2.pop %v5613
        %v5615 = vmul.f32 %v5614, 0.6931472
        %v5616 = vmul.f32 -0.5, %v5515
        %v5617 = vadd.f32 %v5616, 1.0
        %v5618 = vmul.f32 %v5617, %v5515
        %v5619 = vand.u32 2147483647, %v5515
        %vm5620 = vcmp.lt.f32.partialorder %v5619, 0.0004427343
        %v5621 = vsel %vm5620, %v5618, %v5615
        %v5622 = vadd.f32 %v5517, 1.0
        %v5623 = vlog2.pop %v5622
        %v5624 = vmul.f32 %v5623, 0.6931472
        %v5625 = vmul.f32 -0.5, %v5517
        %v5626 = vadd.f32 %v5625, 1.0
        %v5627 = vmul.f32 %v5626, %v5517
        %v5628 = vand.u32 2147483647, %v5517
        %vm5629 = vcmp.lt.f32.partialorder %v5628, 0.0004427343
        %v5630 = vsel %vm5629, %v5627, %v5624
        %v5631 = vadd.f32 %v5519, 1.0
        %v5632 = vlog2.pop %v5631
        %v5633 = vmul.f32 %v5632, 0.6931472
        %v5634 = vmul.f32 -0.5, %v5519
        %v5635 = vadd.f32 %v5634, 1.0
        %v5636 = vmul.f32 %v5635, %v5519
        %v5637 = vand.u32 2147483647, %v5519
        %vm5638 = vcmp.lt.f32.partialorder %v5637, 0.0004427343
        %v5639 = vsel %vm5638, %v5636, %v5633
        %v5640 = vadd.f32 %v5521, 1.0
        %v5641 = vlog2.pop %v5640
        %v5642 = vmul.f32 %v5641, 0.6931472
        %v5643 = vmul.f32 -0.5, %v5521
        %v5644 = vadd.f32 %v5643, 1.0
        %v5645 = vmul.f32 %v5644, %v5521
        %v5646 = vand.u32 2147483647, %v5521
        %vm5647 = vcmp.lt.f32.partialorder %v5646, 0.0004427343
        %v5648 = vsel %vm5647, %v5645, %v5642
        %v5649 = vadd.f32 %v5523, 1.0
        %v5650 = vlog2.pop %v5649
        %v5651 = vmul.f32 %v5650, 0.6931472
        %v5652 = vmul.f32 -0.5, %v5523
        %v5653 = vadd.f32 %v5652, 1.0
        %v5654 = vmul.f32 %v5653, %v5523
        %v5655 = vand.u32 2147483647, %v5523
        %vm5656 = vcmp.lt.f32.partialorder %v5655, 0.0004427343
        %v5657 = vsel %vm5656, %v5654, %v5651
        %v5658 = vadd.f32 %v5525, 1.0
        %v5659 = vlog2.pop %v5658
        %v5660 = vmul.f32 %v5659, 0.6931472
        %v5661 = vmul.f32 -0.5, %v5525
        %v5662 = vadd.f32 %v5661, 1.0
        %v5663 = vmul.f32 %v5662, %v5525
        %v5664 = vand.u32 2147483647, %v5525
        %vm5665 = vcmp.lt.f32.partialorder %v5664, 0.0004427343
        %v5666 = vsel %vm5665, %v5663, %v5660
        %v5667 = vadd.f32 %v5527, 1.0
        %v5668 = vlog2.pop %v5667
        %v5669 = vmul.f32 %v5668, 0.6931472
        %v5670 = vmul.f32 -0.5, %v5527
        %v5671 = vadd.f32 %v5670, 1.0
        %v5672 = vmul.f32 %v5671, %v5527
        %v5673 = vand.u32 2147483647, %v5527
        %vm5674 = vcmp.lt.f32.partialorder %v5673, 0.0004427343
        %v5675 = vsel %vm5674, %v5672, %v5669
        %v5676 = vadd.f32 %v5529, 1.0
        %v5677 = vlog2.pop %v5676
        %v5678 = vmul.f32 %v5677, 0.6931472
        %v5679 = vmul.f32 -0.5, %v5529
        %v5680 = vadd.f32 %v5679, 1.0
        %v5681 = vmul.f32 %v5680, %v5529
        %v5682 = vand.u32 2147483647, %v5529
        %vm5683 = vcmp.lt.f32.partialorder %v5682, 0.0004427343
        %v5684 = vsel %vm5683, %v5681, %v5678
        %v5685 = vadd.f32 %v5531, 1.0
        %v5686 = vlog2.pop %v5685
        %v5687 = vmul.f32 %v5686, 0.6931472
        %v5688 = vmul.f32 -0.5, %v5531
        %v5689 = vadd.f32 %v5688, 1.0
        %v5690 = vmul.f32 %v5689, %v5531
        %v5691 = vand.u32 2147483647, %v5531
        %vm5692 = vcmp.lt.f32.partialorder %v5691, 0.0004427343
        %v5693 = vsel %vm5692, %v5690, %v5687
        %v5694 = vadd.f32 %v5533, 1.0
        %v5695 = vlog2.pop %v5694
        %v5696 = vmul.f32 %v5695, 0.6931472
        %v5697 = vmul.f32 -0.5, %v5533
        %v5698 = vadd.f32 %v5697, 1.0
        %v5699 = vmul.f32 %v5698, %v5533
        %v5700 = vand.u32 2147483647, %v5533
        %vm5701 = vcmp.lt.f32.partialorder %v5700, 0.0004427343
        %v5702 = vsel %vm5701, %v5699, %v5696
        %v5703 = vadd.f32 %v5535, 1.0
        %v5704 = vlog2.pop %v5703
        %v5705 = vmul.f32 %v5704, 0.6931472
        %v5706 = vmul.f32 -0.5, %v5535
        %v5707 = vadd.f32 %v5706, 1.0
        %v5708 = vmul.f32 %v5707, %v5535
        %v5709 = vand.u32 2147483647, %v5535
        %vm5710 = vcmp.lt.f32.partialorder %v5709, 0.0004427343
        %v5711 = vsel %vm5710, %v5708, %v5705
        %v5712 = vadd.f32 %v5537, 1.0
        %v5713 = vlog2.pop %v5712
        %v5714 = vmul.f32 %v5713, 0.6931472
        %v5715 = vmul.f32 -0.5, %v5537
        %v5716 = vadd.f32 %v5715, 1.0
        %v5717 = vmul.f32 %v5716, %v5537
        %v5718 = vand.u32 2147483647, %v5537
        %vm5719 = vcmp.lt.f32.partialorder %v5718, 0.0004427343
        %v5720 = vsel %vm5719, %v5717, %v5714
        %v5721 = vadd.f32 %v5539, 1.0
        %v5722 = vlog2.pop %v5721
        %v5723 = vmul.f32 %v5722, 0.6931472
        %v5724 = vmul.f32 -0.5, %v5539
        %v5725 = vadd.f32 %v5724, 1.0
        %v5726 = vmul.f32 %v5725, %v5539
        %v5727 = vand.u32 2147483647, %v5539
        %vm5728 = vcmp.lt.f32.partialorder %v5727, 0.0004427343
        %v5729 = vsel %vm5728, %v5726, %v5723
        %v5730 = vadd.f32 %v5541, 1.0
        %v5731 = vlog2.pop %v5730
        %v5732 = vmul.f32 %v5731, 0.6931472
        %v5733 = vmul.f32 -0.5, %v5541
        %v5734 = vadd.f32 %v5733, 1.0
        %v5735 = vmul.f32 %v5734, %v5541
        %v5736 = vand.u32 2147483647, %v5541
        %vm5737 = vcmp.lt.f32.partialorder %v5736, 0.0004427343
        %v5738 = vsel %vm5737, %v5735, %v5732
        %v5739 = vadd.f32 %v5543, 1.0
        %v5740 = vlog2.pop %v5739
        %v5741 = vmul.f32 %v5740, 0.6931472
        %v5742 = vmul.f32 -0.5, %v5543
        %v5743 = vadd.f32 %v5742, 1.0
        %v5744 = vmul.f32 %v5743, %v5543
        %v5745 = vand.u32 2147483647, %v5543
        %vm5746 = vcmp.lt.f32.partialorder %v5745, 0.0004427343
        %v5747 = vsel %vm5746, %v5744, %v5741
        %v5748 = vadd.f32 %v5545, 1.0
        %v5749 = vlog2.pop %v5748
        %v5750 = vmul.f32 %v5749, 0.6931472
        %v5751 = vmul.f32 -0.5, %v5545
        %v5752 = vadd.f32 %v5751, 1.0
        %v5753 = vmul.f32 %v5752, %v5545
        %v5754 = vand.u32 2147483647, %v5545
        %vm5755 = vcmp.lt.f32.partialorder %v5754, 0.0004427343
        %v5756 = vsel %vm5755, %v5753, %v5750
        %v5757 = vadd.f32 %v5547, 1.0
        %v5758 = vlog2.pop %v5757
        %v5759 = vmul.f32 %v5758, 0.6931472
        %v5760 = vmul.f32 -0.5, %v5547
        %v5761 = vadd.f32 %v5760, 1.0
        %v5762 = vmul.f32 %v5761, %v5547
        %v5763 = vand.u32 2147483647, %v5547
        %vm5764 = vcmp.lt.f32.partialorder %v5763, 0.0004427343
        %v5765 = vsel %vm5764, %v5762, %v5759
        %v5766 = vadd.f32 %v5549, 1.0
        %v5767 = vlog2.pop %v5766
        %v5768 = vmul.f32 %v5767, 0.6931472
        %v5769 = vmul.f32 -0.5, %v5549
        %v5770 = vadd.f32 %v5769, 1.0
        %v5771 = vmul.f32 %v5770, %v5549
        %v5772 = vand.u32 2147483647, %v5549
        %vm5773 = vcmp.lt.f32.partialorder %v5772, 0.0004427343
        %v5774 = vsel %vm5773, %v5771, %v5768
        %v5775 = vadd.f32 %v5551, 1.0
        %v5776 = vlog2.pop %v5775
        %v5777 = vmul.f32 %v5776, 0.6931472
        %v5778 = vmul.f32 -0.5, %v5551
        %v5779 = vadd.f32 %v5778, 1.0
        %v5780 = vmul.f32 %v5779, %v5551
        %v5781 = vand.u32 2147483647, %v5551
        %vm5782 = vcmp.lt.f32.partialorder %v5781, 0.0004427343
        %v5783 = vsel %vm5782, %v5780, %v5777
        %v5784 = vadd.f32 %v5553, 1.0
        %v5785 = vlog2.pop %v5784
        %v5786 = vmul.f32 %v5785, 0.6931472
        %v5787 = vmul.f32 -0.5, %v5553
        %v5788 = vadd.f32 %v5787, 1.0
        %v5789 = vmul.f32 %v5788, %v5553
        %v5790 = vand.u32 2147483647, %v5553
        %vm5791 = vcmp.lt.f32.partialorder %v5790, 0.0004427343
        %v5792 = vsel %vm5791, %v5789, %v5786
        %v5793 = vadd.f32 %v5555, 1.0
        %v5794 = vlog2.pop %v5793
        %v5795 = vmul.f32 %v5794, 0.6931472
        %v5796 = vmul.f32 -0.5, %v5555
        %v5797 = vadd.f32 %v5796, 1.0
        %v5798 = vmul.f32 %v5797, %v5555
        %v5799 = vand.u32 2147483647, %v5555
        %vm5800 = vcmp.lt.f32.partialorder %v5799, 0.0004427343
        %v5801 = vsel %vm5800, %v5798, %v5795
        %v5802 = vadd.f32 %v5557, 1.0
        %v5803 = vlog2.pop %v5802
        %v5804 = vmul.f32 %v5803, 0.6931472
        %v5805 = vmul.f32 -0.5, %v5557
        %v5806 = vadd.f32 %v5805, 1.0
        %v5807 = vmul.f32 %v5806, %v5557
        %v5808 = vand.u32 2147483647, %v5557
        %vm5809 = vcmp.lt.f32.partialorder %v5808, 0.0004427343
        %v5810 = vsel %vm5809, %v5807, %v5804
        %v5811 = vadd.f32 %v5559, 1.0
        %v5812 = vlog2.pop %v5811
        %v5813 = vmul.f32 %v5812, 0.6931472
        %v5814 = vmul.f32 -0.5, %v5559
        %v5815 = vadd.f32 %v5814, 1.0
        %v5816 = vmul.f32 %v5815, %v5559
        %v5817 = vand.u32 2147483647, %v5559
        %vm5818 = vcmp.lt.f32.partialorder %v5817, 0.0004427343
        %v5819 = vsel %vm5818, %v5816, %v5813
        %v5820 = vadd.f32 %v5561, 1.0
        %v5821 = vlog2.pop %v5820
        %v5822 = vmul.f32 %v5821, 0.6931472
        %v5823 = vmul.f32 -0.5, %v5561
        %v5824 = vadd.f32 %v5823, 1.0
        %v5825 = vmul.f32 %v5824, %v5561
        %v5826 = vand.u32 2147483647, %v5561
        %vm5827 = vcmp.lt.f32.partialorder %v5826, 0.0004427343
        %v5828 = vsel %vm5827, %v5825, %v5822
        %v5829 = vadd.f32 %v5563, 1.0
        %v5830 = vlog2.pop %v5829
        %v5831 = vmul.f32 %v5830, 0.6931472
        %v5832 = vmul.f32 -0.5, %v5563
        %v5833 = vadd.f32 %v5832, 1.0
        %v5834 = vmul.f32 %v5833, %v5563
        %v5835 = vand.u32 2147483647, %v5563
        %vm5836 = vcmp.lt.f32.partialorder %v5835, 0.0004427343
        %v5837 = vsel %vm5836, %v5834, %v5831
        %v5838 = vadd.f32 %v5565, 1.0
        %v5839 = vlog2.pop %v5838
        %v5840 = vmul.f32 %v5839, 0.6931472
        %v5841 = vmul.f32 -0.5, %v5565
        %v5842 = vadd.f32 %v5841, 1.0
        %v5843 = vmul.f32 %v5842, %v5565
        %v5844 = vand.u32 2147483647, %v5565
        %vm5845 = vcmp.lt.f32.partialorder %v5844, 0.0004427343
        %v5846 = vsel %vm5845, %v5843, %v5840
        %v5847 = vadd.f32 %v5567, 1.0
        %v5848 = vlog2.pop %v5847
        %v5849 = vmul.f32 %v5848, 0.6931472
        %v5850 = vmul.f32 -0.5, %v5567
        %v5851 = vadd.f32 %v5850, 1.0
        %v5852 = vmul.f32 %v5851, %v5567
        %v5853 = vand.u32 2147483647, %v5567
        %vm5854 = vcmp.lt.f32.partialorder %v5853, 0.0004427343
        %v5855 = vsel %vm5854, %v5852, %v5849
        %v5856 = vmul.f32 %v5576, 0.01
        %v5857 = vmul.f32 %v5585, 0.01
        %v5858 = vmul.f32 %v5594, 0.01
        %v5859 = vmul.f32 %v5603, 0.01
        %v5860 = vmul.f32 %v5612, 0.01
        %v5861 = vmul.f32 %v5621, 0.01
        %v5862 = vmul.f32 %v5630, 0.01
        %v5863 = vmul.f32 %v5639, 0.01
        %v5864 = vmul.f32 %v5648, 0.01
        %v5865 = vmul.f32 %v5657, 0.01
        %v5866 = vmul.f32 %v5666, 0.01
        %v5867 = vmul.f32 %v5675, 0.01
        %v5868 = vmul.f32 %v5684, 0.01
        %v5869 = vmul.f32 %v5693, 0.01
        %v5870 = vmul.f32 %v5702, 0.01
        %v5871 = vmul.f32 %v5711, 0.01
        %v5872 = vmul.f32 %v5720, 0.01
        %v5873 = vmul.f32 %v5729, 0.01
        %v5874 = vmul.f32 %v5738, 0.01
        %v5875 = vmul.f32 %v5747, 0.01
        %v5876 = vmul.f32 %v5756, 0.01
        %v5877 = vmul.f32 %v5765, 0.01
        %v5878 = vmul.f32 %v5774, 0.01
        %v5879 = vmul.f32 %v5783, 0.01
        %v5880 = vmul.f32 %v5792, 0.01
        %v5881 = vmul.f32 %v5801, 0.01
        %v5882 = vmul.f32 %v5810, 0.01
        %v5883 = vmul.f32 %v5819, 0.01
        %v5884 = vmul.f32 %v5828, 0.01
        %v5885 = vmul.f32 %v5837, 0.01
        %v5886 = vmul.f32 %v5846, 0.01
        %v5887 = vmul.f32 %v5855, 0.01
        %v5888 = vsel %vm5472, %v5281, %v5856
        %v5889 = vsel %vm5473, %v5283, %v5857
        %v5890 = vsel %vm5474, %v5394, %v5858
        %v5891 = vsel %vm5475, %v5396, %v5859
        %v5892 = vsel %vm5476, %v5287, %v5860
        %v5893 = vsel %vm5477, %v5289, %v5861
        %v5894 = vsel %vm5478, %v5400, %v5862
        %v5895 = vsel %vm5479, %v5402, %v5863
        %v5896 = vsel %vm5480, %v5293, %v5864
        %v5897 = vsel %vm5481, %v5295, %v5865
        %v5898 = vsel %vm5482, %v5406, %v5866
        %v5899 = vsel %vm5483, %v5408, %v5867
        %v5900 = vsel %vm5484, %v5299, %v5868
        %v5901 = vsel %vm5485, %v5301, %v5869
        %v5902 = vsel %vm5486, %v5412, %v5870
        %v5903 = vsel %vm5487, %v5414, %v5871
        %v5904 = vsel %vm5488, %v5305, %v5872
        %v5905 = vsel %vm5489, %v5307, %v5873
        %v5906 = vsel %vm5490, %v5418, %v5874
        %v5907 = vsel %vm5491, %v5420, %v5875
        %v5908 = vsel %vm5492, %v5311, %v5876
        %v5909 = vsel %vm5493, %v5313, %v5877
        %v5910 = vsel %vm5494, %v5424, %v5878
        %v5911 = vsel %vm5495, %v5426, %v5879
        %v5912 = vsel %vm5496, %v5317, %v5880
        %v5913 = vsel %vm5497, %v5319, %v5881
        %v5914 = vsel %vm5498, %v5430, %v5882
        %v5915 = vsel %vm5499, %v5432, %v5883
        %v5916 = vsel %vm5500, %v5323, %v5884
        %v5917 = vsel %vm5501, %v5325, %v5885
        %v5918 = vsel %vm5502, %v5436, %v5886
        %v5919 = vsel %vm5503, %v5438, %v5887
        %s5920 = scalar_lea.vmem [#allocation2], 384
        %v5921 = vld [vmem:[%s5920] sm:$0xff]
        %v5922 = vld [vmem:[%s5920 + $0x8] sm:$0xff]
        %v5923 = vld [vmem:[%s5920 + $0x10] sm:$0xff]
        %v5924 = vld [vmem:[%s5920 + $0x18] sm:$0xff]
        %v5925 = vld [vmem:[%s5920 + $0x20] sm:$0xff]
        %v5926 = vld [vmem:[%s5920 + $0x28] sm:$0xff]
        %v5927 = vld [vmem:[%s5920 + $0x30] sm:$0xff]
        %v5928 = vld [vmem:[%s5920 + $0x38] sm:$0xff]
        %5929 = vset.pattern.permute.xlu0 7
        %5930 = vperm.xlu0 %5929, %v670
        %v5931 = vpop.permute.xlu0 %5930
        %5933 = vset.pattern.permute.xlu0 7
        %5934 = vperm.xlu0 %5933, %v671
        %v5935 = vpop.permute.xlu0 %5934
        %5937 = vset.pattern.permute.xlu0 7
        %5938 = vperm.xlu0 %5937, %v672
        %v5939 = vpop.permute.xlu0 %5938
        %5941 = vset.pattern.permute.xlu0 7
        %5942 = vperm.xlu0 %5941, %v673
        %v5943 = vpop.permute.xlu0 %5942
        %5945 = vset.pattern.permute.xlu0 7
        %5946 = vperm.xlu0 %5945, %v674
        %v5947 = vpop.permute.xlu0 %5946
        %5949 = vset.pattern.permute.xlu0 7
        %5950 = vperm.xlu0 %5949, %v675
        %v5951 = vpop.permute.xlu0 %5950
        %5953 = vset.pattern.permute.xlu0 7
        %5954 = vperm.xlu0 %5953, %v676
        %v5955 = vpop.permute.xlu0 %5954
        %5957 = vset.pattern.permute.xlu0 7
        %5958 = vperm.xlu0 %5957, %v677
        %v5959 = vpop.permute.xlu0 %5958
        %v5962 = vsel %vm1270, %v5921, 0
        %v5965 = vsel %vm1270, %v5922, 0
        %v5968 = vsel %vm1270, %v5923, 0
        %v5971 = vsel %vm1270, %v5924, 0
        %v5974 = vsel %vm1270, %v5925, 0
        %v5977 = vsel %vm1270, %v5926, 0
        %v5980 = vsel %vm1270, %v5927, 0
        %v5983 = vsel %vm1270, %v5928, 0
        %5985 = vmatprep.subr.mxu0 %v5889
        %5986 = vmatpush1.msra.mxu0 %v5888
        %5987 = vmatprep.subr.mxu0 %v5893
        %5988 = vmatpush1.msra.mxu0 %v5892
        %5989 = vmatprep.subr.mxu0 %v5897
        %5990 = vmatpush1.msra.mxu0 %v5896
        %5991 = vmatprep.subr.mxu0 %v5901
        %5992 = vmatpush1.msra.mxu0 %v5900
        %5993 = vmatprep.subr.mxu0 %v5905
        %5994 = vmatpush1.msra.mxu0 %v5904
        %5995 = vmatprep.subr.mxu0 %v5909
        %5996 = vmatpush1.msra.mxu0 %v5908
        %5997 = vmatprep.subr.mxu0 %v5913
        %5998 = vmatpush1.msra.mxu0 %v5912
        %5999 = vmatprep.subr.mxu0 %v5917
        %6000 = vmatpush1.msra.mxu0 %v5916
        %6001 = vmatprep.subr.mxu0 0.0
        %6002 = vmatpush1.msra.mxu0 0.0
        %6003 = vmatprep.subr.mxu0 0.0
        %6004 = vmatpush1.msra.mxu0 0.0
        %6005 = vmatprep.subr.mxu0 0.0
        %6006 = vmatpush1.msra.mxu0 0.0
        %6007 = vmatprep.subr.mxu0 0.0
        %6008 = vmatpush1.msra.mxu0 0.0
        %6009 = vmatprep.subr.mxu0 0.0
        %6010 = vmatpush1.msra.mxu0 0.0
        %6011 = vmatprep.subr.mxu0 0.0
        %6012 = vmatpush1.msra.mxu0 0.0
        %6013 = vmatprep.subr.mxu0 0.0
        %6014 = vmatpush1.msra.mxu0 0.0
        %6015 = vmatprep.subr.mxu0 0.0
        %6016 = vmatpush1.msra.mxu0 0.0
        %6017 = vmatprep.subr.mxu0 0.0
        %6018 = vmatpush1.msra.mxu0 0.0
        %6019 = vmatprep.subr.mxu0 0.0
        %6020 = vmatpush1.msra.mxu0 0.0
        %6021 = vmatprep.subr.mxu0 0.0
        %6022 = vmatpush1.msra.mxu0 0.0
        %6023 = vmatprep.subr.mxu0 0.0
        %6024 = vmatpush1.msra.mxu0 0.0
        %6025 = vmatprep.subr.mxu0 0.0
        %6026 = vmatpush1.msra.mxu0 0.0
        %6027 = vmatprep.subr.mxu0 0.0
        %6028 = vmatpush1.msra.mxu0 0.0
        %6029 = vmatprep.subr.mxu0 0.0
        %6030 = vmatpush1.msra.mxu0 0.0
        %6031 = vmatprep.subr.mxu0 0.0
        %6032 = vmatpush1.msra.mxu0 0.0
        %6033 = vmatprep.subr.mxu0 0.0
        %6034 = vmatpush1.msra.mxu0 0.0
        %6035 = vmatprep.subr.mxu0 0.0
        %6036 = vmatpush1.msra.mxu0 0.0
        %6037 = vmatprep.subr.mxu0 0.0
        %6038 = vmatpush1.msra.mxu0 0.0
        %6039 = vmatprep.subr.mxu0 0.0
        %6040 = vmatpush1.msra.mxu0 0.0
        %6041 = vmatprep.subr.mxu0 0.0
        %6042 = vmatpush1.msra.mxu0 0.0
        %6043 = vmatprep.subr.mxu0 0.0
        %6044 = vmatpush1.msra.mxu0 0.0
        %6045 = vmatprep.subr.mxu0 0.0
        %6046 = vmatpush1.msra.mxu0 0.0
        %6047 = vmatprep.subr.mxu0 0.0
        %6048 = vmatpush1.msra.mxu0 0.0
        %6049 = vmatprep.mubr.f32.mxu0 0.0
        %6050 = vmatmul.mubr.f32.gmra.mrb[0].mxu0 %v5962
        %v6051 = vpop.f32.mrb[0].mxu0
        %v6052 = vadd.f32 %v5931, %v6051
        %v6053 = vpop.f32.mrb[0].mxu0
        %v6054 = vadd.f32 %v5931, %v6053
        %6055 = vmatprep.mubr.f32.mxu0 0.0
        %6056 = vmatmul.mubr.f32.gmra.mrb[0].mxu0 %v5965
        %v6057 = vpop.f32.mrb[0].mxu0
        %v6058 = vadd.f32 %v5935, %v6057
        %v6059 = vpop.f32.mrb[0].mxu0
        %v6060 = vadd.f32 %v5935, %v6059
        %6061 = vmatprep.mubr.f32.mxu0 0.0
        %6062 = vmatmul.mubr.f32.gmra.mrb[0].mxu0 %v5968
        %v6063 = vpop.f32.mrb[0].mxu0
        %v6064 = vadd.f32 %v5939, %v6063
        %v6065 = vpop.f32.mrb[0].mxu0
        %v6066 = vadd.f32 %v5939, %v6065
        %6067 = vmatprep.mubr.f32.mxu0 0.0
        %6068 = vmatmul.mubr.f32.gmra.mrb[0].mxu0 %v5971
        %v6069 = vpop.f32.mrb[0].mxu0
        %v6070 = vadd.f32 %v5943, %v6069
        %v6071 = vpop.f32.mrb[0].mxu0
        %v6072 = vadd.f32 %v5943, %v6071
        %6073 = vmatprep.mubr.f32.mxu0 0.0
        %6074 = vmatmul.mubr.f32.gmra.mrb[0].mxu0 %v5974
        %v6075 = vpop.f32.mrb[0].mxu0
        %v6076 = vadd.f32 %v5947, %v6075
        %v6077 = vpop.f32.mrb[0].mxu0
        %v6078 = vadd.f32 %v5947, %v6077
        %6079 = vmatprep.mubr.f32.mxu0 0.0
        %6080 = vmatmul.mubr.f32.gmra.mrb[0].mxu0 %v5977
        %v6081 = vpop.f32.mrb[0].mxu0
        %v6082 = vadd.f32 %v5951, %v6081
        %v6083 = vpop.f32.mrb[0].mxu0
        %v6084 = vadd.f32 %v5951, %v6083
        %6085 = vmatprep.mubr.f32.mxu0 0.0
        %6086 = vmatmul.mubr.f32.gmra.mrb[0].mxu0 %v5980
        %v6087 = vpop.f32.mrb[0].mxu0
        %v6088 = vadd.f32 %v5955, %v6087
        %v6089 = vpop.f32.mrb[0].mxu0
        %v6090 = vadd.f32 %v5955, %v6089
        %6091 = vmatprep.mubr.f32.mxu0 0.0
        %6092 = vmatmul.mubr.f32.gmra.mrb[0].mxu0 %v5983
        %v6093 = vpop.f32.mrb[0].mxu0
        %v6094 = vadd.f32 %v5959, %v6093
        %v6095 = vpop.f32.mrb[0].mxu0
        %v6096 = vadd.f32 %v5959, %v6095
        %6097 = vdwg.mxu0
        %6098 = vmatprep.subr.mxu0 %v5891
        %6099 = vmatpush1.msra.mxu0 %v5890
        %6100 = vmatprep.subr.mxu0 %v5895
        %6101 = vmatpush1.msra.mxu0 %v5894
        %6102 = vmatprep.subr.mxu0 %v5899
        %6103 = vmatpush1.msra.mxu0 %v5898
        %6104 = vmatprep.subr.mxu0 %v5903
        %6105 = vmatpush1.msra.mxu0 %v5902
        %6106 = vmatprep.subr.mxu0 %v5907
        %6107 = vmatpush1.msra.mxu0 %v5906
        %6108 = vmatprep.subr.mxu0 %v5911
        %6109 = vmatpush1.msra.mxu0 %v5910
        %6110 = vmatprep.subr.mxu0 %v5915
        %6111 = vmatpush1.msra.mxu0 %v5914
        %6112 = vmatprep.subr.mxu0 %v5919
        %6113 = vmatpush1.msra.mxu0 %v5918
        %6114 = vmatprep.subr.mxu0 0.0
        %6115 = vmatpush1.msra.mxu0 0.0
        %6116 = vmatprep.subr.mxu0 0.0
        %6117 = vmatpush1.msra.mxu0 0.0
        %6118 = vmatprep.subr.mxu0 0.0
        %6119 = vmatpush1.msra.mxu0 0.0
        %6120 = vmatprep.subr.mxu0 0.0
        %6121 = vmatpush1.msra.mxu0 0.0
        %6122 = vmatprep.subr.mxu0 0.0
        %6123 = vmatpush1.msra.mxu0 0.0
        %6124 = vmatprep.subr.mxu0 0.0
        %6125 = vmatpush1.msra.mxu0 0.0
        %6126 = vmatprep.subr.mxu0 0.0
        %6127 = vmatpush1.msra.mxu0 0.0
        %6128 = vmatprep.subr.mxu0 0.0
        %6129 = vmatpush1.msra.mxu0 0.0
        %6130 = vmatprep.subr.mxu0 0.0
        %6131 = vmatpush1.msra.mxu0 0.0
        %6132 = vmatprep.subr.mxu0 0.0
        %6133 = vmatpush1.msra.mxu0 0.0
        %6134 = vmatprep.subr.mxu0 0.0
        %6135 = vmatpush1.msra.mxu0 0.0
        %6136 = vmatprep.subr.mxu0 0.0
        %6137 = vmatpush1.msra.mxu0 0.0
        %6138 = vmatprep.subr.mxu0 0.0
        %6139 = vmatpush1.msra.mxu0 0.0
        %6140 = vmatprep.subr.mxu0 0.0
        %6141 = vmatpush1.msra.mxu0 0.0
        %6142 = vmatprep.subr.mxu0 0.0
        %6143 = vmatpush1.msra.mxu0 0.0
        %6144 = vmatprep.subr.mxu0 0.0
        %6145 = vmatpush1.msra.mxu0 0.0
        %6146 = vmatprep.subr.mxu0 0.0
        %6147 = vmatpush1.msra.mxu0 0.0
        %6148 = vmatprep.subr.mxu0 0.0
        %6149 = vmatpush1.msra.mxu0 0.0
        %6150 = vmatprep.subr.mxu0 0.0
        %6151 = vmatpush1.msra.mxu0 0.0
        %6152 = vmatprep.subr.mxu0 0.0
        %6153 = vmatpush1.msra.mxu0 0.0
        %6154 = vmatprep.subr.mxu0 0.0
        %6155 = vmatpush1.msra.mxu0 0.0
        %6156 = vmatprep.subr.mxu0 0.0
        %6157 = vmatpush1.msra.mxu0 0.0
        %6158 = vmatprep.subr.mxu0 0.0
        %6159 = vmatpush1.msra.mxu0 0.0
        %6160 = vmatprep.subr.mxu0 0.0
        %6161 = vmatpush1.msra.mxu0 0.0
        %6162 = vmatprep.mubr.f32.mxu0 0.0
        %6163 = vmatmul.mubr.f32.gmra.mrb[0].mxu0 %v5962
        %v6164 = vpop.f32.mrb[0].mxu0
        %v6165 = vadd.f32 %v5931, %v6164
        %v6166 = vpop.f32.mrb[0].mxu0
        %v6167 = vadd.f32 %v5931, %v6166
        %6168 = vmatprep.mubr.f32.mxu0 0.0
        %6169 = vmatmul.mubr.f32.gmra.mrb[0].mxu0 %v5965
        %v6170 = vpop.f32.mrb[0].mxu0
        %v6171 = vadd.f32 %v5935, %v6170
        %v6172 = vpop.f32.mrb[0].mxu0
        %v6173 = vadd.f32 %v5935, %v6172
        %6174 = vmatprep.mubr.f32.mxu0 0.0
        %6175 = vmatmul.mubr.f32.gmra.mrb[0].mxu0 %v5968
        %v6176 = vpop.f32.mrb[0].mxu0
        %v6177 = vadd.f32 %v5939, %v6176
        %v6178 = vpop.f32.mrb[0].mxu0
        %v6179 = vadd.f32 %v5939, %v6178
        %6180 = vmatprep.mubr.f32.mxu0 0.0
        %6181 = vmatmul.mubr.f32.gmra.mrb[0].mxu0 %v5971
        %v6182 = vpop.f32.mrb[0].mxu0
        %v6183 = vadd.f32 %v5943, %v6182
        %v6184 = vpop.f32.mrb[0].mxu0
        %v6185 = vadd.f32 %v5943, %v6184
        %6186 = vmatprep.mubr.f32.mxu0 0.0
        %6187 = vmatmul.mubr.f32.gmra.mrb[0].mxu0 %v5974
        %v6188 = vpop.f32.mrb[0].mxu0
        %v6189 = vadd.f32 %v5947, %v6188
        %v6190 = vpop.f32.mrb[0].mxu0
        %v6191 = vadd.f32 %v5947, %v6190
        %6192 = vmatprep.mubr.f32.mxu0 0.0
        %6193 = vmatmul.mubr.f32.gmra.mrb[0].mxu0 %v5977
        %v6194 = vpop.f32.mrb[0].mxu0
        %v6195 = vadd.f32 %v5951, %v6194
        %v6196 = vpop.f32.mrb[0].mxu0
        %v6197 = vadd.f32 %v5951, %v6196
        %6198 = vmatprep.mubr.f32.mxu0 0.0
        %6199 = vmatmul.mubr.f32.gmra.mrb[0].mxu0 %v5980
        %v6200 = vpop.f32.mrb[0].mxu0
        %v6201 = vadd.f32 %v5955, %v6200
        %v6202 = vpop.f32.mrb[0].mxu0
        %v6203 = vadd.f32 %v5955, %v6202
        %6204 = vmatprep.mubr.f32.mxu0 0.0
        %6205 = vmatmul.mubr.f32.gmra.mrb[0].mxu0 %v5983
        %v6206 = vpop.f32.mrb[0].mxu0
        %v6207 = vadd.f32 %v5959, %v6206
        %v6208 = vpop.f32.mrb[0].mxu0
        %v6209 = vadd.f32 %v5959, %v6208
        %6210 = vdwg.mxu0
        %v6211 = vmul.f32 %v6052, 100.0
        %v6212 = vmul.f32 %v6054, 100.0
        %v6213 = vmul.f32 %v6165, 100.0
        %v6214 = vmul.f32 %v6167, 100.0
        %v6215 = vmul.f32 %v6058, 100.0
        %v6216 = vmul.f32 %v6060, 100.0
        %v6217 = vmul.f32 %v6171, 100.0
        %v6218 = vmul.f32 %v6173, 100.0
        %v6219 = vmul.f32 %v6064, 100.0
        %v6220 = vmul.f32 %v6066, 100.0
        %v6221 = vmul.f32 %v6177, 100.0
        %v6222 = vmul.f32 %v6179, 100.0
        %v6223 = vmul.f32 %v6070, 100.0
        %v6224 = vmul.f32 %v6072, 100.0
        %v6225 = vmul.f32 %v6183, 100.0
        %v6226 = vmul.f32 %v6185, 100.0
        %v6227 = vmul.f32 %v6076, 100.0
        %v6228 = vmul.f32 %v6078, 100.0
        %v6229 = vmul.f32 %v6189, 100.0
        %v6230 = vmul.f32 %v6191, 100.0
        %v6231 = vmul.f32 %v6082, 100.0
        %v6232 = vmul.f32 %v6084, 100.0
        %v6233 = vmul.f32 %v6195, 100.0
        %v6234 = vmul.f32 %v6197, 100.0
        %v6235 = vmul.f32 %v6088, 100.0
        %v6236 = vmul.f32 %v6090, 100.0
        %v6237 = vmul.f32 %v6201, 100.0
        %v6238 = vmul.f32 %v6203, 100.0
        %v6239 = vmul.f32 %v6094, 100.0
        %v6240 = vmul.f32 %v6096, 100.0
        %v6241 = vmul.f32 %v6207, 100.0
        %v6242 = vmul.f32 %v6209, 100.0
        %vm6243 = vcmp.gt.f32.partialorder %v6211, 20.0
        %vm6244 = vcmp.gt.f32.partialorder %v6212, 20.0
        %vm6245 = vcmp.gt.f32.partialorder %v6213, 20.0
        %vm6246 = vcmp.gt.f32.partialorder %v6214, 20.0
        %vm6247 = vcmp.gt.f32.partialorder %v6215, 20.0
        %vm6248 = vcmp.gt.f32.partialorder %v6216, 20.0
        %vm6249 = vcmp.gt.f32.partialorder %v6217, 20.0
        %vm6250 = vcmp.gt.f32.partialorder %v6218, 20.0
        %vm6251 = vcmp.gt.f32.partialorder %v6219, 20.0
        %vm6252 = vcmp.gt.f32.partialorder %v6220, 20.0
        %vm6253 = vcmp.gt.f32.partialorder %v6221, 20.0
        %vm6254 = vcmp.gt.f32.partialorder %v6222, 20.0
        %vm6255 = vcmp.gt.f32.partialorder %v6223, 20.0
        %vm6256 = vcmp.gt.f32.partialorder %v6224, 20.0
        %vm6257 = vcmp.gt.f32.partialorder %v6225, 20.0
        %vm6258 = vcmp.gt.f32.partialorder %v6226, 20.0
        %vm6259 = vcmp.gt.f32.partialorder %v6227, 20.0
        %vm6260 = vcmp.gt.f32.partialorder %v6228, 20.0
        %vm6261 = vcmp.gt.f32.partialorder %v6229, 20.0
        %vm6262 = vcmp.gt.f32.partialorder %v6230, 20.0
        %vm6263 = vcmp.gt.f32.partialorder %v6231, 20.0
        %vm6264 = vcmp.gt.f32.partialorder %v6232, 20.0
        %vm6265 = vcmp.gt.f32.partialorder %v6233, 20.0
        %vm6266 = vcmp.gt.f32.partialorder %v6234, 20.0
        %vm6267 = vcmp.gt.f32.partialorder %v6235, 20.0
        %vm6268 = vcmp.gt.f32.partialorder %v6236, 20.0
        %vm6269 = vcmp.gt.f32.partialorder %v6237, 20.0
        %vm6270 = vcmp.gt.f32.partialorder %v6238, 20.0
        %vm6271 = vcmp.gt.f32.partialorder %v6239, 20.0
        %vm6272 = vcmp.gt.f32.partialorder %v6240, 20.0
        %vm6273 = vcmp.gt.f32.partialorder %v6241, 20.0
        %vm6274 = vcmp.gt.f32.partialorder %v6242, 20.0
        %v6275 = vmul.f32 %v6211, 1.442695
        %v6276 = vpow.pop %v6275
        %v6277 = vmul.f32 %v6212, 1.442695
        %v6278 = vpow.pop %v6277
        %v6279 = vmul.f32 %v6213, 1.442695
        %v6280 = vpow.pop %v6279
        %v6281 = vmul.f32 %v6214, 1.442695
        %v6282 = vpow.pop %v6281
        %v6283 = vmul.f32 %v6215, 1.442695
        %v6284 = vpow.pop %v6283
        %v6285 = vmul.f32 %v6216, 1.442695
        %v6286 = vpow.pop %v6285
        %v6287 = vmul.f32 %v6217, 1.442695
        %v6288 = vpow.pop %v6287
        %v6289 = vmul.f32 %v6218, 1.442695
        %v6290 = vpow.pop %v6289
        %v6291 = vmul.f32 %v6219, 1.442695
        %v6292 = vpow.pop %v6291
        %v6293 = vmul.f32 %v6220, 1.442695
        %v6294 = vpow.pop %v6293
        %v6295 = vmul.f32 %v6221, 1.442695
        %v6296 = vpow.pop %v6295
        %v6297 = vmul.f32 %v6222, 1.442695
        %v6298 = vpow.pop %v6297
        %v6299 = vmul.f32 %v6223, 1.442695
        %v6300 = vpow.pop %v6299
        %v6301 = vmul.f32 %v6224, 1.442695
        %v6302 = vpow.pop %v6301
        %v6303 = vmul.f32 %v6225, 1.442695
        %v6304 = vpow.pop %v6303
        %v6305 = vmul.f32 %v6226, 1.442695
        %v6306 = vpow.pop %v6305
        %v6307 = vmul.f32 %v6227, 1.442695
        %v6308 = vpow.pop %v6307
        %v6309 = vmul.f32 %v6228, 1.442695
        %v6310 = vpow.pop %v6309
        %v6311 = vmul.f32 %v6229, 1.442695
        %v6312 = vpow.pop %v6311
        %v6313 = vmul.f32 %v6230, 1.442695
        %v6314 = vpow.pop %v6313
        %v6315 = vmul.f32 %v6231, 1.442695
        %v6316 = vpow.pop %v6315
        %v6317 = vmul.f32 %v6232, 1.442695
        %v6318 = vpow.pop %v6317
        %v6319 = vmul.f32 %v6233, 1.442695
        %v6320 = vpow.pop %v6319
        %v6321 = vmul.f32 %v6234, 1.442695
        %v6322 = vpow.pop %v6321
        %v6323 = vmul.f32 %v6235, 1.442695
        %v6324 = vpow.pop %v6323
        %v6325 = vmul.f32 %v6236, 1.442695
        %v6326 = vpow.pop %v6325
        %v6327 = vmul.f32 %v6237, 1.442695
        %v6328 = vpow.pop %v6327
        %v6329 = vmul.f32 %v6238, 1.442695
        %v6330 = vpow.pop %v6329
        %v6331 = vmul.f32 %v6239, 1.442695
        %v6332 = vpow.pop %v6331
        %v6333 = vmul.f32 %v6240, 1.442695
        %v6334 = vpow.pop %v6333
        %v6335 = vmul.f32 %v6241, 1.442695
        %v6336 = vpow.pop %v6335
        %v6337 = vmul.f32 %v6242, 1.442695
        %v6338 = vpow.pop %v6337
        %v6339 = vadd.f32 %v6276, 1.0
        %v6340 = vlog2.pop %v6339
        %v6341 = vmul.f32 %v6340, 0.6931472
        %v6342 = vmul.f32 -0.5, %v6276
        %v6343 = vadd.f32 %v6342, 1.0
        %v6344 = vmul.f32 %v6343, %v6276
        %v6345 = vand.u32 2147483647, %v6276
        %vm6346 = vcmp.lt.f32.partialorder %v6345, 0.0004427343
        %v6347 = vsel %vm6346, %v6344, %v6341
        %v6348 = vadd.f32 %v6278, 1.0
        %v6349 = vlog2.pop %v6348
        %v6350 = vmul.f32 %v6349, 0.6931472
        %v6351 = vmul.f32 -0.5, %v6278
        %v6352 = vadd.f32 %v6351, 1.0
        %v6353 = vmul.f32 %v6352, %v6278
        %v6354 = vand.u32 2147483647, %v6278
        %vm6355 = vcmp.lt.f32.partialorder %v6354, 0.0004427343
        %v6356 = vsel %vm6355, %v6353, %v6350
        %v6357 = vadd.f32 %v6280, 1.0
        %v6358 = vlog2.pop %v6357
        %v6359 = vmul.f32 %v6358, 0.6931472
        %v6360 = vmul.f32 -0.5, %v6280
        %v6361 = vadd.f32 %v6360, 1.0
        %v6362 = vmul.f32 %v6361, %v6280
        %v6363 = vand.u32 2147483647, %v6280
        %vm6364 = vcmp.lt.f32.partialorder %v6363, 0.0004427343
        %v6365 = vsel %vm6364, %v6362, %v6359
        %v6366 = vadd.f32 %v6282, 1.0
        %v6367 = vlog2.pop %v6366
        %v6368 = vmul.f32 %v6367, 0.6931472
        %v6369 = vmul.f32 -0.5, %v6282
        %v6370 = vadd.f32 %v6369, 1.0
        %v6371 = vmul.f32 %v6370, %v6282
        %v6372 = vand.u32 2147483647, %v6282
        %vm6373 = vcmp.lt.f32.partialorder %v6372, 0.0004427343
        %v6374 = vsel %vm6373, %v6371, %v6368
        %v6375 = vadd.f32 %v6284, 1.0
        %v6376 = vlog2.pop %v6375
        %v6377 = vmul.f32 %v6376, 0.6931472
        %v6378 = vmul.f32 -0.5, %v6284
        %v6379 = vadd.f32 %v6378, 1.0
        %v6380 = vmul.f32 %v6379, %v6284
        %v6381 = vand.u32 2147483647, %v6284
        %vm6382 = vcmp.lt.f32.partialorder %v6381, 0.0004427343
        %v6383 = vsel %vm6382, %v6380, %v6377
        %v6384 = vadd.f32 %v6286, 1.0
        %v6385 = vlog2.pop %v6384
        %v6386 = vmul.f32 %v6385, 0.6931472
        %v6387 = vmul.f32 -0.5, %v6286
        %v6388 = vadd.f32 %v6387, 1.0
        %v6389 = vmul.f32 %v6388, %v6286
        %v6390 = vand.u32 2147483647, %v6286
        %vm6391 = vcmp.lt.f32.partialorder %v6390, 0.0004427343
        %v6392 = vsel %vm6391, %v6389, %v6386
        %v6393 = vadd.f32 %v6288, 1.0
        %v6394 = vlog2.pop %v6393
        %v6395 = vmul.f32 %v6394, 0.6931472
        %v6396 = vmul.f32 -0.5, %v6288
        %v6397 = vadd.f32 %v6396, 1.0
        %v6398 = vmul.f32 %v6397, %v6288
        %v6399 = vand.u32 2147483647, %v6288
        %vm6400 = vcmp.lt.f32.partialorder %v6399, 0.0004427343
        %v6401 = vsel %vm6400, %v6398, %v6395
        %v6402 = vadd.f32 %v6290, 1.0
        %v6403 = vlog2.pop %v6402
        %v6404 = vmul.f32 %v6403, 0.6931472
        %v6405 = vmul.f32 -0.5, %v6290
        %v6406 = vadd.f32 %v6405, 1.0
        %v6407 = vmul.f32 %v6406, %v6290
        %v6408 = vand.u32 2147483647, %v6290
        %vm6409 = vcmp.lt.f32.partialorder %v6408, 0.0004427343
        %v6410 = vsel %vm6409, %v6407, %v6404
        %v6411 = vadd.f32 %v6292, 1.0
        %v6412 = vlog2.pop %v6411
        %v6413 = vmul.f32 %v6412, 0.6931472
        %v6414 = vmul.f32 -0.5, %v6292
        %v6415 = vadd.f32 %v6414, 1.0
        %v6416 = vmul.f32 %v6415, %v6292
        %v6417 = vand.u32 2147483647, %v6292
        %vm6418 = vcmp.lt.f32.partialorder %v6417, 0.0004427343
        %v6419 = vsel %vm6418, %v6416, %v6413
        %v6420 = vadd.f32 %v6294, 1.0
        %v6421 = vlog2.pop %v6420
        %v6422 = vmul.f32 %v6421, 0.6931472
        %v6423 = vmul.f32 -0.5, %v6294
        %v6424 = vadd.f32 %v6423, 1.0
        %v6425 = vmul.f32 %v6424, %v6294
        %v6426 = vand.u32 2147483647, %v6294
        %vm6427 = vcmp.lt.f32.partialorder %v6426, 0.0004427343
        %v6428 = vsel %vm6427, %v6425, %v6422
        %v6429 = vadd.f32 %v6296, 1.0
        %v6430 = vlog2.pop %v6429
        %v6431 = vmul.f32 %v6430, 0.6931472
        %v6432 = vmul.f32 -0.5, %v6296
        %v6433 = vadd.f32 %v6432, 1.0
        %v6434 = vmul.f32 %v6433, %v6296
        %v6435 = vand.u32 2147483647, %v6296
        %vm6436 = vcmp.lt.f32.partialorder %v6435, 0.0004427343
        %v6437 = vsel %vm6436, %v6434, %v6431
        %v6438 = vadd.f32 %v6298, 1.0
        %v6439 = vlog2.pop %v6438
        %v6440 = vmul.f32 %v6439, 0.6931472
        %v6441 = vmul.f32 -0.5, %v6298
        %v6442 = vadd.f32 %v6441, 1.0
        %v6443 = vmul.f32 %v6442, %v6298
        %v6444 = vand.u32 2147483647, %v6298
        %vm6445 = vcmp.lt.f32.partialorder %v6444, 0.0004427343
        %v6446 = vsel %vm6445, %v6443, %v6440
        %v6447 = vadd.f32 %v6300, 1.0
        %v6448 = vlog2.pop %v6447
        %v6449 = vmul.f32 %v6448, 0.6931472
        %v6450 = vmul.f32 -0.5, %v6300
        %v6451 = vadd.f32 %v6450, 1.0
        %v6452 = vmul.f32 %v6451, %v6300
        %v6453 = vand.u32 2147483647, %v6300
        %vm6454 = vcmp.lt.f32.partialorder %v6453, 0.0004427343
        %v6455 = vsel %vm6454, %v6452, %v6449
        %v6456 = vadd.f32 %v6302, 1.0
        %v6457 = vlog2.pop %v6456
        %v6458 = vmul.f32 %v6457, 0.6931472
        %v6459 = vmul.f32 -0.5, %v6302
        %v6460 = vadd.f32 %v6459, 1.0
        %v6461 = vmul.f32 %v6460, %v6302
        %v6462 = vand.u32 2147483647, %v6302
        %vm6463 = vcmp.lt.f32.partialorder %v6462, 0.0004427343
        %v6464 = vsel %vm6463, %v6461, %v6458
        %v6465 = vadd.f32 %v6304, 1.0
        %v6466 = vlog2.pop %v6465
        %v6467 = vmul.f32 %v6466, 0.6931472
        %v6468 = vmul.f32 -0.5, %v6304
        %v6469 = vadd.f32 %v6468, 1.0
        %v6470 = vmul.f32 %v6469, %v6304
        %v6471 = vand.u32 2147483647, %v6304
        %vm6472 = vcmp.lt.f32.partialorder %v6471, 0.0004427343
        %v6473 = vsel %vm6472, %v6470, %v6467
        %v6474 = vadd.f32 %v6306, 1.0
        %v6475 = vlog2.pop %v6474
        %v6476 = vmul.f32 %v6475, 0.6931472
        %v6477 = vmul.f32 -0.5, %v6306
        %v6478 = vadd.f32 %v6477, 1.0
        %v6479 = vmul.f32 %v6478, %v6306
        %v6480 = vand.u32 2147483647, %v6306
        %vm6481 = vcmp.lt.f32.partialorder %v6480, 0.0004427343
        %v6482 = vsel %vm6481, %v6479, %v6476
        %v6483 = vadd.f32 %v6308, 1.0
        %v6484 = vlog2.pop %v6483
        %v6485 = vmul.f32 %v6484, 0.6931472
        %v6486 = vmul.f32 -0.5, %v6308
        %v6487 = vadd.f32 %v6486, 1.0
        %v6488 = vmul.f32 %v6487, %v6308
        %v6489 = vand.u32 2147483647, %v6308
        %vm6490 = vcmp.lt.f32.partialorder %v6489, 0.0004427343
        %v6491 = vsel %vm6490, %v6488, %v6485
        %v6492 = vadd.f32 %v6310, 1.0
        %v6493 = vlog2.pop %v6492
        %v6494 = vmul.f32 %v6493, 0.6931472
        %v6495 = vmul.f32 -0.5, %v6310
        %v6496 = vadd.f32 %v6495, 1.0
        %v6497 = vmul.f32 %v6496, %v6310
        %v6498 = vand.u32 2147483647, %v6310
        %vm6499 = vcmp.lt.f32.partialorder %v6498, 0.0004427343
        %v6500 = vsel %vm6499, %v6497, %v6494
        %v6501 = vadd.f32 %v6312, 1.0
        %v6502 = vlog2.pop %v6501
        %v6503 = vmul.f32 %v6502, 0.6931472
        %v6504 = vmul.f32 -0.5, %v6312
        %v6505 = vadd.f32 %v6504, 1.0
        %v6506 = vmul.f32 %v6505, %v6312
        %v6507 = vand.u32 2147483647, %v6312
        %vm6508 = vcmp.lt.f32.partialorder %v6507, 0.0004427343
        %v6509 = vsel %vm6508, %v6506, %v6503
        %v6510 = vadd.f32 %v6314, 1.0
        %v6511 = vlog2.pop %v6510
        %v6512 = vmul.f32 %v6511, 0.6931472
        %v6513 = vmul.f32 -0.5, %v6314
        %v6514 = vadd.f32 %v6513, 1.0
        %v6515 = vmul.f32 %v6514, %v6314
        %v6516 = vand.u32 2147483647, %v6314
        %vm6517 = vcmp.lt.f32.partialorder %v6516, 0.0004427343
        %v6518 = vsel %vm6517, %v6515, %v6512
        %v6519 = vadd.f32 %v6316, 1.0
        %v6520 = vlog2.pop %v6519
        %v6521 = vmul.f32 %v6520, 0.6931472
        %v6522 = vmul.f32 -0.5, %v6316
        %v6523 = vadd.f32 %v6522, 1.0
        %v6524 = vmul.f32 %v6523, %v6316
        %v6525 = vand.u32 2147483647, %v6316
        %vm6526 = vcmp.lt.f32.partialorder %v6525, 0.0004427343
        %v6527 = vsel %vm6526, %v6524, %v6521
        %v6528 = vadd.f32 %v6318, 1.0
        %v6529 = vlog2.pop %v6528
        %v6530 = vmul.f32 %v6529, 0.6931472
        %v6531 = vmul.f32 -0.5, %v6318
        %v6532 = vadd.f32 %v6531, 1.0
        %v6533 = vmul.f32 %v6532, %v6318
        %v6534 = vand.u32 2147483647, %v6318
        %vm6535 = vcmp.lt.f32.partialorder %v6534, 0.0004427343
        %v6536 = vsel %vm6535, %v6533, %v6530
        %v6537 = vadd.f32 %v6320, 1.0
        %v6538 = vlog2.pop %v6537
        %v6539 = vmul.f32 %v6538, 0.6931472
        %v6540 = vmul.f32 -0.5, %v6320
        %v6541 = vadd.f32 %v6540, 1.0
        %v6542 = vmul.f32 %v6541, %v6320
        %v6543 = vand.u32 2147483647, %v6320
        %vm6544 = vcmp.lt.f32.partialorder %v6543, 0.0004427343
        %v6545 = vsel %vm6544, %v6542, %v6539
        %v6546 = vadd.f32 %v6322, 1.0
        %v6547 = vlog2.pop %v6546
        %v6548 = vmul.f32 %v6547, 0.6931472
        %v6549 = vmul.f32 -0.5, %v6322
        %v6550 = vadd.f32 %v6549, 1.0
        %v6551 = vmul.f32 %v6550, %v6322
        %v6552 = vand.u32 2147483647, %v6322
        %vm6553 = vcmp.lt.f32.partialorder %v6552, 0.0004427343
        %v6554 = vsel %vm6553, %v6551, %v6548
        %v6555 = vadd.f32 %v6324, 1.0
        %v6556 = vlog2.pop %v6555
        %v6557 = vmul.f32 %v6556, 0.6931472
        %v6558 = vmul.f32 -0.5, %v6324
        %v6559 = vadd.f32 %v6558, 1.0
        %v6560 = vmul.f32 %v6559, %v6324
        %v6561 = vand.u32 2147483647, %v6324
        %vm6562 = vcmp.lt.f32.partialorder %v6561, 0.0004427343
        %v6563 = vsel %vm6562, %v6560, %v6557
        %v6564 = vadd.f32 %v6326, 1.0
        %v6565 = vlog2.pop %v6564
        %v6566 = vmul.f32 %v6565, 0.6931472
        %v6567 = vmul.f32 -0.5, %v6326
        %v6568 = vadd.f32 %v6567, 1.0
        %v6569 = vmul.f32 %v6568, %v6326
        %v6570 = vand.u32 2147483647, %v6326
        %vm6571 = vcmp.lt.f32.partialorder %v6570, 0.0004427343
        %v6572 = vsel %vm6571, %v6569, %v6566
        %v6573 = vadd.f32 %v6328, 1.0
        %v6574 = vlog2.pop %v6573
        %v6575 = vmul.f32 %v6574, 0.6931472
        %v6576 = vmul.f32 -0.5, %v6328
        %v6577 = vadd.f32 %v6576, 1.0
        %v6578 = vmul.f32 %v6577, %v6328
        %v6579 = vand.u32 2147483647, %v6328
        %vm6580 = vcmp.lt.f32.partialorder %v6579, 0.0004427343
        %v6581 = vsel %vm6580, %v6578, %v6575
        %v6582 = vadd.f32 %v6330, 1.0
        %v6583 = vlog2.pop %v6582
        %v6584 = vmul.f32 %v6583, 0.6931472
        %v6585 = vmul.f32 -0.5, %v6330
        %v6586 = vadd.f32 %v6585, 1.0
        %v6587 = vmul.f32 %v6586, %v6330
        %v6588 = vand.u32 2147483647, %v6330
        %vm6589 = vcmp.lt.f32.partialorder %v6588, 0.0004427343
        %v6590 = vsel %vm6589, %v6587, %v6584
        %v6591 = vadd.f32 %v6332, 1.0
        %v6592 = vlog2.pop %v6591
        %v6593 = vmul.f32 %v6592, 0.6931472
        %v6594 = vmul.f32 -0.5, %v6332
        %v6595 = vadd.f32 %v6594, 1.0
        %v6596 = vmul.f32 %v6595, %v6332
        %v6597 = vand.u32 2147483647, %v6332
        %vm6598 = vcmp.lt.f32.partialorder %v6597, 0.0004427343
        %v6599 = vsel %vm6598, %v6596, %v6593
        %v6600 = vadd.f32 %v6334, 1.0
        %v6601 = vlog2.pop %v6600
        %v6602 = vmul.f32 %v6601, 0.6931472
        %v6603 = vmul.f32 -0.5, %v6334
        %v6604 = vadd.f32 %v6603, 1.0
        %v6605 = vmul.f32 %v6604, %v6334
        %v6606 = vand.u32 2147483647, %v6334
        %vm6607 = vcmp.lt.f32.partialorder %v6606, 0.0004427343
        %v6608 = vsel %vm6607, %v6605, %v6602
        %v6609 = vadd.f32 %v6336, 1.0
        %v6610 = vlog2.pop %v6609
        %v6611 = vmul.f32 %v6610, 0.6931472
        %v6612 = vmul.f32 -0.5, %v6336
        %v6613 = vadd.f32 %v6612, 1.0
        %v6614 = vmul.f32 %v6613, %v6336
        %v6615 = vand.u32 2147483647, %v6336
        %vm6616 = vcmp.lt.f32.partialorder %v6615, 0.0004427343
        %v6617 = vsel %vm6616, %v6614, %v6611
        %v6618 = vadd.f32 %v6338, 1.0
        %v6619 = vlog2.pop %v6618
        %v6620 = vmul.f32 %v6619, 0.6931472
        %v6621 = vmul.f32 -0.5, %v6338
        %v6622 = vadd.f32 %v6621, 1.0
        %v6623 = vmul.f32 %v6622, %v6338
        %v6624 = vand.u32 2147483647, %v6338
        %vm6625 = vcmp.lt.f32.partialorder %v6624, 0.0004427343
        %v6626 = vsel %vm6625, %v6623, %v6620
        %v6627 = vmul.f32 %v6347, 0.01
        %v6628 = vmul.f32 %v6356, 0.01
        %v6629 = vmul.f32 %v6365, 0.01
        %v6630 = vmul.f32 %v6374, 0.01
        %v6631 = vmul.f32 %v6383, 0.01
        %v6632 = vmul.f32 %v6392, 0.01
        %v6633 = vmul.f32 %v6401, 0.01
        %v6634 = vmul.f32 %v6410, 0.01
        %v6635 = vmul.f32 %v6419, 0.01
        %v6636 = vmul.f32 %v6428, 0.01
        %v6637 = vmul.f32 %v6437, 0.01
        %v6638 = vmul.f32 %v6446, 0.01
        %v6639 = vmul.f32 %v6455, 0.01
        %v6640 = vmul.f32 %v6464, 0.01
        %v6641 = vmul.f32 %v6473, 0.01
        %v6642 = vmul.f32 %v6482, 0.01
        %v6643 = vmul.f32 %v6491, 0.01
        %v6644 = vmul.f32 %v6500, 0.01
        %v6645 = vmul.f32 %v6509, 0.01
        %v6646 = vmul.f32 %v6518, 0.01
        %v6647 = vmul.f32 %v6527, 0.01
        %v6648 = vmul.f32 %v6536, 0.01
        %v6649 = vmul.f32 %v6545, 0.01
        %v6650 = vmul.f32 %v6554, 0.01
        %v6651 = vmul.f32 %v6563, 0.01
        %v6652 = vmul.f32 %v6572, 0.01
        %v6653 = vmul.f32 %v6581, 0.01
        %v6654 = vmul.f32 %v6590, 0.01
        %v6655 = vmul.f32 %v6599, 0.01
        %v6656 = vmul.f32 %v6608, 0.01
        %v6657 = vmul.f32 %v6617, 0.01
        %v6658 = vmul.f32 %v6626, 0.01
        %v6659 = vsel %vm6243, %v6052, %v6627
        %v6660 = vsel %vm6244, %v6054, %v6628
        %v6661 = vsel %vm6245, %v6165, %v6629
        %v6662 = vsel %vm6246, %v6167, %v6630
        %v6663 = vsel %vm6247, %v6058, %v6631
        %v6664 = vsel %vm6248, %v6060, %v6632
        %v6665 = vsel %vm6249, %v6171, %v6633
        %v6666 = vsel %vm6250, %v6173, %v6634
        %v6667 = vsel %vm6251, %v6064, %v6635
        %v6668 = vsel %vm6252, %v6066, %v6636
        %v6669 = vsel %vm6253, %v6177, %v6637
        %v6670 = vsel %vm6254, %v6179, %v6638
        %v6671 = vsel %vm6255, %v6070, %v6639
        %v6672 = vsel %vm6256, %v6072, %v6640
        %v6673 = vsel %vm6257, %v6183, %v6641
        %v6674 = vsel %vm6258, %v6185, %v6642
        %v6675 = vsel %vm6259, %v6076, %v6643
        %v6676 = vsel %vm6260, %v6078, %v6644
        %v6677 = vsel %vm6261, %v6189, %v6645
        %v6678 = vsel %vm6262, %v6191, %v6646
        %v6679 = vsel %vm6263, %v6082, %v6647
        %v6680 = vsel %vm6264, %v6084, %v6648
        %v6681 = vsel %vm6265, %v6195, %v6649
        %v6682 = vsel %vm6266, %v6197, %v6650
        %v6683 = vsel %vm6267, %v6088, %v6651
        %v6684 = vsel %vm6268, %v6090, %v6652
        %v6685 = vsel %vm6269, %v6201, %v6653
        %v6686 = vsel %vm6270, %v6203, %v6654
        %v6687 = vsel %vm6271, %v6094, %v6655
        %v6688 = vsel %vm6272, %v6096, %v6656
        %v6689 = vsel %vm6273, %v6207, %v6657
        %v6690 = vsel %vm6274, %v6209, %v6658
        %v6691 = vld [vmem:[%s4] sm:$0xff]
        %v6692 = vld [vmem:[%s4 + $0x8] sm:$0xff]
        %v6693 = vld [vmem:[%s4 + $0x10] sm:$0xff]
        %v6694 = vld [vmem:[%s4 + $0x18] sm:$0xff]
        %v6695 = vld [vmem:[%s4 + $0x20] sm:$0xff]
        %v6696 = vld [vmem:[%s4 + $0x28] sm:$0xff]
        %v6697 = vld [vmem:[%s4 + $0x30] sm:$0xff]
        %v6698 = vld [vmem:[%s4 + $0x38] sm:$0xff]
        %v6699 = vld [vmem:[%s4 + $0x40] sm:$0x1]
        %v6700 = vld [vmem:[%s5] sm:$0xff]
        %v6701 = vld [vmem:[%s5 + $0x8] sm:$0xff]
        %v6702 = vld [vmem:[%s5 + $0x10] sm:$0xff]
        %v6703 = vld [vmem:[%s5 + $0x18] sm:$0xff]
        %v6704 = vld [vmem:[%s5 + $0x20] sm:$0xff]
        %v6705 = vld [vmem:[%s5 + $0x28] sm:$0xff]
        %v6706 = vld [vmem:[%s5 + $0x30] sm:$0xff]
        %v6707 = vld [vmem:[%s5 + $0x38] sm:$0xff]
        %v6708 = vld [vmem:[%s5 + $0x40] sm:$0x1]
        %6710 = vset.pattern.permute.xlu0 0
        %6711 = vperm.xlu0 %6710, %v6700
        %v6712 = vpop.permute.xlu0 %6711
        %6715 = vset.pattern.permute.xlu0 0
        %6716 = vperm.xlu0 %6715, %v6701
        %v6717 = vpop.permute.xlu0 %6716
        %6720 = vset.pattern.permute.xlu0 0
        %6721 = vperm.xlu0 %6720, %v6702
        %v6722 = vpop.permute.xlu0 %6721
        %6725 = vset.pattern.permute.xlu0 0
        %6726 = vperm.xlu0 %6725, %v6703
        %v6727 = vpop.permute.xlu0 %6726
        %6730 = vset.pattern.permute.xlu0 0
        %6731 = vperm.xlu0 %6730, %v6704
        %v6732 = vpop.permute.xlu0 %6731
        %6735 = vset.pattern.permute.xlu0 0
        %6736 = vperm.xlu0 %6735, %v6705
        %v6737 = vpop.permute.xlu0 %6736
        %6740 = vset.pattern.permute.xlu0 0
        %6741 = vperm.xlu0 %6740, %v6706
        %v6742 = vpop.permute.xlu0 %6741
        %6745 = vset.pattern.permute.xlu0 0
        %6746 = vperm.xlu0 %6745, %v6707
        %v6747 = vpop.permute.xlu0 %6746
        %6750 = vset.pattern.permute.xlu0 0
        %6751 = vperm.xlu0 %6750, %v6708
        %v6752 = vpop.permute.xlu0 %6751
        %v6755 = vsel %vm1270, %v6691, 0
        %v6758 = vsel %vm1270, %v6692, 0
        %v6761 = vsel %vm1270, %v6693, 0
        %v6764 = vsel %vm1270, %v6694, 0
        %v6767 = vsel %vm1270, %v6695, 0
        %v6770 = vsel %vm1270, %v6696, 0
        %v6773 = vsel %vm1270, %v6697, 0
        %v6776 = vsel %vm1270, %v6698, 0
        %v6779 = vsel %vm1270, %v6699, 0
        %6781 = vmatprep.subr.mxu0 %v6660
        %6782 = vmatpush1.msra.mxu0 %v6659
        %6783 = vmatprep.subr.mxu0 %v6664
        %6784 = vmatpush1.msra.mxu0 %v6663
        %6785 = vmatprep.subr.mxu0 %v6668
        %6786 = vmatpush1.msra.mxu0 %v6667
        %6787 = vmatprep.subr.mxu0 %v6672
        %6788 = vmatpush1.msra.mxu0 %v6671
        %6789 = vmatprep.subr.mxu0 %v6676
        %6790 = vmatpush1.msra.mxu0 %v6675
        %6791 = vmatprep.subr.mxu0 %v6680
        %6792 = vmatpush1.msra.mxu0 %v6679
        %6793 = vmatprep.subr.mxu0 %v6684
        %6794 = vmatpush1.msra.mxu0 %v6683
        %6795 = vmatprep.subr.mxu0 %v6688
        %6796 = vmatpush1.msra.mxu0 %v6687
        %6797 = vmatprep.subr.mxu0 0.0
        %6798 = vmatpush1.msra.mxu0 0.0
        %6799 = vmatprep.subr.mxu0 0.0
        %6800 = vmatpush1.msra.mxu0 0.0
        %6801 = vmatprep.subr.mxu0 0.0
        %6802 = vmatpush1.msra.mxu0 0.0
        %6803 = vmatprep.subr.mxu0 0.0
        %6804 = vmatpush1.msra.mxu0 0.0
        %6805 = vmatprep.subr.mxu0 0.0
        %6806 = vmatpush1.msra.mxu0 0.0
        %6807 = vmatprep.subr.mxu0 0.0
        %6808 = vmatpush1.msra.mxu0 0.0
        %6809 = vmatprep.subr.mxu0 0.0
        %6810 = vmatpush1.msra.mxu0 0.0
        %6811 = vmatprep.subr.mxu0 0.0
        %6812 = vmatpush1.msra.mxu0 0.0
        %6813 = vmatprep.subr.mxu0 0.0
        %6814 = vmatpush1.msra.mxu0 0.0
        %6815 = vmatprep.subr.mxu0 0.0
        %6816 = vmatpush1.msra.mxu0 0.0
        %6817 = vmatprep.subr.mxu0 0.0
        %6818 = vmatpush1.msra.mxu0 0.0
        %6819 = vmatprep.subr.mxu0 0.0
        %6820 = vmatpush1.msra.mxu0 0.0
        %6821 = vmatprep.subr.mxu0 0.0
        %6822 = vmatpush1.msra.mxu0 0.0
        %6823 = vmatprep.subr.mxu0 0.0
        %6824 = vmatpush1.msra.mxu0 0.0
        %6825 = vmatprep.subr.mxu0 0.0
        %6826 = vmatpush1.msra.mxu0 0.0
        %6827 = vmatprep.subr.mxu0 0.0
        %6828 = vmatpush1.msra.mxu0 0.0
        %6829 = vmatprep.subr.mxu0 0.0
        %6830 = vmatpush1.msra.mxu0 0.0
        %6831 = vmatprep.subr.mxu0 0.0
        %6832 = vmatpush1.msra.mxu0 0.0
        %6833 = vmatprep.subr.mxu0 0.0
        %6834 = vmatpush1.msra.mxu0 0.0
        %6835 = vmatprep.subr.mxu0 0.0
        %6836 = vmatpush1.msra.mxu0 0.0
        %6837 = vmatprep.subr.mxu0 0.0
        %6838 = vmatpush1.msra.mxu0 0.0
        %6839 = vmatprep.subr.mxu0 0.0
        %6840 = vmatpush1.msra.mxu0 0.0
        %6841 = vmatprep.subr.mxu0 0.0
        %6842 = vmatpush1.msra.mxu0 0.0
        %6843 = vmatprep.subr.mxu0 0.0
        %6844 = vmatpush1.msra.mxu0 0.0
        %6845 = vmatprep.mubr.f32.mxu0 0.0
        %6846 = vmatmul.mubr.f32.gmra.mrb[0].mxu0 %v6755
        %v6847 = vpop.f32.mrb[0].mxu0
        %v6848 = vadd.f32 %v6712, %v6847
        %v6849 = vpop.f32.mrb[0].mxu0
        %v6850 = vadd.f32 %v6712, %v6849
        %6851 = vmatprep.mubr.f32.mxu0 0.0
        %6852 = vmatmul.mubr.f32.gmra.mrb[0].mxu0 %v6758
        %v6853 = vpop.f32.mrb[0].mxu0
        %v6854 = vadd.f32 %v6717, %v6853
        %v6855 = vpop.f32.mrb[0].mxu0
        %v6856 = vadd.f32 %v6717, %v6855
        %6857 = vmatprep.mubr.f32.mxu0 0.0
        %6858 = vmatmul.mubr.f32.gmra.mrb[0].mxu0 %v6761
        %v6859 = vpop.f32.mrb[0].mxu0
        %v6860 = vadd.f32 %v6722, %v6859
        %v6861 = vpop.f32.mrb[0].mxu0
        %v6862 = vadd.f32 %v6722, %v6861
        %6863 = vmatprep.mubr.f32.mxu0 0.0
        %6864 = vmatmul.mubr.f32.gmra.mrb[0].mxu0 %v6764
        %v6865 = vpop.f32.mrb[0].mxu0
        %v6866 = vadd.f32 %v6727, %v6865
        %v6867 = vpop.f32.mrb[0].mxu0
        %v6868 = vadd.f32 %v6727, %v6867
        %6869 = vmatprep.mubr.f32.mxu0 0.0
        %6870 = vmatmul.mubr.f32.gmra.mrb[0].mxu0 %v6767
        %v6871 = vpop.f32.mrb[0].mxu0
        %v6872 = vadd.f32 %v6732, %v6871
        %v6873 = vpop.f32.mrb[0].mxu0
        %v6874 = vadd.f32 %v6732, %v6873
        %6875 = vmatprep.mubr.f32.mxu0 0.0
        %6876 = vmatmul.mubr.f32.gmra.mrb[0].mxu0 %v6770
        %v6877 = vpop.f32.mrb[0].mxu0
        %v6878 = vadd.f32 %v6737, %v6877
        %v6879 = vpop.f32.mrb[0].mxu0
        %v6880 = vadd.f32 %v6737, %v6879
        %6881 = vmatprep.mubr.f32.mxu0 0.0
        %6882 = vmatmul.mubr.f32.gmra.mrb[0].mxu0 %v6773
        %v6883 = vpop.f32.mrb[0].mxu0
        %v6884 = vadd.f32 %v6742, %v6883
        %v6885 = vpop.f32.mrb[0].mxu0
        %v6886 = vadd.f32 %v6742, %v6885
        %6887 = vmatprep.mubr.f32.mxu0 0.0
        %6888 = vmatmul.mubr.f32.gmra.mrb[0].mxu0 %v6776
        %v6889 = vpop.f32.mrb[0].mxu0
        %v6890 = vadd.f32 %v6747, %v6889
        %v6891 = vpop.f32.mrb[0].mxu0
        %v6892 = vadd.f32 %v6747, %v6891
        %6893 = vmatprep.mubr.f32.mxu0 0.0
        %6894 = vmatmul.mubr.f32.gmra.mrb[0].mxu0 %v6779
        %v6895 = vpop.f32.mrb[0].mxu0
        %v6896 = vadd.f32 %v6752, %v6895
        %v6897 = vpop.f32.mrb[0].mxu0
        %v6898 = vadd.f32 %v6752, %v6897
        %6899 = vdwg.mxu0
        %6900 = vmatprep.subr.mxu0 %v6662
        %6901 = vmatpush1.msra.mxu0 %v6661
        %6902 = vmatprep.subr.mxu0 %v6666
        %6903 = vmatpush1.msra.mxu0 %v6665
        %6904 = vmatprep.subr.mxu0 %v6670
        %6905 = vmatpush1.msra.mxu0 %v6669
        %6906 = vmatprep.subr.mxu0 %v6674
        %6907 = vmatpush1.msra.mxu0 %v6673
        %6908 = vmatprep.subr.mxu0 %v6678
        %6909 = vmatpush1.msra.mxu0 %v6677
        %6910 = vmatprep.subr.mxu0 %v6682
        %6911 = vmatpush1.msra.mxu0 %v6681
        %6912 = vmatprep.subr.mxu0 %v6686
        %6913 = vmatpush1.msra.mxu0 %v6685
        %6914 = vmatprep.subr.mxu0 %v6690
        %6915 = vmatpush1.msra.mxu0 %v6689
        %6916 = vmatprep.subr.mxu0 0.0
        %6917 = vmatpush1.msra.mxu0 0.0
        %6918 = vmatprep.subr.mxu0 0.0
        %6919 = vmatpush1.msra.mxu0 0.0
        %6920 = vmatprep.subr.mxu0 0.0
        %6921 = vmatpush1.msra.mxu0 0.0
        %6922 = vmatprep.subr.mxu0 0.0
        %6923 = vmatpush1.msra.mxu0 0.0
        %6924 = vmatprep.subr.mxu0 0.0
        %6925 = vmatpush1.msra.mxu0 0.0
        %6926 = vmatprep.subr.mxu0 0.0
        %6927 = vmatpush1.msra.mxu0 0.0
        %6928 = vmatprep.subr.mxu0 0.0
        %6929 = vmatpush1.msra.mxu0 0.0
        %6930 = vmatprep.subr.mxu0 0.0
        %6931 = vmatpush1.msra.mxu0 0.0
        %6932 = vmatprep.subr.mxu0 0.0
        %6933 = vmatpush1.msra.mxu0 0.0
        %6934 = vmatprep.subr.mxu0 0.0
        %6935 = vmatpush1.msra.mxu0 0.0
        %6936 = vmatprep.subr.mxu0 0.0
        %6937 = vmatpush1.msra.mxu0 0.0
        %6938 = vmatprep.subr.mxu0 0.0
        %6939 = vmatpush1.msra.mxu0 0.0
        %6940 = vmatprep.subr.mxu0 0.0
        %6941 = vmatpush1.msra.mxu0 0.0
        %6942 = vmatprep.subr.mxu0 0.0
        %6943 = vmatpush1.msra.mxu0 0.0
        %6944 = vmatprep.subr.mxu0 0.0
        %6945 = vmatpush1.msra.mxu0 0.0
        %6946 = vmatprep.subr.mxu0 0.0
        %6947 = vmatpush1.msra.mxu0 0.0
        %6948 = vmatprep.subr.mxu0 0.0
        %6949 = vmatpush1.msra.mxu0 0.0
        %6950 = vmatprep.subr.mxu0 0.0
        %6951 = vmatpush1.msra.mxu0 0.0
        %6952 = vmatprep.subr.mxu0 0.0
        %6953 = vmatpush1.msra.mxu0 0.0
        %6954 = vmatprep.subr.mxu0 0.0
        %6955 = vmatpush1.msra.mxu0 0.0
        %6956 = vmatprep.subr.mxu0 0.0
        %6957 = vmatpush1.msra.mxu0 0.0
        %6958 = vmatprep.subr.mxu0 0.0
        %6959 = vmatpush1.msra.mxu0 0.0
        %6960 = vmatprep.subr.mxu0 0.0
        %6961 = vmatpush1.msra.mxu0 0.0
        %6962 = vmatprep.subr.mxu0 0.0
        %6963 = vmatpush1.msra.mxu0 0.0
        %6964 = vmatprep.mubr.f32.mxu0 0.0
        %6965 = vmatmul.mubr.f32.gmra.mrb[0].mxu0 %v6755
        %v6966 = vpop.f32.mrb[0].mxu0
        %v6967 = vadd.f32 %v6712, %v6966
        %v6968 = vpop.f32.mrb[0].mxu0
        %v6969 = vadd.f32 %v6712, %v6968
        %6970 = vmatprep.mubr.f32.mxu0 0.0
        %6971 = vmatmul.mubr.f32.gmra.mrb[0].mxu0 %v6758
        %v6972 = vpop.f32.mrb[0].mxu0
        %v6973 = vadd.f32 %v6717, %v6972
        %v6974 = vpop.f32.mrb[0].mxu0
        %v6975 = vadd.f32 %v6717, %v6974
        %6976 = vmatprep.mubr.f32.mxu0 0.0
        %6977 = vmatmul.mubr.f32.gmra.mrb[0].mxu0 %v6761
        %v6978 = vpop.f32.mrb[0].mxu0
        %v6979 = vadd.f32 %v6722, %v6978
        %v6980 = vpop.f32.mrb[0].mxu0
        %v6981 = vadd.f32 %v6722, %v6980
        %6982 = vmatprep.mubr.f32.mxu0 0.0
        %6983 = vmatmul.mubr.f32.gmra.mrb[0].mxu0 %v6764
        %v6984 = vpop.f32.mrb[0].mxu0
        %v6985 = vadd.f32 %v6727, %v6984
        %v6986 = vpop.f32.mrb[0].mxu0
        %v6987 = vadd.f32 %v6727, %v6986
        %6988 = vmatprep.mubr.f32.mxu0 0.0
        %6989 = vmatmul.mubr.f32.gmra.mrb[0].mxu0 %v6767
        %v6990 = vpop.f32.mrb[0].mxu0
        %v6991 = vadd.f32 %v6732, %v6990
        %v6992 = vpop.f32.mrb[0].mxu0
        %v6993 = vadd.f32 %v6732, %v6992
        %6994 = vmatprep.mubr.f32.mxu0 0.0
        %6995 = vmatmul.mubr.f32.gmra.mrb[0].mxu0 %v6770
        %v6996 = vpop.f32.mrb[0].mxu0
        %v6997 = vadd.f32 %v6737, %v6996
        %v6998 = vpop.f32.mrb[0].mxu0
        %v6999 = vadd.f32 %v6737, %v6998
        %7000 = vmatprep.mubr.f32.mxu0 0.0
        %7001 = vmatmul.mubr.f32.gmra.mrb[0].mxu0 %v6773
        %v7002 = vpop.f32.mrb[0].mxu0
        %v7003 = vadd.f32 %v6742, %v7002
        %v7004 = vpop.f32.mrb[0].mxu0
        %v7005 = vadd.f32 %v6742, %v7004
        %7006 = vmatprep.mubr.f32.mxu0 0.0
        %7007 = vmatmul.mubr.f32.gmra.mrb[0].mxu0 %v6776
        %v7008 = vpop.f32.mrb[0].mxu0
        %v7009 = vadd.f32 %v6747, %v7008
        %v7010 = vpop.f32.mrb[0].mxu0
        %v7011 = vadd.f32 %v6747, %v7010
        %7012 = vmatprep.mubr.f32.mxu0 0.0
        %7013 = vmatmul.mubr.f32.gmra.mrb[0].mxu0 %v6779
        %v7014 = vpop.f32.mrb[0].mxu0
        %v7015 = vadd.f32 %v6752, %v7014
        %v7016 = vpop.f32.mrb[0].mxu0
        %v7017 = vadd.f32 %v6752, %v7016
        %7018 = vdwg.mxu0
        %7019 = vst [vmem:[%s260] sm:$0xff] %v6848
        %7020 = vst [vmem:[%s260 + $0x8] sm:$0xff] %v6850
        %7021 = vst [vmem:[%s260 + $0x10] sm:$0xff] %v6967
        %7022 = vst [vmem:[%s260 + $0x18] sm:$0xff] %v6969
        %7023 = vst [vmem:[%s260 + $0x20] sm:$0xff] %v6854
        %7024 = vst [vmem:[%s260 + $0x28] sm:$0xff] %v6856
        %7025 = vst [vmem:[%s260 + $0x30] sm:$0xff] %v6973
        %7026 = vst [vmem:[%s260 + $0x38] sm:$0xff] %v6975
        %7027 = vst [vmem:[%s260 + $0x40] sm:$0xff] %v6860
        %7028 = vst [vmem:[%s260 + $0x48] sm:$0xff] %v6862
        %7029 = vst [vmem:[%s260 + $0x50] sm:$0xff] %v6979
        %7030 = vst [vmem:[%s260 + $0x58] sm:$0xff] %v6981
        %7031 = vst [vmem:[%s260 + $0x60] sm:$0xff] %v6866
        %7032 = vst [vmem:[%s260 + $0x68] sm:$0xff] %v6868
        %7033 = vst [vmem:[%s260 + $0x70] sm:$0xff] %v6985
        %7034 = vst [vmem:[%s260 + $0x78] sm:$0xff] %v6987
        %7035 = vst [vmem:[%s260 + $0x80] sm:$0xff] %v6872
        %7036 = vst [vmem:[%s260 + $0x88] sm:$0xff] %v6874
        %7037 = vst [vmem:[%s260 + $0x90] sm:$0xff] %v6991
        %7038 = vst [vmem:[%s260 + $0x98] sm:$0xff] %v6993
        %7039 = vst [vmem:[%s260 + $0xa0] sm:$0xff] %v6878
        %7040 = vst [vmem:[%s260 + $0xa8] sm:$0xff] %v6880
        %7041 = vst [vmem:[%s260 + $0xb0] sm:$0xff] %v6997
        %7042 = vst [vmem:[%s260 + $0xb8] sm:$0xff] %v6999
        %7043 = vst [vmem:[%s260 + $0xc0] sm:$0xff] %v6884
        %7044 = vst [vmem:[%s260 + $0xc8] sm:$0xff] %v6886
        %7045 = vst [vmem:[%s260 + $0xd0] sm:$0xff] %v7003
        %7046 = vst [vmem:[%s260 + $0xd8] sm:$0xff] %v7005
        %7047 = vst [vmem:[%s260 + $0xe0] sm:$0xff] %v6890
        %7048 = vst [vmem:[%s260 + $0xe8] sm:$0xff] %v6892
        %7049 = vst [vmem:[%s260 + $0xf0] sm:$0xff] %v7009
        %7050 = vst [vmem:[%s260 + $0xf8] sm:$0xff] %v7011
        %7051 = vst [vmem:[%s260 + $0x100] sm:$0x1] %v6896
        %7052 = vst [vmem:[%s260 + $0x108] sm:$0x1] %v6898
        %7053 = vst [vmem:[%s260 + $0x110] sm:$0x1] %v7015
        %7054 = vst [vmem:[%s260 + $0x118] sm:$0x1] %v7017
        %s7055 = sand.u32 %s160, 1
        %s7056 = scalar_lea.sflag [#allocation4], %s7055
        %s7057 = sand.u32 %s160, 1
        %s7058 = smul.addr %s7057, 288
        %s7059 = scalar_lea.vmem [#allocation5], %s7058
        // Predicated region
        $region49: #{tpu_custom_call.1} parent=43 // pred_check
          %p7060 = pneg %p170
        $region50: #{tpu_custom_call.1} parent=43 // pred_check_branch
          %7062 = sbr.rel (%p7060) target = $region52
        $region51: #{tpu_custom_call.1} parent=43 // pred_region
          %s7063 = smul.u32 4, %s21
          %s7065 = ssub.s32 4608, 4608
          %7066 = vsyncadd %s7056, %s7065
          %s7067 = smul.addr %s7063, 128
          %s7068 = scalar_lea.hbm %s6, %s7067
          %s7069 = sshll.u32 %s7059, 4
          %s7070 = int_to_ptr.vmem [resolvable:$true] %s7069
          %7075 = dma.vmem_to_hbm [thread:$0]  %s7070, 4608, %s7068, %s7056, 512, 1024, 32
        $region52: #{tpu_custom_call.1} parent=43 // pred_fallthru
          _
      $region44: #{tpu_custom_call.1} parent=5 // pred_fallthru
        _
      %p7076 = scmp.le.s32.totalorder 2, %s16
      // Predicated region
      $region53: #{tpu_custom_call.1} parent=5 // pred_check
        %p7077 = pneg %p7076
      $region54: #{tpu_custom_call.1} parent=5 // pred_check_branch
        %7079 = sbr.rel (%p7077) target = $region56
      $region55: #{tpu_custom_call.1} parent=5 // pred_region
        %s7080 = ssub.s32 %s16, 2
        // Predicated region
        $region57: #{tpu_custom_call.1} parent=55 // pred_check
          %p7081 = pneg %p176
        $region58: #{tpu_custom_call.1} parent=55 // pred_check_branch
          %7083 = sbr.rel (%p7081) target = $region60
        $region59: #{tpu_custom_call.1} parent=55 // pred_region
          %s7084 = sand.u32 %s161, 1
          %s7085 = scalar_lea.sflag [#allocation4], %s7084
          %s7086 = sand.u32 %s161, 1
          %s7087 = smul.addr %s7086, 288
          %s7088 = scalar_lea.vmem [#allocation5], %s7087
          %7089 = dma.done %s7085, 4608
        $region60: #{tpu_custom_call.1} parent=55 // pred_fallthru
          _
      $region56: #{tpu_custom_call.1} parent=5 // pred_fallthru
        _
    $region6: #{tpu_custom_call.1} parent=1 // loop_footer
      %s20 = sadd.s32 1, %s16
    $region7: #{tpu_custom_call.1} parent=1 // loop_footer_branch
      %15 = sbr.rel target = $region3
    $region8: #{tpu_custom_call.1} parent=1 // loop_exit
      _
    %7090 = vsyncpa [#allocation3], 1
    %s7091 = scalar_lea.sflag [#allocation3], 1
    %7092 = vsyncpa %s7091, 1
    %7093 = vsyncpa [#allocation4], 1
    %s7094 = scalar_lea.sflag [#allocation4], 1
    %7095 = vsyncpa %s7094, 1

</llo_original>
